<compile_context>
chip_gen: v7x
topology: tpu7x:2x2x1
jax: 0.10.0
libtpu: 0.0.40
codegen_flags: <defaults>
</compile_context>

<pallas_src>
import jax
import jax.numpy as jnp
from jax import lax
from jax.experimental import pallas as pl
from jax.experimental.pallas import tpu as pltpu


def _round_up(x, m):
    return (x + m - 1) // m * m


def _pick_row_tile(n, target=256):
    """Largest row-tile <= target that divides n (n itself if n <= target)."""
    if n <= target:
        return n
    for rt in range(target, 7, -1):
        if n % rt == 0:
            return rt
    return n


# ----------------------------------------------------------------------------
# Pallas kernel 1: hoisted input projection (both LSTM directions at once).
#   (N, E) bf16 @ (E, 8H) bf16 + bias -> (N, 8H) f32 pre-activations.
# ----------------------------------------------------------------------------
def _proj_kernel(x_ref, w_ref, b_ref, o_ref):
    o_ref[...] = (
        jnp.dot(x_ref[...], w_ref[...], preferred_element_type=jnp.float32)
        + b_ref[...]
    )


def fused_input_projection(x_bf16, w_bf16, bias_f32):
    N, E = x_bf16.shape
    G = w_bf16.shape[1]
    rt = _pick_row_tile(N)
    return pl.pallas_call(
        _proj_kernel,
        out_shape=jax.ShapeDtypeStruct((N, G), jnp.float32),
        grid_spec=pltpu.PrefetchScalarGridSpec(
            num_scalar_prefetch=0,
            grid=(N // rt,),
            in_specs=[
                pl.BlockSpec((rt, E), lambda i: (i, 0)),
                pl.BlockSpec((E, G), lambda i: (0, 0)),
                pl.BlockSpec((1, G), lambda i: (0, 0)),
            ],
            out_specs=pl.BlockSpec((rt, G), lambda i: (i, 0)),
        ),
        compiler_params=pltpu.CompilerParams(
            dimension_semantics=("parallel",)),
    )(x_bf16, w_bf16, bias_f32)


# ----------------------------------------------------------------------------
# Pallas kernel 2: fused bidirectional LSTM recurrence, time-blocked.
#   Per grid step: forward direction consumes time block i (ascending), backward
#   direction consumes time block nblk-1-i (descending within the block).
#   Only h @ W_hh is done per step; the x projection is already folded in.
#   Gate order matches PyTorch nn.LSTM: [i, f, g, o].
#   Hidden states carried in f32 VMEM scratch; outputs stored bf16 (lane dense).
# ----------------------------------------------------------------------------
def _bilstm_kernel(pre_f_ref, pre_b_ref, whh_f_ref, whh_b_ref,
                   hf_out_ref, hb_out_ref, hf_sc, cf_sc, hb_sc, cb_sc):
    @pl.when(pl.program_id(0) == 0)
    def _():
        hf_sc[...] = jnp.zeros_like(hf_sc)
        cf_sc[...] = jnp.zeros_like(cf_sc)
        hb_sc[...] = jnp.zeros_like(hb_sc)
        cb_sc[...] = jnp.zeros_like(cb_sc)

    H = hf_sc.shape[-1]
    tt = pre_f_ref.shape[0]
    out_dtype = hf_out_ref.dtype

    def cell(pre, h, c, whh_ref):
        gates = pre + jnp.dot(h, whh_ref[...],
                              preferred_element_type=jnp.float32)
        i_g = jax.nn.sigmoid(gates[:, 0 * H:1 * H])
        f_g = jax.nn.sigmoid(gates[:, 1 * H:2 * H])
        g_g = jnp.tanh(gates[:, 2 * H:3 * H])
        o_g = jax.nn.sigmoid(gates[:, 3 * H:4 * H])
        c_new = f_g * c + i_g * g_g
        h_new = o_g * jnp.tanh(c_new)
        return h_new, c_new

    def body(j, carry):
        # forward direction: ascending local time j
        h_new, c_new = cell(pre_f_ref[j], hf_sc[...], cf_sc[...], whh_f_ref)
        hf_sc[...] = h_new
        cf_sc[...] = c_new
        hf_out_ref[j] = h_new.astype(out_dtype)
        # backward direction: descending local time within its reversed block
        jr = tt - 1 - j
        h_new_b, c_new_b = cell(pre_b_ref[jr], hb_sc[...], cb_sc[...],
                                whh_b_ref)
        hb_sc[...] = h_new_b
        cb_sc[...] = c_new_b
        hb_out_ref[jr] = h_new_b.astype(out_dtype)
        return carry

    lax.fori_loop(0, tt, body, 0, unroll=True)


def bilstm(pre_all, w_hh_f_t, w_hh_b_t, time_block=8):
    """pre_all: (T, Bp, 8H) f32 = [fwd pre-acts | bwd pre-acts] along last axis.

    Returns (h_fwd, h_bwd), each (T, Bp, H) bf16.
    """
    T, Bp, G = pre_all.shape
    H = G // 8
    tt = min(time_block, T)
    while T % tt:
        tt -= 1
    nblk = T // tt

    return pl.pallas_call(
        _bilstm_kernel,
        out_shape=(jax.ShapeDtypeStruct((T, Bp, H), jnp.bfloat16),
                   jax.ShapeDtypeStruct((T, Bp, H), jnp.bfloat16)),
        grid_spec=pltpu.PrefetchScalarGridSpec(
            num_scalar_prefetch=0,
            grid=(nblk,),
            in_specs=[
                # forward pre-activations: ascending time blocks, columns [0,4H)
                pl.BlockSpec((tt, Bp, 4 * H), lambda i: (i, 0, 0)),
                # backward pre-activations: DESCENDING time blocks (no [::-1]
                # HBM copy), columns [4H, 8H)
                pl.BlockSpec((tt, Bp, 4 * H), lambda i: (nblk - 1 - i, 0, 1)),
                pl.BlockSpec((H, 4 * H), lambda i: (0, 0)),
                pl.BlockSpec((H, 4 * H), lambda i: (0, 0)),
            ],
            out_specs=[
                pl.BlockSpec((tt, Bp, H), lambda i: (i, 0, 0)),
                pl.BlockSpec((tt, Bp, H), lambda i: (nblk - 1 - i, 0, 0)),
            ],
            scratch_shapes=[pltpu.VMEM((Bp, H), jnp.float32)] * 4,
        ),
        compiler_params=pltpu.CompilerParams(
            dimension_semantics=("arbitrary",)),
    )(pre_all, pre_all, w_hh_f_t, w_hh_b_t)


# ----------------------------------------------------------------------------
# Pallas kernel 3: fused classifier logits = h_fwd @ W1 + h_bwd @ W2 + b.
#   Reads the two bf16 direction outputs directly (no concat / transpose);
#   output is lane-padded to 128 so stores are dense (sliced in the wrapper).
# ----------------------------------------------------------------------------
def _classifier_kernel(hf_ref, hb_ref, w1_ref, w2_ref, b_ref, o_ref):
    o_ref[...] = (
        jnp.dot(hf_ref[...], w1_ref[...], preferred_element_type=jnp.float32)
        + jnp.dot(hb_ref[...], w2_ref[...], preferred_element_type=jnp.float32)
        + b_ref[...]
    )


def fused_classifier(hf_flat, hb_flat, w1_bf16, w2_bf16, bias_f32):
    N, H = hf_flat.shape
    Lp = w1_bf16.shape[1]
    rt = _pick_row_tile(N)
    return pl.pallas_call(
        _classifier_kernel,
        out_shape=jax.ShapeDtypeStruct((N, Lp), jnp.float32),
        grid_spec=pltpu.PrefetchScalarGridSpec(
            num_scalar_prefetch=0,
            grid=(N // rt,),
            in_specs=[
                pl.BlockSpec((rt, H), lambda i: (i, 0)),
                pl.BlockSpec((rt, H), lambda i: (i, 0)),
                pl.BlockSpec((H, Lp), lambda i: (0, 0)),
                pl.BlockSpec((H, Lp), lambda i: (0, 0)),
                pl.BlockSpec((1, Lp), lambda i: (0, 0)),
            ],
            out_specs=pl.BlockSpec((rt, Lp), lambda i: (i, 0)),
        ),
        compiler_params=pltpu.CompilerParams(
            dimension_semantics=("parallel",)),
    )(hf_flat, hb_flat, w1_bf16, w2_bf16, bias_f32)


# ----------------------------------------------------------------------------
# CRF negative log-likelihood (torchcrf semantics, batch_first, reduction='sum').
# Sequential logsumexp recurrence over T with tiny (L,L) state: plain-JAX glue.
# ----------------------------------------------------------------------------
def crf_neg_log_likelihood_tm(em, tags, mask, start_t, end_t, trans):
    # em: (T, B, L) time-major emissions; tags/mask: (B, T)
    tg = jnp.transpose(tags).astype(jnp.int32)     # (T, B)
    mk = jnp.transpose(mask).astype(jnp.float32)   # (T, B)
    T, B, L = em.shape
    b_idx = jnp.arange(B)

    # --- numerator (score of the given tag sequence) ---
    score0 = start_t[tg[0]] + em[0, b_idx, tg[0]]

    def num_step(score, xs):
        e_t, t_prev, t_cur, m_t = xs
        step = trans[t_prev, t_cur] + e_t[b_idx, t_cur]
        return score + step * m_t, None

    score, _ = lax.scan(num_step, score0, (em[1:], tg[:-1], tg[1:], mk[1:]))
    # NOTE: assumes a contiguous prefix mask with mask[:, 0] == 1 (same
    # requirement as torchcrf).
    seq_len = jnp.sum(mk, axis=0).astype(jnp.int32)
    last_tags = tg[seq_len - 1, b_idx]
    score = score + end_t[last_tags]

    # --- denominator (forward algorithm / partition function) ---
    alpha0 = start_t[None, :] + em[0]

    def den_step(alpha, xs):
        e_t, m_t = xs
        nxt = jax.scipy.special.logsumexp(
            alpha[:, :, None] + trans[None, :, :] + e_t[:, None, :], axis=1)
        alpha = jnp.where(m_t[:, None] > 0, nxt, alpha)
        return alpha, None

    alpha, _ = lax.scan(den_step, alpha0, (em[1:], mk[1:]))
    denom = jax.scipy.special.logsumexp(alpha + end_t[None, :], axis=1)

    return -jnp.sum(score - denom)   # loss = -1 * crf(..., reduction='sum')


# ----------------------------------------------------------------------------
# Parameters & full forward.
# ----------------------------------------------------------------------------
def init_params(key, vocab, emb, hidden, num_label):
    ks = jax.random.split(key, 12)
    s = 0.1
    return {
        "embedding": jax.random.normal(ks[0], (vocab, emb), jnp.float32) * s,
        # forward-direction LSTM (PyTorch layout)
        "w_ih_f": jax.random.normal(ks[1], (4 * hidden, emb), jnp.float32) * s,
        "w_hh_f": jax.random.normal(ks[2], (4 * hidden, hidden), jnp.float32) * s,
        "b_ih_f": jax.random.normal(ks[3], (4 * hidden,), jnp.float32) * s,
        "b_hh_f": jax.random.normal(ks[4], (4 * hidden,), jnp.float32) * s,
        # backward-direction LSTM
        "w_ih_b": jax.random.normal(ks[5], (4 * hidden, emb), jnp.float32) * s,
        "w_hh_b": jax.random.normal(ks[6], (4 * hidden, hidden), jnp.float32) * s,
        "b_ih_b": jax.random.normal(ks[7], (4 * hidden,), jnp.float32) * s,
        "b_hh_b": jax.random.normal(ks[8], (4 * hidden,), jnp.float32) * s,
        # classifier (PyTorch layout (L, 2H))
        "w_cls": jax.random.normal(ks[9], (num_label, 2 * hidden), jnp.float32) * s,
        "b_cls": jax.random.normal(ks[10], (num_label,), jnp.float32) * s,
        # CRF
        "crf_start": jax.random.normal(ks[11], (num_label,), jnp.float32) * s,
        "crf_end": jax.random.normal(ks[11], (num_label,), jnp.float32) * s * 0.5,
        "crf_trans": jax.random.normal(ks[11], (num_label, num_label), jnp.float32) * s,
    }


@jax.jit
def lstm_crf_forward(params, input_ids, labels, attention_mask):
    B, T = input_ids.shape
    H = params["w_hh_f"].shape[1]
    L = params["w_cls"].shape[0]
    Bp = _round_up(B, 8)          # pad batch to a sublane multiple
    Lp = _round_up(L, 128)        # lane-dense classifier output

    # --- embedding gather (glue), done time-major to avoid a (B,T,E) transpose ---
    ids_tm = jnp.transpose(input_ids)                             # (T, B)
    embeds = jnp.take(params["embedding"], ids_tm, axis=0)        # (T, B, E)
    # TODO(synk): Dropout(0.3) is stochastic; forward here uses eval-mode identity.
    embeds = jnp.pad(embeds, ((0, 0), (0, Bp - B), (0, 0)))       # (T, Bp, E)
    E = embeds.shape[-1]
    x_flat = embeds.reshape(T * Bp, E).astype(jnp.bfloat16)

    # --- hoisted input projection: one bf16 matmul for BOTH directions ---
    w_proj = jnp.concatenate(
        [jnp.transpose(params["w_ih_f"]), jnp.transpose(params["w_ih_b"])],
        axis=1).astype(jnp.bfloat16)                              # (E, 8H)
    b_proj = jnp.concatenate(
        [params["b_ih_f"] + params["b_hh_f"],
         params["b_ih_b"] + params["b_hh_b"]]).reshape(1, 8 * H)  # (1, 8H)
    pre_all = fused_input_projection(x_flat, w_proj, b_proj)      # (T*Bp, 8H) f32
    pre_all = pre_all.reshape(T, Bp, 8 * H)

    # --- fused bidirectional recurrence (Pallas, time-blocked, bf16 outputs) ---
    h_fwd, h_bwd = bilstm(pre_all,
                          jnp.transpose(params["w_hh_f"]),
                          jnp.transpose(params["w_hh_b"]),
                          time_block=8)                           # (T, Bp, H) bf16 each
    # TODO(synk): Dropout(0.3) on lstm_out is identity in eval mode.

    # --- fused classifier: logits = h_fwd@W1 + h_bwd@W2 + b, lane-padded ---
    w_cls = params["w_cls"]                                       # (L, 2H)
    w1 = jnp.pad(jnp.transpose(w_cls[:, :H]), ((0, 0), (0, Lp - L)))
    w2 = jnp.pad(jnp.transpose(w_cls[:, H:]), ((0, 0), (0, Lp - L)))
    b_cls = jnp.pad(params["b_cls"], (0, Lp - L)).reshape(1, Lp)
    logits_flat = fused_classifier(h_fwd.reshape(T * Bp, H),
                                   h_bwd.reshape(T * Bp, H),
                                   w1.astype(jnp.bfloat16),
                                   w2.astype(jnp.bfloat16),
                                   b_cls)                         # (T*Bp, Lp)
    logits_tm = logits_flat.reshape(T, Bp, Lp)[:, :B, :L]         # (T, B, L)
    logits = jnp.transpose(logits_tm, (1, 0, 2))                  # (B, T, L)

    # --- CRF loss (labels path) ---
    labels = labels[:, :T]
    loss = crf_neg_log_likelihood_tm(logits_tm, labels, attention_mask,
                                     params["crf_start"], params["crf_end"],
                                     params["crf_trans"])
    return loss, logits


if __name__ == "__main__":
    # Small stand-ins for vocab=..., emb=300, hidden=256, num_label from file.
    V, E, H, L = 100, 64, 128, 8
    B, T = 2, 16

    key = jax.random.PRNGKey(0)
    k_p, k_ids, k_lbl = jax.random.split(key, 3)
    params = init_params(k_p, V, E, H, L)

    input_ids = jax.random.randint(k_ids, (B, T), 0, V, dtype=jnp.int32)
    labels = jax.random.randint(k_lbl, (B, T), 0, L, dtype=jnp.int32)
    attention_mask = jnp.ones((B, T), dtype=jnp.int32)

    loss, logits = lstm_crf_forward(params, input_ids, labels, attention_mask)
    jax.block_until_ready((loss, logits))
    assert logits.shape == (B, T, L)
    assert bool(jnp.isfinite(loss))
    print("KERNEL_OK")
</pallas_src>

<mosaic_0001>
module attributes {stable_mosaic.version = 11 : i64} {
  func.func @_proj_kernel(%arg0: i32, %arg1: memref<128x64xbf16, #tpu.memory_space<vmem>>, %arg2: memref<64x1024xbf16, #tpu.memory_space<vmem>>, %arg3: memref<1x1024xf32, #tpu.memory_space<vmem>>, %arg4: memref<128x1024xf32, #tpu.memory_space<vmem>>) attributes {dimension_semantics = [#tpu.dimension_semantics<parallel>], iteration_bounds = array<i64: 1>, scalar_prefetch = 0 : i64, scratch_operands = 0 : i64, tpu.core_type = #tpu.core_type<tc>, window_params = [{transform_indices = @transform_0, window_bounds = array<i64: 128, 64>}, {pipeline_mode = #tpu.pipeline_mode<synchronous>, transform_indices = @transform_1, window_bounds = array<i64: 64, 1024>}, {pipeline_mode = #tpu.pipeline_mode<synchronous>, transform_indices = @transform_2, window_bounds = array<i64: 1, 1024>}, {transform_indices = @transform_3, window_bounds = array<i64: 128, 1024>}]} {
    %c0 = arith.constant 0 : index
    %c0_0 = arith.constant 0 : index
    %0 = vector.load %arg1[%c0, %c0_0] : memref<128x64xbf16, #tpu.memory_space<vmem>>, vector<128x64xbf16>
    %c0_1 = arith.constant 0 : index
    %c0_2 = arith.constant 0 : index
    %1 = vector.load %arg2[%c0_1, %c0_2] : memref<64x1024xbf16, #tpu.memory_space<vmem>>, vector<64x1024xbf16>
    %cst = arith.constant dense<0.000000e+00> : vector<128x1024xf32>
    %2 = tpu.matmul %0, %1, %cst {dimension_numbers = #tpu.dot_dimension_numbers<[1], [0], [0], [1], [0, 0, 1, 1], [], []>} : vector<128x64xbf16>, vector<64x1024xbf16>, vector<128x1024xf32> -> vector<128x1024xf32>
    %c0_3 = arith.constant 0 : index
    %c0_4 = arith.constant 0 : index
    %3 = vector.load %arg3[%c0_3, %c0_4] : memref<1x1024xf32, #tpu.memory_space<vmem>>, vector<1x1024xf32>
    %4 = vector.broadcast %3 : vector<1x1024xf32> to vector<128x1024xf32>
    %5 = arith.addf %2, %4 : vector<128x1024xf32>
    %c0_5 = arith.constant 0 : index
    %c0_6 = arith.constant 0 : index
    %6 = vector.load %arg4[%c0_5, %c0_6] : memref<128x1024xf32, #tpu.memory_space<vmem>>, vector<128x1024xf32>
    tpu.vector_store %arg4[%c0_5, %c0_6], %5 {strides = array<i32>} : memref<128x1024xf32, #tpu.memory_space<vmem>>, vector<128x1024xf32>,
    return
  }
  func.func @transform_0(%arg0: i32) -> (i32, i32) {
    %c0_i32 = arith.constant 0 : i32
    %c0_i32_0 = arith.constant 0 : i32
    return %arg0, %c0_i32 : i32, i32
  }
  func.func @transform_1(%arg0: i32) -> (i32, i32) {
    %c0_i32 = arith.constant 0 : i32
    %c0_i32_0 = arith.constant 0 : i32
    %c0_i32_1 = arith.constant 0 : i32
    return %c0_i32, %c0_i32_0 : i32, i32
  }
  func.func @transform_2(%arg0: i32) -> (i32, i32) {
    %c0_i32 = arith.constant 0 : i32
    %c0_i32_0 = arith.constant 0 : i32
    %c0_i32_1 = arith.constant 0 : i32
    return %c0_i32, %c0_i32_0 : i32, i32
  }
  func.func @transform_3(%arg0: i32) -> (i32, i32) {
    %c0_i32 = arith.constant 0 : i32
    %c0_i32_0 = arith.constant 0 : i32
    return %arg0, %c0_i32 : i32, i32
  }
}

module attributes {stable_mosaic.version = 11 : i64} {
  func.func @_classifier_kernel(%arg0: i32, %arg1: memref<128x128xbf16, #tpu.memory_space<vmem>>, %arg2: memref<128x128xbf16, #tpu.memory_space<vmem>>, %arg3: memref<128x128xbf16, #tpu.memory_space<vmem>>, %arg4: memref<128x128xbf16, #tpu.memory_space<vmem>>, %arg5: memref<1x128xf32, #tpu.memory_space<vmem>>, %arg6: memref<128x128xf32, #tpu.memory_space<vmem>>) attributes {dimension_semantics = [#tpu.dimension_semantics<parallel>], iteration_bounds = array<i64: 1>, scalar_prefetch = 0 : i64, scratch_operands = 0 : i64, tpu.core_type = #tpu.core_type<tc>, window_params = [{transform_indices = @transform_0, window_bounds = array<i64: 128, 128>}, {transform_indices = @transform_1, window_bounds = array<i64: 128, 128>}, {pipeline_mode = #tpu.pipeline_mode<synchronous>, transform_indices = @transform_2, window_bounds = array<i64: 128, 128>}, {pipeline_mode = #tpu.pipeline_mode<synchronous>, transform_indices = @transform_3, window_bounds = array<i64: 128, 128>}, {pipeline_mode = #tpu.pipeline_mode<synchronous>, transform_indices = @transform_4, window_bounds = array<i64: 1, 128>}, {transform_indices = @transform_5, window_bounds = array<i64: 128, 128>}]} {
    %c0 = arith.constant 0 : index
    %c0_0 = arith.constant 0 : index
    %0 = vector.load %arg1[%c0, %c0_0] : memref<128x128xbf16, #tpu.memory_space<vmem>>, vector<128x128xbf16>
    %c0_1 = arith.constant 0 : index
    %c0_2 = arith.constant 0 : index
    %1 = vector.load %arg3[%c0_1, %c0_2] : memref<128x128xbf16, #tpu.memory_space<vmem>>, vector<128x128xbf16>
    %cst = arith.constant dense<0.000000e+00> : vector<128x128xf32>
    %2 = tpu.matmul %0, %1, %cst {dimension_numbers = #tpu.dot_dimension_numbers<[1], [0], [0], [1], [0, 0, 1, 1], [], []>} : vector<128x128xbf16>, vector<128x128xbf16>, vector<128x128xf32> -> vector<128x128xf32>
    %c0_3 = arith.constant 0 : index
    %c0_4 = arith.constant 0 : index
    %3 = vector.load %arg2[%c0_3, %c0_4] : memref<128x128xbf16, #tpu.memory_space<vmem>>, vector<128x128xbf16>
    %c0_5 = arith.constant 0 : index
    %c0_6 = arith.constant 0 : index
    %4 = vector.load %arg4[%c0_5, %c0_6] : memref<128x128xbf16, #tpu.memory_space<vmem>>, vector<128x128xbf16>
    %cst_7 = arith.constant dense<0.000000e+00> : vector<128x128xf32>
    %5 = tpu.matmul %3, %4, %cst_7 {dimension_numbers = #tpu.dot_dimension_numbers<[1], [0], [0], [1], [0, 0, 1, 1], [], []>} : vector<128x128xbf16>, vector<128x128xbf16>, vector<128x128xf32> -> vector<128x128xf32>
    %6 = arith.addf %2, %5 : vector<128x128xf32>
    %c0_8 = arith.constant 0 : index
    %c0_9 = arith.constant 0 : index
    %7 = vector.load %arg5[%c0_8, %c0_9] : memref<1x128xf32, #tpu.memory_space<vmem>>, vector<1x128xf32>
    %8 = vector.broadcast %7 : vector<1x128xf32> to vector<128x128xf32>
    %9 = arith.addf %6, %8 : vector<128x128xf32>
    %c0_10 = arith.constant 0 : index
    %c0_11 = arith.constant 0 : index
    %10 = vector.load %arg6[%c0_10, %c0_11] : memref<128x128xf32, #tpu.memory_space<vmem>>, vector<128x128xf32>
    tpu.vector_store %arg6[%c0_10, %c0_11], %9 {strides = array<i32>} : memref<128x128xf32, #tpu.memory_space<vmem>>, vector<128x128xf32>,
    return
  }
  func.func @transform_0(%arg0: i32) -> (i32, i32) {
    %c0_i32 = arith.constant 0 : i32
    %c0_i32_0 = arith.constant 0 : i32
    return %arg0, %c0_i32 : i32, i32
  }
  func.func @transform_1(%arg0: i32) -> (i32, i32) {
    %c0_i32 = arith.constant 0 : i32
    %c0_i32_0 = arith.constant 0 : i32
    return %arg0, %c0_i32 : i32, i32
  }
  func.func @transform_2(%arg0: i32) -> (i32, i32) {
    %c0_i32 = arith.constant 0 : i32
    %c0_i32_0 = arith.constant 0 : i32
    %c0_i32_1 = arith.constant 0 : i32
    return %c0_i32, %c0_i32_0 : i32, i32
  }
  func.func @transform_3(%arg0: i32) -> (i32, i32) {
    %c0_i32 = arith.constant 0 : i32
    %c0_i32_0 = arith.constant 0 : i32
    %c0_i32_1 = arith.constant 0 : i32
    return %c0_i32, %c0_i32_0 : i32, i32
  }
  func.func @transform_4(%arg0: i32) -> (i32, i32) {
    %c0_i32 = arith.constant 0 : i32
    %c0_i32_0 = arith.constant 0 : i32
    %c0_i32_1 = arith.constant 0 : i32
    return %c0_i32, %c0_i32_0 : i32, i32
  }
  func.func @transform_5(%arg0: i32) -> (i32, i32) {
    %c0_i32 = arith.constant 0 : i32
    %c0_i32_0 = arith.constant 0 : i32
    return %arg0, %c0_i32 : i32, i32
  }
}

module attributes {stable_mosaic.version = 11 : i64} {
  func.func @_bilstm_kernel(%arg0: i32, %arg1: memref<8x8x512xf32, #tpu.memory_space<vmem>>, %arg2: memref<8x8x512xf32, #tpu.memory_space<vmem>>, %arg3: memref<128x512xf32, #tpu.memory_space<vmem>>, %arg4: memref<128x512xf32, #tpu.memory_space<vmem>>, %arg5: memref<8x8x128xbf16, #tpu.memory_space<vmem>>, %arg6: memref<8x8x128xbf16, #tpu.memory_space<vmem>>, %arg7: memref<8x128xf32, #tpu.memory_space<vmem>>, %arg8: memref<8x128xf32, #tpu.memory_space<vmem>>, %arg9: memref<8x128xf32, #tpu.memory_space<vmem>>, %arg10: memref<8x128xf32, #tpu.memory_space<vmem>>) attributes {dimension_semantics = [#tpu.dimension_semantics<arbitrary>], iteration_bounds = array<i64: 2>, scalar_prefetch = 0 : i64, scratch_operands = 4 : i64, tpu.core_type = #tpu.core_type<tc>, window_params = [{transform_indices = @transform_0, window_bounds = array<i64: 8, 8, 512>}, {transform_indices = @transform_1, window_bounds = array<i64: 8, 8, 512>}, {pipeline_mode = #tpu.pipeline_mode<synchronous>, transform_indices = @transform_2, window_bounds = array<i64: 128, 512>}, {pipeline_mode = #tpu.pipeline_mode<synchronous>, transform_indices = @transform_3, window_bounds = array<i64: 128, 512>}, {transform_indices = @transform_4, window_bounds = array<i64: 8, 8, 128>}, {transform_indices = @transform_5, window_bounds = array<i64: 8, 8, 128>}]} {
    %c0_i32 = arith.constant 0 : i32
    %0 = arith.cmpi eq, %arg0, %c0_i32 : i32
    %1 = arith.extui %0 : i1 to i32
    %c0_i32_0 = arith.constant 0 : i32
    %2 = arith.cmpi ne, %1, %c0_i32_0 : i32
    scf.if %2 {
      %cst_296 = arith.constant 0.000000e+00 : f32
      %651 = vector.broadcast %cst_296 : f32 to vector<8x128xf32>
      %c0_297 = arith.constant 0 : index
      %c0_298 = arith.constant 0 : index
      %652 = vector.load %arg7[%c0_297, %c0_298] : memref<8x128xf32, #tpu.memory_space<vmem>>, vector<8x128xf32>
      tpu.vector_store %arg7[%c0_297, %c0_298], %651 {strides = array<i32>} : memref<8x128xf32, #tpu.memory_space<vmem>>, vector<8x128xf32>,
      %cst_299 = arith.constant 0.000000e+00 : f32
      %653 = vector.broadcast %cst_299 : f32 to vector<8x128xf32>
      %c0_300 = arith.constant 0 : index
      %c0_301 = arith.constant 0 : index
      %654 = vector.load %arg8[%c0_300, %c0_301] : memref<8x128xf32, #tpu.memory_space<vmem>>, vector<8x128xf32>
      tpu.vector_store %arg8[%c0_300, %c0_301], %653 {strides = array<i32>} : memref<8x128xf32, #tpu.memory_space<vmem>>, vector<8x128xf32>,
      %cst_302 = arith.constant 0.000000e+00 : f32
      %655 = vector.broadcast %cst_302 : f32 to vector<8x128xf32>
      %c0_303 = arith.constant 0 : index
      %c0_304 = arith.constant 0 : index
      %656 = vector.load %arg9[%c0_303, %c0_304] : memref<8x128xf32, #tpu.memory_space<vmem>>, vector<8x128xf32>
      tpu.vector_store %arg9[%c0_303, %c0_304], %655 {strides = array<i32>} : memref<8x128xf32, #tpu.memory_space<vmem>>, vector<8x128xf32>,
      %cst_305 = arith.constant 0.000000e+00 : f32
      %657 = vector.broadcast %cst_305 : f32 to vector<8x128xf32>
      %c0_306 = arith.constant 0 : index
      %c0_307 = arith.constant 0 : index
      %658 = vector.load %arg10[%c0_306, %c0_307] : memref<8x128xf32, #tpu.memory_space<vmem>>, vector<8x128xf32>
      tpu.vector_store %arg10[%c0_306, %c0_307], %657 {strides = array<i32>} : memref<8x128xf32, #tpu.memory_space<vmem>>, vector<8x128xf32>,
    } else {
    }
    %c0_i32_1 = arith.constant 0 : i32
    %3 = arith.index_cast %c0_i32_1 : i32 to index
    %c0 = arith.constant 0 : index
    %c0_2 = arith.constant 0 : index
    %4 = vector.load %arg1[%3, %c0, %c0_2] : memref<8x8x512xf32, #tpu.memory_space<vmem>>, vector<1x8x512xf32>
    %5 = vector.shape_cast %4 : vector<1x8x512xf32> to vector<8x512xf32>
    %c0_3 = arith.constant 0 : index
    %c0_4 = arith.constant 0 : index
    %6 = vector.load %arg7[%c0_3, %c0_4] : memref<8x128xf32, #tpu.memory_space<vmem>>, vector<8x128xf32>
    %c0_5 = arith.constant 0 : index
    %c0_6 = arith.constant 0 : index
    %7 = vector.load %arg8[%c0_5, %c0_6] : memref<8x128xf32, #tpu.memory_space<vmem>>, vector<8x128xf32>
    %c0_7 = arith.constant 0 : index
    %c0_8 = arith.constant 0 : index
    %8 = vector.load %arg3[%c0_7, %c0_8] : memref<128x512xf32, #tpu.memory_space<vmem>>, vector<128x512xf32>
    %cst = arith.constant dense<0.000000e+00> : vector<8x512xf32>
    %9 = tpu.matmul %6, %8, %cst {dimension_numbers = #tpu.dot_dimension_numbers<[1], [0], [0], [1], [0, 0, 1, 1], [], []>} : vector<8x128xf32>, vector<128x512xf32>, vector<8x512xf32> -> vector<8x512xf32>
    %10 = arith.addf %5, %9 : vector<8x512xf32>
    %11 = vector.extract_strided_slice %10 {offsets = [0, 0], sizes = [8, 128], strides = [1, 1]} : vector<8x512xf32> to vector<8x128xf32>
    %12 = arith.negf %11 : vector<8x128xf32>
    %13 = math.exp %12 : vector<8x128xf32>
    %cst_9 = arith.constant 1.000000e+00 : f32
    %14 = vector.broadcast %cst_9 : f32 to vector<8x128xf32>
    %15 = arith.addf %14, %13 : vector<8x128xf32>
    %16 = arith.divf %14, %15 : vector<8x128xf32>
    %17 = vector.extract_strided_slice %10 {offsets = [0, 128], sizes = [8, 128], strides = [1, 1]} : vector<8x512xf32> to vector<8x128xf32>
    %18 = arith.negf %17 : vector<8x128xf32>
    %19 = math.exp %18 : vector<8x128xf32>
    %cst_10 = arith.constant 1.000000e+00 : f32
    %20 = vector.broadcast %cst_10 : f32 to vector<8x128xf32>
    %21 = arith.addf %20, %19 : vector<8x128xf32>
    %22 = arith.divf %20, %21 : vector<8x128xf32>
    %23 = vector.extract_strided_slice %10 {offsets = [0, 256], sizes = [8, 128], strides = [1, 1]} : vector<8x512xf32> to vector<8x128xf32>
    %24 = math.tanh %23 : vector<8x128xf32>
    %25 = vector.extract_strided_slice %10 {offsets = [0, 384], sizes = [8, 128], strides = [1, 1]} : vector<8x512xf32> to vector<8x128xf32>
    %26 = arith.negf %25 : vector<8x128xf32>
    %27 = math.exp %26 : vector<8x128xf32>
    %cst_11 = arith.constant 1.000000e+00 : f32
    %28 = vector.broadcast %cst_11 : f32 to vector<8x128xf32>
    %29 = arith.addf %28, %27 : vector<8x128xf32>
    %30 = arith.divf %28, %29 : vector<8x128xf32>
    %31 = arith.mulf %22, %7 : vector<8x128xf32>
    %32 = arith.mulf %16, %24 : vector<8x128xf32>
    %33 = arith.addf %31, %32 : vector<8x128xf32>
    %34 = math.tanh %33 : vector<8x128xf32>
    %35 = arith.mulf %30, %34 : vector<8x128xf32>
    %c0_12 = arith.constant 0 : index
    %c0_13 = arith.constant 0 : index
    %36 = vector.load %arg7[%c0_12, %c0_13] : memref<8x128xf32, #tpu.memory_space<vmem>>, vector<8x128xf32>
    tpu.vector_store %arg7[%c0_12, %c0_13], %35 {strides = array<i32>} : memref<8x128xf32, #tpu.memory_space<vmem>>, vector<8x128xf32>,
    %c0_14 = arith.constant 0 : index
    %c0_15 = arith.constant 0 : index
    %37 = vector.load %arg8[%c0_14, %c0_15] : memref<8x128xf32, #tpu.memory_space<vmem>>, vector<8x128xf32>
    tpu.vector_store %arg8[%c0_14, %c0_15], %33 {strides = array<i32>} : memref<8x128xf32, #tpu.memory_space<vmem>>, vector<8x128xf32>,
    %38 = arith.truncf %35 : vector<8x128xf32> to vector<8x128xbf16>
    %39 = arith.index_cast %c0_i32_1 : i32 to index
    %c0_16 = arith.constant 0 : index
    %c0_17 = arith.constant 0 : index
    %40 = vector.load %arg5[%39, %c0_16, %c0_17] : memref<8x8x128xbf16, #tpu.memory_space<vmem>>, vector<1x8x128xbf16>
    %41 = vector.shape_cast %40 : vector<1x8x128xbf16> to vector<8x128xbf16>
    %42 = vector.shape_cast %38 : vector<8x128xbf16> to vector<1x8x128xbf16>
    tpu.vector_store %arg5[%39, %c0_16, %c0_17], %42 {strides = array<i32>} : memref<8x8x128xbf16, #tpu.memory_space<vmem>>, vector<1x8x128xbf16>,
    %c7_i32 = arith.constant 7 : i32
    %43 = arith.subi %c7_i32, %c0_i32_1 : i32
    %44 = arith.index_cast %43 : i32 to index
    %c0_18 = arith.constant 0 : index
    %c0_19 = arith.constant 0 : index
    %45 = vector.load %arg2[%44, %c0_18, %c0_19] : memref<8x8x512xf32, #tpu.memory_space<vmem>>, vector<1x8x512xf32>
    %46 = vector.shape_cast %45 : vector<1x8x512xf32> to vector<8x512xf32>
    %c0_20 = arith.constant 0 : index
    %c0_21 = arith.constant 0 : index
    %47 = vector.load %arg9[%c0_20, %c0_21] : memref<8x128xf32, #tpu.memory_space<vmem>>, vector<8x128xf32>
    %c0_22 = arith.constant 0 : index
    %c0_23 = arith.constant 0 : index
    %48 = vector.load %arg10[%c0_22, %c0_23] : memref<8x128xf32, #tpu.memory_space<vmem>>, vector<8x128xf32>
    %c0_24 = arith.constant 0 : index
    %c0_25 = arith.constant 0 : index
    %49 = vector.load %arg4[%c0_24, %c0_25] : memref<128x512xf32, #tpu.memory_space<vmem>>, vector<128x512xf32>
    %cst_26 = arith.constant dense<0.000000e+00> : vector<8x512xf32>
    %50 = tpu.matmul %47, %49, %cst_26 {dimension_numbers = #tpu.dot_dimension_numbers<[1], [0], [0], [1], [0, 0, 1, 1], [], []>} : vector<8x128xf32>, vector<128x512xf32>, vector<8x512xf32> -> vector<8x512xf32>
    %51 = arith.addf %46, %50 : vector<8x512xf32>
    %52 = vector.extract_strided_slice %51 {offsets = [0, 0], sizes = [8, 128], strides = [1, 1]} : vector<8x512xf32> to vector<8x128xf32>
    %53 = arith.negf %52 : vector<8x128xf32>
    %54 = math.exp %53 : vector<8x128xf32>
    %cst_27 = arith.constant 1.000000e+00 : f32
    %55 = vector.broadcast %cst_27 : f32 to vector<8x128xf32>
    %56 = arith.addf %55, %54 : vector<8x128xf32>
    %57 = arith.divf %55, %56 : vector<8x128xf32>
    %58 = vector.extract_strided_slice %51 {offsets = [0, 128], sizes = [8, 128], strides = [1, 1]} : vector<8x512xf32> to vector<8x128xf32>
    %59 = arith.negf %58 : vector<8x128xf32>
    %60 = math.exp %59 : vector<8x128xf32>
    %cst_28 = arith.constant 1.000000e+00 : f32
    %61 = vector.broadcast %cst_28 : f32 to vector<8x128xf32>
    %62 = arith.addf %61, %60 : vector<8x128xf32>
    %63 = arith.divf %61, %62 : vector<8x128xf32>
    %64 = vector.extract_strided_slice %51 {offsets = [0, 256], sizes = [8, 128], strides = [1, 1]} : vector<8x512xf32> to vector<8x128xf32>
    %65 = math.tanh %64 : vector<8x128xf32>
    %66 = vector.extract_strided_slice %51 {offsets = [0, 384], sizes = [8, 128], strides = [1, 1]} : vector<8x512xf32> to vector<8x128xf32>
    %67 = arith.negf %66 : vector<8x128xf32>
    %68 = math.exp %67 : vector<8x128xf32>
    %cst_29 = arith.constant 1.000000e+00 : f32
    %69 = vector.broadcast %cst_29 : f32 to vector<8x128xf32>
    %70 = arith.addf %69, %68 : vector<8x128xf32>
    %71 = arith.divf %69, %70 : vector<8x128xf32>
    %72 = arith.mulf %63, %48 : vector<8x128xf32>
    %73 = arith.mulf %57, %65 : vector<8x128xf32>
    %74 = arith.addf %72, %73 : vector<8x128xf32>
    %75 = math.tanh %74 : vector<8x128xf32>
    %76 = arith.mulf %71, %75 : vector<8x128xf32>
    %c0_30 = arith.constant 0 : index
    %c0_31 = arith.constant 0 : index
    %77 = vector.load %arg9[%c0_30, %c0_31] : memref<8x128xf32, #tpu.memory_space<vmem>>, vector<8x128xf32>
    tpu.vector_store %arg9[%c0_30, %c0_31], %76 {strides = array<i32>} : memref<8x128xf32, #tpu.memory_space<vmem>>, vector<8x128xf32>,
    %c0_32 = arith.constant 0 : index
    %c0_33 = arith.constant 0 : index
    %78 = vector.load %arg10[%c0_32, %c0_33] : memref<8x128xf32, #tpu.memory_space<vmem>>, vector<8x128xf32>
    tpu.vector_store %arg10[%c0_32, %c0_33], %74 {strides = array<i32>} : memref<8x128xf32, #tpu.memory_space<vmem>>, vector<8x128xf32>,
    %79 = arith.truncf %76 : vector<8x128xf32> to vector<8x128xbf16>
    %80 = arith.index_cast %43 : i32 to index
    %c0_34 = arith.constant 0 : index
    %c0_35 = arith.constant 0 : index
    %81 = vector.load %arg6[%80, %c0_34, %c0_35] : memref<8x8x128xbf16, #tpu.memory_space<vmem>>, vector<1x8x128xbf16>
    %82 = vector.shape_cast %81 : vector<1x8x128xbf16> to vector<8x128xbf16>
    %83 = vector.shape_cast %79 : vector<8x128xbf16> to vector<1x8x128xbf16>
    tpu.vector_store %arg6[%80, %c0_34, %c0_35], %83 {strides = array<i32>} : memref<8x8x128xbf16, #tpu.memory_space<vmem>>, vector<1x8x128xbf16>,
    %c1_i32 = arith.constant 1 : i32
    %84 = arith.index_cast %c1_i32 : i32 to index
    %c0_36 = arith.constant 0 : index
    %c0_37 = arith.constant 0 : index
    %85 = vector.load %arg1[%84, %c0_36, %c0_37] : memref<8x8x512xf32, #tpu.memory_space<vmem>>, vector<1x8x512xf32>
    %86 = vector.shape_cast %85 : vector<1x8x512xf32> to vector<8x512xf32>
    %c0_38 = arith.constant 0 : index
    %c0_39 = arith.constant 0 : index
    %87 = vector.load %arg7[%c0_38, %c0_39] : memref<8x128xf32, #tpu.memory_space<vmem>>, vector<8x128xf32>
    %c0_40 = arith.constant 0 : index
    %c0_41 = arith.constant 0 : index
    %88 = vector.load %arg8[%c0_40, %c0_41] : memref<8x128xf32, #tpu.memory_space<vmem>>, vector<8x128xf32>
    %c0_42 = arith.constant 0 : index
    %c0_43 = arith.constant 0 : index
    %89 = vector.load %arg3[%c0_42, %c0_43] : memref<128x512xf32, #tpu.memory_space<vmem>>, vector<128x512xf32>
    %cst_44 = arith.constant dense<0.000000e+00> : vector<8x512xf32>
    %90 = tpu.matmul %87, %89, %cst_44 {dimension_numbers = #tpu.dot_dimension_numbers<[1], [0], [0], [1], [0, 0, 1, 1], [], []>} : vector<8x128xf32>, vector<128x512xf32>, vector<8x512xf32> -> vector<8x512xf32>
    %91 = arith.addf %86, %90 : vector<8x512xf32>
    %92 = vector.extract_strided_slice %91 {offsets = [0, 0], sizes = [8, 128], strides = [1, 1]} : vector<8x512xf32> to vector<8x128xf32>
    %93 = arith.negf %92 : vector<8x128xf32>
    %94 = math.exp %93 : vector<8x128xf32>
    %cst_45 = arith.constant 1.000000e+00 : f32
    %95 = vector.broadcast %cst_45 : f32 to vector<8x128xf32>
    %96 = arith.addf %95, %94 : vector<8x128xf32>
    %97 = arith.divf %95, %96 : vector<8x128xf32>
    %98 = vector.extract_strided_slice %91 {offsets = [0, 128], sizes = [8, 128], strides = [1, 1]} : vector<8x512xf32> to vector<8x128xf32>
    %99 = arith.negf %98 : vector<8x128xf32>
    %100 = math.exp %99 : vector<8x128xf32>
    %cst_46 = arith.constant 1.000000e+00 : f32
    %101 = vector.broadcast %cst_46 : f32 to vector<8x128xf32>
    %102 = arith.addf %101, %100 : vector<8x128xf32>
    %103 = arith.divf %101, %102 : vector<8x128xf32>
    %104 = vector.extract_strided_slice %91 {offsets = [0, 256], sizes = [8, 128], strides = [1, 1]} : vector<8x512xf32> to vector<8x128xf32>
    %105 = math.tanh %104 : vector<8x128xf32>
    %106 = vector.extract_strided_slice %91 {offsets = [0, 384], sizes = [8, 128], strides = [1, 1]} : vector<8x512xf32> to vector<8x128xf32>
    %107 = arith.negf %106 : vector<8x128xf32>
    %108 = math.exp %107 : vector<8x128xf32>
    %cst_47 = arith.constant 1.000000e+00 : f32
    %109 = vector.broadcast %cst_47 : f32 to vector<8x128xf32>
    %110 = arith.addf %109, %108 : vector<8x128xf32>
    %111 = arith.divf %109, %110 : vector<8x128xf32>
    %112 = arith.mulf %103, %88 : vector<8x128xf32>
    %113 = arith.mulf %97, %105 : vector<8x128xf32>
    %114 = arith.addf %112, %113 : vector<8x128xf32>
    %115 = math.tanh %114 : vector<8x128xf32>
    %116 = arith.mulf %111, %115 : vector<8x128xf32>
    %c0_48 = arith.constant 0 : index
    %c0_49 = arith.constant 0 : index
    %117 = vector.load %arg7[%c0_48, %c0_49] : memref<8x128xf32, #tpu.memory_space<vmem>>, vector<8x128xf32>
    tpu.vector_store %arg7[%c0_48, %c0_49], %116 {strides = array<i32>} : memref<8x128xf32, #tpu.memory_space<vmem>>, vector<8x128xf32>,
    %c0_50 = arith.constant 0 : index
    %c0_51 = arith.constant 0 : index
    %118 = vector.load %arg8[%c0_50, %c0_51] : memref<8x128xf32, #tpu.memory_space<vmem>>, vector<8x128xf32>
    tpu.vector_store %arg8[%c0_50, %c0_51], %114 {strides = array<i32>} : memref<8x128xf32, #tpu.memory_space<vmem>>, vector<8x128xf32>,
    %119 = arith.truncf %116 : vector<8x128xf32> to vector<8x128xbf16>
    %120 = arith.index_cast %c1_i32 : i32 to index
    %c0_52 = arith.constant 0 : index
    %c0_53 = arith.constant 0 : index
    %121 = vector.load %arg5[%120, %c0_52, %c0_53] : memref<8x8x128xbf16, #tpu.memory_space<vmem>>, vector<1x8x128xbf16>
    %122 = vector.shape_cast %121 : vector<1x8x128xbf16> to vector<8x128xbf16>
    %123 = vector.shape_cast %119 : vector<8x128xbf16> to vector<1x8x128xbf16>
    tpu.vector_store %arg5[%120, %c0_52, %c0_53], %123 {strides = array<i32>} : memref<8x8x128xbf16, #tpu.memory_space<vmem>>, vector<1x8x128xbf16>,
    %c7_i32_54 = arith.constant 7 : i32
    %124 = arith.subi %c7_i32_54, %c1_i32 : i32
    %125 = arith.index_cast %124 : i32 to index
    %c0_55 = arith.constant 0 : index
    %c0_56 = arith.constant 0 : index
    %126 = vector.load %arg2[%125, %c0_55, %c0_56] : memref<8x8x512xf32, #tpu.memory_space<vmem>>, vector<1x8x512xf32>
    %127 = vector.shape_cast %126 : vector<1x8x512xf32> to vector<8x512xf32>
    %c0_57 = arith.constant 0 : index
    %c0_58 = arith.constant 0 : index
    %128 = vector.load %arg9[%c0_57, %c0_58] : memref<8x128xf32, #tpu.memory_space<vmem>>, vector<8x128xf32>
    %c0_59 = arith.constant 0 : index
    %c0_60 = arith.constant 0 : index
    %129 = vector.load %arg10[%c0_59, %c0_60] : memref<8x128xf32, #tpu.memory_space<vmem>>, vector<8x128xf32>
    %c0_61 = arith.constant 0 : index
    %c0_62 = arith.constant 0 : index
    %130 = vector.load %arg4[%c0_61, %c0_62] : memref<128x512xf32, #tpu.memory_space<vmem>>, vector<128x512xf32>
    %cst_63 = arith.constant dense<0.000000e+00> : vector<8x512xf32>
    %131 = tpu.matmul %128, %130, %cst_63 {dimension_numbers = #tpu.dot_dimension_numbers<[1], [0], [0], [1], [0, 0, 1, 1], [], []>} : vector<8x128xf32>, vector<128x512xf32>, vector<8x512xf32> -> vector<8x512xf32>
    %132 = arith.addf %127, %131 : vector<8x512xf32>
    %133 = vector.extract_strided_slice %132 {offsets = [0, 0], sizes = [8, 128], strides = [1, 1]} : vector<8x512xf32> to vector<8x128xf32>
    %134 = arith.negf %133 : vector<8x128xf32>
    %135 = math.exp %134 : vector<8x128xf32>
    %cst_64 = arith.constant 1.000000e+00 : f32
    %136 = vector.broadcast %cst_64 : f32 to vector<8x128xf32>
    %137 = arith.addf %136, %135 : vector<8x128xf32>
    %138 = arith.divf %136, %137 : vector<8x128xf32>
    %139 = vector.extract_strided_slice %132 {offsets = [0, 128], sizes = [8, 128], strides = [1, 1]} : vector<8x512xf32> to vector<8x128xf32>
    %140 = arith.negf %139 : vector<8x128xf32>
    %141 = math.exp %140 : vector<8x128xf32>
    %cst_65 = arith.constant 1.000000e+00 : f32
    %142 = vector.broadcast %cst_65 : f32 to vector<8x128xf32>
    %143 = arith.addf %142, %141 : vector<8x128xf32>
    %144 = arith.divf %142, %143 : vector<8x128xf32>
    %145 = vector.extract_strided_slice %132 {offsets = [0, 256], sizes = [8, 128], strides = [1, 1]} : vector<8x512xf32> to vector<8x128xf32>
    %146 = math.tanh %145 : vector<8x128xf32>
    %147 = vector.extract_strided_slice %132 {offsets = [0, 384], sizes = [8, 128], strides = [1, 1]} : vector<8x512xf32> to vector<8x128xf32>
    %148 = arith.negf %147 : vector<8x128xf32>
    %149 = math.exp %148 : vector<8x128xf32>
    %cst_66 = arith.constant 1.000000e+00 : f32
    %150 = vector.broadcast %cst_66 : f32 to vector<8x128xf32>
    %151 = arith.addf %150, %149 : vector<8x128xf32>
    %152 = arith.divf %150, %151 : vector<8x128xf32>
    %153 = arith.mulf %144, %129 : vector<8x128xf32>
    %154 = arith.mulf %138, %146 : vector<8x128xf32>
    %155 = arith.addf %153, %154 : vector<8x128xf32>
    %156 = math.tanh %155 : vector<8x128xf32>
    %157 = arith.mulf %152, %156 : vector<8x128xf32>
    %c0_67 = arith.constant 0 : index
    %c0_68 = arith.constant 0 : index
    %158 = vector.load %arg9[%c0_67, %c0_68] : memref<8x128xf32, #tpu.memory_space<vmem>>, vector<8x128xf32>
    tpu.vector_store %arg9[%c0_67, %c0_68], %157 {strides = array<i32>} : memref<8x128xf32, #tpu.memory_space<vmem>>, vector<8x128xf32>,
    %c0_69 = arith.constant 0 : index
    %c0_70 = arith.constant 0 : index
    %159 = vector.load %arg10[%c0_69, %c0_70] : memref<8x128xf32, #tpu.memory_space<vmem>>, vector<8x128xf32>
    tpu.vector_store %arg10[%c0_69, %c0_70], %155 {strides = array<i32>} : memref<8x128xf32, #tpu.memory_space<vmem>>, vector<8x128xf32>,
    %160 = arith.truncf %157 : vector<8x128xf32> to vector<8x128xbf16>
    %161 = arith.index_cast %124 : i32 to index
    %c0_71 = arith.constant 0 : index
    %c0_72 = arith.constant 0 : index
    %162 = vector.load %arg6[%161, %c0_71, %c0_72] : memref<8x8x128xbf16, #tpu.memory_space<vmem>>, vector<1x8x128xbf16>
    %163 = vector.shape_cast %162 : vector<1x8x128xbf16> to vector<8x128xbf16>
    %164 = vector.shape_cast %160 : vector<8x128xbf16> to vector<1x8x128xbf16>
    tpu.vector_store %arg6[%161, %c0_71, %c0_72], %164 {strides = array<i32>} : memref<8x8x128xbf16, #tpu.memory_space<vmem>>, vector<1x8x128xbf16>,
    %c2_i32 = arith.constant 2 : i32
    %165 = arith.index_cast %c2_i32 : i32 to index
    %c0_73 = arith.constant 0 : index
    %c0_74 = arith.constant 0 : index
    %166 = vector.load %arg1[%165, %c0_73, %c0_74] : memref<8x8x512xf32, #tpu.memory_space<vmem>>, vector<1x8x512xf32>
    %167 = vector.shape_cast %166 : vector<1x8x512xf32> to vector<8x512xf32>
    %c0_75 = arith.constant 0 : index
    %c0_76 = arith.constant 0 : index
    %168 = vector.load %arg7[%c0_75, %c0_76] : memref<8x128xf32, #tpu.memory_space<vmem>>, vector<8x128xf32>
    %c0_77 = arith.constant 0 : index
    %c0_78 = arith.constant 0 : index
    %169 = vector.load %arg8[%c0_77, %c0_78] : memref<8x128xf32, #tpu.memory_space<vmem>>, vector<8x128xf32>
    %c0_79 = arith.constant 0 : index
    %c0_80 = arith.constant 0 : index
    %170 = vector.load %arg3[%c0_79, %c0_80] : memref<128x512xf32, #tpu.memory_space<vmem>>, vector<128x512xf32>
    %cst_81 = arith.constant dense<0.000000e+00> : vector<8x512xf32>
    %171 = tpu.matmul %168, %170, %cst_81 {dimension_numbers = #tpu.dot_dimension_numbers<[1], [0], [0], [1], [0, 0, 1, 1], [], []>} : vector<8x128xf32>, vector<128x512xf32>, vector<8x512xf32> -> vector<8x512xf32>
    %172 = arith.addf %167, %171 : vector<8x512xf32>
    %173 = vector.extract_strided_slice %172 {offsets = [0, 0], sizes = [8, 128], strides = [1, 1]} : vector<8x512xf32> to vector<8x128xf32>
    %174 = arith.negf %173 : vector<8x128xf32>
    %175 = math.exp %174 : vector<8x128xf32>
    %cst_82 = arith.constant 1.000000e+00 : f32
    %176 = vector.broadcast %cst_82 : f32 to vector<8x128xf32>
    %177 = arith.addf %176, %175 : vector<8x128xf32>
    %178 = arith.divf %176, %177 : vector<8x128xf32>
    %179 = vector.extract_strided_slice %172 {offsets = [0, 128], sizes = [8, 128], strides = [1, 1]} : vector<8x512xf32> to vector<8x128xf32>
    %180 = arith.negf %179 : vector<8x128xf32>
    %181 = math.exp %180 : vector<8x128xf32>
    %cst_83 = arith.constant 1.000000e+00 : f32
    %182 = vector.broadcast %cst_83 : f32 to vector<8x128xf32>
    %183 = arith.addf %182, %181 : vector<8x128xf32>
    %184 = arith.divf %182, %183 : vector<8x128xf32>
    %185 = vector.extract_strided_slice %172 {offsets = [0, 256], sizes = [8, 128], strides = [1, 1]} : vector<8x512xf32> to vector<8x128xf32>
    %186 = math.tanh %185 : vector<8x128xf32>
    %187 = vector.extract_strided_slice %172 {offsets = [0, 384], sizes = [8, 128], strides = [1, 1]} : vector<8x512xf32> to vector<8x128xf32>
    %188 = arith.negf %187 : vector<8x128xf32>
    %189 = math.exp %188 : vector<8x128xf32>
    %cst_84 = arith.constant 1.000000e+00 : f32
    %190 = vector.broadcast %cst_84 : f32 to vector<8x128xf32>
    %191 = arith.addf %190, %189 : vector<8x128xf32>
    %192 = arith.divf %190, %191 : vector<8x128xf32>
    %193 = arith.mulf %184, %169 : vector<8x128xf32>
    %194 = arith.mulf %178, %186 : vector<8x128xf32>
    %195 = arith.addf %193, %194 : vector<8x128xf32>
    %196 = math.tanh %195 : vector<8x128xf32>
    %197 = arith.mulf %192, %196 : vector<8x128xf32>
    %c0_85 = arith.constant 0 : index
    %c0_86 = arith.constant 0 : index
    %198 = vector.load %arg7[%c0_85, %c0_86] : memref<8x128xf32, #tpu.memory_space<vmem>>, vector<8x128xf32>
    tpu.vector_store %arg7[%c0_85, %c0_86], %197 {strides = array<i32>} : memref<8x128xf32, #tpu.memory_space<vmem>>, vector<8x128xf32>,
    %c0_87 = arith.constant 0 : index
    %c0_88 = arith.constant 0 : index
    %199 = vector.load %arg8[%c0_87, %c0_88] : memref<8x128xf32, #tpu.memory_space<vmem>>, vector<8x128xf32>
    tpu.vector_store %arg8[%c0_87, %c0_88], %195 {strides = array<i32>} : memref<8x128xf32, #tpu.memory_space<vmem>>, vector<8x128xf32>,
    %200 = arith.truncf %197 : vector<8x128xf32> to vector<8x128xbf16>
    %201 = arith.index_cast %c2_i32 : i32 to index
    %c0_89 = arith.constant 0 : index
    %c0_90 = arith.constant 0 : index
    %202 = vector.load %arg5[%201, %c0_89, %c0_90] : memref<8x8x128xbf16, #tpu.memory_space<vmem>>, vector<1x8x128xbf16>
    %203 = vector.shape_cast %202 : vector<1x8x128xbf16> to vector<8x128xbf16>
    %204 = vector.shape_cast %200 : vector<8x128xbf16> to vector<1x8x128xbf16>
    tpu.vector_store %arg5[%201, %c0_89, %c0_90], %204 {strides = array<i32>} : memref<8x8x128xbf16, #tpu.memory_space<vmem>>, vector<1x8x128xbf16>,
    %c7_i32_91 = arith.constant 7 : i32
    %205 = arith.subi %c7_i32_91, %c2_i32 : i32
    %206 = arith.index_cast %205 : i32 to index
    %c0_92 = arith.constant 0 : index
    %c0_93 = arith.constant 0 : index
    %207 = vector.load %arg2[%206, %c0_92, %c0_93] : memref<8x8x512xf32, #tpu.memory_space<vmem>>, vector<1x8x512xf32>
    %208 = vector.shape_cast %207 : vector<1x8x512xf32> to vector<8x512xf32>
    %c0_94 = arith.constant 0 : index
    %c0_95 = arith.constant 0 : index
    %209 = vector.load %arg9[%c0_94, %c0_95] : memref<8x128xf32, #tpu.memory_space<vmem>>, vector<8x128xf32>
    %c0_96 = arith.constant 0 : index
    %c0_97 = arith.constant 0 : index
    %210 = vector.load %arg10[%c0_96, %c0_97] : memref<8x128xf32, #tpu.memory_space<vmem>>, vector<8x128xf32>
    %c0_98 = arith.constant 0 : index
    %c0_99 = arith.constant 0 : index
    %211 = vector.load %arg4[%c0_98, %c0_99] : memref<128x512xf32, #tpu.memory_space<vmem>>, vector<128x512xf32>
    %cst_100 = arith.constant dense<0.000000e+00> : vector<8x512xf32>
    %212 = tpu.matmul %209, %211, %cst_100 {dimension_numbers = #tpu.dot_dimension_numbers<[1], [0], [0], [1], [0, 0, 1, 1], [], []>} : vector<8x128xf32>, vector<128x512xf32>, vector<8x512xf32> -> vector<8x512xf32>
    %213 = arith.addf %208, %212 : vector<8x512xf32>
    %214 = vector.extract_strided_slice %213 {offsets = [0, 0], sizes = [8, 128], strides = [1, 1]} : vector<8x512xf32> to vector<8x128xf32>
    %215 = arith.negf %214 : vector<8x128xf32>
    %216 = math.exp %215 : vector<8x128xf32>
    %cst_101 = arith.constant 1.000000e+00 : f32
    %217 = vector.broadcast %cst_101 : f32 to vector<8x128xf32>
    %218 = arith.addf %217, %216 : vector<8x128xf32>
    %219 = arith.divf %217, %218 : vector<8x128xf32>
    %220 = vector.extract_strided_slice %213 {offsets = [0, 128], sizes = [8, 128], strides = [1, 1]} : vector<8x512xf32> to vector<8x128xf32>
    %221 = arith.negf %220 : vector<8x128xf32>
    %222 = math.exp %221 : vector<8x128xf32>
    %cst_102 = arith.constant 1.000000e+00 : f32
    %223 = vector.broadcast %cst_102 : f32 to vector<8x128xf32>
    %224 = arith.addf %223, %222 : vector<8x128xf32>
    %225 = arith.divf %223, %224 : vector<8x128xf32>
    %226 = vector.extract_strided_slice %213 {offsets = [0, 256], sizes = [8, 128], strides = [1, 1]} : vector<8x512xf32> to vector<8x128xf32>
    %227 = math.tanh %226 : vector<8x128xf32>
    %228 = vector.extract_strided_slice %213 {offsets = [0, 384], sizes = [8, 128], strides = [1, 1]} : vector<8x512xf32> to vector<8x128xf32>
    %229 = arith.negf %228 : vector<8x128xf32>
    %230 = math.exp %229 : vector<8x128xf32>
    %cst_103 = arith.constant 1.000000e+00 : f32
    %231 = vector.broadcast %cst_103 : f32 to vector<8x128xf32>
    %232 = arith.addf %231, %230 : vector<8x128xf32>
    %233 = arith.divf %231, %232 : vector<8x128xf32>
    %234 = arith.mulf %225, %210 : vector<8x128xf32>
    %235 = arith.mulf %219, %227 : vector<8x128xf32>
    %236 = arith.addf %234, %235 : vector<8x128xf32>
    %237 = math.tanh %236 : vector<8x128xf32>
    %238 = arith.mulf %233, %237 : vector<8x128xf32>
    %c0_104 = arith.constant 0 : index
    %c0_105 = arith.constant 0 : index
    %239 = vector.load %arg9[%c0_104, %c0_105] : memref<8x128xf32, #tpu.memory_space<vmem>>, vector<8x128xf32>
    tpu.vector_store %arg9[%c0_104, %c0_105], %238 {strides = array<i32>} : memref<8x128xf32, #tpu.memory_space<vmem>>, vector<8x128xf32>,
    %c0_106 = arith.constant 0 : index
    %c0_107 = arith.constant 0 : index
    %240 = vector.load %arg10[%c0_106, %c0_107] : memref<8x128xf32, #tpu.memory_space<vmem>>, vector<8x128xf32>
    tpu.vector_store %arg10[%c0_106, %c0_107], %236 {strides = array<i32>} : memref<8x128xf32, #tpu.memory_space<vmem>>, vector<8x128xf32>,
    %241 = arith.truncf %238 : vector<8x128xf32> to vector<8x128xbf16>
    %242 = arith.index_cast %205 : i32 to index
    %c0_108 = arith.constant 0 : index
    %c0_109 = arith.constant 0 : index
    %243 = vector.load %arg6[%242, %c0_108, %c0_109] : memref<8x8x128xbf16, #tpu.memory_space<vmem>>, vector<1x8x128xbf16>
    %244 = vector.shape_cast %243 : vector<1x8x128xbf16> to vector<8x128xbf16>
    %245 = vector.shape_cast %241 : vector<8x128xbf16> to vector<1x8x128xbf16>
    tpu.vector_store %arg6[%242, %c0_108, %c0_109], %245 {strides = array<i32>} : memref<8x8x128xbf16, #tpu.memory_space<vmem>>, vector<1x8x128xbf16>,
    %c3_i32 = arith.constant 3 : i32
    %246 = arith.index_cast %c3_i32 : i32 to index
    %c0_110 = arith.constant 0 : index
    %c0_111 = arith.constant 0 : index
    %247 = vector.load %arg1[%246, %c0_110, %c0_111] : memref<8x8x512xf32, #tpu.memory_space<vmem>>, vector<1x8x512xf32>
    %248 = vector.shape_cast %247 : vector<1x8x512xf32> to vector<8x512xf32>
    %c0_112 = arith.constant 0 : index
    %c0_113 = arith.constant 0 : index
    %249 = vector.load %arg7[%c0_112, %c0_113] : memref<8x128xf32, #tpu.memory_space<vmem>>, vector<8x128xf32>
    %c0_114 = arith.constant 0 : index
    %c0_115 = arith.constant 0 : index
    %250 = vector.load %arg8[%c0_114, %c0_115] : memref<8x128xf32, #tpu.memory_space<vmem>>, vector<8x128xf32>
    %c0_116 = arith.constant 0 : index
    %c0_117 = arith.constant 0 : index
    %251 = vector.load %arg3[%c0_116, %c0_117] : memref<128x512xf32, #tpu.memory_space<vmem>>, vector<128x512xf32>
    %cst_118 = arith.constant dense<0.000000e+00> : vector<8x512xf32>
    %252 = tpu.matmul %249, %251, %cst_118 {dimension_numbers = #tpu.dot_dimension_numbers<[1], [0], [0], [1], [0, 0, 1, 1], [], []>} : vector<8x128xf32>, vector<128x512xf32>, vector<8x512xf32> -> vector<8x512xf32>
    %253 = arith.addf %248, %252 : vector<8x512xf32>
    %254 = vector.extract_strided_slice %253 {offsets = [0, 0], sizes = [8, 128], strides = [1, 1]} : vector<8x512xf32> to vector<8x128xf32>
    %255 = arith.negf %254 : vector<8x128xf32>
    %256 = math.exp %255 : vector<8x128xf32>
    %cst_119 = arith.constant 1.000000e+00 : f32
    %257 = vector.broadcast %cst_119 : f32 to vector<8x128xf32>
    %258 = arith.addf %257, %256 : vector<8x128xf32>
    %259 = arith.divf %257, %258 : vector<8x128xf32>
    %260 = vector.extract_strided_slice %253 {offsets = [0, 128], sizes = [8, 128], strides = [1, 1]} : vector<8x512xf32> to vector<8x128xf32>
    %261 = arith.negf %260 : vector<8x128xf32>
    %262 = math.exp %261 : vector<8x128xf32>
    %cst_120 = arith.constant 1.000000e+00 : f32
    %263 = vector.broadcast %cst_120 : f32 to vector<8x128xf32>
    %264 = arith.addf %263, %262 : vector<8x128xf32>
    %265 = arith.divf %263, %264 : vector<8x128xf32>
    %266 = vector.extract_strided_slice %253 {offsets = [0, 256], sizes = [8, 128], strides = [1, 1]} : vector<8x512xf32> to vector<8x128xf32>
    %267 = math.tanh %266 : vector<8x128xf32>
    %268 = vector.extract_strided_slice %253 {offsets = [0, 384], sizes = [8, 128], strides = [1, 1]} : vector<8x512xf32> to vector<8x128xf32>
    %269 = arith.negf %268 : vector<8x128xf32>
    %270 = math.exp %269 : vector<8x128xf32>
    %cst_121 = arith.constant 1.000000e+00 : f32
    %271 = vector.broadcast %cst_121 : f32 to vector<8x128xf32>
    %272 = arith.addf %271, %270 : vector<8x128xf32>
    %273 = arith.divf %271, %272 : vector<8x128xf32>
    %274 = arith.mulf %265, %250 : vector<8x128xf32>
    %275 = arith.mulf %259, %267 : vector<8x128xf32>
    %276 = arith.addf %274, %275 : vector<8x128xf32>
    %277 = math.tanh %276 : vector<8x128xf32>
    %278 = arith.mulf %273, %277 : vector<8x128xf32>
    %c0_122 = arith.constant 0 : index
    %c0_123 = arith.constant 0 : index
    %279 = vector.load %arg7[%c0_122, %c0_123] : memref<8x128xf32, #tpu.memory_space<vmem>>, vector<8x128xf32>
    tpu.vector_store %arg7[%c0_122, %c0_123], %278 {strides = array<i32>} : memref<8x128xf32, #tpu.memory_space<vmem>>, vector<8x128xf32>,
    %c0_124 = arith.constant 0 : index
    %c0_125 = arith.constant 0 : index
    %280 = vector.load %arg8[%c0_124, %c0_125] : memref<8x128xf32, #tpu.memory_space<vmem>>, vector<8x128xf32>
    tpu.vector_store %arg8[%c0_124, %c0_125], %276 {strides = array<i32>} : memref<8x128xf32, #tpu.memory_space<vmem>>, vector<8x128xf32>,
    %281 = arith.truncf %278 : vector<8x128xf32> to vector<8x128xbf16>
    %282 = arith.index_cast %c3_i32 : i32 to index
    %c0_126 = arith.constant 0 : index
    %c0_127 = arith.constant 0 : index
    %283 = vector.load %arg5[%282, %c0_126, %c0_127] : memref<8x8x128xbf16, #tpu.memory_space<vmem>>, vector<1x8x128xbf16>
    %284 = vector.shape_cast %283 : vector<1x8x128xbf16> to vector<8x128xbf16>
    %285 = vector.shape_cast %281 : vector<8x128xbf16> to vector<1x8x128xbf16>
    tpu.vector_store %arg5[%282, %c0_126, %c0_127], %285 {strides = array<i32>} : memref<8x8x128xbf16, #tpu.memory_space<vmem>>, vector<1x8x128xbf16>,
    %c7_i32_128 = arith.constant 7 : i32
    %286 = arith.subi %c7_i32_128, %c3_i32 : i32
    %287 = arith.index_cast %286 : i32 to index
    %c0_129 = arith.constant 0 : index
    %c0_130 = arith.constant 0 : index
    %288 = vector.load %arg2[%287, %c0_129, %c0_130] : memref<8x8x512xf32, #tpu.memory_space<vmem>>, vector<1x8x512xf32>
    %289 = vector.shape_cast %288 : vector<1x8x512xf32> to vector<8x512xf32>
    %c0_131 = arith.constant 0 : index
    %c0_132 = arith.constant 0 : index
    %290 = vector.load %arg9[%c0_131, %c0_132] : memref<8x128xf32, #tpu.memory_space<vmem>>, vector<8x128xf32>
    %c0_133 = arith.constant 0 : index
    %c0_134 = arith.constant 0 : index
    %291 = vector.load %arg10[%c0_133, %c0_134] : memref<8x128xf32, #tpu.memory_space<vmem>>, vector<8x128xf32>
    %c0_135 = arith.constant 0 : index
    %c0_136 = arith.constant 0 : index
    %292 = vector.load %arg4[%c0_135, %c0_136] : memref<128x512xf32, #tpu.memory_space<vmem>>, vector<128x512xf32>
    %cst_137 = arith.constant dense<0.000000e+00> : vector<8x512xf32>
    %293 = tpu.matmul %290, %292, %cst_137 {dimension_numbers = #tpu.dot_dimension_numbers<[1], [0], [0], [1], [0, 0, 1, 1], [], []>} : vector<8x128xf32>, vector<128x512xf32>, vector<8x512xf32> -> vector<8x512xf32>
    %294 = arith.addf %289, %293 : vector<8x512xf32>
    %295 = vector.extract_strided_slice %294 {offsets = [0, 0], sizes = [8, 128], strides = [1, 1]} : vector<8x512xf32> to vector<8x128xf32>
    %296 = arith.negf %295 : vector<8x128xf32>
    %297 = math.exp %296 : vector<8x128xf32>
    %cst_138 = arith.constant 1.000000e+00 : f32
    %298 = vector.broadcast %cst_138 : f32 to vector<8x128xf32>
    %299 = arith.addf %298, %297 : vector<8x128xf32>
    %300 = arith.divf %298, %299 : vector<8x128xf32>
    %301 = vector.extract_strided_slice %294 {offsets = [0, 128], sizes = [8, 128], strides = [1, 1]} : vector<8x512xf32> to vector<8x128xf32>
    %302 = arith.negf %301 : vector<8x128xf32>
    %303 = math.exp %302 : vector<8x128xf32>
    %cst_139 = arith.constant 1.000000e+00 : f32
    %304 = vector.broadcast %cst_139 : f32 to vector<8x128xf32>
    %305 = arith.addf %304, %303 : vector<8x128xf32>
    %306 = arith.divf %304, %305 : vector<8x128xf32>
    %307 = vector.extract_strided_slice %294 {offsets = [0, 256], sizes = [8, 128], strides = [1, 1]} : vector<8x512xf32> to vector<8x128xf32>
    %308 = math.tanh %307 : vector<8x128xf32>
    %309 = vector.extract_strided_slice %294 {offsets = [0, 384], sizes = [8, 128], strides = [1, 1]} : vector<8x512xf32> to vector<8x128xf32>
    %310 = arith.negf %309 : vector<8x128xf32>
    %311 = math.exp %310 : vector<8x128xf32>
    %cst_140 = arith.constant 1.000000e+00 : f32
    %312 = vector.broadcast %cst_140 : f32 to vector<8x128xf32>
    %313 = arith.addf %312, %311 : vector<8x128xf32>
    %314 = arith.divf %312, %313 : vector<8x128xf32>
    %315 = arith.mulf %306, %291 : vector<8x128xf32>
    %316 = arith.mulf %300, %308 : vector<8x128xf32>
    %317 = arith.addf %315, %316 : vector<8x128xf32>
    %318 = math.tanh %317 : vector<8x128xf32>
    %319 = arith.mulf %314, %318 : vector<8x128xf32>
    %c0_141 = arith.constant 0 : index
    %c0_142 = arith.constant 0 : index
    %320 = vector.load %arg9[%c0_141, %c0_142] : memref<8x128xf32, #tpu.memory_space<vmem>>, vector<8x128xf32>
    tpu.vector_store %arg9[%c0_141, %c0_142], %319 {strides = array<i32>} : memref<8x128xf32, #tpu.memory_space<vmem>>, vector<8x128xf32>,
    %c0_143 = arith.constant 0 : index
    %c0_144 = arith.constant 0 : index
    %321 = vector.load %arg10[%c0_143, %c0_144] : memref<8x128xf32, #tpu.memory_space<vmem>>, vector<8x128xf32>
    tpu.vector_store %arg10[%c0_143, %c0_144], %317 {strides = array<i32>} : memref<8x128xf32, #tpu.memory_space<vmem>>, vector<8x128xf32>,
    %322 = arith.truncf %319 : vector<8x128xf32> to vector<8x128xbf16>
    %323 = arith.index_cast %286 : i32 to index
    %c0_145 = arith.constant 0 : index
    %c0_146 = arith.constant 0 : index
    %324 = vector.load %arg6[%323, %c0_145, %c0_146] : memref<8x8x128xbf16, #tpu.memory_space<vmem>>, vector<1x8x128xbf16>
    %325 = vector.shape_cast %324 : vector<1x8x128xbf16> to vector<8x128xbf16>
    %326 = vector.shape_cast %322 : vector<8x128xbf16> to vector<1x8x128xbf16>
    tpu.vector_store %arg6[%323, %c0_145, %c0_146], %326 {strides = array<i32>} : memref<8x8x128xbf16, #tpu.memory_space<vmem>>, vector<1x8x128xbf16>,
    %c4_i32 = arith.constant 4 : i32
    %327 = arith.index_cast %c4_i32 : i32 to index
    %c0_147 = arith.constant 0 : index
    %c0_148 = arith.constant 0 : index
    %328 = vector.load %arg1[%327, %c0_147, %c0_148] : memref<8x8x512xf32, #tpu.memory_space<vmem>>, vector<1x8x512xf32>
    %329 = vector.shape_cast %328 : vector<1x8x512xf32> to vector<8x512xf32>
    %c0_149 = arith.constant 0 : index
    %c0_150 = arith.constant 0 : index
    %330 = vector.load %arg7[%c0_149, %c0_150] : memref<8x128xf32, #tpu.memory_space<vmem>>, vector<8x128xf32>
    %c0_151 = arith.constant 0 : index
    %c0_152 = arith.constant 0 : index
    %331 = vector.load %arg8[%c0_151, %c0_152] : memref<8x128xf32, #tpu.memory_space<vmem>>, vector<8x128xf32>
    %c0_153 = arith.constant 0 : index
    %c0_154 = arith.constant 0 : index
    %332 = vector.load %arg3[%c0_153, %c0_154] : memref<128x512xf32, #tpu.memory_space<vmem>>, vector<128x512xf32>
    %cst_155 = arith.constant dense<0.000000e+00> : vector<8x512xf32>
    %333 = tpu.matmul %330, %332, %cst_155 {dimension_numbers = #tpu.dot_dimension_numbers<[1], [0], [0], [1], [0, 0, 1, 1], [], []>} : vector<8x128xf32>, vector<128x512xf32>, vector<8x512xf32> -> vector<8x512xf32>
    %334 = arith.addf %329, %333 : vector<8x512xf32>
    %335 = vector.extract_strided_slice %334 {offsets = [0, 0], sizes = [8, 128], strides = [1, 1]} : vector<8x512xf32> to vector<8x128xf32>
    %336 = arith.negf %335 : vector<8x128xf32>
    %337 = math.exp %336 : vector<8x128xf32>
    %cst_156 = arith.constant 1.000000e+00 : f32
    %338 = vector.broadcast %cst_156 : f32 to vector<8x128xf32>
    %339 = arith.addf %338, %337 : vector<8x128xf32>
    %340 = arith.divf %338, %339 : vector<8x128xf32>
    %341 = vector.extract_strided_slice %334 {offsets = [0, 128], sizes = [8, 128], strides = [1, 1]} : vector<8x512xf32> to vector<8x128xf32>
    %342 = arith.negf %341 : vector<8x128xf32>
    %343 = math.exp %342 : vector<8x128xf32>
    %cst_157 = arith.constant 1.000000e+00 : f32
    %344 = vector.broadcast %cst_157 : f32 to vector<8x128xf32>
    %345 = arith.addf %344, %343 : vector<8x128xf32>
    %346 = arith.divf %344, %345 : vector<8x128xf32>
    %347 = vector.extract_strided_slice %334 {offsets = [0, 256], sizes = [8, 128], strides = [1, 1]} : vector<8x512xf32> to vector<8x128xf32>
    %348 = math.tanh %347 : vector<8x128xf32>
    %349 = vector.extract_strided_slice %334 {offsets = [0, 384], sizes = [8, 128], strides = [1, 1]} : vector<8x512xf32> to vector<8x128xf32>
    %350 = arith.negf %349 : vector<8x128xf32>
    %351 = math.exp %350 : vector<8x128xf32>
    %cst_158 = arith.constant 1.000000e+00 : f32
    %352 = vector.broadcast %cst_158 : f32 to vector<8x128xf32>
    %353 = arith.addf %352, %351 : vector<8x128xf32>
    %354 = arith.divf %352, %353 : vector<8x128xf32>
    %355 = arith.mulf %346, %331 : vector<8x128xf32>
    %356 = arith.mulf %340, %348 : vector<8x128xf32>
    %357 = arith.addf %355, %356 : vector<8x128xf32>
    %358 = math.tanh %357 : vector<8x128xf32>
    %359 = arith.mulf %354, %358 : vector<8x128xf32>
    %c0_159 = arith.constant 0 : index
    %c0_160 = arith.constant 0 : index
    %360 = vector.load %arg7[%c0_159, %c0_160] : memref<8x128xf32, #tpu.memory_space<vmem>>, vector<8x128xf32>
    tpu.vector_store %arg7[%c0_159, %c0_160], %359 {strides = array<i32>} : memref<8x128xf32, #tpu.memory_space<vmem>>, vector<8x128xf32>,
    %c0_161 = arith.constant 0 : index
    %c0_162 = arith.constant 0 : index
    %361 = vector.load %arg8[%c0_161, %c0_162] : memref<8x128xf32, #tpu.memory_space<vmem>>, vector<8x128xf32>
    tpu.vector_store %arg8[%c0_161, %c0_162], %357 {strides = array<i32>} : memref<8x128xf32, #tpu.memory_space<vmem>>, vector<8x128xf32>,
    %362 = arith.truncf %359 : vector<8x128xf32> to vector<8x128xbf16>
    %363 = arith.index_cast %c4_i32 : i32 to index
    %c0_163 = arith.constant 0 : index
    %c0_164 = arith.constant 0 : index
    %364 = vector.load %arg5[%363, %c0_163, %c0_164] : memref<8x8x128xbf16, #tpu.memory_space<vmem>>, vector<1x8x128xbf16>
    %365 = vector.shape_cast %364 : vector<1x8x128xbf16> to vector<8x128xbf16>
    %366 = vector.shape_cast %362 : vector<8x128xbf16> to vector<1x8x128xbf16>
    tpu.vector_store %arg5[%363, %c0_163, %c0_164], %366 {strides = array<i32>} : memref<8x8x128xbf16, #tpu.memory_space<vmem>>, vector<1x8x128xbf16>,
    %c7_i32_165 = arith.constant 7 : i32
    %367 = arith.subi %c7_i32_165, %c4_i32 : i32
    %368 = arith.index_cast %367 : i32 to index
    %c0_166 = arith.constant 0 : index
    %c0_167 = arith.constant 0 : index
    %369 = vector.load %arg2[%368, %c0_166, %c0_167] : memref<8x8x512xf32, #tpu.memory_space<vmem>>, vector<1x8x512xf32>
    %370 = vector.shape_cast %369 : vector<1x8x512xf32> to vector<8x512xf32>
    %c0_168 = arith.constant 0 : index
    %c0_169 = arith.constant 0 : index
    %371 = vector.load %arg9[%c0_168, %c0_169] : memref<8x128xf32, #tpu.memory_space<vmem>>, vector<8x128xf32>
    %c0_170 = arith.constant 0 : index
    %c0_171 = arith.constant 0 : index
    %372 = vector.load %arg10[%c0_170, %c0_171] : memref<8x128xf32, #tpu.memory_space<vmem>>, vector<8x128xf32>
    %c0_172 = arith.constant 0 : index
    %c0_173 = arith.constant 0 : index
    %373 = vector.load %arg4[%c0_172, %c0_173] : memref<128x512xf32, #tpu.memory_space<vmem>>, vector<128x512xf32>
    %cst_174 = arith.constant dense<0.000000e+00> : vector<8x512xf32>
    %374 = tpu.matmul %371, %373, %cst_174 {dimension_numbers = #tpu.dot_dimension_numbers<[1], [0], [0], [1], [0, 0, 1, 1], [], []>} : vector<8x128xf32>, vector<128x512xf32>, vector<8x512xf32> -> vector<8x512xf32>
    %375 = arith.addf %370, %374 : vector<8x512xf32>
    %376 = vector.extract_strided_slice %375 {offsets = [0, 0], sizes = [8, 128], strides = [1, 1]} : vector<8x512xf32> to vector<8x128xf32>
    %377 = arith.negf %376 : vector<8x128xf32>
    %378 = math.exp %377 : vector<8x128xf32>
    %cst_175 = arith.constant 1.000000e+00 : f32
    %379 = vector.broadcast %cst_175 : f32 to vector<8x128xf32>
    %380 = arith.addf %379, %378 : vector<8x128xf32>
    %381 = arith.divf %379, %380 : vector<8x128xf32>
    %382 = vector.extract_strided_slice %375 {offsets = [0, 128], sizes = [8, 128], strides = [1, 1]} : vector<8x512xf32> to vector<8x128xf32>
    %383 = arith.negf %382 : vector<8x128xf32>
    %384 = math.exp %383 : vector<8x128xf32>
    %cst_176 = arith.constant 1.000000e+00 : f32
    %385 = vector.broadcast %cst_176 : f32 to vector<8x128xf32>
    %386 = arith.addf %385, %384 : vector<8x128xf32>
    %387 = arith.divf %385, %386 : vector<8x128xf32>
    %388 = vector.extract_strided_slice %375 {offsets = [0, 256], sizes = [8, 128], strides = [1, 1]} : vector<8x512xf32> to vector<8x128xf32>
    %389 = math.tanh %388 : vector<8x128xf32>
    %390 = vector.extract_strided_slice %375 {offsets = [0, 384], sizes = [8, 128], strides = [1, 1]} : vector<8x512xf32> to vector<8x128xf32>
    %391 = arith.negf %390 : vector<8x128xf32>
    %392 = math.exp %391 : vector<8x128xf32>
    %cst_177 = arith.constant 1.000000e+00 : f32
    %393 = vector.broadcast %cst_177 : f32 to vector<8x128xf32>
    %394 = arith.addf %393, %392 : vector<8x128xf32>
    %395 = arith.divf %393, %394 : vector<8x128xf32>
    %396 = arith.mulf %387, %372 : vector<8x128xf32>
    %397 = arith.mulf %381, %389 : vector<8x128xf32>
    %398 = arith.addf %396, %397 : vector<8x128xf32>
    %399 = math.tanh %398 : vector<8x128xf32>
    %400 = arith.mulf %395, %399 : vector<8x128xf32>
    %c0_178 = arith.constant 0 : index
    %c0_179 = arith.constant 0 : index
    %401 = vector.load %arg9[%c0_178, %c0_179] : memref<8x128xf32, #tpu.memory_space<vmem>>, vector<8x128xf32>
    tpu.vector_store %arg9[%c0_178, %c0_179], %400 {strides = array<i32>} : memref<8x128xf32, #tpu.memory_space<vmem>>, vector<8x128xf32>,
    %c0_180 = arith.constant 0 : index
    %c0_181 = arith.constant 0 : index
    %402 = vector.load %arg10[%c0_180, %c0_181] : memref<8x128xf32, #tpu.memory_space<vmem>>, vector<8x128xf32>
    tpu.vector_store %arg10[%c0_180, %c0_181], %398 {strides = array<i32>} : memref<8x128xf32, #tpu.memory_space<vmem>>, vector<8x128xf32>,
    %403 = arith.truncf %400 : vector<8x128xf32> to vector<8x128xbf16>
    %404 = arith.index_cast %367 : i32 to index
    %c0_182 = arith.constant 0 : index
    %c0_183 = arith.constant 0 : index
    %405 = vector.load %arg6[%404, %c0_182, %c0_183] : memref<8x8x128xbf16, #tpu.memory_space<vmem>>, vector<1x8x128xbf16>
    %406 = vector.shape_cast %405 : vector<1x8x128xbf16> to vector<8x128xbf16>
    %407 = vector.shape_cast %403 : vector<8x128xbf16> to vector<1x8x128xbf16>
    tpu.vector_store %arg6[%404, %c0_182, %c0_183], %407 {strides = array<i32>} : memref<8x8x128xbf16, #tpu.memory_space<vmem>>, vector<1x8x128xbf16>,
    %c5_i32 = arith.constant 5 : i32
    %408 = arith.index_cast %c5_i32 : i32 to index
    %c0_184 = arith.constant 0 : index
    %c0_185 = arith.constant 0 : index
    %409 = vector.load %arg1[%408, %c0_184, %c0_185] : memref<8x8x512xf32, #tpu.memory_space<vmem>>, vector<1x8x512xf32>
    %410 = vector.shape_cast %409 : vector<1x8x512xf32> to vector<8x512xf32>
    %c0_186 = arith.constant 0 : index
    %c0_187 = arith.constant 0 : index
    %411 = vector.load %arg7[%c0_186, %c0_187] : memref<8x128xf32, #tpu.memory_space<vmem>>, vector<8x128xf32>
    %c0_188 = arith.constant 0 : index
    %c0_189 = arith.constant 0 : index
    %412 = vector.load %arg8[%c0_188, %c0_189] : memref<8x128xf32, #tpu.memory_space<vmem>>, vector<8x128xf32>
    %c0_190 = arith.constant 0 : index
    %c0_191 = arith.constant 0 : index
    %413 = vector.load %arg3[%c0_190, %c0_191] : memref<128x512xf32, #tpu.memory_space<vmem>>, vector<128x512xf32>
    %cst_192 = arith.constant dense<0.000000e+00> : vector<8x512xf32>
    %414 = tpu.matmul %411, %413, %cst_192 {dimension_numbers = #tpu.dot_dimension_numbers<[1], [0], [0], [1], [0, 0, 1, 1], [], []>} : vector<8x128xf32>, vector<128x512xf32>, vector<8x512xf32> -> vector<8x512xf32>
    %415 = arith.addf %410, %414 : vector<8x512xf32>
    %416 = vector.extract_strided_slice %415 {offsets = [0, 0], sizes = [8, 128], strides = [1, 1]} : vector<8x512xf32> to vector<8x128xf32>
    %417 = arith.negf %416 : vector<8x128xf32>
    %418 = math.exp %417 : vector<8x128xf32>
    %cst_193 = arith.constant 1.000000e+00 : f32
    %419 = vector.broadcast %cst_193 : f32 to vector<8x128xf32>
    %420 = arith.addf %419, %418 : vector<8x128xf32>
    %421 = arith.divf %419, %420 : vector<8x128xf32>
    %422 = vector.extract_strided_slice %415 {offsets = [0, 128], sizes = [8, 128], strides = [1, 1]} : vector<8x512xf32> to vector<8x128xf32>
    %423 = arith.negf %422 : vector<8x128xf32>
    %424 = math.exp %423 : vector<8x128xf32>
    %cst_194 = arith.constant 1.000000e+00 : f32
    %425 = vector.broadcast %cst_194 : f32 to vector<8x128xf32>
    %426 = arith.addf %425, %424 : vector<8x128xf32>
    %427 = arith.divf %425, %426 : vector<8x128xf32>
    %428 = vector.extract_strided_slice %415 {offsets = [0, 256], sizes = [8, 128], strides = [1, 1]} : vector<8x512xf32> to vector<8x128xf32>
    %429 = math.tanh %428 : vector<8x128xf32>
    %430 = vector.extract_strided_slice %415 {offsets = [0, 384], sizes = [8, 128], strides = [1, 1]} : vector<8x512xf32> to vector<8x128xf32>
    %431 = arith.negf %430 : vector<8x128xf32>
    %432 = math.exp %431 : vector<8x128xf32>
    %cst_195 = arith.constant 1.000000e+00 : f32
    %433 = vector.broadcast %cst_195 : f32 to vector<8x128xf32>
    %434 = arith.addf %433, %432 : vector<8x128xf32>
    %435 = arith.divf %433, %434 : vector<8x128xf32>
    %436 = arith.mulf %427, %412 : vector<8x128xf32>
    %437 = arith.mulf %421, %429 : vector<8x128xf32>
    %438 = arith.addf %436, %437 : vector<8x128xf32>
    %439 = math.tanh %438 : vector<8x128xf32>
    %440 = arith.mulf %435, %439 : vector<8x128xf32>
    %c0_196 = arith.constant 0 : index
    %c0_197 = arith.constant 0 : index
    %441 = vector.load %arg7[%c0_196, %c0_197] : memref<8x128xf32, #tpu.memory_space<vmem>>, vector<8x128xf32>
    tpu.vector_store %arg7[%c0_196, %c0_197], %440 {strides = array<i32>} : memref<8x128xf32, #tpu.memory_space<vmem>>, vector<8x128xf32>,
    %c0_198 = arith.constant 0 : index
    %c0_199 = arith.constant 0 : index
    %442 = vector.load %arg8[%c0_198, %c0_199] : memref<8x128xf32, #tpu.memory_space<vmem>>, vector<8x128xf32>
    tpu.vector_store %arg8[%c0_198, %c0_199], %438 {strides = array<i32>} : memref<8x128xf32, #tpu.memory_space<vmem>>, vector<8x128xf32>,
    %443 = arith.truncf %440 : vector<8x128xf32> to vector<8x128xbf16>
    %444 = arith.index_cast %c5_i32 : i32 to index
    %c0_200 = arith.constant 0 : index
    %c0_201 = arith.constant 0 : index
    %445 = vector.load %arg5[%444, %c0_200, %c0_201] : memref<8x8x128xbf16, #tpu.memory_space<vmem>>, vector<1x8x128xbf16>
    %446 = vector.shape_cast %445 : vector<1x8x128xbf16> to vector<8x128xbf16>
    %447 = vector.shape_cast %443 : vector<8x128xbf16> to vector<1x8x128xbf16>
    tpu.vector_store %arg5[%444, %c0_200, %c0_201], %447 {strides = array<i32>} : memref<8x8x128xbf16, #tpu.memory_space<vmem>>, vector<1x8x128xbf16>,
    %c7_i32_202 = arith.constant 7 : i32
    %448 = arith.subi %c7_i32_202, %c5_i32 : i32
    %449 = arith.index_cast %448 : i32 to index
    %c0_203 = arith.constant 0 : index
    %c0_204 = arith.constant 0 : index
    %450 = vector.load %arg2[%449, %c0_203, %c0_204] : memref<8x8x512xf32, #tpu.memory_space<vmem>>, vector<1x8x512xf32>
    %451 = vector.shape_cast %450 : vector<1x8x512xf32> to vector<8x512xf32>
    %c0_205 = arith.constant 0 : index
    %c0_206 = arith.constant 0 : index
    %452 = vector.load %arg9[%c0_205, %c0_206] : memref<8x128xf32, #tpu.memory_space<vmem>>, vector<8x128xf32>
    %c0_207 = arith.constant 0 : index
    %c0_208 = arith.constant 0 : index
    %453 = vector.load %arg10[%c0_207, %c0_208] : memref<8x128xf32, #tpu.memory_space<vmem>>, vector<8x128xf32>
    %c0_209 = arith.constant 0 : index
    %c0_210 = arith.constant 0 : index
    %454 = vector.load %arg4[%c0_209, %c0_210] : memref<128x512xf32, #tpu.memory_space<vmem>>, vector<128x512xf32>
    %cst_211 = arith.constant dense<0.000000e+00> : vector<8x512xf32>
    %455 = tpu.matmul %452, %454, %cst_211 {dimension_numbers = #tpu.dot_dimension_numbers<[1], [0], [0], [1], [0, 0, 1, 1], [], []>} : vector<8x128xf32>, vector<128x512xf32>, vector<8x512xf32> -> vector<8x512xf32>
    %456 = arith.addf %451, %455 : vector<8x512xf32>
    %457 = vector.extract_strided_slice %456 {offsets = [0, 0], sizes = [8, 128], strides = [1, 1]} : vector<8x512xf32> to vector<8x128xf32>
    %458 = arith.negf %457 : vector<8x128xf32>
    %459 = math.exp %458 : vector<8x128xf32>
    %cst_212 = arith.constant 1.000000e+00 : f32
    %460 = vector.broadcast %cst_212 : f32 to vector<8x128xf32>
    %461 = arith.addf %460, %459 : vector<8x128xf32>
    %462 = arith.divf %460, %461 : vector<8x128xf32>
    %463 = vector.extract_strided_slice %456 {offsets = [0, 128], sizes = [8, 128], strides = [1, 1]} : vector<8x512xf32> to vector<8x128xf32>
    %464 = arith.negf %463 : vector<8x128xf32>
    %465 = math.exp %464 : vector<8x128xf32>
    %cst_213 = arith.constant 1.000000e+00 : f32
    %466 = vector.broadcast %cst_213 : f32 to vector<8x128xf32>
    %467 = arith.addf %466, %465 : vector<8x128xf32>
    %468 = arith.divf %466, %467 : vector<8x128xf32>
    %469 = vector.extract_strided_slice %456 {offsets = [0, 256], sizes = [8, 128], strides = [1, 1]} : vector<8x512xf32> to vector<8x128xf32>
    %470 = math.tanh %469 : vector<8x128xf32>
    %471 = vector.extract_strided_slice %456 {offsets = [0, 384], sizes = [8, 128], strides = [1, 1]} : vector<8x512xf32> to vector<8x128xf32>
    %472 = arith.negf %471 : vector<8x128xf32>
    %473 = math.exp %472 : vector<8x128xf32>
    %cst_214 = arith.constant 1.000000e+00 : f32
    %474 = vector.broadcast %cst_214 : f32 to vector<8x128xf32>
    %475 = arith.addf %474, %473 : vector<8x128xf32>
    %476 = arith.divf %474, %475 : vector<8x128xf32>
    %477 = arith.mulf %468, %453 : vector<8x128xf32>
    %478 = arith.mulf %462, %470 : vector<8x128xf32>
    %479 = arith.addf %477, %478 : vector<8x128xf32>
    %480 = math.tanh %479 : vector<8x128xf32>
    %481 = arith.mulf %476, %480 : vector<8x128xf32>
    %c0_215 = arith.constant 0 : index
    %c0_216 = arith.constant 0 : index
    %482 = vector.load %arg9[%c0_215, %c0_216] : memref<8x128xf32, #tpu.memory_space<vmem>>, vector<8x128xf32>
    tpu.vector_store %arg9[%c0_215, %c0_216], %481 {strides = array<i32>} : memref<8x128xf32, #tpu.memory_space<vmem>>, vector<8x128xf32>,
    %c0_217 = arith.constant 0 : index
    %c0_218 = arith.constant 0 : index
    %483 = vector.load %arg10[%c0_217, %c0_218] : memref<8x128xf32, #tpu.memory_space<vmem>>, vector<8x128xf32>
    tpu.vector_store %arg10[%c0_217, %c0_218], %479 {strides = array<i32>} : memref<8x128xf32, #tpu.memory_space<vmem>>, vector<8x128xf32>,
    %484 = arith.truncf %481 : vector<8x128xf32> to vector<8x128xbf16>
    %485 = arith.index_cast %448 : i32 to index
    %c0_219 = arith.constant 0 : index
    %c0_220 = arith.constant 0 : index
    %486 = vector.load %arg6[%485, %c0_219, %c0_220] : memref<8x8x128xbf16, #tpu.memory_space<vmem>>, vector<1x8x128xbf16>
    %487 = vector.shape_cast %486 : vector<1x8x128xbf16> to vector<8x128xbf16>
    %488 = vector.shape_cast %484 : vector<8x128xbf16> to vector<1x8x128xbf16>
    tpu.vector_store %arg6[%485, %c0_219, %c0_220], %488 {strides = array<i32>} : memref<8x8x128xbf16, #tpu.memory_space<vmem>>, vector<1x8x128xbf16>,
    %c6_i32 = arith.constant 6 : i32
    %489 = arith.index_cast %c6_i32 : i32 to index
    %c0_221 = arith.constant 0 : index
    %c0_222 = arith.constant 0 : index
    %490 = vector.load %arg1[%489, %c0_221, %c0_222] : memref<8x8x512xf32, #tpu.memory_space<vmem>>, vector<1x8x512xf32>
    %491 = vector.shape_cast %490 : vector<1x8x512xf32> to vector<8x512xf32>
    %c0_223 = arith.constant 0 : index
    %c0_224 = arith.constant 0 : index
    %492 = vector.load %arg7[%c0_223, %c0_224] : memref<8x128xf32, #tpu.memory_space<vmem>>, vector<8x128xf32>
    %c0_225 = arith.constant 0 : index
    %c0_226 = arith.constant 0 : index
    %493 = vector.load %arg8[%c0_225, %c0_226] : memref<8x128xf32, #tpu.memory_space<vmem>>, vector<8x128xf32>
    %c0_227 = arith.constant 0 : index
    %c0_228 = arith.constant 0 : index
    %494 = vector.load %arg3[%c0_227, %c0_228] : memref<128x512xf32, #tpu.memory_space<vmem>>, vector<128x512xf32>
    %cst_229 = arith.constant dense<0.000000e+00> : vector<8x512xf32>
    %495 = tpu.matmul %492, %494, %cst_229 {dimension_numbers = #tpu.dot_dimension_numbers<[1], [0], [0], [1], [0, 0, 1, 1], [], []>} : vector<8x128xf32>, vector<128x512xf32>, vector<8x512xf32> -> vector<8x512xf32>
    %496 = arith.addf %491, %495 : vector<8x512xf32>
    %497 = vector.extract_strided_slice %496 {offsets = [0, 0], sizes = [8, 128], strides = [1, 1]} : vector<8x512xf32> to vector<8x128xf32>
    %498 = arith.negf %497 : vector<8x128xf32>
    %499 = math.exp %498 : vector<8x128xf32>
    %cst_230 = arith.constant 1.000000e+00 : f32
    %500 = vector.broadcast %cst_230 : f32 to vector<8x128xf32>
    %501 = arith.addf %500, %499 : vector<8x128xf32>
    %502 = arith.divf %500, %501 : vector<8x128xf32>
    %503 = vector.extract_strided_slice %496 {offsets = [0, 128], sizes = [8, 128], strides = [1, 1]} : vector<8x512xf32> to vector<8x128xf32>
    %504 = arith.negf %503 : vector<8x128xf32>
    %505 = math.exp %504 : vector<8x128xf32>
    %cst_231 = arith.constant 1.000000e+00 : f32
    %506 = vector.broadcast %cst_231 : f32 to vector<8x128xf32>
    %507 = arith.addf %506, %505 : vector<8x128xf32>
    %508 = arith.divf %506, %507 : vector<8x128xf32>
    %509 = vector.extract_strided_slice %496 {offsets = [0, 256], sizes = [8, 128], strides = [1, 1]} : vector<8x512xf32> to vector<8x128xf32>
    %510 = math.tanh %509 : vector<8x128xf32>
    %511 = vector.extract_strided_slice %496 {offsets = [0, 384], sizes = [8, 128], strides = [1, 1]} : vector<8x512xf32> to vector<8x128xf32>
    %512 = arith.negf %511 : vector<8x128xf32>
    %513 = math.exp %512 : vector<8x128xf32>
    %cst_232 = arith.constant 1.000000e+00 : f32
    %514 = vector.broadcast %cst_232 : f32 to vector<8x128xf32>
    %515 = arith.addf %514, %513 : vector<8x128xf32>
    %516 = arith.divf %514, %515 : vector<8x128xf32>
    %517 = arith.mulf %508, %493 : vector<8x128xf32>
    %518 = arith.mulf %502, %510 : vector<8x128xf32>
    %519 = arith.addf %517, %518 : vector<8x128xf32>
    %520 = math.tanh %519 : vector<8x128xf32>
    %521 = arith.mulf %516, %520 : vector<8x128xf32>
    %c0_233 = arith.constant 0 : index
    %c0_234 = arith.constant 0 : index
    %522 = vector.load %arg7[%c0_233, %c0_234] : memref<8x128xf32, #tpu.memory_space<vmem>>, vector<8x128xf32>
    tpu.vector_store %arg7[%c0_233, %c0_234], %521 {strides = array<i32>} : memref<8x128xf32, #tpu.memory_space<vmem>>, vector<8x128xf32>,
    %c0_235 = arith.constant 0 : index
    %c0_236 = arith.constant 0 : index
    %523 = vector.load %arg8[%c0_235, %c0_236] : memref<8x128xf32, #tpu.memory_space<vmem>>, vector<8x128xf32>
    tpu.vector_store %arg8[%c0_235, %c0_236], %519 {strides = array<i32>} : memref<8x128xf32, #tpu.memory_space<vmem>>, vector<8x128xf32>,
    %524 = arith.truncf %521 : vector<8x128xf32> to vector<8x128xbf16>
    %525 = arith.index_cast %c6_i32 : i32 to index
    %c0_237 = arith.constant 0 : index
    %c0_238 = arith.constant 0 : index
    %526 = vector.load %arg5[%525, %c0_237, %c0_238] : memref<8x8x128xbf16, #tpu.memory_space<vmem>>, vector<1x8x128xbf16>
    %527 = vector.shape_cast %526 : vector<1x8x128xbf16> to vector<8x128xbf16>
    %528 = vector.shape_cast %524 : vector<8x128xbf16> to vector<1x8x128xbf16>
    tpu.vector_store %arg5[%525, %c0_237, %c0_238], %528 {strides = array<i32>} : memref<8x8x128xbf16, #tpu.memory_space<vmem>>, vector<1x8x128xbf16>,
    %c7_i32_239 = arith.constant 7 : i32
    %529 = arith.subi %c7_i32_239, %c6_i32 : i32
    %530 = arith.index_cast %529 : i32 to index
    %c0_240 = arith.constant 0 : index
    %c0_241 = arith.constant 0 : index
    %531 = vector.load %arg2[%530, %c0_240, %c0_241] : memref<8x8x512xf32, #tpu.memory_space<vmem>>, vector<1x8x512xf32>
    %532 = vector.shape_cast %531 : vector<1x8x512xf32> to vector<8x512xf32>
    %c0_242 = arith.constant 0 : index
    %c0_243 = arith.constant 0 : index
    %533 = vector.load %arg9[%c0_242, %c0_243] : memref<8x128xf32, #tpu.memory_space<vmem>>, vector<8x128xf32>
    %c0_244 = arith.constant 0 : index
    %c0_245 = arith.constant 0 : index
    %534 = vector.load %arg10[%c0_244, %c0_245] : memref<8x128xf32, #tpu.memory_space<vmem>>, vector<8x128xf32>
    %c0_246 = arith.constant 0 : index
    %c0_247 = arith.constant 0 : index
    %535 = vector.load %arg4[%c0_246, %c0_247] : memref<128x512xf32, #tpu.memory_space<vmem>>, vector<128x512xf32>
    %cst_248 = arith.constant dense<0.000000e+00> : vector<8x512xf32>
    %536 = tpu.matmul %533, %535, %cst_248 {dimension_numbers = #tpu.dot_dimension_numbers<[1], [0], [0], [1], [0, 0, 1, 1], [], []>} : vector<8x128xf32>, vector<128x512xf32>, vector<8x512xf32> -> vector<8x512xf32>
    %537 = arith.addf %532, %536 : vector<8x512xf32>
    %538 = vector.extract_strided_slice %537 {offsets = [0, 0], sizes = [8, 128], strides = [1, 1]} : vector<8x512xf32> to vector<8x128xf32>
    %539 = arith.negf %538 : vector<8x128xf32>
    %540 = math.exp %539 : vector<8x128xf32>
    %cst_249 = arith.constant 1.000000e+00 : f32
    %541 = vector.broadcast %cst_249 : f32 to vector<8x128xf32>
    %542 = arith.addf %541, %540 : vector<8x128xf32>
    %543 = arith.divf %541, %542 : vector<8x128xf32>
    %544 = vector.extract_strided_slice %537 {offsets = [0, 128], sizes = [8, 128], strides = [1, 1]} : vector<8x512xf32> to vector<8x128xf32>
    %545 = arith.negf %544 : vector<8x128xf32>
    %546 = math.exp %545 : vector<8x128xf32>
    %cst_250 = arith.constant 1.000000e+00 : f32
    %547 = vector.broadcast %cst_250 : f32 to vector<8x128xf32>
    %548 = arith.addf %547, %546 : vector<8x128xf32>
    %549 = arith.divf %547, %548 : vector<8x128xf32>
    %550 = vector.extract_strided_slice %537 {offsets = [0, 256], sizes = [8, 128], strides = [1, 1]} : vector<8x512xf32> to vector<8x128xf32>
    %551 = math.tanh %550 : vector<8x128xf32>
    %552 = vector.extract_strided_slice %537 {offsets = [0, 384], sizes = [8, 128], strides = [1, 1]} : vector<8x512xf32> to vector<8x128xf32>
    %553 = arith.negf %552 : vector<8x128xf32>
    %554 = math.exp %553 : vector<8x128xf32>
    %cst_251 = arith.constant 1.000000e+00 : f32
    %555 = vector.broadcast %cst_251 : f32 to vector<8x128xf32>
    %556 = arith.addf %555, %554 : vector<8x128xf32>
    %557 = arith.divf %555, %556 : vector<8x128xf32>
    %558 = arith.mulf %549, %534 : vector<8x128xf32>
    %559 = arith.mulf %543, %551 : vector<8x128xf32>
    %560 = arith.addf %558, %559 : vector<8x128xf32>
    %561 = math.tanh %560 : vector<8x128xf32>
    %562 = arith.mulf %557, %561 : vector<8x128xf32>
    %c0_252 = arith.constant 0 : index
    %c0_253 = arith.constant 0 : index
    %563 = vector.load %arg9[%c0_252, %c0_253] : memref<8x128xf32, #tpu.memory_space<vmem>>, vector<8x128xf32>
    tpu.vector_store %arg9[%c0_252, %c0_253], %562 {strides = array<i32>} : memref<8x128xf32, #tpu.memory_space<vmem>>, vector<8x128xf32>,
    %c0_254 = arith.constant 0 : index
    %c0_255 = arith.constant 0 : index
    %564 = vector.load %arg10[%c0_254, %c0_255] : memref<8x128xf32, #tpu.memory_space<vmem>>, vector<8x128xf32>
    tpu.vector_store %arg10[%c0_254, %c0_255], %560 {strides = array<i32>} : memref<8x128xf32, #tpu.memory_space<vmem>>, vector<8x128xf32>,
    %565 = arith.truncf %562 : vector<8x128xf32> to vector<8x128xbf16>
    %566 = arith.index_cast %529 : i32 to index
    %c0_256 = arith.constant 0 : index
    %c0_257 = arith.constant 0 : index
    %567 = vector.load %arg6[%566, %c0_256, %c0_257] : memref<8x8x128xbf16, #tpu.memory_space<vmem>>, vector<1x8x128xbf16>
    %568 = vector.shape_cast %567 : vector<1x8x128xbf16> to vector<8x128xbf16>
    %569 = vector.shape_cast %565 : vector<8x128xbf16> to vector<1x8x128xbf16>
    tpu.vector_store %arg6[%566, %c0_256, %c0_257], %569 {strides = array<i32>} : memref<8x8x128xbf16, #tpu.memory_space<vmem>>, vector<1x8x128xbf16>,
    %c7_i32_258 = arith.constant 7 : i32
    %570 = arith.index_cast %c7_i32_258 : i32 to index
    %c0_259 = arith.constant 0 : index
    %c0_260 = arith.constant 0 : index
    %571 = vector.load %arg1[%570, %c0_259, %c0_260] : memref<8x8x512xf32, #tpu.memory_space<vmem>>, vector<1x8x512xf32>
    %572 = vector.shape_cast %571 : vector<1x8x512xf32> to vector<8x512xf32>
    %c0_261 = arith.constant 0 : index
    %c0_262 = arith.constant 0 : index
    %573 = vector.load %arg7[%c0_261, %c0_262] : memref<8x128xf32, #tpu.memory_space<vmem>>, vector<8x128xf32>
    %c0_263 = arith.constant 0 : index
    %c0_264 = arith.constant 0 : index
    %574 = vector.load %arg8[%c0_263, %c0_264] : memref<8x128xf32, #tpu.memory_space<vmem>>, vector<8x128xf32>
    %c0_265 = arith.constant 0 : index
    %c0_266 = arith.constant 0 : index
    %575 = vector.load %arg3[%c0_265, %c0_266] : memref<128x512xf32, #tpu.memory_space<vmem>>, vector<128x512xf32>
    %cst_267 = arith.constant dense<0.000000e+00> : vector<8x512xf32>
    %576 = tpu.matmul %573, %575, %cst_267 {dimension_numbers = #tpu.dot_dimension_numbers<[1], [0], [0], [1], [0, 0, 1, 1], [], []>} : vector<8x128xf32>, vector<128x512xf32>, vector<8x512xf32> -> vector<8x512xf32>
    %577 = arith.addf %572, %576 : vector<8x512xf32>
    %578 = vector.extract_strided_slice %577 {offsets = [0, 0], sizes = [8, 128], strides = [1, 1]} : vector<8x512xf32> to vector<8x128xf32>
    %579 = arith.negf %578 : vector<8x128xf32>
    %580 = math.exp %579 : vector<8x128xf32>
    %cst_268 = arith.constant 1.000000e+00 : f32
    %581 = vector.broadcast %cst_268 : f32 to vector<8x128xf32>
    %582 = arith.addf %581, %580 : vector<8x128xf32>
    %583 = arith.divf %581, %582 : vector<8x128xf32>
    %584 = vector.extract_strided_slice %577 {offsets = [0, 128], sizes = [8, 128], strides = [1, 1]} : vector<8x512xf32> to vector<8x128xf32>
    %585 = arith.negf %584 : vector<8x128xf32>
    %586 = math.exp %585 : vector<8x128xf32>
    %cst_269 = arith.constant 1.000000e+00 : f32
    %587 = vector.broadcast %cst_269 : f32 to vector<8x128xf32>
    %588 = arith.addf %587, %586 : vector<8x128xf32>
    %589 = arith.divf %587, %588 : vector<8x128xf32>
    %590 = vector.extract_strided_slice %577 {offsets = [0, 256], sizes = [8, 128], strides = [1, 1]} : vector<8x512xf32> to vector<8x128xf32>
    %591 = math.tanh %590 : vector<8x128xf32>
    %592 = vector.extract_strided_slice %577 {offsets = [0, 384], sizes = [8, 128], strides = [1, 1]} : vector<8x512xf32> to vector<8x128xf32>
    %593 = arith.negf %592 : vector<8x128xf32>
    %594 = math.exp %593 : vector<8x128xf32>
    %cst_270 = arith.constant 1.000000e+00 : f32
    %595 = vector.broadcast %cst_270 : f32 to vector<8x128xf32>
    %596 = arith.addf %595, %594 : vector<8x128xf32>
    %597 = arith.divf %595, %596 : vector<8x128xf32>
    %598 = arith.mulf %589, %574 : vector<8x128xf32>
    %599 = arith.mulf %583, %591 : vector<8x128xf32>
    %600 = arith.addf %598, %599 : vector<8x128xf32>
    %601 = math.tanh %600 : vector<8x128xf32>
    %602 = arith.mulf %597, %601 : vector<8x128xf32>
    %c0_271 = arith.constant 0 : index
    %c0_272 = arith.constant 0 : index
    %603 = vector.load %arg7[%c0_271, %c0_272] : memref<8x128xf32, #tpu.memory_space<vmem>>, vector<8x128xf32>
    tpu.vector_store %arg7[%c0_271, %c0_272], %602 {strides = array<i32>} : memref<8x128xf32, #tpu.memory_space<vmem>>, vector<8x128xf32>,
    %c0_273 = arith.constant 0 : index
    %c0_274 = arith.constant 0 : index
    %604 = vector.load %arg8[%c0_273, %c0_274] : memref<8x128xf32, #tpu.memory_space<vmem>>, vector<8x128xf32>
    tpu.vector_store %arg8[%c0_273, %c0_274], %600 {strides = array<i32>} : memref<8x128xf32, #tpu.memory_space<vmem>>, vector<8x128xf32>,
    %605 = arith.truncf %602 : vector<8x128xf32> to vector<8x128xbf16>
    %606 = arith.index_cast %c7_i32_258 : i32 to index
    %c0_275 = arith.constant 0 : index
    %c0_276 = arith.constant 0 : index
    %607 = vector.load %arg5[%606, %c0_275, %c0_276] : memref<8x8x128xbf16, #tpu.memory_space<vmem>>, vector<1x8x128xbf16>
    %608 = vector.shape_cast %607 : vector<1x8x128xbf16> to vector<8x128xbf16>
    %609 = vector.shape_cast %605 : vector<8x128xbf16> to vector<1x8x128xbf16>
    tpu.vector_store %arg5[%606, %c0_275, %c0_276], %609 {strides = array<i32>} : memref<8x8x128xbf16, #tpu.memory_space<vmem>>, vector<1x8x128xbf16>,
    %c7_i32_277 = arith.constant 7 : i32
    %610 = arith.subi %c7_i32_277, %c7_i32_258 : i32
    %611 = arith.index_cast %610 : i32 to index
    %c0_278 = arith.constant 0 : index
    %c0_279 = arith.constant 0 : index
    %612 = vector.load %arg2[%611, %c0_278, %c0_279] : memref<8x8x512xf32, #tpu.memory_space<vmem>>, vector<1x8x512xf32>
    %613 = vector.shape_cast %612 : vector<1x8x512xf32> to vector<8x512xf32>
    %c0_280 = arith.constant 0 : index
    %c0_281 = arith.constant 0 : index
    %614 = vector.load %arg9[%c0_280, %c0_281] : memref<8x128xf32, #tpu.memory_space<vmem>>, vector<8x128xf32>
    %c0_282 = arith.constant 0 : index
    %c0_283 = arith.constant 0 : index
    %615 = vector.load %arg10[%c0_282, %c0_283] : memref<8x128xf32, #tpu.memory_space<vmem>>, vector<8x128xf32>
    %c0_284 = arith.constant 0 : index
    %c0_285 = arith.constant 0 : index
    %616 = vector.load %arg4[%c0_284, %c0_285] : memref<128x512xf32, #tpu.memory_space<vmem>>, vector<128x512xf32>
    %cst_286 = arith.constant dense<0.000000e+00> : vector<8x512xf32>
    %617 = tpu.matmul %614, %616, %cst_286 {dimension_numbers = #tpu.dot_dimension_numbers<[1], [0], [0], [1], [0, 0, 1, 1], [], []>} : vector<8x128xf32>, vector<128x512xf32>, vector<8x512xf32> -> vector<8x512xf32>
    %618 = arith.addf %613, %617 : vector<8x512xf32>
    %619 = vector.extract_strided_slice %618 {offsets = [0, 0], sizes = [8, 128], strides = [1, 1]} : vector<8x512xf32> to vector<8x128xf32>
    %620 = arith.negf %619 : vector<8x128xf32>
    %621 = math.exp %620 : vector<8x128xf32>
    %cst_287 = arith.constant 1.000000e+00 : f32
    %622 = vector.broadcast %cst_287 : f32 to vector<8x128xf32>
    %623 = arith.addf %622, %621 : vector<8x128xf32>
    %624 = arith.divf %622, %623 : vector<8x128xf32>
    %625 = vector.extract_strided_slice %618 {offsets = [0, 128], sizes = [8, 128], strides = [1, 1]} : vector<8x512xf32> to vector<8x128xf32>
    %626 = arith.negf %625 : vector<8x128xf32>
    %627 = math.exp %626 : vector<8x128xf32>
    %cst_288 = arith.constant 1.000000e+00 : f32
    %628 = vector.broadcast %cst_288 : f32 to vector<8x128xf32>
    %629 = arith.addf %628, %627 : vector<8x128xf32>
    %630 = arith.divf %628, %629 : vector<8x128xf32>
    %631 = vector.extract_strided_slice %618 {offsets = [0, 256], sizes = [8, 128], strides = [1, 1]} : vector<8x512xf32> to vector<8x128xf32>
    %632 = math.tanh %631 : vector<8x128xf32>
    %633 = vector.extract_strided_slice %618 {offsets = [0, 384], sizes = [8, 128], strides = [1, 1]} : vector<8x512xf32> to vector<8x128xf32>
    %634 = arith.negf %633 : vector<8x128xf32>
    %635 = math.exp %634 : vector<8x128xf32>
    %cst_289 = arith.constant 1.000000e+00 : f32
    %636 = vector.broadcast %cst_289 : f32 to vector<8x128xf32>
    %637 = arith.addf %636, %635 : vector<8x128xf32>
    %638 = arith.divf %636, %637 : vector<8x128xf32>
    %639 = arith.mulf %630, %615 : vector<8x128xf32>
    %640 = arith.mulf %624, %632 : vector<8x128xf32>
    %641 = arith.addf %639, %640 : vector<8x128xf32>
    %642 = math.tanh %641 : vector<8x128xf32>
    %643 = arith.mulf %638, %642 : vector<8x128xf32>
    %c0_290 = arith.constant 0 : index
    %c0_291 = arith.constant 0 : index
    %644 = vector.load %arg9[%c0_290, %c0_291] : memref<8x128xf32, #tpu.memory_space<vmem>>, vector<8x128xf32>
    tpu.vector_store %arg9[%c0_290, %c0_291], %643 {strides = array<i32>} : memref<8x128xf32, #tpu.memory_space<vmem>>, vector<8x128xf32>,
    %c0_292 = arith.constant 0 : index
    %c0_293 = arith.constant 0 : index
    %645 = vector.load %arg10[%c0_292, %c0_293] : memref<8x128xf32, #tpu.memory_space<vmem>>, vector<8x128xf32>
    tpu.vector_store %arg10[%c0_292, %c0_293], %641 {strides = array<i32>} : memref<8x128xf32, #tpu.memory_space<vmem>>, vector<8x128xf32>,
    %646 = arith.truncf %643 : vector<8x128xf32> to vector<8x128xbf16>
    %647 = arith.index_cast %610 : i32 to index
    %c0_294 = arith.constant 0 : index
    %c0_295 = arith.constant 0 : index
    %648 = vector.load %arg6[%647, %c0_294, %c0_295] : memref<8x8x128xbf16, #tpu.memory_space<vmem>>, vector<1x8x128xbf16>
    %649 = vector.shape_cast %648 : vector<1x8x128xbf16> to vector<8x128xbf16>
    %650 = vector.shape_cast %646 : vector<8x128xbf16> to vector<1x8x128xbf16>
    tpu.vector_store %arg6[%647, %c0_294, %c0_295], %650 {strides = array<i32>} : memref<8x8x128xbf16, #tpu.memory_space<vmem>>, vector<1x8x128xbf16>,
    %c8_i32 = arith.constant 8 : i32
    return
  }
  func.func @transform_0(%arg0: i32) -> (i32, i32, i32) {
    %c0_i32 = arith.constant 0 : i32
    %c0_i32_0 = arith.constant 0 : i32
    %c0_i32_1 = arith.constant 0 : i32
    return %arg0, %c0_i32, %c0_i32_0 : i32, i32, i32
  }
  func.func @transform_1(%arg0: i32) -> (i32, i32, i32) {
    %c1_i32 = arith.constant 1 : i32
    %0 = arith.subi %c1_i32, %arg0 : i32
    %c0_i32 = arith.constant 0 : i32
    %c1_i32_0 = arith.constant 1 : i32
    %c0_i32_1 = arith.constant 0 : i32
    return %0, %c0_i32, %c1_i32_0 : i32, i32, i32
  }
  func.func @transform_2(%arg0: i32) -> (i32, i32) {
    %c0_i32 = arith.constant 0 : i32
    %c0_i32_0 = arith.constant 0 : i32
    %c0_i32_1 = arith.constant 0 : i32
    return %c0_i32, %c0_i32_0 : i32, i32
  }
  func.func @transform_3(%arg0: i32) -> (i32, i32) {
    %c0_i32 = arith.constant 0 : i32
    %c0_i32_0 = arith.constant 0 : i32
    %c0_i32_1 = arith.constant 0 : i32
    return %c0_i32, %c0_i32_0 : i32, i32
  }
  func.func @transform_4(%arg0: i32) -> (i32, i32, i32) {
    %c0_i32 = arith.constant 0 : i32
    %c0_i32_0 = arith.constant 0 : i32
    %c0_i32_1 = arith.constant 0 : i32
    return %arg0, %c0_i32, %c0_i32_0 : i32, i32, i32
  }
  func.func @transform_5(%arg0: i32) -> (i32, i32, i32) {
    %c1_i32 = arith.constant 1 : i32
    %0 = arith.subi %c1_i32, %arg0 : i32
    %c0_i32 = arith.constant 0 : i32
    %c0_i32_0 = arith.constant 0 : i32
    %c0_i32_1 = arith.constant 0 : i32
    return %0, %c0_i32, %c0_i32_0 : i32, i32, i32
  }
}

</mosaic_0001>

<llo_original>
// kernel: lstm_crf_forward.5
$region0: #{lstm_crf_forward.5}
  #allocation0 [shape = 'u32[]', space=smem, size = 0x4, offset = 0x4, fixed_abs, tag = 'smem constant byte address 0x4 - core index']
  #allocation1 [shape = 'u32[144,128]{1,0:T(1,128)}', space=vmem, size = 0x12000, scoped, tag = 'internal scratch']
  %s0 = inlined_call_operand.vmem [shape: bf16[128,128], index: 0, kind: input, shape index: {}]
  %s1 = inlined_call_operand.vmem [shape: bf16[128,128], index: 1, kind: input, shape index: {}]
  %s2 = inlined_call_operand.vmem [shape: bf16[128,128], index: 2, kind: input, shape index: {}]
  %s3 = inlined_call_operand.vmem [shape: bf16[128,128], index: 3, kind: input, shape index: {}]
  %s4 = inlined_call_operand.vmem [shape: f32[1,128], index: 4, kind: input, shape index: {}]
  %s5 = inlined_call_operand.vmem [shape: f32[128,128], index: 5, kind: output, shape index: {}]
  %s6 = sld [smem:[#allocation0]]
  $region30: #{lstm_crf_forward.5} parent=0
    _
  %s8 = ssub.s32 1, %s6
  %s9 = scalar_select 0, %s8, %s6
  // Predicated region
  $region2: #{lstm_crf_forward.5} parent=0 // pred_check
    _
  $region3: #{lstm_crf_forward.5} parent=0 // pred_check_branch
    %11 = sbr.rel (0) target = $region5
  $region4: #{lstm_crf_forward.5} parent=0 // pred_region
    _
  $region5: #{lstm_crf_forward.5} parent=0 // pred_fallthru
    _
  // Predicated region
  $region6: #{lstm_crf_forward.5} parent=0 // pred_check
    _
  $region7: #{lstm_crf_forward.5} parent=0 // pred_check_branch
    %13 = sbr.rel (0) target = $region9
  $region8: #{lstm_crf_forward.5} parent=0 // pred_region
    _
  $region9: #{lstm_crf_forward.5} parent=0 // pred_fallthru
    _
  // Predicated region
  $region10: #{lstm_crf_forward.5} parent=0 // pred_check
    _
  $region11: #{lstm_crf_forward.5} parent=0 // pred_check_branch
    %15 = sbr.rel (0) target = $region13
  $region12: #{lstm_crf_forward.5} parent=0 // pred_region
    _
  $region13: #{lstm_crf_forward.5} parent=0 // pred_fallthru
    _
  // Predicated region
  $region14: #{lstm_crf_forward.5} parent=0 // pred_check
    _
  $region15: #{lstm_crf_forward.5} parent=0 // pred_check_branch
    %17 = sbr.rel (0) target = $region17
  $region16: #{lstm_crf_forward.5} parent=0 // pred_region
    _
  $region17: #{lstm_crf_forward.5} parent=0 // pred_fallthru
    _
  // Predicated region
  $region18: #{lstm_crf_forward.5} parent=0 // pred_check
    _
  $region19: #{lstm_crf_forward.5} parent=0 // pred_check_branch
    %19 = sbr.rel (0) target = $region21
  $region20: #{lstm_crf_forward.5} parent=0 // pred_region
    _
  $region21: #{lstm_crf_forward.5} parent=0 // pred_fallthru
    _
  %v21 = vld [vmem:[%s0] sm:$0xf]
  %v22 = vld [vmem:[%s0 + $0x4] sm:$0xf]
  %v23 = vld [vmem:[%s0 + $0x8] sm:$0xf]
  %v24 = vld [vmem:[%s0 + $0xc] sm:$0xf]
  %v25 = vld [vmem:[%s0 + $0x10] sm:$0xf]
  %v26 = vld [vmem:[%s0 + $0x14] sm:$0xf]
  %v27 = vld [vmem:[%s0 + $0x18] sm:$0xf]
  %v28 = vld [vmem:[%s0 + $0x1c] sm:$0xf]
  %v29 = vld [vmem:[%s0 + $0x20] sm:$0xf]
  %v30 = vld [vmem:[%s0 + $0x24] sm:$0xf]
  %v31 = vld [vmem:[%s0 + $0x28] sm:$0xf]
  %v32 = vld [vmem:[%s0 + $0x2c] sm:$0xf]
  %v33 = vld [vmem:[%s0 + $0x30] sm:$0xf]
  %v34 = vld [vmem:[%s0 + $0x34] sm:$0xf]
  %v35 = vld [vmem:[%s0 + $0x38] sm:$0xf]
  %v36 = vld [vmem:[%s0 + $0x3c] sm:$0xf]
  %v37 = vld [vmem:[%s2] sm:$0xf]
  %v38 = vld [vmem:[%s2 + $0x4] sm:$0xf]
  %v39 = vld [vmem:[%s2 + $0x8] sm:$0xf]
  %v40 = vld [vmem:[%s2 + $0xc] sm:$0xf]
  %v41 = vld [vmem:[%s2 + $0x10] sm:$0xf]
  %v42 = vld [vmem:[%s2 + $0x14] sm:$0xf]
  %v43 = vld [vmem:[%s2 + $0x18] sm:$0xf]
  %v44 = vld [vmem:[%s2 + $0x1c] sm:$0xf]
  %v45 = vld [vmem:[%s2 + $0x20] sm:$0xf]
  %v46 = vld [vmem:[%s2 + $0x24] sm:$0xf]
  %v47 = vld [vmem:[%s2 + $0x28] sm:$0xf]
  %v48 = vld [vmem:[%s2 + $0x2c] sm:$0xf]
  %v49 = vld [vmem:[%s2 + $0x30] sm:$0xf]
  %v50 = vld [vmem:[%s2 + $0x34] sm:$0xf]
  %v51 = vld [vmem:[%s2 + $0x38] sm:$0xf]
  %v52 = vld [vmem:[%s2 + $0x3c] sm:$0xf]
  %v53 = vld [vmem:[%s1] sm:$0xf]
  %v54 = vld [vmem:[%s1 + $0x4] sm:$0xf]
  %v55 = vld [vmem:[%s1 + $0x8] sm:$0xf]
  %v56 = vld [vmem:[%s1 + $0xc] sm:$0xf]
  %v57 = vld [vmem:[%s1 + $0x10] sm:$0xf]
  %v58 = vld [vmem:[%s1 + $0x14] sm:$0xf]
  %v59 = vld [vmem:[%s1 + $0x18] sm:$0xf]
  %v60 = vld [vmem:[%s1 + $0x1c] sm:$0xf]
  %v61 = vld [vmem:[%s1 + $0x20] sm:$0xf]
  %v62 = vld [vmem:[%s1 + $0x24] sm:$0xf]
  %v63 = vld [vmem:[%s1 + $0x28] sm:$0xf]
  %v64 = vld [vmem:[%s1 + $0x2c] sm:$0xf]
  %v65 = vld [vmem:[%s1 + $0x30] sm:$0xf]
  %v66 = vld [vmem:[%s1 + $0x34] sm:$0xf]
  %v67 = vld [vmem:[%s1 + $0x38] sm:$0xf]
  %v68 = vld [vmem:[%s1 + $0x3c] sm:$0xf]
  %v69 = vld [vmem:[%s3] sm:$0xf]
  %v70 = vld [vmem:[%s3 + $0x4] sm:$0xf]
  %v71 = vld [vmem:[%s3 + $0x8] sm:$0xf]
  %v72 = vld [vmem:[%s3 + $0xc] sm:$0xf]
  %v73 = vld [vmem:[%s3 + $0x10] sm:$0xf]
  %v74 = vld [vmem:[%s3 + $0x14] sm:$0xf]
  %v75 = vld [vmem:[%s3 + $0x18] sm:$0xf]
  %v76 = vld [vmem:[%s3 + $0x1c] sm:$0xf]
  %v77 = vld [vmem:[%s3 + $0x20] sm:$0xf]
  %v78 = vld [vmem:[%s3 + $0x24] sm:$0xf]
  %v79 = vld [vmem:[%s3 + $0x28] sm:$0xf]
  %v80 = vld [vmem:[%s3 + $0x2c] sm:$0xf]
  %v81 = vld [vmem:[%s3 + $0x30] sm:$0xf]
  %v82 = vld [vmem:[%s3 + $0x34] sm:$0xf]
  %v83 = vld [vmem:[%s3 + $0x38] sm:$0xf]
  %v84 = vld [vmem:[%s3 + $0x3c] sm:$0xf]
  %v101 = vunpack.c.l.b16 %v53
  %v102 = vunpack.c.l.b16 %v54
  %v103 = vunpack.c.l.b16 %v55
  %v104 = vunpack.c.l.b16 %v56
  %v105 = vunpack.c.l.b16 %v57
  %v106 = vunpack.c.l.b16 %v58
  %v107 = vunpack.c.l.b16 %v59
  %v108 = vunpack.c.l.b16 %v60
  %v109 = vunpack.c.l.b16 %v61
  %v110 = vunpack.c.l.b16 %v62
  %v111 = vunpack.c.l.b16 %v63
  %v112 = vunpack.c.l.b16 %v64
  %v113 = vunpack.c.l.b16 %v65
  %v114 = vunpack.c.l.b16 %v66
  %v115 = vunpack.c.l.b16 %v67
  %v116 = vunpack.c.l.b16 %v68
  %v117 = vpack.c.b16 %v102, %v101
  %v118 = vpack.c.b16 %v104, %v103
  %v119 = vpack.c.b16 %v106, %v105
  %v120 = vpack.c.b16 %v108, %v107
  %v121 = vpack.c.b16 %v110, %v109
  %v122 = vpack.c.b16 %v112, %v111
  %v123 = vpack.c.b16 %v114, %v113
  %v124 = vpack.c.b16 %v116, %v115
  %v149 = vunpack.c.l.b16 %v69
  %v150 = vunpack.c.l.b16 %v70
  %v151 = vunpack.c.l.b16 %v71
  %v152 = vunpack.c.l.b16 %v72
  %v153 = vunpack.c.l.b16 %v73
  %v154 = vunpack.c.l.b16 %v74
  %v155 = vunpack.c.l.b16 %v75
  %v156 = vunpack.c.l.b16 %v76
  %v157 = vunpack.c.l.b16 %v77
  %v158 = vunpack.c.l.b16 %v78
  %v159 = vunpack.c.l.b16 %v79
  %v160 = vunpack.c.l.b16 %v80
  %v161 = vunpack.c.l.b16 %v81
  %v162 = vunpack.c.l.b16 %v82
  %v163 = vunpack.c.l.b16 %v83
  %v164 = vunpack.c.l.b16 %v84
  %v165 = vpack.c.b16 %v150, %v149
  %v166 = vpack.c.b16 %v152, %v151
  %v167 = vpack.c.b16 %v154, %v153
  %v168 = vpack.c.b16 %v156, %v155
  %v169 = vpack.c.b16 %v158, %v157
  %v170 = vpack.c.b16 %v160, %v159
  %v171 = vpack.c.b16 %v162, %v161
  %v172 = vpack.c.b16 %v164, %v163
  %181 = vmatprep.subr.bf16.mxu0 0
  %182 = vmatpush1.bf16.msra.mxu0 %v165
  %183 = vmatprep.subr.bf16.mxu0 0
  %184 = vmatpush1.bf16.msra.mxu0 %v166
  %185 = vmatprep.subr.bf16.mxu0 0
  %186 = vmatpush1.bf16.msra.mxu0 %v167
  %187 = vmatprep.subr.bf16.mxu0 0
  %188 = vmatpush1.bf16.msra.mxu0 %v168
  %189 = vmatprep.subr.bf16.mxu0 0
  %190 = vmatpush1.bf16.msra.mxu0 %v169
  %191 = vmatprep.subr.bf16.mxu0 0
  %192 = vmatpush1.bf16.msra.mxu0 %v170
  %193 = vmatprep.subr.bf16.mxu0 0
  %194 = vmatpush1.bf16.msra.mxu0 %v171
  %195 = vmatprep.subr.bf16.mxu0 0
  %196 = vmatpush1.bf16.msra.mxu0 %v172
  %197 = vmatprep.subr.bf16.mxu0 0
  %198 = vmatpush1.bf16.msra.mxu0 0
  %199 = vmatprep.subr.bf16.mxu0 0
  %200 = vmatpush1.bf16.msra.mxu0 0
  %201 = vmatprep.subr.bf16.mxu0 0
  %202 = vmatpush1.bf16.msra.mxu0 0
  %203 = vmatprep.subr.bf16.mxu0 0
  %204 = vmatpush1.bf16.msra.mxu0 0
  %205 = vmatprep.subr.bf16.mxu0 0
  %206 = vmatpush1.bf16.msra.mxu0 0
  %207 = vmatprep.subr.bf16.mxu0 0
  %208 = vmatpush1.bf16.msra.mxu0 0
  %209 = vmatprep.subr.bf16.mxu0 0
  %210 = vmatpush1.bf16.msra.mxu0 0
  %211 = vmatprep.subr.bf16.mxu0 0
  %212 = vmatpush1.bf16.msra.mxu0 0
  %213 = vmatprep.mubr.bf16.mxu0 0
  %214 = vmatmul.mubr.bf16.gmra.mrb[0].mxu0 %v117
  %v215 = vpop.f32.mrb[0].mxu0
  %v216 = vadd.f32 0.0, %v215
  %v217 = vpop.f32.mrb[0].mxu0
  %v218 = vpop.f32.mrb[0].mxu0
  %v219 = vadd.f32 0.0, %v218
  %v220 = vpop.f32.mrb[0].mxu0
  %221 = vmatprep.mubr.bf16.mxu0 0
  %222 = vmatmul.mubr.bf16.gmra.mrb[0].mxu0 %v118
  %v223 = vpop.f32.mrb[0].mxu0
  %v224 = vadd.f32 0.0, %v223
  %v225 = vpop.f32.mrb[0].mxu0
  %v226 = vpop.f32.mrb[0].mxu0
  %v227 = vadd.f32 0.0, %v226
  %v228 = vpop.f32.mrb[0].mxu0
  %229 = vmatprep.mubr.bf16.mxu0 0
  %230 = vmatmul.mubr.bf16.gmra.mrb[0].mxu0 %v119
  %v231 = vpop.f32.mrb[0].mxu0
  %v232 = vadd.f32 0.0, %v231
  %v233 = vpop.f32.mrb[0].mxu0
  %v234 = vpop.f32.mrb[0].mxu0
  %v235 = vadd.f32 0.0, %v234
  %v236 = vpop.f32.mrb[0].mxu0
  %237 = vmatprep.mubr.bf16.mxu0 0
  %238 = vmatmul.mubr.bf16.gmra.mrb[0].mxu0 %v120
  %v239 = vpop.f32.mrb[0].mxu0
  %v240 = vadd.f32 0.0, %v239
  %v241 = vpop.f32.mrb[0].mxu0
  %v242 = vpop.f32.mrb[0].mxu0
  %v243 = vadd.f32 0.0, %v242
  %v244 = vpop.f32.mrb[0].mxu0
  %245 = vmatprep.mubr.bf16.mxu0 0
  %246 = vmatmul.mubr.bf16.gmra.mrb[0].mxu0 %v121
  %v247 = vpop.f32.mrb[0].mxu0
  %v248 = vadd.f32 0.0, %v247
  %v249 = vpop.f32.mrb[0].mxu0
  %v250 = vpop.f32.mrb[0].mxu0
  %v251 = vadd.f32 0.0, %v250
  %v252 = vpop.f32.mrb[0].mxu0
  %253 = vmatprep.mubr.bf16.mxu0 0
  %254 = vmatmul.mubr.bf16.gmra.mrb[0].mxu0 %v122
  %v255 = vpop.f32.mrb[0].mxu0
  %v256 = vadd.f32 0.0, %v255
  %v257 = vpop.f32.mrb[0].mxu0
  %v258 = vpop.f32.mrb[0].mxu0
  %v259 = vadd.f32 0.0, %v258
  %v260 = vpop.f32.mrb[0].mxu0
  %261 = vmatprep.mubr.bf16.mxu0 0
  %262 = vmatmul.mubr.bf16.gmra.mrb[0].mxu0 %v123
  %v263 = vpop.f32.mrb[0].mxu0
  %v264 = vadd.f32 0.0, %v263
  %v265 = vpop.f32.mrb[0].mxu0
  %v266 = vpop.f32.mrb[0].mxu0
  %v267 = vadd.f32 0.0, %v266
  %v268 = vpop.f32.mrb[0].mxu0
  %269 = vmatprep.mubr.bf16.mxu0 0
  %270 = vmatmul.mubr.bf16.gmra.mrb[0].mxu0 %v124
  %v271 = vpop.f32.mrb[0].mxu0
  %v272 = vadd.f32 0.0, %v271
  %v273 = vpop.f32.mrb[0].mxu0
  %v274 = vpop.f32.mrb[0].mxu0
  %v275 = vadd.f32 0.0, %v274
  %v276 = vpop.f32.mrb[0].mxu0
  %277 = vdwg.mxu0
  %v294 = vunpack.c.l.b16 %v21
  %v295 = vunpack.c.l.b16 %v22
  %v296 = vunpack.c.l.b16 %v23
  %v297 = vunpack.c.l.b16 %v24
  %v298 = vunpack.c.l.b16 %v25
  %v299 = vunpack.c.l.b16 %v26
  %v300 = vunpack.c.l.b16 %v27
  %v301 = vunpack.c.l.b16 %v28
  %v302 = vunpack.c.l.b16 %v29
  %v303 = vunpack.c.l.b16 %v30
  %v304 = vunpack.c.l.b16 %v31
  %v305 = vunpack.c.l.b16 %v32
  %v306 = vunpack.c.l.b16 %v33
  %v307 = vunpack.c.l.b16 %v34
  %v308 = vunpack.c.l.b16 %v35
  %v309 = vunpack.c.l.b16 %v36
  %v310 = vpack.c.b16 %v295, %v294
  %v311 = vpack.c.b16 %v297, %v296
  %v312 = vpack.c.b16 %v299, %v298
  %v313 = vpack.c.b16 %v301, %v300
  %v314 = vpack.c.b16 %v303, %v302
  %v315 = vpack.c.b16 %v305, %v304
  %v316 = vpack.c.b16 %v307, %v306
  %v317 = vpack.c.b16 %v309, %v308
  %v342 = vunpack.c.l.b16 %v37
  %v343 = vunpack.c.l.b16 %v38
  %v344 = vunpack.c.l.b16 %v39
  %v345 = vunpack.c.l.b16 %v40
  %v346 = vunpack.c.l.b16 %v41
  %v347 = vunpack.c.l.b16 %v42
  %v348 = vunpack.c.l.b16 %v43
  %v349 = vunpack.c.l.b16 %v44
  %v350 = vunpack.c.l.b16 %v45
  %v351 = vunpack.c.l.b16 %v46
  %v352 = vunpack.c.l.b16 %v47
  %v353 = vunpack.c.l.b16 %v48
  %v354 = vunpack.c.l.b16 %v49
  %v355 = vunpack.c.l.b16 %v50
  %v356 = vunpack.c.l.b16 %v51
  %v357 = vunpack.c.l.b16 %v52
  %v358 = vpack.c.b16 %v343, %v342
  %v359 = vpack.c.b16 %v345, %v344
  %v360 = vpack.c.b16 %v347, %v346
  %v361 = vpack.c.b16 %v349, %v348
  %v362 = vpack.c.b16 %v351, %v350
  %v363 = vpack.c.b16 %v353, %v352
  %v364 = vpack.c.b16 %v355, %v354
  %v365 = vpack.c.b16 %v357, %v356
  %374 = vmatprep.subr.bf16.mxu0 0
  %375 = vmatpush1.bf16.msra.mxu0 %v358
  %376 = vmatprep.subr.bf16.mxu0 0
  %377 = vmatpush1.bf16.msra.mxu0 %v359
  %378 = vmatprep.subr.bf16.mxu0 0
  %379 = vmatpush1.bf16.msra.mxu0 %v360
  %380 = vmatprep.subr.bf16.mxu0 0
  %381 = vmatpush1.bf16.msra.mxu0 %v361
  %382 = vmatprep.subr.bf16.mxu0 0
  %383 = vmatpush1.bf16.msra.mxu0 %v362
  %384 = vmatprep.subr.bf16.mxu0 0
  %385 = vmatpush1.bf16.msra.mxu0 %v363
  %386 = vmatprep.subr.bf16.mxu0 0
  %387 = vmatpush1.bf16.msra.mxu0 %v364
  %388 = vmatprep.subr.bf16.mxu0 0
  %389 = vmatpush1.bf16.msra.mxu0 %v365
  %390 = vmatprep.subr.bf16.mxu0 0
  %391 = vmatpush1.bf16.msra.mxu0 0
  %392 = vmatprep.subr.bf16.mxu0 0
  %393 = vmatpush1.bf16.msra.mxu0 0
  %394 = vmatprep.subr.bf16.mxu0 0
  %395 = vmatpush1.bf16.msra.mxu0 0
  %396 = vmatprep.subr.bf16.mxu0 0
  %397 = vmatpush1.bf16.msra.mxu0 0
  %398 = vmatprep.subr.bf16.mxu0 0
  %399 = vmatpush1.bf16.msra.mxu0 0
  %400 = vmatprep.subr.bf16.mxu0 0
  %401 = vmatpush1.bf16.msra.mxu0 0
  %402 = vmatprep.subr.bf16.mxu0 0
  %403 = vmatpush1.bf16.msra.mxu0 0
  %404 = vmatprep.subr.bf16.mxu0 0
  %405 = vmatpush1.bf16.msra.mxu0 0
  %406 = vmatprep.mubr.bf16.mxu0 0
  %407 = vmatmul.mubr.bf16.gmra.mrb[0].mxu0 %v310
  %v408 = vpop.f32.mrb[0].mxu0
  %v409 = vadd.f32 %v216, %v408
  %v410 = vpop.f32.mrb[0].mxu0
  %v411 = vpop.f32.mrb[0].mxu0
  %v412 = vadd.f32 %v219, %v411
  %v413 = vpop.f32.mrb[0].mxu0
  %414 = vmatprep.mubr.bf16.mxu0 0
  %415 = vmatmul.mubr.bf16.gmra.mrb[0].mxu0 %v311
  %v416 = vpop.f32.mrb[0].mxu0
  %v417 = vadd.f32 %v224, %v416
  %v418 = vpop.f32.mrb[0].mxu0
  %v419 = vpop.f32.mrb[0].mxu0
  %v420 = vadd.f32 %v227, %v419
  %v421 = vpop.f32.mrb[0].mxu0
  %422 = vmatprep.mubr.bf16.mxu0 0
  %423 = vmatmul.mubr.bf16.gmra.mrb[0].mxu0 %v312
  %v424 = vpop.f32.mrb[0].mxu0
  %v425 = vadd.f32 %v232, %v424
  %v426 = vpop.f32.mrb[0].mxu0
  %v427 = vpop.f32.mrb[0].mxu0
  %v428 = vadd.f32 %v235, %v427
  %v429 = vpop.f32.mrb[0].mxu0
  %430 = vmatprep.mubr.bf16.mxu0 0
  %431 = vmatmul.mubr.bf16.gmra.mrb[0].mxu0 %v313
  %v432 = vpop.f32.mrb[0].mxu0
  %v433 = vadd.f32 %v240, %v432
  %v434 = vpop.f32.mrb[0].mxu0
  %v435 = vpop.f32.mrb[0].mxu0
  %v436 = vadd.f32 %v243, %v435
  %v437 = vpop.f32.mrb[0].mxu0
  %438 = vmatprep.mubr.bf16.mxu0 0
  %439 = vmatmul.mubr.bf16.gmra.mrb[0].mxu0 %v314
  %v440 = vpop.f32.mrb[0].mxu0
  %v441 = vadd.f32 %v248, %v440
  %v442 = vpop.f32.mrb[0].mxu0
  %v443 = vpop.f32.mrb[0].mxu0
  %v444 = vadd.f32 %v251, %v443
  %v445 = vpop.f32.mrb[0].mxu0
  %446 = vmatprep.mubr.bf16.mxu0 0
  %447 = vmatmul.mubr.bf16.gmra.mrb[0].mxu0 %v315
  %v448 = vpop.f32.mrb[0].mxu0
  %v449 = vadd.f32 %v256, %v448
  %v450 = vpop.f32.mrb[0].mxu0
  %v451 = vpop.f32.mrb[0].mxu0
  %v452 = vadd.f32 %v259, %v451
  %v453 = vpop.f32.mrb[0].mxu0
  %454 = vmatprep.mubr.bf16.mxu0 0
  %455 = vmatmul.mubr.bf16.gmra.mrb[0].mxu0 %v316
  %v456 = vpop.f32.mrb[0].mxu0
  %v457 = vadd.f32 %v264, %v456
  %v458 = vpop.f32.mrb[0].mxu0
  %v459 = vpop.f32.mrb[0].mxu0
  %v460 = vadd.f32 %v267, %v459
  %v461 = vpop.f32.mrb[0].mxu0
  %462 = vmatprep.mubr.bf16.mxu0 0
  %463 = vmatmul.mubr.bf16.gmra.mrb[0].mxu0 %v317
  %v464 = vpop.f32.mrb[0].mxu0
  %v465 = vadd.f32 %v272, %v464
  %v466 = vpop.f32.mrb[0].mxu0
  %v467 = vpop.f32.mrb[0].mxu0
  %v468 = vadd.f32 %v275, %v467
  %v469 = vpop.f32.mrb[0].mxu0
  %470 = vdwg.mxu0
  %v471 = vld [vmem:[%s4] sm:$0x1]
  %v473 = vlaneseq
  %v474 = vshrl.u32 %v473, 7
  %v475 = vsub.s32 0, %v474
  %v476 = vrot.slane %v471, %v475
  %v478 = vadd.f32 %v409, %v476
  %v479 = vadd.f32 %v412, %v476
  %v480 = vadd.f32 %v417, %v476
  %v481 = vadd.f32 %v420, %v476
  %v482 = vadd.f32 %v425, %v476
  %v483 = vadd.f32 %v428, %v476
  %v484 = vadd.f32 %v433, %v476
  %v485 = vadd.f32 %v436, %v476
  %v486 = vadd.f32 %v441, %v476
  %v487 = vadd.f32 %v444, %v476
  %v488 = vadd.f32 %v449, %v476
  %v489 = vadd.f32 %v452, %v476
  %v490 = vadd.f32 %v457, %v476
  %v491 = vadd.f32 %v460, %v476
  %v492 = vadd.f32 %v465, %v476
  %v493 = vadd.f32 %v468, %v476
  %494 = vst [vmem:[%s5] sm:$0xff] %v478
  %495 = vst [vmem:[%s5 + $0x8] sm:$0xff] %v479
  %496 = vst [vmem:[%s5 + $0x10] sm:$0xff] %v480
  %497 = vst [vmem:[%s5 + $0x18] sm:$0xff] %v481
  %498 = vst [vmem:[%s5 + $0x20] sm:$0xff] %v482
  %499 = vst [vmem:[%s5 + $0x28] sm:$0xff] %v483
  %500 = vst [vmem:[%s5 + $0x30] sm:$0xff] %v484
  %501 = vst [vmem:[%s5 + $0x38] sm:$0xff] %v485
  %502 = vst [vmem:[%s5 + $0x40] sm:$0xff] %v486
  %503 = vst [vmem:[%s5 + $0x48] sm:$0xff] %v487
  %504 = vst [vmem:[%s5 + $0x50] sm:$0xff] %v488
  %505 = vst [vmem:[%s5 + $0x58] sm:$0xff] %v489
  %506 = vst [vmem:[%s5 + $0x60] sm:$0xff] %v490
  %507 = vst [vmem:[%s5 + $0x68] sm:$0xff] %v491
  %508 = vst [vmem:[%s5 + $0x70] sm:$0xff] %v492
  %509 = vst [vmem:[%s5 + $0x78] sm:$0xff] %v493
  // Predicated region
  $region22: #{lstm_crf_forward.5} parent=0 // pred_check
    _
  $region23: #{lstm_crf_forward.5} parent=0 // pred_check_branch
    %511 = sbr.rel (0) target = $region25
  $region24: #{lstm_crf_forward.5} parent=0 // pred_region
    _
  $region25: #{lstm_crf_forward.5} parent=0 // pred_fallthru
    _
  // Predicated region
  $region26: #{lstm_crf_forward.5} parent=0 // pred_check
    _
  $region27: #{lstm_crf_forward.5} parent=0 // pred_check_branch
    %513 = sbr.rel (0) target = $region29
  $region28: #{lstm_crf_forward.5} parent=0 // pred_region
    _
  $region29: #{lstm_crf_forward.5} parent=0 // pred_fallthru
    _

// kernel: lstm_crf_forward.3
$region0: #{lstm_crf_forward.3}
  #allocation0 [shape = 'u32[]', space=smem, size = 0x4, offset = 0x4, fixed_abs, tag = 'smem constant byte address 0x4 - core index']
  #allocation1 [shape = 'u32[144,128]{1,0:T(1,128)}', space=vmem, size = 0x12000, scoped, tag = 'internal scratch']
  %s0 = inlined_call_operand.vmem [shape: bf16[128,64], index: 0, kind: input, shape index: {}]
  %s1 = inlined_call_operand.vmem [shape: bf16[64,1024], index: 1, kind: input, shape index: {}]
  %s2 = inlined_call_operand.vmem [shape: f32[1,1024], index: 2, kind: input, shape index: {}]
  %s3 = inlined_call_operand.vmem [shape: f32[128,1024], index: 3, kind: output, shape index: {}]
  %s4 = sld [smem:[#allocation0]]
  $region22: #{lstm_crf_forward.3} parent=0
    _
  %s6 = ssub.s32 1, %s4
  %s7 = scalar_select 0, %s6, %s4
  // Predicated region
  $region2: #{lstm_crf_forward.3} parent=0 // pred_check
    _
  $region3: #{lstm_crf_forward.3} parent=0 // pred_check_branch
    %9 = sbr.rel (0) target = $region5
  $region4: #{lstm_crf_forward.3} parent=0 // pred_region
    _
  $region5: #{lstm_crf_forward.3} parent=0 // pred_fallthru
    _
  // Predicated region
  $region6: #{lstm_crf_forward.3} parent=0 // pred_check
    _
  $region7: #{lstm_crf_forward.3} parent=0 // pred_check_branch
    %11 = sbr.rel (0) target = $region9
  $region8: #{lstm_crf_forward.3} parent=0 // pred_region
    _
  $region9: #{lstm_crf_forward.3} parent=0 // pred_fallthru
    _
  // Predicated region
  $region10: #{lstm_crf_forward.3} parent=0 // pred_check
    _
  $region11: #{lstm_crf_forward.3} parent=0 // pred_check_branch
    %13 = sbr.rel (0) target = $region13
  $region12: #{lstm_crf_forward.3} parent=0 // pred_region
    _
  $region13: #{lstm_crf_forward.3} parent=0 // pred_fallthru
    _
  %v15 = vld [vmem:[%s0] sm:$0xf]
  %v16 = vld [vmem:[%s0 + $0x4] sm:$0xf]
  %v17 = vld [vmem:[%s0 + $0x8] sm:$0xf]
  %v18 = vld [vmem:[%s0 + $0xc] sm:$0xf]
  %v19 = vld [vmem:[%s0 + $0x10] sm:$0xf]
  %v20 = vld [vmem:[%s0 + $0x14] sm:$0xf]
  %v21 = vld [vmem:[%s0 + $0x18] sm:$0xf]
  %v22 = vld [vmem:[%s0 + $0x1c] sm:$0xf]
  %v23 = vld [vmem:[%s0 + $0x20] sm:$0xf]
  %v24 = vld [vmem:[%s0 + $0x24] sm:$0xf]
  %v25 = vld [vmem:[%s0 + $0x28] sm:$0xf]
  %v26 = vld [vmem:[%s0 + $0x2c] sm:$0xf]
  %v27 = vld [vmem:[%s0 + $0x30] sm:$0xf]
  %v28 = vld [vmem:[%s0 + $0x34] sm:$0xf]
  %v29 = vld [vmem:[%s0 + $0x38] sm:$0xf]
  %v30 = vld [vmem:[%s0 + $0x3c] sm:$0xf]
  %v31 = vld [vmem:[%s1] sm:$0xff]
  %v32 = vld [vmem:[%s1 + $0x8] sm:$0xff]
  %v33 = vld [vmem:[%s1 + $0x10] sm:$0xff]
  %v34 = vld [vmem:[%s1 + $0x18] sm:$0xff]
  %v35 = vld [vmem:[%s1 + $0x20] sm:$0xff]
  %v36 = vld [vmem:[%s1 + $0x28] sm:$0xff]
  %v37 = vld [vmem:[%s1 + $0x30] sm:$0xff]
  %v38 = vld [vmem:[%s1 + $0x38] sm:$0xff]
  %v39 = vld [vmem:[%s1 + $0x40] sm:$0xff]
  %v40 = vld [vmem:[%s1 + $0x48] sm:$0xff]
  %v41 = vld [vmem:[%s1 + $0x50] sm:$0xff]
  %v42 = vld [vmem:[%s1 + $0x58] sm:$0xff]
  %v43 = vld [vmem:[%s1 + $0x60] sm:$0xff]
  %v44 = vld [vmem:[%s1 + $0x68] sm:$0xff]
  %v45 = vld [vmem:[%s1 + $0x70] sm:$0xff]
  %v46 = vld [vmem:[%s1 + $0x78] sm:$0xff]
  %v47 = vld [vmem:[%s1 + $0x80] sm:$0xff]
  %v48 = vld [vmem:[%s1 + $0x88] sm:$0xff]
  %v49 = vld [vmem:[%s1 + $0x90] sm:$0xff]
  %v50 = vld [vmem:[%s1 + $0x98] sm:$0xff]
  %v51 = vld [vmem:[%s1 + $0xa0] sm:$0xff]
  %v52 = vld [vmem:[%s1 + $0xa8] sm:$0xff]
  %v53 = vld [vmem:[%s1 + $0xb0] sm:$0xff]
  %v54 = vld [vmem:[%s1 + $0xb8] sm:$0xff]
  %v55 = vld [vmem:[%s1 + $0xc0] sm:$0xff]
  %v56 = vld [vmem:[%s1 + $0xc8] sm:$0xff]
  %v57 = vld [vmem:[%s1 + $0xd0] sm:$0xff]
  %v58 = vld [vmem:[%s1 + $0xd8] sm:$0xff]
  %v59 = vld [vmem:[%s1 + $0xe0] sm:$0xff]
  %v60 = vld [vmem:[%s1 + $0xe8] sm:$0xff]
  %v61 = vld [vmem:[%s1 + $0xf0] sm:$0xff]
  %v62 = vld [vmem:[%s1 + $0xf8] sm:$0xff]
  %v63 = vld [vmem:[%s2] sm:$0xff]
  %v65 = vlaneseq
  %v66 = vshrl.u32 %v65, 7
  %v67 = vsub.s32 0, %v66
  %v68 = vrot.slane %v63, %v67
  %v69 = vlaneseq
  %v70 = vshrl.u32 %v69, 7
  %v71 = vsub.s32 1, %v70
  %v72 = vrot.slane %v63, %v71
  %v73 = vlaneseq
  %v74 = vshrl.u32 %v73, 7
  %v75 = vsub.s32 2, %v74
  %v76 = vrot.slane %v63, %v75
  %v77 = vlaneseq
  %v78 = vshrl.u32 %v77, 7
  %v79 = vsub.s32 3, %v78
  %v80 = vrot.slane %v63, %v79
  %v81 = vlaneseq
  %v82 = vshrl.u32 %v81, 7
  %v83 = vsub.s32 4, %v82
  %v84 = vrot.slane %v63, %v83
  %v85 = vlaneseq
  %v86 = vshrl.u32 %v85, 7
  %v87 = vsub.s32 5, %v86
  %v88 = vrot.slane %v63, %v87
  %v89 = vlaneseq
  %v90 = vshrl.u32 %v89, 7
  %v91 = vsub.s32 6, %v90
  %v92 = vrot.slane %v63, %v91
  %v93 = vlaneseq
  %v94 = vshrl.u32 %v93, 7
  %v95 = vsub.s32 7, %v94
  %v96 = vrot.slane %v63, %v95
  %v121 = vunpack.c.l.b16 %v15
  %v122 = vunpack.c.l.b16 %v16
  %v123 = vunpack.c.l.b16 %v17
  %v124 = vunpack.c.l.b16 %v18
  %v125 = vunpack.c.l.b16 %v19
  %v126 = vunpack.c.l.b16 %v20
  %v127 = vunpack.c.l.b16 %v21
  %v128 = vunpack.c.l.b16 %v22
  %v129 = vunpack.c.l.b16 %v23
  %v130 = vunpack.c.l.b16 %v24
  %v131 = vunpack.c.l.b16 %v25
  %v132 = vunpack.c.l.b16 %v26
  %v133 = vunpack.c.l.b16 %v27
  %v134 = vunpack.c.l.b16 %v28
  %v135 = vunpack.c.l.b16 %v29
  %v136 = vunpack.c.l.b16 %v30
  %v137 = vpack.c.b16 %v122, %v121
  %v138 = vpack.c.b16 %v124, %v123
  %v139 = vpack.c.b16 %v126, %v125
  %v140 = vpack.c.b16 %v128, %v127
  %v141 = vpack.c.b16 %v130, %v129
  %v142 = vpack.c.b16 %v132, %v131
  %v143 = vpack.c.b16 %v134, %v133
  %v144 = vpack.c.b16 %v136, %v135
  %v177 = vunpack.c.l.b16 %v31
  %v178 = vunpack.c.h.b16 %v31
  %v179 = vunpack.c.l.b16 %v32
  %v180 = vunpack.c.h.b16 %v32
  %v181 = vunpack.c.l.b16 %v33
  %v182 = vunpack.c.h.b16 %v33
  %v183 = vunpack.c.l.b16 %v34
  %v184 = vunpack.c.h.b16 %v34
  %v185 = vunpack.c.l.b16 %v35
  %v186 = vunpack.c.h.b16 %v35
  %v187 = vunpack.c.l.b16 %v36
  %v188 = vunpack.c.h.b16 %v36
  %v189 = vunpack.c.l.b16 %v37
  %v190 = vunpack.c.h.b16 %v37
  %v191 = vunpack.c.l.b16 %v38
  %v192 = vunpack.c.h.b16 %v38
  %v193 = vunpack.c.l.b16 %v39
  %v194 = vunpack.c.h.b16 %v39
  %v195 = vunpack.c.l.b16 %v40
  %v196 = vunpack.c.h.b16 %v40
  %v197 = vunpack.c.l.b16 %v41
  %v198 = vunpack.c.h.b16 %v41
  %v199 = vunpack.c.l.b16 %v42
  %v200 = vunpack.c.h.b16 %v42
  %v201 = vunpack.c.l.b16 %v43
  %v202 = vunpack.c.h.b16 %v43
  %v203 = vunpack.c.l.b16 %v44
  %v204 = vunpack.c.h.b16 %v44
  %v205 = vunpack.c.l.b16 %v45
  %v206 = vunpack.c.h.b16 %v45
  %v207 = vunpack.c.l.b16 %v46
  %v208 = vunpack.c.h.b16 %v46
  %v209 = vunpack.c.l.b16 %v47
  %v210 = vunpack.c.h.b16 %v47
  %v211 = vunpack.c.l.b16 %v48
  %v212 = vunpack.c.h.b16 %v48
  %v213 = vunpack.c.l.b16 %v49
  %v214 = vunpack.c.h.b16 %v49
  %v215 = vunpack.c.l.b16 %v50
  %v216 = vunpack.c.h.b16 %v50
  %v217 = vunpack.c.l.b16 %v51
  %v218 = vunpack.c.h.b16 %v51
  %v219 = vunpack.c.l.b16 %v52
  %v220 = vunpack.c.h.b16 %v52
  %v221 = vunpack.c.l.b16 %v53
  %v222 = vunpack.c.h.b16 %v53
  %v223 = vunpack.c.l.b16 %v54
  %v224 = vunpack.c.h.b16 %v54
  %v225 = vunpack.c.l.b16 %v55
  %v226 = vunpack.c.h.b16 %v55
  %v227 = vunpack.c.l.b16 %v56
  %v228 = vunpack.c.h.b16 %v56
  %v229 = vunpack.c.l.b16 %v57
  %v230 = vunpack.c.h.b16 %v57
  %v231 = vunpack.c.l.b16 %v58
  %v232 = vunpack.c.h.b16 %v58
  %v233 = vunpack.c.l.b16 %v59
  %v234 = vunpack.c.h.b16 %v59
  %v235 = vunpack.c.l.b16 %v60
  %v236 = vunpack.c.h.b16 %v60
  %v237 = vunpack.c.l.b16 %v61
  %v238 = vunpack.c.h.b16 %v61
  %v239 = vunpack.c.l.b16 %v62
  %v240 = vunpack.c.h.b16 %v62
  %v241 = vpack.c.b16 %v185, %v177
  %v242 = vpack.c.b16 %v186, %v178
  %v243 = vpack.c.b16 %v187, %v179
  %v244 = vpack.c.b16 %v188, %v180
  %v245 = vpack.c.b16 %v189, %v181
  %v246 = vpack.c.b16 %v190, %v182
  %v247 = vpack.c.b16 %v191, %v183
  %v248 = vpack.c.b16 %v192, %v184
  %v249 = vpack.c.b16 %v201, %v193
  %v250 = vpack.c.b16 %v202, %v194
  %v251 = vpack.c.b16 %v203, %v195
  %v252 = vpack.c.b16 %v204, %v196
  %v253 = vpack.c.b16 %v205, %v197
  %v254 = vpack.c.b16 %v206, %v198
  %v255 = vpack.c.b16 %v207, %v199
  %v256 = vpack.c.b16 %v208, %v200
  %v257 = vpack.c.b16 %v217, %v209
  %v258 = vpack.c.b16 %v218, %v210
  %v259 = vpack.c.b16 %v219, %v211
  %v260 = vpack.c.b16 %v220, %v212
  %v261 = vpack.c.b16 %v221, %v213
  %v262 = vpack.c.b16 %v222, %v214
  %v263 = vpack.c.b16 %v223, %v215
  %v264 = vpack.c.b16 %v224, %v216
  %v265 = vpack.c.b16 %v233, %v225
  %v266 = vpack.c.b16 %v234, %v226
  %v267 = vpack.c.b16 %v235, %v227
  %v268 = vpack.c.b16 %v236, %v228
  %v269 = vpack.c.b16 %v237, %v229
  %v270 = vpack.c.b16 %v238, %v230
  %v271 = vpack.c.b16 %v239, %v231
  %v272 = vpack.c.b16 %v240, %v232
  %vm305 = vcmask 523264
  %v307 = vsel %vm305, %v137, 0
  %v310 = vsel %vm305, %v138, 0
  %v313 = vsel %vm305, %v139, 0
  %v316 = vsel %vm305, %v140, 0
  %v319 = vsel %vm305, %v141, 0
  %v322 = vsel %vm305, %v142, 0
  %v325 = vsel %vm305, %v143, 0
  %v328 = vsel %vm305, %v144, 0
  %330 = vmatprep.subr.bf16.mxu0 %v242
  %331 = vmatpush1.bf16.msra.mxu0 %v241
  %332 = vmatprep.subr.bf16.mxu0 %v250
  %333 = vmatpush1.bf16.msra.mxu0 %v249
  %334 = vmatprep.subr.bf16.mxu0 %v258
  %335 = vmatpush1.bf16.msra.mxu0 %v257
  %336 = vmatprep.subr.bf16.mxu0 %v266
  %337 = vmatpush1.bf16.msra.mxu0 %v265
  %338 = vmatprep.subr.bf16.mxu0 0
  %339 = vmatpush1.bf16.msra.mxu0 0
  %340 = vmatprep.subr.bf16.mxu0 0
  %341 = vmatpush1.bf16.msra.mxu0 0
  %342 = vmatprep.subr.bf16.mxu0 0
  %343 = vmatpush1.bf16.msra.mxu0 0
  %344 = vmatprep.subr.bf16.mxu0 0
  %345 = vmatpush1.bf16.msra.mxu0 0
  %346 = vmatprep.subr.bf16.mxu0 0
  %347 = vmatpush1.bf16.msra.mxu0 0
  %348 = vmatprep.subr.bf16.mxu0 0
  %349 = vmatpush1.bf16.msra.mxu0 0
  %350 = vmatprep.subr.bf16.mxu0 0
  %351 = vmatpush1.bf16.msra.mxu0 0
  %352 = vmatprep.subr.bf16.mxu0 0
  %353 = vmatpush1.bf16.msra.mxu0 0
  %354 = vmatprep.subr.bf16.mxu0 0
  %355 = vmatpush1.bf16.msra.mxu0 0
  %356 = vmatprep.subr.bf16.mxu0 0
  %357 = vmatpush1.bf16.msra.mxu0 0
  %358 = vmatprep.subr.bf16.mxu0 0
  %359 = vmatpush1.bf16.msra.mxu0 0
  %360 = vmatprep.subr.bf16.mxu0 0
  %361 = vmatpush1.bf16.msra.mxu0 0
  %362 = vmatprep.mubr.bf16.mxu0 0
  %363 = vmatmul.mubr.bf16.gmra.mrb[0].mxu0 %v307
  %v364 = vpop.f32.mrb[0].mxu0
  %v365 = vadd.f32 %v68, %v364
  %v366 = vpop.f32.mrb[0].mxu0
  %v367 = vadd.f32 %v72, %v366
  %v368 = vpop.f32.mrb[0].mxu0
  %v369 = vadd.f32 %v68, %v368
  %v370 = vpop.f32.mrb[0].mxu0
  %v371 = vadd.f32 %v72, %v370
  %372 = vmatprep.mubr.bf16.mxu0 0
  %373 = vmatmul.mubr.bf16.gmra.mrb[0].mxu0 %v310
  %v374 = vpop.f32.mrb[0].mxu0
  %v375 = vadd.f32 %v68, %v374
  %v376 = vpop.f32.mrb[0].mxu0
  %v377 = vadd.f32 %v72, %v376
  %v378 = vpop.f32.mrb[0].mxu0
  %v379 = vadd.f32 %v68, %v378
  %v380 = vpop.f32.mrb[0].mxu0
  %v381 = vadd.f32 %v72, %v380
  %382 = vmatprep.mubr.bf16.mxu0 0
  %383 = vmatmul.mubr.bf16.gmra.mrb[0].mxu0 %v313
  %v384 = vpop.f32.mrb[0].mxu0
  %v385 = vadd.f32 %v68, %v384
  %v386 = vpop.f32.mrb[0].mxu0
  %v387 = vadd.f32 %v72, %v386
  %v388 = vpop.f32.mrb[0].mxu0
  %v389 = vadd.f32 %v68, %v388
  %v390 = vpop.f32.mrb[0].mxu0
  %v391 = vadd.f32 %v72, %v390
  %392 = vmatprep.mubr.bf16.mxu0 0
  %393 = vmatmul.mubr.bf16.gmra.mrb[0].mxu0 %v316
  %v394 = vpop.f32.mrb[0].mxu0
  %v395 = vadd.f32 %v68, %v394
  %v396 = vpop.f32.mrb[0].mxu0
  %v397 = vadd.f32 %v72, %v396
  %v398 = vpop.f32.mrb[0].mxu0
  %v399 = vadd.f32 %v68, %v398
  %v400 = vpop.f32.mrb[0].mxu0
  %v401 = vadd.f32 %v72, %v400
  %402 = vmatprep.mubr.bf16.mxu0 0
  %403 = vmatmul.mubr.bf16.gmra.mrb[0].mxu0 %v319
  %v404 = vpop.f32.mrb[0].mxu0
  %v405 = vadd.f32 %v68, %v404
  %v406 = vpop.f32.mrb[0].mxu0
  %v407 = vadd.f32 %v72, %v406
  %v408 = vpop.f32.mrb[0].mxu0
  %v409 = vadd.f32 %v68, %v408
  %v410 = vpop.f32.mrb[0].mxu0
  %v411 = vadd.f32 %v72, %v410
  %412 = vmatprep.mubr.bf16.mxu0 0
  %413 = vmatmul.mubr.bf16.gmra.mrb[0].mxu0 %v322
  %v414 = vpop.f32.mrb[0].mxu0
  %v415 = vadd.f32 %v68, %v414
  %v416 = vpop.f32.mrb[0].mxu0
  %v417 = vadd.f32 %v72, %v416
  %v418 = vpop.f32.mrb[0].mxu0
  %v419 = vadd.f32 %v68, %v418
  %v420 = vpop.f32.mrb[0].mxu0
  %v421 = vadd.f32 %v72, %v420
  %422 = vmatprep.mubr.bf16.mxu0 0
  %423 = vmatmul.mubr.bf16.gmra.mrb[0].mxu0 %v325
  %v424 = vpop.f32.mrb[0].mxu0
  %v425 = vadd.f32 %v68, %v424
  %v426 = vpop.f32.mrb[0].mxu0
  %v427 = vadd.f32 %v72, %v426
  %v428 = vpop.f32.mrb[0].mxu0
  %v429 = vadd.f32 %v68, %v428
  %v430 = vpop.f32.mrb[0].mxu0
  %v431 = vadd.f32 %v72, %v430
  %432 = vmatprep.mubr.bf16.mxu0 0
  %433 = vmatmul.mubr.bf16.gmra.mrb[0].mxu0 %v328
  %v434 = vpop.f32.mrb[0].mxu0
  %v435 = vadd.f32 %v68, %v434
  %v436 = vpop.f32.mrb[0].mxu0
  %v437 = vadd.f32 %v72, %v436
  %v438 = vpop.f32.mrb[0].mxu0
  %v439 = vadd.f32 %v68, %v438
  %v440 = vpop.f32.mrb[0].mxu0
  %v441 = vadd.f32 %v72, %v440
  %442 = vdwg.mxu0
  %443 = vmatprep.subr.bf16.mxu0 %v244
  %444 = vmatpush1.bf16.msra.mxu0 %v243
  %445 = vmatprep.subr.bf16.mxu0 %v252
  %446 = vmatpush1.bf16.msra.mxu0 %v251
  %447 = vmatprep.subr.bf16.mxu0 %v260
  %448 = vmatpush1.bf16.msra.mxu0 %v259
  %449 = vmatprep.subr.bf16.mxu0 %v268
  %450 = vmatpush1.bf16.msra.mxu0 %v267
  %451 = vmatprep.subr.bf16.mxu0 0
  %452 = vmatpush1.bf16.msra.mxu0 0
  %453 = vmatprep.subr.bf16.mxu0 0
  %454 = vmatpush1.bf16.msra.mxu0 0
  %455 = vmatprep.subr.bf16.mxu0 0
  %456 = vmatpush1.bf16.msra.mxu0 0
  %457 = vmatprep.subr.bf16.mxu0 0
  %458 = vmatpush1.bf16.msra.mxu0 0
  %459 = vmatprep.subr.bf16.mxu0 0
  %460 = vmatpush1.bf16.msra.mxu0 0
  %461 = vmatprep.subr.bf16.mxu0 0
  %462 = vmatpush1.bf16.msra.mxu0 0
  %463 = vmatprep.subr.bf16.mxu0 0
  %464 = vmatpush1.bf16.msra.mxu0 0
  %465 = vmatprep.subr.bf16.mxu0 0
  %466 = vmatpush1.bf16.msra.mxu0 0
  %467 = vmatprep.subr.bf16.mxu0 0
  %468 = vmatpush1.bf16.msra.mxu0 0
  %469 = vmatprep.subr.bf16.mxu0 0
  %470 = vmatpush1.bf16.msra.mxu0 0
  %471 = vmatprep.subr.bf16.mxu0 0
  %472 = vmatpush1.bf16.msra.mxu0 0
  %473 = vmatprep.subr.bf16.mxu0 0
  %474 = vmatpush1.bf16.msra.mxu0 0
  %475 = vmatprep.mubr.bf16.mxu0 0
  %476 = vmatmul.mubr.bf16.gmra.mrb[0].mxu0 %v307
  %v477 = vpop.f32.mrb[0].mxu0
  %v478 = vadd.f32 %v76, %v477
  %v479 = vpop.f32.mrb[0].mxu0
  %v480 = vadd.f32 %v80, %v479
  %v481 = vpop.f32.mrb[0].mxu0
  %v482 = vadd.f32 %v76, %v481
  %v483 = vpop.f32.mrb[0].mxu0
  %v484 = vadd.f32 %v80, %v483
  %485 = vmatprep.mubr.bf16.mxu0 0
  %486 = vmatmul.mubr.bf16.gmra.mrb[0].mxu0 %v310
  %v487 = vpop.f32.mrb[0].mxu0
  %v488 = vadd.f32 %v76, %v487
  %v489 = vpop.f32.mrb[0].mxu0
  %v490 = vadd.f32 %v80, %v489
  %v491 = vpop.f32.mrb[0].mxu0
  %v492 = vadd.f32 %v76, %v491
  %v493 = vpop.f32.mrb[0].mxu0
  %v494 = vadd.f32 %v80, %v493
  %495 = vmatprep.mubr.bf16.mxu0 0
  %496 = vmatmul.mubr.bf16.gmra.mrb[0].mxu0 %v313
  %v497 = vpop.f32.mrb[0].mxu0
  %v498 = vadd.f32 %v76, %v497
  %v499 = vpop.f32.mrb[0].mxu0
  %v500 = vadd.f32 %v80, %v499
  %v501 = vpop.f32.mrb[0].mxu0
  %v502 = vadd.f32 %v76, %v501
  %v503 = vpop.f32.mrb[0].mxu0
  %v504 = vadd.f32 %v80, %v503
  %505 = vmatprep.mubr.bf16.mxu0 0
  %506 = vmatmul.mubr.bf16.gmra.mrb[0].mxu0 %v316
  %v507 = vpop.f32.mrb[0].mxu0
  %v508 = vadd.f32 %v76, %v507
  %v509 = vpop.f32.mrb[0].mxu0
  %v510 = vadd.f32 %v80, %v509
  %v511 = vpop.f32.mrb[0].mxu0
  %v512 = vadd.f32 %v76, %v511
  %v513 = vpop.f32.mrb[0].mxu0
  %v514 = vadd.f32 %v80, %v513
  %515 = vmatprep.mubr.bf16.mxu0 0
  %516 = vmatmul.mubr.bf16.gmra.mrb[0].mxu0 %v319
  %v517 = vpop.f32.mrb[0].mxu0
  %v518 = vadd.f32 %v76, %v517
  %v519 = vpop.f32.mrb[0].mxu0
  %v520 = vadd.f32 %v80, %v519
  %v521 = vpop.f32.mrb[0].mxu0
  %v522 = vadd.f32 %v76, %v521
  %v523 = vpop.f32.mrb[0].mxu0
  %v524 = vadd.f32 %v80, %v523
  %525 = vmatprep.mubr.bf16.mxu0 0
  %526 = vmatmul.mubr.bf16.gmra.mrb[0].mxu0 %v322
  %v527 = vpop.f32.mrb[0].mxu0
  %v528 = vadd.f32 %v76, %v527
  %v529 = vpop.f32.mrb[0].mxu0
  %v530 = vadd.f32 %v80, %v529
  %v531 = vpop.f32.mrb[0].mxu0
  %v532 = vadd.f32 %v76, %v531
  %v533 = vpop.f32.mrb[0].mxu0
  %v534 = vadd.f32 %v80, %v533
  %535 = vmatprep.mubr.bf16.mxu0 0
  %536 = vmatmul.mubr.bf16.gmra.mrb[0].mxu0 %v325
  %v537 = vpop.f32.mrb[0].mxu0
  %v538 = vadd.f32 %v76, %v537
  %v539 = vpop.f32.mrb[0].mxu0
  %v540 = vadd.f32 %v80, %v539
  %v541 = vpop.f32.mrb[0].mxu0
  %v542 = vadd.f32 %v76, %v541
  %v543 = vpop.f32.mrb[0].mxu0
  %v544 = vadd.f32 %v80, %v543
  %545 = vmatprep.mubr.bf16.mxu0 0
  %546 = vmatmul.mubr.bf16.gmra.mrb[0].mxu0 %v328
  %v547 = vpop.f32.mrb[0].mxu0
  %v548 = vadd.f32 %v76, %v547
  %v549 = vpop.f32.mrb[0].mxu0
  %v550 = vadd.f32 %v80, %v549
  %v551 = vpop.f32.mrb[0].mxu0
  %v552 = vadd.f32 %v76, %v551
  %v553 = vpop.f32.mrb[0].mxu0
  %v554 = vadd.f32 %v80, %v553
  %555 = vdwg.mxu0
  %556 = vmatprep.subr.bf16.mxu0 %v246
  %557 = vmatpush1.bf16.msra.mxu0 %v245
  %558 = vmatprep.subr.bf16.mxu0 %v254
  %559 = vmatpush1.bf16.msra.mxu0 %v253
  %560 = vmatprep.subr.bf16.mxu0 %v262
  %561 = vmatpush1.bf16.msra.mxu0 %v261
  %562 = vmatprep.subr.bf16.mxu0 %v270
  %563 = vmatpush1.bf16.msra.mxu0 %v269
  %564 = vmatprep.subr.bf16.mxu0 0
  %565 = vmatpush1.bf16.msra.mxu0 0
  %566 = vmatprep.subr.bf16.mxu0 0
  %567 = vmatpush1.bf16.msra.mxu0 0
  %568 = vmatprep.subr.bf16.mxu0 0
  %569 = vmatpush1.bf16.msra.mxu0 0
  %570 = vmatprep.subr.bf16.mxu0 0
  %571 = vmatpush1.bf16.msra.mxu0 0
  %572 = vmatprep.subr.bf16.mxu0 0
  %573 = vmatpush1.bf16.msra.mxu0 0
  %574 = vmatprep.subr.bf16.mxu0 0
  %575 = vmatpush1.bf16.msra.mxu0 0
  %576 = vmatprep.subr.bf16.mxu0 0
  %577 = vmatpush1.bf16.msra.mxu0 0
  %578 = vmatprep.subr.bf16.mxu0 0
  %579 = vmatpush1.bf16.msra.mxu0 0
  %580 = vmatprep.subr.bf16.mxu0 0
  %581 = vmatpush1.bf16.msra.mxu0 0
  %582 = vmatprep.subr.bf16.mxu0 0
  %583 = vmatpush1.bf16.msra.mxu0 0
  %584 = vmatprep.subr.bf16.mxu0 0
  %585 = vmatpush1.bf16.msra.mxu0 0
  %586 = vmatprep.subr.bf16.mxu0 0
  %587 = vmatpush1.bf16.msra.mxu0 0
  %588 = vmatprep.mubr.bf16.mxu0 0
  %589 = vmatmul.mubr.bf16.gmra.mrb[0].mxu0 %v307
  %v590 = vpop.f32.mrb[0].mxu0
  %v591 = vadd.f32 %v84, %v590
  %v592 = vpop.f32.mrb[0].mxu0
  %v593 = vadd.f32 %v88, %v592
  %v594 = vpop.f32.mrb[0].mxu0
  %v595 = vadd.f32 %v84, %v594
  %v596 = vpop.f32.mrb[0].mxu0
  %v597 = vadd.f32 %v88, %v596
  %598 = vmatprep.mubr.bf16.mxu0 0
  %599 = vmatmul.mubr.bf16.gmra.mrb[0].mxu0 %v310
  %v600 = vpop.f32.mrb[0].mxu0
  %v601 = vadd.f32 %v84, %v600
  %v602 = vpop.f32.mrb[0].mxu0
  %v603 = vadd.f32 %v88, %v602
  %v604 = vpop.f32.mrb[0].mxu0
  %v605 = vadd.f32 %v84, %v604
  %v606 = vpop.f32.mrb[0].mxu0
  %v607 = vadd.f32 %v88, %v606
  %608 = vmatprep.mubr.bf16.mxu0 0
  %609 = vmatmul.mubr.bf16.gmra.mrb[0].mxu0 %v313
  %v610 = vpop.f32.mrb[0].mxu0
  %v611 = vadd.f32 %v84, %v610
  %v612 = vpop.f32.mrb[0].mxu0
  %v613 = vadd.f32 %v88, %v612
  %v614 = vpop.f32.mrb[0].mxu0
  %v615 = vadd.f32 %v84, %v614
  %v616 = vpop.f32.mrb[0].mxu0
  %v617 = vadd.f32 %v88, %v616
  %618 = vmatprep.mubr.bf16.mxu0 0
  %619 = vmatmul.mubr.bf16.gmra.mrb[0].mxu0 %v316
  %v620 = vpop.f32.mrb[0].mxu0
  %v621 = vadd.f32 %v84, %v620
  %v622 = vpop.f32.mrb[0].mxu0
  %v623 = vadd.f32 %v88, %v622
  %v624 = vpop.f32.mrb[0].mxu0
  %v625 = vadd.f32 %v84, %v624
  %v626 = vpop.f32.mrb[0].mxu0
  %v627 = vadd.f32 %v88, %v626
  %628 = vmatprep.mubr.bf16.mxu0 0
  %629 = vmatmul.mubr.bf16.gmra.mrb[0].mxu0 %v319
  %v630 = vpop.f32.mrb[0].mxu0
  %v631 = vadd.f32 %v84, %v630
  %v632 = vpop.f32.mrb[0].mxu0
  %v633 = vadd.f32 %v88, %v632
  %v634 = vpop.f32.mrb[0].mxu0
  %v635 = vadd.f32 %v84, %v634
  %v636 = vpop.f32.mrb[0].mxu0
  %v637 = vadd.f32 %v88, %v636
  %638 = vmatprep.mubr.bf16.mxu0 0
  %639 = vmatmul.mubr.bf16.gmra.mrb[0].mxu0 %v322
  %v640 = vpop.f32.mrb[0].mxu0
  %v641 = vadd.f32 %v84, %v640
  %v642 = vpop.f32.mrb[0].mxu0
  %v643 = vadd.f32 %v88, %v642
  %v644 = vpop.f32.mrb[0].mxu0
  %v645 = vadd.f32 %v84, %v644
  %v646 = vpop.f32.mrb[0].mxu0
  %v647 = vadd.f32 %v88, %v646
  %648 = vmatprep.mubr.bf16.mxu0 0
  %649 = vmatmul.mubr.bf16.gmra.mrb[0].mxu0 %v325
  %v650 = vpop.f32.mrb[0].mxu0
  %v651 = vadd.f32 %v84, %v650
  %v652 = vpop.f32.mrb[0].mxu0
  %v653 = vadd.f32 %v88, %v652
  %v654 = vpop.f32.mrb[0].mxu0
  %v655 = vadd.f32 %v84, %v654
  %v656 = vpop.f32.mrb[0].mxu0
  %v657 = vadd.f32 %v88, %v656
  %658 = vmatprep.mubr.bf16.mxu0 0
  %659 = vmatmul.mubr.bf16.gmra.mrb[0].mxu0 %v328
  %v660 = vpop.f32.mrb[0].mxu0
  %v661 = vadd.f32 %v84, %v660
  %v662 = vpop.f32.mrb[0].mxu0
  %v663 = vadd.f32 %v88, %v662
  %v664 = vpop.f32.mrb[0].mxu0
  %v665 = vadd.f32 %v84, %v664
  %v666 = vpop.f32.mrb[0].mxu0
  %v667 = vadd.f32 %v88, %v666
  %668 = vdwg.mxu0
  %669 = vmatprep.subr.bf16.mxu0 %v248
  %670 = vmatpush1.bf16.msra.mxu0 %v247
  %671 = vmatprep.subr.bf16.mxu0 %v256
  %672 = vmatpush1.bf16.msra.mxu0 %v255
  %673 = vmatprep.subr.bf16.mxu0 %v264
  %674 = vmatpush1.bf16.msra.mxu0 %v263
  %675 = vmatprep.subr.bf16.mxu0 %v272
  %676 = vmatpush1.bf16.msra.mxu0 %v271
  %677 = vmatprep.subr.bf16.mxu0 0
  %678 = vmatpush1.bf16.msra.mxu0 0
  %679 = vmatprep.subr.bf16.mxu0 0
  %680 = vmatpush1.bf16.msra.mxu0 0
  %681 = vmatprep.subr.bf16.mxu0 0
  %682 = vmatpush1.bf16.msra.mxu0 0
  %683 = vmatprep.subr.bf16.mxu0 0
  %684 = vmatpush1.bf16.msra.mxu0 0
  %685 = vmatprep.subr.bf16.mxu0 0
  %686 = vmatpush1.bf16.msra.mxu0 0
  %687 = vmatprep.subr.bf16.mxu0 0
  %688 = vmatpush1.bf16.msra.mxu0 0
  %689 = vmatprep.subr.bf16.mxu0 0
  %690 = vmatpush1.bf16.msra.mxu0 0
  %691 = vmatprep.subr.bf16.mxu0 0
  %692 = vmatpush1.bf16.msra.mxu0 0
  %693 = vmatprep.subr.bf16.mxu0 0
  %694 = vmatpush1.bf16.msra.mxu0 0
  %695 = vmatprep.subr.bf16.mxu0 0
  %696 = vmatpush1.bf16.msra.mxu0 0
  %697 = vmatprep.subr.bf16.mxu0 0
  %698 = vmatpush1.bf16.msra.mxu0 0
  %699 = vmatprep.subr.bf16.mxu0 0
  %700 = vmatpush1.bf16.msra.mxu0 0
  %701 = vmatprep.mubr.bf16.mxu0 0
  %702 = vmatmul.mubr.bf16.gmra.mrb[0].mxu0 %v307
  %v703 = vpop.f32.mrb[0].mxu0
  %v704 = vadd.f32 %v92, %v703
  %v705 = vpop.f32.mrb[0].mxu0
  %v706 = vadd.f32 %v96, %v705
  %v707 = vpop.f32.mrb[0].mxu0
  %v708 = vadd.f32 %v92, %v707
  %v709 = vpop.f32.mrb[0].mxu0
  %v710 = vadd.f32 %v96, %v709
  %711 = vmatprep.mubr.bf16.mxu0 0
  %712 = vmatmul.mubr.bf16.gmra.mrb[0].mxu0 %v310
  %v713 = vpop.f32.mrb[0].mxu0
  %v714 = vadd.f32 %v92, %v713
  %v715 = vpop.f32.mrb[0].mxu0
  %v716 = vadd.f32 %v96, %v715
  %v717 = vpop.f32.mrb[0].mxu0
  %v718 = vadd.f32 %v92, %v717
  %v719 = vpop.f32.mrb[0].mxu0
  %v720 = vadd.f32 %v96, %v719
  %721 = vmatprep.mubr.bf16.mxu0 0
  %722 = vmatmul.mubr.bf16.gmra.mrb[0].mxu0 %v313
  %v723 = vpop.f32.mrb[0].mxu0
  %v724 = vadd.f32 %v92, %v723
  %v725 = vpop.f32.mrb[0].mxu0
  %v726 = vadd.f32 %v96, %v725
  %v727 = vpop.f32.mrb[0].mxu0
  %v728 = vadd.f32 %v92, %v727
  %v729 = vpop.f32.mrb[0].mxu0
  %v730 = vadd.f32 %v96, %v729
  %731 = vmatprep.mubr.bf16.mxu0 0
  %732 = vmatmul.mubr.bf16.gmra.mrb[0].mxu0 %v316
  %v733 = vpop.f32.mrb[0].mxu0
  %v734 = vadd.f32 %v92, %v733
  %v735 = vpop.f32.mrb[0].mxu0
  %v736 = vadd.f32 %v96, %v735
  %v737 = vpop.f32.mrb[0].mxu0
  %v738 = vadd.f32 %v92, %v737
  %v739 = vpop.f32.mrb[0].mxu0
  %v740 = vadd.f32 %v96, %v739
  %741 = vmatprep.mubr.bf16.mxu0 0
  %742 = vmatmul.mubr.bf16.gmra.mrb[0].mxu0 %v319
  %v743 = vpop.f32.mrb[0].mxu0
  %v744 = vadd.f32 %v92, %v743
  %v745 = vpop.f32.mrb[0].mxu0
  %v746 = vadd.f32 %v96, %v745
  %v747 = vpop.f32.mrb[0].mxu0
  %v748 = vadd.f32 %v92, %v747
  %v749 = vpop.f32.mrb[0].mxu0
  %v750 = vadd.f32 %v96, %v749
  %751 = vmatprep.mubr.bf16.mxu0 0
  %752 = vmatmul.mubr.bf16.gmra.mrb[0].mxu0 %v322
  %v753 = vpop.f32.mrb[0].mxu0
  %v754 = vadd.f32 %v92, %v753
  %v755 = vpop.f32.mrb[0].mxu0
  %v756 = vadd.f32 %v96, %v755
  %v757 = vpop.f32.mrb[0].mxu0
  %v758 = vadd.f32 %v92, %v757
  %v759 = vpop.f32.mrb[0].mxu0
  %v760 = vadd.f32 %v96, %v759
  %761 = vmatprep.mubr.bf16.mxu0 0
  %762 = vmatmul.mubr.bf16.gmra.mrb[0].mxu0 %v325
  %v763 = vpop.f32.mrb[0].mxu0
  %v764 = vadd.f32 %v92, %v763
  %v765 = vpop.f32.mrb[0].mxu0
  %v766 = vadd.f32 %v96, %v765
  %v767 = vpop.f32.mrb[0].mxu0
  %v768 = vadd.f32 %v92, %v767
  %v769 = vpop.f32.mrb[0].mxu0
  %v770 = vadd.f32 %v96, %v769
  %771 = vmatprep.mubr.bf16.mxu0 0
  %772 = vmatmul.mubr.bf16.gmra.mrb[0].mxu0 %v328
  %v773 = vpop.f32.mrb[0].mxu0
  %v774 = vadd.f32 %v92, %v773
  %v775 = vpop.f32.mrb[0].mxu0
  %v776 = vadd.f32 %v96, %v775
  %v777 = vpop.f32.mrb[0].mxu0
  %v778 = vadd.f32 %v92, %v777
  %v779 = vpop.f32.mrb[0].mxu0
  %v780 = vadd.f32 %v96, %v779
  %781 = vdwg.mxu0
  %782 = vst [vmem:[%s3] sm:$0xff] %v365
  %783 = vst [vmem:[%s3 + $0x8] sm:$0xff] %v367
  %784 = vst [vmem:[%s3 + $0x10] sm:$0xff] %v478
  %785 = vst [vmem:[%s3 + $0x18] sm:$0xff] %v480
  %786 = vst [vmem:[%s3 + $0x20] sm:$0xff] %v591
  %787 = vst [vmem:[%s3 + $0x28] sm:$0xff] %v593
  %788 = vst [vmem:[%s3 + $0x30] sm:$0xff] %v704
  %789 = vst [vmem:[%s3 + $0x38] sm:$0xff] %v706
  %790 = vst [vmem:[%s3 + $0x40] sm:$0xff] %v369
  %791 = vst [vmem:[%s3 + $0x48] sm:$0xff] %v371
  %792 = vst [vmem:[%s3 + $0x50] sm:$0xff] %v482
  %793 = vst [vmem:[%s3 + $0x58] sm:$0xff] %v484
  %794 = vst [vmem:[%s3 + $0x60] sm:$0xff] %v595
  %795 = vst [vmem:[%s3 + $0x68] sm:$0xff] %v597
  %796 = vst [vmem:[%s3 + $0x70] sm:$0xff] %v708
  %797 = vst [vmem:[%s3 + $0x78] sm:$0xff] %v710
  %798 = vst [vmem:[%s3 + $0x80] sm:$0xff] %v375
  %799 = vst [vmem:[%s3 + $0x88] sm:$0xff] %v377
  %800 = vst [vmem:[%s3 + $0x90] sm:$0xff] %v488
  %801 = vst [vmem:[%s3 + $0x98] sm:$0xff] %v490
  %802 = vst [vmem:[%s3 + $0xa0] sm:$0xff] %v601
  %803 = vst [vmem:[%s3 + $0xa8] sm:$0xff] %v603
  %804 = vst [vmem:[%s3 + $0xb0] sm:$0xff] %v714
  %805 = vst [vmem:[%s3 + $0xb8] sm:$0xff] %v716
  %806 = vst [vmem:[%s3 + $0xc0] sm:$0xff] %v379
  %807 = vst [vmem:[%s3 + $0xc8] sm:$0xff] %v381
  %808 = vst [vmem:[%s3 + $0xd0] sm:$0xff] %v492
  %809 = vst [vmem:[%s3 + $0xd8] sm:$0xff] %v494
  %810 = vst [vmem:[%s3 + $0xe0] sm:$0xff] %v605
  %811 = vst [vmem:[%s3 + $0xe8] sm:$0xff] %v607
  %812 = vst [vmem:[%s3 + $0xf0] sm:$0xff] %v718
  %813 = vst [vmem:[%s3 + $0xf8] sm:$0xff] %v720
  %814 = vst [vmem:[%s3 + $0x100] sm:$0xff] %v385
  %815 = vst [vmem:[%s3 + $0x108] sm:$0xff] %v387
  %816 = vst [vmem:[%s3 + $0x110] sm:$0xff] %v498
  %817 = vst [vmem:[%s3 + $0x118] sm:$0xff] %v500
  %818 = vst [vmem:[%s3 + $0x120] sm:$0xff] %v611
  %819 = vst [vmem:[%s3 + $0x128] sm:$0xff] %v613
  %820 = vst [vmem:[%s3 + $0x130] sm:$0xff] %v724
  %821 = vst [vmem:[%s3 + $0x138] sm:$0xff] %v726
  %822 = vst [vmem:[%s3 + $0x140] sm:$0xff] %v389
  %823 = vst [vmem:[%s3 + $0x148] sm:$0xff] %v391
  %824 = vst [vmem:[%s3 + $0x150] sm:$0xff] %v502
  %825 = vst [vmem:[%s3 + $0x158] sm:$0xff] %v504
  %826 = vst [vmem:[%s3 + $0x160] sm:$0xff] %v615
  %827 = vst [vmem:[%s3 + $0x168] sm:$0xff] %v617
  %828 = vst [vmem:[%s3 + $0x170] sm:$0xff] %v728
  %829 = vst [vmem:[%s3 + $0x178] sm:$0xff] %v730
  %830 = vst [vmem:[%s3 + $0x180] sm:$0xff] %v395
  %831 = vst [vmem:[%s3 + $0x188] sm:$0xff] %v397
  %832 = vst [vmem:[%s3 + $0x190] sm:$0xff] %v508
  %833 = vst [vmem:[%s3 + $0x198] sm:$0xff] %v510
  %834 = vst [vmem:[%s3 + $0x1a0] sm:$0xff] %v621
  %835 = vst [vmem:[%s3 + $0x1a8] sm:$0xff] %v623
  %836 = vst [vmem:[%s3 + $0x1b0] sm:$0xff] %v734
  %837 = vst [vmem:[%s3 + $0x1b8] sm:$0xff] %v736
  %838 = vst [vmem:[%s3 + $0x1c0] sm:$0xff] %v399
  %839 = vst [vmem:[%s3 + $0x1c8] sm:$0xff] %v401
  %840 = vst [vmem:[%s3 + $0x1d0] sm:$0xff] %v512
  %841 = vst [vmem:[%s3 + $0x1d8] sm:$0xff] %v514
  %842 = vst [vmem:[%s3 + $0x1e0] sm:$0xff] %v625
  %843 = vst [vmem:[%s3 + $0x1e8] sm:$0xff] %v627
  %844 = vst [vmem:[%s3 + $0x1f0] sm:$0xff] %v738
  %845 = vst [vmem:[%s3 + $0x1f8] sm:$0xff] %v740
  %846 = vst [vmem:[%s3 + $0x200] sm:$0xff] %v405
  %847 = vst [vmem:[%s3 + $0x208] sm:$0xff] %v407
  %848 = vst [vmem:[%s3 + $0x210] sm:$0xff] %v518
  %849 = vst [vmem:[%s3 + $0x218] sm:$0xff] %v520
  %850 = vst [vmem:[%s3 + $0x220] sm:$0xff] %v631
  %851 = vst [vmem:[%s3 + $0x228] sm:$0xff] %v633
  %852 = vst [vmem:[%s3 + $0x230] sm:$0xff] %v744
  %853 = vst [vmem:[%s3 + $0x238] sm:$0xff] %v746
  %854 = vst [vmem:[%s3 + $0x240] sm:$0xff] %v409
  %855 = vst [vmem:[%s3 + $0x248] sm:$0xff] %v411
  %856 = vst [vmem:[%s3 + $0x250] sm:$0xff] %v522
  %857 = vst [vmem:[%s3 + $0x258] sm:$0xff] %v524
  %858 = vst [vmem:[%s3 + $0x260] sm:$0xff] %v635
  %859 = vst [vmem:[%s3 + $0x268] sm:$0xff] %v637
  %860 = vst [vmem:[%s3 + $0x270] sm:$0xff] %v748
  %861 = vst [vmem:[%s3 + $0x278] sm:$0xff] %v750
  %862 = vst [vmem:[%s3 + $0x280] sm:$0xff] %v415
  %863 = vst [vmem:[%s3 + $0x288] sm:$0xff] %v417
  %864 = vst [vmem:[%s3 + $0x290] sm:$0xff] %v528
  %865 = vst [vmem:[%s3 + $0x298] sm:$0xff] %v530
  %866 = vst [vmem:[%s3 + $0x2a0] sm:$0xff] %v641
  %867 = vst [vmem:[%s3 + $0x2a8] sm:$0xff] %v643
  %868 = vst [vmem:[%s3 + $0x2b0] sm:$0xff] %v754
  %869 = vst [vmem:[%s3 + $0x2b8] sm:$0xff] %v756
  %870 = vst [vmem:[%s3 + $0x2c0] sm:$0xff] %v419
  %871 = vst [vmem:[%s3 + $0x2c8] sm:$0xff] %v421
  %872 = vst [vmem:[%s3 + $0x2d0] sm:$0xff] %v532
  %873 = vst [vmem:[%s3 + $0x2d8] sm:$0xff] %v534
  %874 = vst [vmem:[%s3 + $0x2e0] sm:$0xff] %v645
  %875 = vst [vmem:[%s3 + $0x2e8] sm:$0xff] %v647
  %876 = vst [vmem:[%s3 + $0x2f0] sm:$0xff] %v758
  %877 = vst [vmem:[%s3 + $0x2f8] sm:$0xff] %v760
  %878 = vst [vmem:[%s3 + $0x300] sm:$0xff] %v425
  %879 = vst [vmem:[%s3 + $0x308] sm:$0xff] %v427
  %880 = vst [vmem:[%s3 + $0x310] sm:$0xff] %v538
  %881 = vst [vmem:[%s3 + $0x318] sm:$0xff] %v540
  %882 = vst [vmem:[%s3 + $0x320] sm:$0xff] %v651
  %883 = vst [vmem:[%s3 + $0x328] sm:$0xff] %v653
  %884 = vst [vmem:[%s3 + $0x330] sm:$0xff] %v764
  %885 = vst [vmem:[%s3 + $0x338] sm:$0xff] %v766
  %886 = vst [vmem:[%s3 + $0x340] sm:$0xff] %v429
  %887 = vst [vmem:[%s3 + $0x348] sm:$0xff] %v431
  %888 = vst [vmem:[%s3 + $0x350] sm:$0xff] %v542
  %889 = vst [vmem:[%s3 + $0x358] sm:$0xff] %v544
  %890 = vst [vmem:[%s3 + $0x360] sm:$0xff] %v655
  %891 = vst [vmem:[%s3 + $0x368] sm:$0xff] %v657
  %892 = vst [vmem:[%s3 + $0x370] sm:$0xff] %v768
  %893 = vst [vmem:[%s3 + $0x378] sm:$0xff] %v770
  %894 = vst [vmem:[%s3 + $0x380] sm:$0xff] %v435
  %895 = vst [vmem:[%s3 + $0x388] sm:$0xff] %v437
  %896 = vst [vmem:[%s3 + $0x390] sm:$0xff] %v548
  %897 = vst [vmem:[%s3 + $0x398] sm:$0xff] %v550
  %898 = vst [vmem:[%s3 + $0x3a0] sm:$0xff] %v661
  %899 = vst [vmem:[%s3 + $0x3a8] sm:$0xff] %v663
  %900 = vst [vmem:[%s3 + $0x3b0] sm:$0xff] %v774
  %901 = vst [vmem:[%s3 + $0x3b8] sm:$0xff] %v776
  %902 = vst [vmem:[%s3 + $0x3c0] sm:$0xff] %v439
  %903 = vst [vmem:[%s3 + $0x3c8] sm:$0xff] %v441
  %904 = vst [vmem:[%s3 + $0x3d0] sm:$0xff] %v552
  %905 = vst [vmem:[%s3 + $0x3d8] sm:$0xff] %v554
  %906 = vst [vmem:[%s3 + $0x3e0] sm:$0xff] %v665
  %907 = vst [vmem:[%s3 + $0x3e8] sm:$0xff] %v667
  %908 = vst [vmem:[%s3 + $0x3f0] sm:$0xff] %v778
  %909 = vst [vmem:[%s3 + $0x3f8] sm:$0xff] %v780
  // Predicated region
  $region14: #{lstm_crf_forward.3} parent=0 // pred_check
    _
  $region15: #{lstm_crf_forward.3} parent=0 // pred_check_branch
    %911 = sbr.rel (0) target = $region17
  $region16: #{lstm_crf_forward.3} parent=0 // pred_region
    _
  $region17: #{lstm_crf_forward.3} parent=0 // pred_fallthru
    _
  // Predicated region
  $region18: #{lstm_crf_forward.3} parent=0 // pred_check
    _
  $region19: #{lstm_crf_forward.3} parent=0 // pred_check_branch
    %913 = sbr.rel (0) target = $region21
  $region20: #{lstm_crf_forward.3} parent=0 // pred_region
    _
  $region21: #{lstm_crf_forward.3} parent=0 // pred_fallthru
    _

// kernel: lstm_crf_forward.4
$region0: #{lstm_crf_forward.4}
  #allocation0 [shape = 'u32[]', space=smem, size = 0x4, offset = 0x4, fixed_abs, tag = 'smem constant byte address 0x4 - core index']
  #allocation1 [shape = 'u32[144,128]{1,0:T(1,128)}', space=vmem, size = 0x12000, scoped, tag = 'internal scratch']
  #allocation2 [shape = 'f32[8,128]{1,0:T(8,128)}', space=vmem, size = 0x1000, scoped, tag = 'scratch operand']
  #allocation3 [shape = 'f32[8,128]{1,0:T(8,128)}', space=vmem, size = 0x1000, scoped, tag = 'scratch operand']
  #allocation4 [shape = 'f32[8,128]{1,0:T(8,128)}', space=vmem, size = 0x1000, scoped, tag = 'scratch operand']
  #allocation5 [shape = 'f32[8,128]{1,0:T(8,128)}', space=vmem, size = 0x1000, scoped, tag = 'scratch operand']
  %s0 = inlined_call_operand.vmem [shape: f32[16,8,1024], index: 0, kind: input, shape index: {}, may-alias: {0,1}]
  %s1 = inlined_call_operand.vmem [shape: f32[16,8,1024], index: 1, kind: input, shape index: {}, may-alias: {0,1}]
  %s2 = inlined_call_operand.vmem [shape: f32[128,512], index: 2, kind: input, shape index: {}]
  %s3 = inlined_call_operand.vmem [shape: f32[128,512], index: 3, kind: input, shape index: {}]
  %s4 = inlined_call_operand.vmem [shape: bf16[16,8,128], index: 4, kind: output, shape index: {0}]
  %s5 = inlined_call_operand.vmem [shape: bf16[16,8,128], index: 5, kind: output, shape index: {1}]
  %6 = xla_tuple %s4, %s5
  %s7 = sld [smem:[#allocation0]]
  $region107: #{lstm_crf_forward.4} parent=0
    _
  %s9 = ssub.s32 1, %s7
  %s10 = scalar_select 0, %s9, %s7
  $region1: #{lstm_crf_forward.4} parent=0
    #allocation6 [shape = 'u8[262144]{0}', space=vmem, size = 0x40000, scoped, tag = 'input window, operand 0']
    #allocation7 [shape = 'u8[262144]{0}', space=vmem, size = 0x40000, scoped, tag = 'input window, operand 1']
    loop: start=0, step=1, limit=4
    $region2: #{lstm_crf_forward.4} parent=1 // loop_pre_header
      _
    $region3: #{lstm_crf_forward.4} parent=1 // loop_header
      %s12 = sphi 0, %s16
      %p13 = scmp.ge.s32.totalorder %s12, 4
      %s22 = sphi 0, %s24
      %s25 = sphi 0, %s22
      %s26 = sphi 0, %s25
      %s42 = sphi 0, %s26
      %s50 = sphi 0, %s52
      %s53 = sphi 0, %s50
      %s54 = sphi 0, %s53
      %s70 = sphi 0, %s54
      %s74 = sphi 0, %s74
      %s76 = sphi 0, %s74
      %s77 = sphi 0, %s76
      %s91 = sphi 0, %s77
      %s95 = sphi 0, %s95
      %s97 = sphi 0, %s95
      %s98 = sphi 0, %s97
      %s112 = sphi 0, %s98
      %s118 = sphi 0, %s120
      %s121 = sphi 0, %s118
      %s122 = sphi 0, %s121
      %s138 = sphi 0, %s122
      %s146 = sphi 0, %s148
      %s149 = sphi 0, %s146
      %s150 = sphi 0, %s149
      %s166 = sphi 0, %s150
    $region4: #{lstm_crf_forward.4} parent=1 // loop_header_branch
      %15 = sbr.rel (%p13) target = $region8
    $region5: #{lstm_crf_forward.4} parent=1 // loop_body
      %s17 = ssub.s32 %s12, 1
      %s18 = ssub.s32 %s12, 2
      %s19 = sadd.s32 %s12, 1
      %s20 = ssub.s32 %s12, %s19
      %p21 = scmp.eq.s32.totalorder %s20, 0
      %s23 = sadd.s32 %s22, 1
      %s24 = scalar_select %p21, %s22, %s23
      %p27 = pneg %p21
      %p28 = scmp.eq.s32.totalorder %s12, 1
      %p29 = por %p27, %p28
      %p30 = scmp.ne.s32.totalorder %s22, %s25
      %p31 = scmp.eq.s32.totalorder %s12, 0
      %p32 = por %p30, %p31
      %p33 = scmp.ne.s32.totalorder %s22, %s25
      %p34 = scmp.eq.s32.totalorder %s17, 1
      %p35 = por %p33, %p34
      %p36 = scmp.ne.s32.totalorder %s25, %s26
      %p37 = scmp.eq.s32.totalorder %s17, 0
      %p38 = por %p36, %p37
      %p39 = scmp.ne.s32.totalorder %s25, %s26
      %p40 = scmp.eq.s32.totalorder %s18, 1
      %p41 = por %p39, %p40
      %p43 = scmp.ne.s32.totalorder %s26, %s42
      %p44 = scmp.eq.s32.totalorder %s18, 0
      %p45 = por %p43, %p44
      %s46 = ssub.s32 1, %s12
      %s47 = ssub.s32 1, %s19
      %s48 = ssub.s32 %s46, %s47
      %p49 = scmp.eq.s32.totalorder %s48, 0
      %s51 = sadd.s32 %s50, 1
      %s52 = scalar_select %p49, %s50, %s51
      %p55 = pneg %p49
      %p56 = scmp.eq.s32.totalorder %s12, 1
      %p57 = por %p55, %p56
      %p58 = scmp.ne.s32.totalorder %s50, %s53
      %p59 = scmp.eq.s32.totalorder %s12, 0
      %p60 = por %p58, %p59
      %p61 = scmp.ne.s32.totalorder %s50, %s53
      %p62 = scmp.eq.s32.totalorder %s17, 1
      %p63 = por %p61, %p62
      %p64 = scmp.ne.s32.totalorder %s53, %s54
      %p65 = scmp.eq.s32.totalorder %s17, 0
      %p66 = por %p64, %p65
      %p67 = scmp.ne.s32.totalorder %s53, %s54
      %p68 = scmp.eq.s32.totalorder %s18, 1
      %p69 = por %p67, %p68
      %p71 = scmp.ne.s32.totalorder %s54, %s70
      %p72 = scmp.eq.s32.totalorder %s18, 0
      %p73 = por %p71, %p72
      %s75 = sadd.s32 %s74, 1
      %p78 = scmp.eq.s32.totalorder %s12, 1
      %p79 = scmp.ne.s32.totalorder %s74, %s76
      %p80 = scmp.eq.s32.totalorder %s12, 0
      %p81 = por %p79, %p80
      %p82 = scmp.ne.s32.totalorder %s74, %s76
      %p83 = scmp.eq.s32.totalorder %s17, 1
      %p84 = por %p82, %p83
      %p85 = scmp.ne.s32.totalorder %s76, %s77
      %p86 = scmp.eq.s32.totalorder %s17, 0
      %p87 = por %p85, %p86
      %p88 = scmp.ne.s32.totalorder %s76, %s77
      %p89 = scmp.eq.s32.totalorder %s18, 1
      %p90 = por %p88, %p89
      %p92 = scmp.ne.s32.totalorder %s77, %s91
      %p93 = scmp.eq.s32.totalorder %s18, 0
      %p94 = por %p92, %p93
      %s96 = sadd.s32 %s95, 1
      %p99 = scmp.eq.s32.totalorder %s12, 1
      %p100 = scmp.ne.s32.totalorder %s95, %s97
      %p101 = scmp.eq.s32.totalorder %s12, 0
      %p102 = por %p100, %p101
      %p103 = scmp.ne.s32.totalorder %s95, %s97
      %p104 = scmp.eq.s32.totalorder %s17, 1
      %p105 = por %p103, %p104
      %p106 = scmp.ne.s32.totalorder %s97, %s98
      %p107 = scmp.eq.s32.totalorder %s17, 0
      %p108 = por %p106, %p107
      %p109 = scmp.ne.s32.totalorder %s97, %s98
      %p110 = scmp.eq.s32.totalorder %s18, 1
      %p111 = por %p109, %p110
      %p113 = scmp.ne.s32.totalorder %s98, %s112
      %p114 = scmp.eq.s32.totalorder %s18, 0
      %p115 = por %p113, %p114
      %s116 = ssub.s32 %s12, %s19
      %p117 = scmp.eq.s32.totalorder %s116, 0
      %s119 = sadd.s32 %s118, 1
      %s120 = scalar_select %p117, %s118, %s119
      %p123 = pneg %p117
      %p124 = scmp.eq.s32.totalorder %s12, 1
      %p125 = por %p123, %p124
      %p126 = scmp.ne.s32.totalorder %s118, %s121
      %p127 = scmp.eq.s32.totalorder %s12, 0
      %p128 = por %p126, %p127
      %p129 = scmp.ne.s32.totalorder %s118, %s121
      %p130 = scmp.eq.s32.totalorder %s17, 1
      %p131 = por %p129, %p130
      %p132 = scmp.ne.s32.totalorder %s121, %s122
      %p133 = scmp.eq.s32.totalorder %s17, 0
      %p134 = por %p132, %p133
      %p135 = scmp.ne.s32.totalorder %s121, %s122
      %p136 = scmp.eq.s32.totalorder %s18, 1
      %p137 = por %p135, %p136
      %p139 = scmp.ne.s32.totalorder %s122, %s138
      %p140 = scmp.eq.s32.totalorder %s18, 0
      %p141 = por %p139, %p140
      %s142 = ssub.s32 1, %s12
      %s143 = ssub.s32 1, %s19
      %s144 = ssub.s32 %s142, %s143
      %p145 = scmp.eq.s32.totalorder %s144, 0
      %s147 = sadd.s32 %s146, 1
      %s148 = scalar_select %p145, %s146, %s147
      %p151 = pneg %p145
      %p152 = scmp.eq.s32.totalorder %s12, 1
      %p153 = por %p151, %p152
      %p154 = scmp.ne.s32.totalorder %s146, %s149
      %p155 = scmp.eq.s32.totalorder %s12, 0
      %p156 = por %p154, %p155
      %p157 = scmp.ne.s32.totalorder %s146, %s149
      %p158 = scmp.eq.s32.totalorder %s17, 1
      %p159 = por %p157, %p158
      %p160 = scmp.ne.s32.totalorder %s149, %s150
      %p161 = scmp.eq.s32.totalorder %s17, 0
      %p162 = por %p160, %p161
      %p163 = scmp.ne.s32.totalorder %s149, %s150
      %p164 = scmp.eq.s32.totalorder %s18, 1
      %p165 = por %p163, %p164
      %p167 = scmp.ne.s32.totalorder %s150, %s166
      %p168 = scmp.eq.s32.totalorder %s18, 0
      %p169 = por %p167, %p168
      %p170 = scmp.le.s32.totalorder 1, %s12
      %p171 = scmp.lt.s32.totalorder %s12, 3
      %p172 = pnand %p170, %p171
      %p173 = pneg %p172
      // Predicated region
      $region9: #{lstm_crf_forward.4} parent=5 // pred_check
        _
      $region10: #{lstm_crf_forward.4} parent=5 // pred_check_branch
        %175 = sbr.rel (%p172) target = $region12
      $region11: #{lstm_crf_forward.4} parent=5 // pred_region
        %s176 = ssub.s32 %s12, 1
        // Predicated region
        $region13: #{lstm_crf_forward.4} parent=11 // pred_check
          %p177 = pneg %p87
        $region14: #{lstm_crf_forward.4} parent=11 // pred_check_branch
          %179 = sbr.rel (%p177) target = $region16
        $region15: #{lstm_crf_forward.4} parent=11 // pred_region
          _
        $region16: #{lstm_crf_forward.4} parent=11 // pred_fallthru
          _
        // Predicated region
        $region17: #{lstm_crf_forward.4} parent=11 // pred_check
          %p180 = pneg %p108
        $region18: #{lstm_crf_forward.4} parent=11 // pred_check_branch
          %182 = sbr.rel (%p180) target = $region20
        $region19: #{lstm_crf_forward.4} parent=11 // pred_region
          _
        $region20: #{lstm_crf_forward.4} parent=11 // pred_fallthru
          _
      $region12: #{lstm_crf_forward.4} parent=5 // pred_fallthru
        _
      %p183 = scmp.lt.s32.totalorder %s12, 2
      // Predicated region
      $region21: #{lstm_crf_forward.4} parent=5 // pred_check
        %p184 = pneg %p183
      $region22: #{lstm_crf_forward.4} parent=5 // pred_check_branch
        %186 = sbr.rel (%p184) target = $region24
      $region23: #{lstm_crf_forward.4} parent=5 // pred_region
        // Predicated region
        $region25: #{lstm_crf_forward.4} parent=23 // pred_check
          %p187 = pneg %p32
        $region26: #{lstm_crf_forward.4} parent=23 // pred_check_branch
          %189 = sbr.rel (%p187) target = $region28
        $region27: #{lstm_crf_forward.4} parent=23 // pred_region
          %s190 = sand.u32 %s22, 1
          %s191 = sand.u32 %s22, 1
          %s192 = smul.addr %s191, 256
          %s193 = scalar_lea.vmem [#allocation6], %s192
          %s194 = smul.u32 8, %s12
          %s195 = smul.addr %s194, 8
          %s196 = smul.addr %s195, 8
          %s197 = scalar_lea.vmem %s0, %s196
          // Predicated region
          $region29: #{lstm_crf_forward.4} parent=27 // pred_check
            _
          $region30: #{lstm_crf_forward.4} parent=27 // pred_check_branch
            %199 = sbr.rel (0) target = $region32
          $region31: #{lstm_crf_forward.4} parent=27 // pred_region
            // Predicated region
            $region33: #{lstm_crf_forward.4} parent=31 // pred_check
              _
            $region34: #{lstm_crf_forward.4} parent=31 // pred_check_branch
              %201 = sbr.rel (0) target = $region36
            $region35: #{lstm_crf_forward.4} parent=31 // pred_region
              loop: start=0, step=1, limit=1
              $region37: #{lstm_crf_forward.4} parent=35 // loop_pre_header
                _
              $region38: #{lstm_crf_forward.4} parent=35 // loop_header
                %s203 = sphi 0, %s207
                %p204 = scmp.ge.s32.totalorder %s203, 1
                %s208 = sphi %s197, %s197
                %s209 = sphi %s193, %s193
              $region39: #{lstm_crf_forward.4} parent=35 // loop_header_branch
                %206 = sbr.rel (%p204) target = $region43
              $region40: #{lstm_crf_forward.4} parent=35 // loop_body
                %v210 = vld [vmem:[%s208] sm:$0xff]
                %211 = vst [vmem:[%s209] sm:$0xff] %v210
                %v212 = vld [vmem:[%s208 + $0x8] sm:$0xff]
                %213 = vst [vmem:[%s209 + $0x8] sm:$0xff] %v212
                %v214 = vld [vmem:[%s208 + $0x10] sm:$0xff]
                %215 = vst [vmem:[%s209 + $0x10] sm:$0xff] %v214
                %v216 = vld [vmem:[%s208 + $0x18] sm:$0xff]
                %217 = vst [vmem:[%s209 + $0x18] sm:$0xff] %v216
                %v218 = vld [vmem:[%s208 + $0x40] sm:$0xff]
                %219 = vst [vmem:[%s209 + $0x20] sm:$0xff] %v218
                %v220 = vld [vmem:[%s208 + $0x48] sm:$0xff]
                %221 = vst [vmem:[%s209 + $0x28] sm:$0xff] %v220
                %v222 = vld [vmem:[%s208 + $0x50] sm:$0xff]
                %223 = vst [vmem:[%s209 + $0x30] sm:$0xff] %v222
                %v224 = vld [vmem:[%s208 + $0x58] sm:$0xff]
                %225 = vst [vmem:[%s209 + $0x38] sm:$0xff] %v224
                %v226 = vld [vmem:[%s208 + $0x80] sm:$0xff]
                %227 = vst [vmem:[%s209 + $0x40] sm:$0xff] %v226
                %v228 = vld [vmem:[%s208 + $0x88] sm:$0xff]
                %229 = vst [vmem:[%s209 + $0x48] sm:$0xff] %v228
                %v230 = vld [vmem:[%s208 + $0x90] sm:$0xff]
                %231 = vst [vmem:[%s209 + $0x50] sm:$0xff] %v230
                %v232 = vld [vmem:[%s208 + $0x98] sm:$0xff]
                %233 = vst [vmem:[%s209 + $0x58] sm:$0xff] %v232
                %v234 = vld [vmem:[%s208 + $0xc0] sm:$0xff]
                %235 = vst [vmem:[%s209 + $0x60] sm:$0xff] %v234
                %v236 = vld [vmem:[%s208 + $0xc8] sm:$0xff]
                %237 = vst [vmem:[%s209 + $0x68] sm:$0xff] %v236
                %v238 = vld [vmem:[%s208 + $0xd0] sm:$0xff]
                %239 = vst [vmem:[%s209 + $0x70] sm:$0xff] %v238
                %v240 = vld [vmem:[%s208 + $0xd8] sm:$0xff]
                %241 = vst [vmem:[%s209 + $0x78] sm:$0xff] %v240
                %v242 = vld [vmem:[%s208 + $0x100] sm:$0xff]
                %243 = vst [vmem:[%s209 + $0x80] sm:$0xff] %v242
                %v244 = vld [vmem:[%s208 + $0x108] sm:$0xff]
                %245 = vst [vmem:[%s209 + $0x88] sm:$0xff] %v244
                %v246 = vld [vmem:[%s208 + $0x110] sm:$0xff]
                %247 = vst [vmem:[%s209 + $0x90] sm:$0xff] %v246
                %v248 = vld [vmem:[%s208 + $0x118] sm:$0xff]
                %249 = vst [vmem:[%s209 + $0x98] sm:$0xff] %v248
                %v250 = vld [vmem:[%s208 + $0x140] sm:$0xff]
                %251 = vst [vmem:[%s209 + $0xa0] sm:$0xff] %v250
                %v252 = vld [vmem:[%s208 + $0x148] sm:$0xff]
                %253 = vst [vmem:[%s209 + $0xa8] sm:$0xff] %v252
                %v254 = vld [vmem:[%s208 + $0x150] sm:$0xff]
                %255 = vst [vmem:[%s209 + $0xb0] sm:$0xff] %v254
                %v256 = vld [vmem:[%s208 + $0x158] sm:$0xff]
                %257 = vst [vmem:[%s209 + $0xb8] sm:$0xff] %v256
                %v258 = vld [vmem:[%s208 + $0x180] sm:$0xff]
                %259 = vst [vmem:[%s209 + $0xc0] sm:$0xff] %v258
                %v260 = vld [vmem:[%s208 + $0x188] sm:$0xff]
                %261 = vst [vmem:[%s209 + $0xc8] sm:$0xff] %v260
                %v262 = vld [vmem:[%s208 + $0x190] sm:$0xff]
                %263 = vst [vmem:[%s209 + $0xd0] sm:$0xff] %v262
                %v264 = vld [vmem:[%s208 + $0x198] sm:$0xff]
                %265 = vst [vmem:[%s209 + $0xd8] sm:$0xff] %v264
                %v266 = vld [vmem:[%s208 + $0x1c0] sm:$0xff]
                %267 = vst [vmem:[%s209 + $0xe0] sm:$0xff] %v266
                %v268 = vld [vmem:[%s208 + $0x1c8] sm:$0xff]
                %269 = vst [vmem:[%s209 + $0xe8] sm:$0xff] %v268
                %v270 = vld [vmem:[%s208 + $0x1d0] sm:$0xff]
                %271 = vst [vmem:[%s209 + $0xf0] sm:$0xff] %v270
                %v272 = vld [vmem:[%s208 + $0x1d8] sm:$0xff]
                %273 = vst [vmem:[%s209 + $0xf8] sm:$0xff] %v272
              $region41: #{lstm_crf_forward.4} parent=35 // loop_footer
                %s207 = sadd.s32 1, %s203
              $region42: #{lstm_crf_forward.4} parent=35 // loop_footer_branch
                %202 = sbr.rel target = $region38
              $region43: #{lstm_crf_forward.4} parent=35 // loop_exit
                _
            $region36: #{lstm_crf_forward.4} parent=31 // pred_fallthru
              _
            // Predicated region
            $region44: #{lstm_crf_forward.4} parent=31 // pred_check
              _
            $region45: #{lstm_crf_forward.4} parent=31 // pred_check_branch
              %275 = sbr.rel target = $region47
            $region46: #{lstm_crf_forward.4} parent=31 // pred_region
              _
            $region47: #{lstm_crf_forward.4} parent=31 // pred_fallthru
              _
          $region32: #{lstm_crf_forward.4} parent=27 // pred_fallthru
            _
          %276 = vnop
        $region28: #{lstm_crf_forward.4} parent=23 // pred_fallthru
          _
        // Predicated region
        $region48: #{lstm_crf_forward.4} parent=23 // pred_check
          %p277 = pneg %p60
        $region49: #{lstm_crf_forward.4} parent=23 // pred_check_branch
          %279 = sbr.rel (%p277) target = $region51
        $region50: #{lstm_crf_forward.4} parent=23 // pred_region
          %s280 = sand.u32 %s50, 1
          %s281 = sand.u32 %s50, 1
          %s282 = smul.addr %s281, 256
          %s283 = scalar_lea.vmem [#allocation7], %s282
          %s284 = ssub.s32 1, %s12
          %s285 = smul.u32 8, %s284
          %s286 = smul.addr %s285, 8
          %s287 = sadd.s32 4, %s286
          %s288 = smul.addr %s287, 8
          %s289 = scalar_lea.vmem %s1, %s288
          // Predicated region
          $region52: #{lstm_crf_forward.4} parent=50 // pred_check
            _
          $region53: #{lstm_crf_forward.4} parent=50 // pred_check_branch
            %291 = sbr.rel (0) target = $region55
          $region54: #{lstm_crf_forward.4} parent=50 // pred_region
            // Predicated region
            $region56: #{lstm_crf_forward.4} parent=54 // pred_check
              _
            $region57: #{lstm_crf_forward.4} parent=54 // pred_check_branch
              %293 = sbr.rel (0) target = $region59
            $region58: #{lstm_crf_forward.4} parent=54 // pred_region
              loop: start=0, step=1, limit=1
              $region60: #{lstm_crf_forward.4} parent=58 // loop_pre_header
                _
              $region61: #{lstm_crf_forward.4} parent=58 // loop_header
                %s295 = sphi 0, %s299
                %p296 = scmp.ge.s32.totalorder %s295, 1
                %s300 = sphi %s289, %s289
                %s301 = sphi %s283, %s283
              $region62: #{lstm_crf_forward.4} parent=58 // loop_header_branch
                %298 = sbr.rel (%p296) target = $region66
              $region63: #{lstm_crf_forward.4} parent=58 // loop_body
                %v302 = vld [vmem:[%s300] sm:$0xff]
                %303 = vst [vmem:[%s301] sm:$0xff] %v302
                %v304 = vld [vmem:[%s300 + $0x8] sm:$0xff]
                %305 = vst [vmem:[%s301 + $0x8] sm:$0xff] %v304
                %v306 = vld [vmem:[%s300 + $0x10] sm:$0xff]
                %307 = vst [vmem:[%s301 + $0x10] sm:$0xff] %v306
                %v308 = vld [vmem:[%s300 + $0x18] sm:$0xff]
                %309 = vst [vmem:[%s301 + $0x18] sm:$0xff] %v308
                %v310 = vld [vmem:[%s300 + $0x40] sm:$0xff]
                %311 = vst [vmem:[%s301 + $0x20] sm:$0xff] %v310
                %v312 = vld [vmem:[%s300 + $0x48] sm:$0xff]
                %313 = vst [vmem:[%s301 + $0x28] sm:$0xff] %v312
                %v314 = vld [vmem:[%s300 + $0x50] sm:$0xff]
                %315 = vst [vmem:[%s301 + $0x30] sm:$0xff] %v314
                %v316 = vld [vmem:[%s300 + $0x58] sm:$0xff]
                %317 = vst [vmem:[%s301 + $0x38] sm:$0xff] %v316
                %v318 = vld [vmem:[%s300 + $0x80] sm:$0xff]
                %319 = vst [vmem:[%s301 + $0x40] sm:$0xff] %v318
                %v320 = vld [vmem:[%s300 + $0x88] sm:$0xff]
                %321 = vst [vmem:[%s301 + $0x48] sm:$0xff] %v320
                %v322 = vld [vmem:[%s300 + $0x90] sm:$0xff]
                %323 = vst [vmem:[%s301 + $0x50] sm:$0xff] %v322
                %v324 = vld [vmem:[%s300 + $0x98] sm:$0xff]
                %325 = vst [vmem:[%s301 + $0x58] sm:$0xff] %v324
                %v326 = vld [vmem:[%s300 + $0xc0] sm:$0xff]
                %327 = vst [vmem:[%s301 + $0x60] sm:$0xff] %v326
                %v328 = vld [vmem:[%s300 + $0xc8] sm:$0xff]
                %329 = vst [vmem:[%s301 + $0x68] sm:$0xff] %v328
                %v330 = vld [vmem:[%s300 + $0xd0] sm:$0xff]
                %331 = vst [vmem:[%s301 + $0x70] sm:$0xff] %v330
                %v332 = vld [vmem:[%s300 + $0xd8] sm:$0xff]
                %333 = vst [vmem:[%s301 + $0x78] sm:$0xff] %v332
                %v334 = vld [vmem:[%s300 + $0x100] sm:$0xff]
                %335 = vst [vmem:[%s301 + $0x80] sm:$0xff] %v334
                %v336 = vld [vmem:[%s300 + $0x108] sm:$0xff]
                %337 = vst [vmem:[%s301 + $0x88] sm:$0xff] %v336
                %v338 = vld [vmem:[%s300 + $0x110] sm:$0xff]
                %339 = vst [vmem:[%s301 + $0x90] sm:$0xff] %v338
                %v340 = vld [vmem:[%s300 + $0x118] sm:$0xff]
                %341 = vst [vmem:[%s301 + $0x98] sm:$0xff] %v340
                %v342 = vld [vmem:[%s300 + $0x140] sm:$0xff]
                %343 = vst [vmem:[%s301 + $0xa0] sm:$0xff] %v342
                %v344 = vld [vmem:[%s300 + $0x148] sm:$0xff]
                %345 = vst [vmem:[%s301 + $0xa8] sm:$0xff] %v344
                %v346 = vld [vmem:[%s300 + $0x150] sm:$0xff]
                %347 = vst [vmem:[%s301 + $0xb0] sm:$0xff] %v346
                %v348 = vld [vmem:[%s300 + $0x158] sm:$0xff]
                %349 = vst [vmem:[%s301 + $0xb8] sm:$0xff] %v348
                %v350 = vld [vmem:[%s300 + $0x180] sm:$0xff]
                %351 = vst [vmem:[%s301 + $0xc0] sm:$0xff] %v350
                %v352 = vld [vmem:[%s300 + $0x188] sm:$0xff]
                %353 = vst [vmem:[%s301 + $0xc8] sm:$0xff] %v352
                %v354 = vld [vmem:[%s300 + $0x190] sm:$0xff]
                %355 = vst [vmem:[%s301 + $0xd0] sm:$0xff] %v354
                %v356 = vld [vmem:[%s300 + $0x198] sm:$0xff]
                %357 = vst [vmem:[%s301 + $0xd8] sm:$0xff] %v356
                %v358 = vld [vmem:[%s300 + $0x1c0] sm:$0xff]
                %359 = vst [vmem:[%s301 + $0xe0] sm:$0xff] %v358
                %v360 = vld [vmem:[%s300 + $0x1c8] sm:$0xff]
                %361 = vst [vmem:[%s301 + $0xe8] sm:$0xff] %v360
                %v362 = vld [vmem:[%s300 + $0x1d0] sm:$0xff]
                %363 = vst [vmem:[%s301 + $0xf0] sm:$0xff] %v362
                %v364 = vld [vmem:[%s300 + $0x1d8] sm:$0xff]
                %365 = vst [vmem:[%s301 + $0xf8] sm:$0xff] %v364
              $region64: #{lstm_crf_forward.4} parent=58 // loop_footer
                %s299 = sadd.s32 1, %s295
              $region65: #{lstm_crf_forward.4} parent=58 // loop_footer_branch
                %294 = sbr.rel target = $region61
              $region66: #{lstm_crf_forward.4} parent=58 // loop_exit
                _
            $region59: #{lstm_crf_forward.4} parent=54 // pred_fallthru
              _
            // Predicated region
            $region67: #{lstm_crf_forward.4} parent=54 // pred_check
              _
            $region68: #{lstm_crf_forward.4} parent=54 // pred_check_branch
              %367 = sbr.rel target = $region70
            $region69: #{lstm_crf_forward.4} parent=54 // pred_region
              _
            $region70: #{lstm_crf_forward.4} parent=54 // pred_fallthru
              _
          $region55: #{lstm_crf_forward.4} parent=50 // pred_fallthru
            _
          %368 = vnop
        $region51: #{lstm_crf_forward.4} parent=23 // pred_fallthru
          _
      $region24: #{lstm_crf_forward.4} parent=5 // pred_fallthru
        _
      %p369 = scmp.le.s32.totalorder 1, %s12
      %p370 = scmp.lt.s32.totalorder %s12, 3
      %p371 = pnand %p369, %p370
      %p372 = pneg %p371
      // Predicated region
      $region71: #{lstm_crf_forward.4} parent=5 // pred_check
        _
      $region72: #{lstm_crf_forward.4} parent=5 // pred_check_branch
        %374 = sbr.rel (%p371) target = $region74
      $region73: #{lstm_crf_forward.4} parent=5 // pred_region
        %s375 = ssub.s32 %s12, 1
        %s376 = sand.u32 %s25, 1
        %s377 = sand.u32 %s25, 1
        %s378 = smul.addr %s377, 256
        %s379 = scalar_lea.vmem [#allocation6], %s378
        // Predicated region
        $region75: #{lstm_crf_forward.4} parent=73 // pred_check
          %p380 = pneg %p38
        $region76: #{lstm_crf_forward.4} parent=73 // pred_check_branch
          %382 = sbr.rel (%p380) target = $region78
        $region77: #{lstm_crf_forward.4} parent=73 // pred_region
          _
        $region78: #{lstm_crf_forward.4} parent=73 // pred_fallthru
          _
        %s383 = sand.u32 %s53, 1
        %s384 = sand.u32 %s53, 1
        %s385 = smul.addr %s384, 256
        %s386 = scalar_lea.vmem [#allocation7], %s385
        // Predicated region
        $region79: #{lstm_crf_forward.4} parent=73 // pred_check
          %p387 = pneg %p66
        $region80: #{lstm_crf_forward.4} parent=73 // pred_check_branch
          %389 = sbr.rel (%p387) target = $region82
        $region81: #{lstm_crf_forward.4} parent=73 // pred_region
          _
        $region82: #{lstm_crf_forward.4} parent=73 // pred_fallthru
          _
        %s390 = sand.u32 %s25, 1
        %s391 = sand.u32 %s25, 1
        %s392 = smul.addr %s391, 256
        %s393 = scalar_lea.vmem [#allocation6], %s392
        %p394 = pneg %p38
        %p395 = pneg %p35
        %s396 = sand.u32 %s53, 1
        %s397 = sand.u32 %s53, 1
        %s398 = smul.addr %s397, 256
        %s399 = scalar_lea.vmem [#allocation7], %s398
        %p400 = pneg %p66
        %p401 = pneg %p63
        %p402 = pneg %p87
        %p403 = pneg %p84
        %p404 = pneg %p108
        %p405 = pneg %p105
        %p406 = pneg %p134
        %p407 = pneg %p131
        %s408 = smul.u32 8, %s17
        %p409 = scmp.lt.s32.totalorder %s408, 15
        %s410 = scalar_select %p409, %s408, 15
        %s411 = smul.addr %s410, 4
        %s412 = scalar_lea.vmem %s4, %s411
        %p413 = pneg %p162
        %p414 = pneg %p159
        %s415 = ssub.s32 1, %s17
        %s416 = smul.u32 8, %s415
        %p417 = scmp.lt.s32.totalorder %s416, 15
        %s418 = scalar_select %p417, %s416, 15
        %s419 = smul.addr %s418, 4
        %s420 = scalar_lea.vmem %s5, %s419
        %s421 = smul.u32 8, %s17
        %s422 = ssub.s32 1, %s17
        %s423 = smul.u32 8, %s422
        %s424 = smul.u32 8, %s17
        %p425 = scmp.lt.s32.totalorder %s424, 15
        %s426 = scalar_select %p425, %s424, 15
        %s427 = smul.addr %s426, 4
        %s428 = scalar_lea.vmem %s4, %s427
        %s429 = smul.u32 8, %s17
        %s430 = ssub.s32 1, %s17
        %s431 = smul.u32 8, %s430
        %p432 = scmp.lt.s32.totalorder %s431, 15
        %s433 = scalar_select %p432, %s431, 15
        %s434 = smul.addr %s433, 4
        %s435 = scalar_lea.vmem %s5, %s434
        %s436 = ssub.s32 1, %s17
        %s437 = smul.u32 8, %s436
        %p438 = scmp.eq.s32.totalorder %s17, 0
        // Predicated region
        $region83: #{lstm_crf_forward.4} parent=73 // pred_check
          %p439 = pneg %p438
        $region84: #{lstm_crf_forward.4} parent=73 // pred_check_branch
          %441 = sbr.rel (%p439) target = $region86
        $region85: #{lstm_crf_forward.4} parent=73 // pred_region
          %442 = vst [vmem:[#allocation2] sm:$0xff] 0.0
          %443 = vst [vmem:[#allocation3] sm:$0xff] 0.0
          %444 = vst [vmem:[#allocation4] sm:$0xff] 0.0
          %445 = vst [vmem:[#allocation5] sm:$0xff] 0.0
        $region86: #{lstm_crf_forward.4} parent=73 // pred_fallthru
          _
        %v446 = vld [vmem:[%s379] sm:$0xff]
        %v447 = vld [vmem:[%s379 + $0x8] sm:$0xff]
        %v448 = vld [vmem:[%s379 + $0x10] sm:$0xff]
        %v449 = vld [vmem:[%s379 + $0x18] sm:$0xff]
        %v450 = vld [vmem:[#allocation2] sm:$0xff]
        %v451 = vld [vmem:[#allocation3] sm:$0xff]
        %v452 = vld [vmem:[%s2] sm:$0xff]
        %v453 = vld [vmem:[%s2 + $0x8] sm:$0xff]
        %v454 = vld [vmem:[%s2 + $0x10] sm:$0xff]
        %v455 = vld [vmem:[%s2 + $0x18] sm:$0xff]
        %v456 = vld [vmem:[%s2 + $0x20] sm:$0xff]
        %v457 = vld [vmem:[%s2 + $0x28] sm:$0xff]
        %v458 = vld [vmem:[%s2 + $0x30] sm:$0xff]
        %v459 = vld [vmem:[%s2 + $0x38] sm:$0xff]
        %v460 = vld [vmem:[%s2 + $0x40] sm:$0xff]
        %v461 = vld [vmem:[%s2 + $0x48] sm:$0xff]
        %v462 = vld [vmem:[%s2 + $0x50] sm:$0xff]
        %v463 = vld [vmem:[%s2 + $0x58] sm:$0xff]
        %v464 = vld [vmem:[%s2 + $0x60] sm:$0xff]
        %v465 = vld [vmem:[%s2 + $0x68] sm:$0xff]
        %v466 = vld [vmem:[%s2 + $0x70] sm:$0xff]
        %v467 = vld [vmem:[%s2 + $0x78] sm:$0xff]
        %v468 = vld [vmem:[%s2 + $0x80] sm:$0xff]
        %v469 = vld [vmem:[%s2 + $0x88] sm:$0xff]
        %v470 = vld [vmem:[%s2 + $0x90] sm:$0xff]
        %v471 = vld [vmem:[%s2 + $0x98] sm:$0xff]
        %v472 = vld [vmem:[%s2 + $0xa0] sm:$0xff]
        %v473 = vld [vmem:[%s2 + $0xa8] sm:$0xff]
        %v474 = vld [vmem:[%s2 + $0xb0] sm:$0xff]
        %v475 = vld [vmem:[%s2 + $0xb8] sm:$0xff]
        %v476 = vld [vmem:[%s2 + $0xc0] sm:$0xff]
        %v477 = vld [vmem:[%s2 + $0xc8] sm:$0xff]
        %v478 = vld [vmem:[%s2 + $0xd0] sm:$0xff]
        %v479 = vld [vmem:[%s2 + $0xd8] sm:$0xff]
        %v480 = vld [vmem:[%s2 + $0xe0] sm:$0xff]
        %v481 = vld [vmem:[%s2 + $0xe8] sm:$0xff]
        %v482 = vld [vmem:[%s2 + $0xf0] sm:$0xff]
        %v483 = vld [vmem:[%s2 + $0xf8] sm:$0xff]
        %v484 = vld [vmem:[%s2 + $0x100] sm:$0xff]
        %v485 = vld [vmem:[%s2 + $0x108] sm:$0xff]
        %v486 = vld [vmem:[%s2 + $0x110] sm:$0xff]
        %v487 = vld [vmem:[%s2 + $0x118] sm:$0xff]
        %v488 = vld [vmem:[%s2 + $0x120] sm:$0xff]
        %v489 = vld [vmem:[%s2 + $0x128] sm:$0xff]
        %v490 = vld [vmem:[%s2 + $0x130] sm:$0xff]
        %v491 = vld [vmem:[%s2 + $0x138] sm:$0xff]
        %v492 = vld [vmem:[%s2 + $0x140] sm:$0xff]
        %v493 = vld [vmem:[%s2 + $0x148] sm:$0xff]
        %v494 = vld [vmem:[%s2 + $0x150] sm:$0xff]
        %v495 = vld [vmem:[%s2 + $0x158] sm:$0xff]
        %v496 = vld [vmem:[%s2 + $0x160] sm:$0xff]
        %v497 = vld [vmem:[%s2 + $0x168] sm:$0xff]
        %v498 = vld [vmem:[%s2 + $0x170] sm:$0xff]
        %v499 = vld [vmem:[%s2 + $0x178] sm:$0xff]
        %v500 = vld [vmem:[%s2 + $0x180] sm:$0xff]
        %v501 = vld [vmem:[%s2 + $0x188] sm:$0xff]
        %v502 = vld [vmem:[%s2 + $0x190] sm:$0xff]
        %v503 = vld [vmem:[%s2 + $0x198] sm:$0xff]
        %v504 = vld [vmem:[%s2 + $0x1a0] sm:$0xff]
        %v505 = vld [vmem:[%s2 + $0x1a8] sm:$0xff]
        %v506 = vld [vmem:[%s2 + $0x1b0] sm:$0xff]
        %v507 = vld [vmem:[%s2 + $0x1b8] sm:$0xff]
        %v508 = vld [vmem:[%s2 + $0x1c0] sm:$0xff]
        %v509 = vld [vmem:[%s2 + $0x1c8] sm:$0xff]
        %v510 = vld [vmem:[%s2 + $0x1d0] sm:$0xff]
        %v511 = vld [vmem:[%s2 + $0x1d8] sm:$0xff]
        %v512 = vld [vmem:[%s2 + $0x1e0] sm:$0xff]
        %v513 = vld [vmem:[%s2 + $0x1e8] sm:$0xff]
        %v514 = vld [vmem:[%s2 + $0x1f0] sm:$0xff]
        %v515 = vld [vmem:[%s2 + $0x1f8] sm:$0xff]
        %516 = vmatprep.subr.mxu0 %v453
        %517 = vmatpush1.msra.mxu0 %v452
        %518 = vmatprep.subr.mxu0 %v457
        %519 = vmatpush1.msra.mxu0 %v456
        %520 = vmatprep.subr.mxu0 %v461
        %521 = vmatpush1.msra.mxu0 %v460
        %522 = vmatprep.subr.mxu0 %v465
        %523 = vmatpush1.msra.mxu0 %v464
        %524 = vmatprep.subr.mxu0 %v469
        %525 = vmatpush1.msra.mxu0 %v468
        %526 = vmatprep.subr.mxu0 %v473
        %527 = vmatpush1.msra.mxu0 %v472
        %528 = vmatprep.subr.mxu0 %v477
        %529 = vmatpush1.msra.mxu0 %v476
        %530 = vmatprep.subr.mxu0 %v481
        %531 = vmatpush1.msra.mxu0 %v480
        %532 = vmatprep.subr.mxu0 %v485
        %533 = vmatpush1.msra.mxu0 %v484
        %534 = vmatprep.subr.mxu0 %v489
        %535 = vmatpush1.msra.mxu0 %v488
        %536 = vmatprep.subr.mxu0 %v493
        %537 = vmatpush1.msra.mxu0 %v492
        %538 = vmatprep.subr.mxu0 %v497
        %539 = vmatpush1.msra.mxu0 %v496
        %540 = vmatprep.subr.mxu0 %v501
        %541 = vmatpush1.msra.mxu0 %v500
        %542 = vmatprep.subr.mxu0 %v505
        %543 = vmatpush1.msra.mxu0 %v504
        %544 = vmatprep.subr.mxu0 %v509
        %545 = vmatpush1.msra.mxu0 %v508
        %546 = vmatprep.subr.mxu0 %v513
        %547 = vmatpush1.msra.mxu0 %v512
        %548 = vmatprep.subr.mxu0 0.0
        %549 = vmatpush1.msra.mxu0 0.0
        %550 = vmatprep.subr.mxu0 0.0
        %551 = vmatpush1.msra.mxu0 0.0
        %552 = vmatprep.subr.mxu0 0.0
        %553 = vmatpush1.msra.mxu0 0.0
        %554 = vmatprep.subr.mxu0 0.0
        %555 = vmatpush1.msra.mxu0 0.0
        %556 = vmatprep.subr.mxu0 0.0
        %557 = vmatpush1.msra.mxu0 0.0
        %558 = vmatprep.subr.mxu0 0.0
        %559 = vmatpush1.msra.mxu0 0.0
        %560 = vmatprep.subr.mxu0 0.0
        %561 = vmatpush1.msra.mxu0 0.0
        %562 = vmatprep.subr.mxu0 0.0
        %563 = vmatpush1.msra.mxu0 0.0
        %564 = vmatprep.subr.mxu0 0.0
        %565 = vmatpush1.msra.mxu0 0.0
        %566 = vmatprep.subr.mxu0 0.0
        %567 = vmatpush1.msra.mxu0 0.0
        %568 = vmatprep.subr.mxu0 0.0
        %569 = vmatpush1.msra.mxu0 0.0
        %570 = vmatprep.subr.mxu0 0.0
        %571 = vmatpush1.msra.mxu0 0.0
        %572 = vmatprep.subr.mxu0 0.0
        %573 = vmatpush1.msra.mxu0 0.0
        %574 = vmatprep.subr.mxu0 0.0
        %575 = vmatpush1.msra.mxu0 0.0
        %576 = vmatprep.subr.mxu0 0.0
        %577 = vmatpush1.msra.mxu0 0.0
        %578 = vmatprep.subr.mxu0 0.0
        %579 = vmatpush1.msra.mxu0 0.0
        %580 = vmatprep.mubr.f32.mxu0 0.0
        %581 = vmatmul.mubr.f32.gmra.mrb[0].mxu0 %v450
        %v582 = vpop.f32.mrb[0].mxu0
        %v583 = vadd.f32 0.0, %v582
        %v584 = vpop.f32.mrb[0].mxu0
        %v585 = vadd.f32 0.0, %v584
        %586 = vdwg.mxu0
        %587 = vmatprep.subr.mxu0 %v455
        %588 = vmatpush1.msra.mxu0 %v454
        %589 = vmatprep.subr.mxu0 %v459
        %590 = vmatpush1.msra.mxu0 %v458
        %591 = vmatprep.subr.mxu0 %v463
        %592 = vmatpush1.msra.mxu0 %v462
        %593 = vmatprep.subr.mxu0 %v467
        %594 = vmatpush1.msra.mxu0 %v466
        %595 = vmatprep.subr.mxu0 %v471
        %596 = vmatpush1.msra.mxu0 %v470
        %597 = vmatprep.subr.mxu0 %v475
        %598 = vmatpush1.msra.mxu0 %v474
        %599 = vmatprep.subr.mxu0 %v479
        %600 = vmatpush1.msra.mxu0 %v478
        %601 = vmatprep.subr.mxu0 %v483
        %602 = vmatpush1.msra.mxu0 %v482
        %603 = vmatprep.subr.mxu0 %v487
        %604 = vmatpush1.msra.mxu0 %v486
        %605 = vmatprep.subr.mxu0 %v491
        %606 = vmatpush1.msra.mxu0 %v490
        %607 = vmatprep.subr.mxu0 %v495
        %608 = vmatpush1.msra.mxu0 %v494
        %609 = vmatprep.subr.mxu0 %v499
        %610 = vmatpush1.msra.mxu0 %v498
        %611 = vmatprep.subr.mxu0 %v503
        %612 = vmatpush1.msra.mxu0 %v502
        %613 = vmatprep.subr.mxu0 %v507
        %614 = vmatpush1.msra.mxu0 %v506
        %615 = vmatprep.subr.mxu0 %v511
        %616 = vmatpush1.msra.mxu0 %v510
        %617 = vmatprep.subr.mxu0 %v515
        %618 = vmatpush1.msra.mxu0 %v514
        %619 = vmatprep.subr.mxu0 0.0
        %620 = vmatpush1.msra.mxu0 0.0
        %621 = vmatprep.subr.mxu0 0.0
        %622 = vmatpush1.msra.mxu0 0.0
        %623 = vmatprep.subr.mxu0 0.0
        %624 = vmatpush1.msra.mxu0 0.0
        %625 = vmatprep.subr.mxu0 0.0
        %626 = vmatpush1.msra.mxu0 0.0
        %627 = vmatprep.subr.mxu0 0.0
        %628 = vmatpush1.msra.mxu0 0.0
        %629 = vmatprep.subr.mxu0 0.0
        %630 = vmatpush1.msra.mxu0 0.0
        %631 = vmatprep.subr.mxu0 0.0
        %632 = vmatpush1.msra.mxu0 0.0
        %633 = vmatprep.subr.mxu0 0.0
        %634 = vmatpush1.msra.mxu0 0.0
        %635 = vmatprep.subr.mxu0 0.0
        %636 = vmatpush1.msra.mxu0 0.0
        %637 = vmatprep.subr.mxu0 0.0
        %638 = vmatpush1.msra.mxu0 0.0
        %639 = vmatprep.subr.mxu0 0.0
        %640 = vmatpush1.msra.mxu0 0.0
        %641 = vmatprep.subr.mxu0 0.0
        %642 = vmatpush1.msra.mxu0 0.0
        %643 = vmatprep.subr.mxu0 0.0
        %644 = vmatpush1.msra.mxu0 0.0
        %645 = vmatprep.subr.mxu0 0.0
        %646 = vmatpush1.msra.mxu0 0.0
        %647 = vmatprep.subr.mxu0 0.0
        %648 = vmatpush1.msra.mxu0 0.0
        %649 = vmatprep.subr.mxu0 0.0
        %650 = vmatpush1.msra.mxu0 0.0
        %651 = vmatprep.mubr.f32.mxu0 0.0
        %652 = vmatmul.mubr.f32.gmra.mrb[0].mxu0 %v450
        %v653 = vpop.f32.mrb[0].mxu0
        %v654 = vadd.f32 0.0, %v653
        %v655 = vpop.f32.mrb[0].mxu0
        %v656 = vadd.f32 0.0, %v655
        %657 = vdwg.mxu0
        %v658 = vadd.f32 %v446, %v583
        %v659 = vadd.f32 %v447, %v585
        %v660 = vadd.f32 %v448, %v654
        %v661 = vadd.f32 %v449, %v656
        %v662 = vxor.u32 %v658, 2147483648
        %v663 = vmul.f32 %v662, 1.442695
        %v664 = vpow.pop %v663
        %v665 = vadd.f32 %v664, 1.0
        %v666 = vrcp.pop %v665
        %v667 = vmul.f32 1.0, %v666
        %v668 = vxor.u32 %v659, 2147483648
        %v669 = vmul.f32 %v668, 1.442695
        %v670 = vpow.pop %v669
        %v671 = vadd.f32 %v670, 1.0
        %v672 = vrcp.pop %v671
        %v673 = vmul.f32 1.0, %v672
        %v674 = vtanh.pop %v660
        %v675 = vxor.u32 %v661, 2147483648
        %v676 = vmul.f32 %v675, 1.442695
        %v677 = vpow.pop %v676
        %v678 = vadd.f32 %v677, 1.0
        %v679 = vrcp.pop %v678
        %v680 = vmul.f32 1.0, %v679
        %v681 = vmul.f32 %v673, %v451
        %v682 = vmul.f32 %v667, %v674
        %v683 = vadd.f32 %v681, %v682
        %v684 = vtanh.pop %v683
        %v685 = vmul.f32 %v680, %v684
        %686 = vst [vmem:[#allocation2] sm:$0xff] %v685
        %687 = vst [vmem:[#allocation3] sm:$0xff] %v683
        %v688 = vpack.c.bf16 %v685, %v685
        %689 = vst [vmem:[%s428] sm:$0xf] %v688
        %s690 = scalar_lea.vmem %s386, 224 [#allocation7]
        %v691 = vld [vmem:[%s690] sm:$0xff]
        %v692 = vld [vmem:[%s690 + $0x8] sm:$0xff]
        %v693 = vld [vmem:[%s690 + $0x10] sm:$0xff]
        %v694 = vld [vmem:[%s690 + $0x18] sm:$0xff]
        %v695 = vld [vmem:[#allocation4] sm:$0xff]
        %v696 = vld [vmem:[#allocation5] sm:$0xff]
        %v697 = vld [vmem:[%s3] sm:$0xff]
        %v698 = vld [vmem:[%s3 + $0x8] sm:$0xff]
        %v699 = vld [vmem:[%s3 + $0x10] sm:$0xff]
        %v700 = vld [vmem:[%s3 + $0x18] sm:$0xff]
        %v701 = vld [vmem:[%s3 + $0x20] sm:$0xff]
        %v702 = vld [vmem:[%s3 + $0x28] sm:$0xff]
        %v703 = vld [vmem:[%s3 + $0x30] sm:$0xff]
        %v704 = vld [vmem:[%s3 + $0x38] sm:$0xff]
        %v705 = vld [vmem:[%s3 + $0x40] sm:$0xff]
        %v706 = vld [vmem:[%s3 + $0x48] sm:$0xff]
        %v707 = vld [vmem:[%s3 + $0x50] sm:$0xff]
        %v708 = vld [vmem:[%s3 + $0x58] sm:$0xff]
        %v709 = vld [vmem:[%s3 + $0x60] sm:$0xff]
        %v710 = vld [vmem:[%s3 + $0x68] sm:$0xff]
        %v711 = vld [vmem:[%s3 + $0x70] sm:$0xff]
        %v712 = vld [vmem:[%s3 + $0x78] sm:$0xff]
        %v713 = vld [vmem:[%s3 + $0x80] sm:$0xff]
        %v714 = vld [vmem:[%s3 + $0x88] sm:$0xff]
        %v715 = vld [vmem:[%s3 + $0x90] sm:$0xff]
        %v716 = vld [vmem:[%s3 + $0x98] sm:$0xff]
        %v717 = vld [vmem:[%s3 + $0xa0] sm:$0xff]
        %v718 = vld [vmem:[%s3 + $0xa8] sm:$0xff]
        %v719 = vld [vmem:[%s3 + $0xb0] sm:$0xff]
        %v720 = vld [vmem:[%s3 + $0xb8] sm:$0xff]
        %v721 = vld [vmem:[%s3 + $0xc0] sm:$0xff]
        %v722 = vld [vmem:[%s3 + $0xc8] sm:$0xff]
        %v723 = vld [vmem:[%s3 + $0xd0] sm:$0xff]
        %v724 = vld [vmem:[%s3 + $0xd8] sm:$0xff]
        %v725 = vld [vmem:[%s3 + $0xe0] sm:$0xff]
        %v726 = vld [vmem:[%s3 + $0xe8] sm:$0xff]
        %v727 = vld [vmem:[%s3 + $0xf0] sm:$0xff]
        %v728 = vld [vmem:[%s3 + $0xf8] sm:$0xff]
        %v729 = vld [vmem:[%s3 + $0x100] sm:$0xff]
        %v730 = vld [vmem:[%s3 + $0x108] sm:$0xff]
        %v731 = vld [vmem:[%s3 + $0x110] sm:$0xff]
        %v732 = vld [vmem:[%s3 + $0x118] sm:$0xff]
        %v733 = vld [vmem:[%s3 + $0x120] sm:$0xff]
        %v734 = vld [vmem:[%s3 + $0x128] sm:$0xff]
        %v735 = vld [vmem:[%s3 + $0x130] sm:$0xff]
        %v736 = vld [vmem:[%s3 + $0x138] sm:$0xff]
        %v737 = vld [vmem:[%s3 + $0x140] sm:$0xff]
        %v738 = vld [vmem:[%s3 + $0x148] sm:$0xff]
        %v739 = vld [vmem:[%s3 + $0x150] sm:$0xff]
        %v740 = vld [vmem:[%s3 + $0x158] sm:$0xff]
        %v741 = vld [vmem:[%s3 + $0x160] sm:$0xff]
        %v742 = vld [vmem:[%s3 + $0x168] sm:$0xff]
        %v743 = vld [vmem:[%s3 + $0x170] sm:$0xff]
        %v744 = vld [vmem:[%s3 + $0x178] sm:$0xff]
        %v745 = vld [vmem:[%s3 + $0x180] sm:$0xff]
        %v746 = vld [vmem:[%s3 + $0x188] sm:$0xff]
        %v747 = vld [vmem:[%s3 + $0x190] sm:$0xff]
        %v748 = vld [vmem:[%s3 + $0x198] sm:$0xff]
        %v749 = vld [vmem:[%s3 + $0x1a0] sm:$0xff]
        %v750 = vld [vmem:[%s3 + $0x1a8] sm:$0xff]
        %v751 = vld [vmem:[%s3 + $0x1b0] sm:$0xff]
        %v752 = vld [vmem:[%s3 + $0x1b8] sm:$0xff]
        %v753 = vld [vmem:[%s3 + $0x1c0] sm:$0xff]
        %v754 = vld [vmem:[%s3 + $0x1c8] sm:$0xff]
        %v755 = vld [vmem:[%s3 + $0x1d0] sm:$0xff]
        %v756 = vld [vmem:[%s3 + $0x1d8] sm:$0xff]
        %v757 = vld [vmem:[%s3 + $0x1e0] sm:$0xff]
        %v758 = vld [vmem:[%s3 + $0x1e8] sm:$0xff]
        %v759 = vld [vmem:[%s3 + $0x1f0] sm:$0xff]
        %v760 = vld [vmem:[%s3 + $0x1f8] sm:$0xff]
        %761 = vmatprep.subr.mxu0 %v698
        %762 = vmatpush1.msra.mxu0 %v697
        %763 = vmatprep.subr.mxu0 %v702
        %764 = vmatpush1.msra.mxu0 %v701
        %765 = vmatprep.subr.mxu0 %v706
        %766 = vmatpush1.msra.mxu0 %v705
        %767 = vmatprep.subr.mxu0 %v710
        %768 = vmatpush1.msra.mxu0 %v709
        %769 = vmatprep.subr.mxu0 %v714
        %770 = vmatpush1.msra.mxu0 %v713
        %771 = vmatprep.subr.mxu0 %v718
        %772 = vmatpush1.msra.mxu0 %v717
        %773 = vmatprep.subr.mxu0 %v722
        %774 = vmatpush1.msra.mxu0 %v721
        %775 = vmatprep.subr.mxu0 %v726
        %776 = vmatpush1.msra.mxu0 %v725
        %777 = vmatprep.subr.mxu0 %v730
        %778 = vmatpush1.msra.mxu0 %v729
        %779 = vmatprep.subr.mxu0 %v734
        %780 = vmatpush1.msra.mxu0 %v733
        %781 = vmatprep.subr.mxu0 %v738
        %782 = vmatpush1.msra.mxu0 %v737
        %783 = vmatprep.subr.mxu0 %v742
        %784 = vmatpush1.msra.mxu0 %v741
        %785 = vmatprep.subr.mxu0 %v746
        %786 = vmatpush1.msra.mxu0 %v745
        %787 = vmatprep.subr.mxu0 %v750
        %788 = vmatpush1.msra.mxu0 %v749
        %789 = vmatprep.subr.mxu0 %v754
        %790 = vmatpush1.msra.mxu0 %v753
        %791 = vmatprep.subr.mxu0 %v758
        %792 = vmatpush1.msra.mxu0 %v757
        %793 = vmatprep.subr.mxu0 0.0
        %794 = vmatpush1.msra.mxu0 0.0
        %795 = vmatprep.subr.mxu0 0.0
        %796 = vmatpush1.msra.mxu0 0.0
        %797 = vmatprep.subr.mxu0 0.0
        %798 = vmatpush1.msra.mxu0 0.0
        %799 = vmatprep.subr.mxu0 0.0
        %800 = vmatpush1.msra.mxu0 0.0
        %801 = vmatprep.subr.mxu0 0.0
        %802 = vmatpush1.msra.mxu0 0.0
        %803 = vmatprep.subr.mxu0 0.0
        %804 = vmatpush1.msra.mxu0 0.0
        %805 = vmatprep.subr.mxu0 0.0
        %806 = vmatpush1.msra.mxu0 0.0
        %807 = vmatprep.subr.mxu0 0.0
        %808 = vmatpush1.msra.mxu0 0.0
        %809 = vmatprep.subr.mxu0 0.0
        %810 = vmatpush1.msra.mxu0 0.0
        %811 = vmatprep.subr.mxu0 0.0
        %812 = vmatpush1.msra.mxu0 0.0
        %813 = vmatprep.subr.mxu0 0.0
        %814 = vmatpush1.msra.mxu0 0.0
        %815 = vmatprep.subr.mxu0 0.0
        %816 = vmatpush1.msra.mxu0 0.0
        %817 = vmatprep.subr.mxu0 0.0
        %818 = vmatpush1.msra.mxu0 0.0
        %819 = vmatprep.subr.mxu0 0.0
        %820 = vmatpush1.msra.mxu0 0.0
        %821 = vmatprep.subr.mxu0 0.0
        %822 = vmatpush1.msra.mxu0 0.0
        %823 = vmatprep.subr.mxu0 0.0
        %824 = vmatpush1.msra.mxu0 0.0
        %825 = vmatprep.mubr.f32.mxu0 0.0
        %826 = vmatmul.mubr.f32.gmra.mrb[0].mxu0 %v695
        %v827 = vpop.f32.mrb[0].mxu0
        %v828 = vadd.f32 0.0, %v827
        %v829 = vpop.f32.mrb[0].mxu0
        %v830 = vadd.f32 0.0, %v829
        %831 = vdwg.mxu0
        %832 = vmatprep.subr.mxu0 %v700
        %833 = vmatpush1.msra.mxu0 %v699
        %834 = vmatprep.subr.mxu0 %v704
        %835 = vmatpush1.msra.mxu0 %v703
        %836 = vmatprep.subr.mxu0 %v708
        %837 = vmatpush1.msra.mxu0 %v707
        %838 = vmatprep.subr.mxu0 %v712
        %839 = vmatpush1.msra.mxu0 %v711
        %840 = vmatprep.subr.mxu0 %v716
        %841 = vmatpush1.msra.mxu0 %v715
        %842 = vmatprep.subr.mxu0 %v720
        %843 = vmatpush1.msra.mxu0 %v719
        %844 = vmatprep.subr.mxu0 %v724
        %845 = vmatpush1.msra.mxu0 %v723
        %846 = vmatprep.subr.mxu0 %v728
        %847 = vmatpush1.msra.mxu0 %v727
        %848 = vmatprep.subr.mxu0 %v732
        %849 = vmatpush1.msra.mxu0 %v731
        %850 = vmatprep.subr.mxu0 %v736
        %851 = vmatpush1.msra.mxu0 %v735
        %852 = vmatprep.subr.mxu0 %v740
        %853 = vmatpush1.msra.mxu0 %v739
        %854 = vmatprep.subr.mxu0 %v744
        %855 = vmatpush1.msra.mxu0 %v743
        %856 = vmatprep.subr.mxu0 %v748
        %857 = vmatpush1.msra.mxu0 %v747
        %858 = vmatprep.subr.mxu0 %v752
        %859 = vmatpush1.msra.mxu0 %v751
        %860 = vmatprep.subr.mxu0 %v756
        %861 = vmatpush1.msra.mxu0 %v755
        %862 = vmatprep.subr.mxu0 %v760
        %863 = vmatpush1.msra.mxu0 %v759
        %864 = vmatprep.subr.mxu0 0.0
        %865 = vmatpush1.msra.mxu0 0.0
        %866 = vmatprep.subr.mxu0 0.0
        %867 = vmatpush1.msra.mxu0 0.0
        %868 = vmatprep.subr.mxu0 0.0
        %869 = vmatpush1.msra.mxu0 0.0
        %870 = vmatprep.subr.mxu0 0.0
        %871 = vmatpush1.msra.mxu0 0.0
        %872 = vmatprep.subr.mxu0 0.0
        %873 = vmatpush1.msra.mxu0 0.0
        %874 = vmatprep.subr.mxu0 0.0
        %875 = vmatpush1.msra.mxu0 0.0
        %876 = vmatprep.subr.mxu0 0.0
        %877 = vmatpush1.msra.mxu0 0.0
        %878 = vmatprep.subr.mxu0 0.0
        %879 = vmatpush1.msra.mxu0 0.0
        %880 = vmatprep.subr.mxu0 0.0
        %881 = vmatpush1.msra.mxu0 0.0
        %882 = vmatprep.subr.mxu0 0.0
        %883 = vmatpush1.msra.mxu0 0.0
        %884 = vmatprep.subr.mxu0 0.0
        %885 = vmatpush1.msra.mxu0 0.0
        %886 = vmatprep.subr.mxu0 0.0
        %887 = vmatpush1.msra.mxu0 0.0
        %888 = vmatprep.subr.mxu0 0.0
        %889 = vmatpush1.msra.mxu0 0.0
        %890 = vmatprep.subr.mxu0 0.0
        %891 = vmatpush1.msra.mxu0 0.0
        %892 = vmatprep.subr.mxu0 0.0
        %893 = vmatpush1.msra.mxu0 0.0
        %894 = vmatprep.subr.mxu0 0.0
        %895 = vmatpush1.msra.mxu0 0.0
        %896 = vmatprep.mubr.f32.mxu0 0.0
        %897 = vmatmul.mubr.f32.gmra.mrb[0].mxu0 %v695
        %v898 = vpop.f32.mrb[0].mxu0
        %v899 = vadd.f32 0.0, %v898
        %v900 = vpop.f32.mrb[0].mxu0
        %v901 = vadd.f32 0.0, %v900
        %902 = vdwg.mxu0
        %v903 = vadd.f32 %v691, %v828
        %v904 = vadd.f32 %v692, %v830
        %v905 = vadd.f32 %v693, %v899
        %v906 = vadd.f32 %v694, %v901
        %v907 = vxor.u32 %v903, 2147483648
        %v908 = vmul.f32 %v907, 1.442695
        %v909 = vpow.pop %v908
        %v910 = vadd.f32 %v909, 1.0
        %v911 = vrcp.pop %v910
        %v912 = vmul.f32 1.0, %v911
        %v913 = vxor.u32 %v904, 2147483648
        %v914 = vmul.f32 %v913, 1.442695
        %v915 = vpow.pop %v914
        %v916 = vadd.f32 %v915, 1.0
        %v917 = vrcp.pop %v916
        %v918 = vmul.f32 1.0, %v917
        %v919 = vtanh.pop %v905
        %v920 = vxor.u32 %v906, 2147483648
        %v921 = vmul.f32 %v920, 1.442695
        %v922 = vpow.pop %v921
        %v923 = vadd.f32 %v922, 1.0
        %v924 = vrcp.pop %v923
        %v925 = vmul.f32 1.0, %v924
        %v926 = vmul.f32 %v918, %v696
        %v927 = vmul.f32 %v912, %v919
        %v928 = vadd.f32 %v926, %v927
        %v929 = vtanh.pop %v928
        %v930 = vmul.f32 %v925, %v929
        %931 = vst [vmem:[#allocation4] sm:$0xff] %v930
        %932 = vst [vmem:[#allocation5] sm:$0xff] %v928
        %v933 = vpack.c.bf16 %v930, %v930
        %s934 = scalar_lea.vmem %s435, 28
        %935 = vst [vmem:[%s934] sm:$0xf] %v933
        %s936 = scalar_lea.vmem %s379, 32 [#allocation6]
        %v937 = vld [vmem:[%s936] sm:$0xff]
        %v938 = vld [vmem:[%s936 + $0x8] sm:$0xff]
        %v939 = vld [vmem:[%s936 + $0x10] sm:$0xff]
        %v940 = vld [vmem:[%s936 + $0x18] sm:$0xff]
        %v941 = vld [vmem:[#allocation2] sm:$0xff]
        %v942 = vld [vmem:[#allocation3] sm:$0xff]
        %v943 = vld [vmem:[%s2] sm:$0xff]
        %v944 = vld [vmem:[%s2 + $0x8] sm:$0xff]
        %v945 = vld [vmem:[%s2 + $0x10] sm:$0xff]
        %v946 = vld [vmem:[%s2 + $0x18] sm:$0xff]
        %v947 = vld [vmem:[%s2 + $0x20] sm:$0xff]
        %v948 = vld [vmem:[%s2 + $0x28] sm:$0xff]
        %v949 = vld [vmem:[%s2 + $0x30] sm:$0xff]
        %v950 = vld [vmem:[%s2 + $0x38] sm:$0xff]
        %v951 = vld [vmem:[%s2 + $0x40] sm:$0xff]
        %v952 = vld [vmem:[%s2 + $0x48] sm:$0xff]
        %v953 = vld [vmem:[%s2 + $0x50] sm:$0xff]
        %v954 = vld [vmem:[%s2 + $0x58] sm:$0xff]
        %v955 = vld [vmem:[%s2 + $0x60] sm:$0xff]
        %v956 = vld [vmem:[%s2 + $0x68] sm:$0xff]
        %v957 = vld [vmem:[%s2 + $0x70] sm:$0xff]
        %v958 = vld [vmem:[%s2 + $0x78] sm:$0xff]
        %v959 = vld [vmem:[%s2 + $0x80] sm:$0xff]
        %v960 = vld [vmem:[%s2 + $0x88] sm:$0xff]
        %v961 = vld [vmem:[%s2 + $0x90] sm:$0xff]
        %v962 = vld [vmem:[%s2 + $0x98] sm:$0xff]
        %v963 = vld [vmem:[%s2 + $0xa0] sm:$0xff]
        %v964 = vld [vmem:[%s2 + $0xa8] sm:$0xff]
        %v965 = vld [vmem:[%s2 + $0xb0] sm:$0xff]
        %v966 = vld [vmem:[%s2 + $0xb8] sm:$0xff]
        %v967 = vld [vmem:[%s2 + $0xc0] sm:$0xff]
        %v968 = vld [vmem:[%s2 + $0xc8] sm:$0xff]
        %v969 = vld [vmem:[%s2 + $0xd0] sm:$0xff]
        %v970 = vld [vmem:[%s2 + $0xd8] sm:$0xff]
        %v971 = vld [vmem:[%s2 + $0xe0] sm:$0xff]
        %v972 = vld [vmem:[%s2 + $0xe8] sm:$0xff]
        %v973 = vld [vmem:[%s2 + $0xf0] sm:$0xff]
        %v974 = vld [vmem:[%s2 + $0xf8] sm:$0xff]
        %v975 = vld [vmem:[%s2 + $0x100] sm:$0xff]
        %v976 = vld [vmem:[%s2 + $0x108] sm:$0xff]
        %v977 = vld [vmem:[%s2 + $0x110] sm:$0xff]
        %v978 = vld [vmem:[%s2 + $0x118] sm:$0xff]
        %v979 = vld [vmem:[%s2 + $0x120] sm:$0xff]
        %v980 = vld [vmem:[%s2 + $0x128] sm:$0xff]
        %v981 = vld [vmem:[%s2 + $0x130] sm:$0xff]
        %v982 = vld [vmem:[%s2 + $0x138] sm:$0xff]
        %v983 = vld [vmem:[%s2 + $0x140] sm:$0xff]
        %v984 = vld [vmem:[%s2 + $0x148] sm:$0xff]
        %v985 = vld [vmem:[%s2 + $0x150] sm:$0xff]
        %v986 = vld [vmem:[%s2 + $0x158] sm:$0xff]
        %v987 = vld [vmem:[%s2 + $0x160] sm:$0xff]
        %v988 = vld [vmem:[%s2 + $0x168] sm:$0xff]
        %v989 = vld [vmem:[%s2 + $0x170] sm:$0xff]
        %v990 = vld [vmem:[%s2 + $0x178] sm:$0xff]
        %v991 = vld [vmem:[%s2 + $0x180] sm:$0xff]
        %v992 = vld [vmem:[%s2 + $0x188] sm:$0xff]
        %v993 = vld [vmem:[%s2 + $0x190] sm:$0xff]
        %v994 = vld [vmem:[%s2 + $0x198] sm:$0xff]
        %v995 = vld [vmem:[%s2 + $0x1a0] sm:$0xff]
        %v996 = vld [vmem:[%s2 + $0x1a8] sm:$0xff]
        %v997 = vld [vmem:[%s2 + $0x1b0] sm:$0xff]
        %v998 = vld [vmem:[%s2 + $0x1b8] sm:$0xff]
        %v999 = vld [vmem:[%s2 + $0x1c0] sm:$0xff]
        %v1000 = vld [vmem:[%s2 + $0x1c8] sm:$0xff]
        %v1001 = vld [vmem:[%s2 + $0x1d0] sm:$0xff]
        %v1002 = vld [vmem:[%s2 + $0x1d8] sm:$0xff]
        %v1003 = vld [vmem:[%s2 + $0x1e0] sm:$0xff]
        %v1004 = vld [vmem:[%s2 + $0x1e8] sm:$0xff]
        %v1005 = vld [vmem:[%s2 + $0x1f0] sm:$0xff]
        %v1006 = vld [vmem:[%s2 + $0x1f8] sm:$0xff]
        %1007 = vmatprep.subr.mxu0 %v944
        %1008 = vmatpush1.msra.mxu0 %v943
        %1009 = vmatprep.subr.mxu0 %v948
        %1010 = vmatpush1.msra.mxu0 %v947
        %1011 = vmatprep.subr.mxu0 %v952
        %1012 = vmatpush1.msra.mxu0 %v951
        %1013 = vmatprep.subr.mxu0 %v956
        %1014 = vmatpush1.msra.mxu0 %v955
        %1015 = vmatprep.subr.mxu0 %v960
        %1016 = vmatpush1.msra.mxu0 %v959
        %1017 = vmatprep.subr.mxu0 %v964
        %1018 = vmatpush1.msra.mxu0 %v963
        %1019 = vmatprep.subr.mxu0 %v968
        %1020 = vmatpush1.msra.mxu0 %v967
        %1021 = vmatprep.subr.mxu0 %v972
        %1022 = vmatpush1.msra.mxu0 %v971
        %1023 = vmatprep.subr.mxu0 %v976
        %1024 = vmatpush1.msra.mxu0 %v975
        %1025 = vmatprep.subr.mxu0 %v980
        %1026 = vmatpush1.msra.mxu0 %v979
        %1027 = vmatprep.subr.mxu0 %v984
        %1028 = vmatpush1.msra.mxu0 %v983
        %1029 = vmatprep.subr.mxu0 %v988
        %1030 = vmatpush1.msra.mxu0 %v987
        %1031 = vmatprep.subr.mxu0 %v992
        %1032 = vmatpush1.msra.mxu0 %v991
        %1033 = vmatprep.subr.mxu0 %v996
        %1034 = vmatpush1.msra.mxu0 %v995
        %1035 = vmatprep.subr.mxu0 %v1000
        %1036 = vmatpush1.msra.mxu0 %v999
        %1037 = vmatprep.subr.mxu0 %v1004
        %1038 = vmatpush1.msra.mxu0 %v1003
        %1039 = vmatprep.subr.mxu0 0.0
        %1040 = vmatpush1.msra.mxu0 0.0
        %1041 = vmatprep.subr.mxu0 0.0
        %1042 = vmatpush1.msra.mxu0 0.0
        %1043 = vmatprep.subr.mxu0 0.0
        %1044 = vmatpush1.msra.mxu0 0.0
        %1045 = vmatprep.subr.mxu0 0.0
        %1046 = vmatpush1.msra.mxu0 0.0
        %1047 = vmatprep.subr.mxu0 0.0
        %1048 = vmatpush1.msra.mxu0 0.0
        %1049 = vmatprep.subr.mxu0 0.0
        %1050 = vmatpush1.msra.mxu0 0.0
        %1051 = vmatprep.subr.mxu0 0.0
        %1052 = vmatpush1.msra.mxu0 0.0
        %1053 = vmatprep.subr.mxu0 0.0
        %1054 = vmatpush1.msra.mxu0 0.0
        %1055 = vmatprep.subr.mxu0 0.0
        %1056 = vmatpush1.msra.mxu0 0.0
        %1057 = vmatprep.subr.mxu0 0.0
        %1058 = vmatpush1.msra.mxu0 0.0
        %1059 = vmatprep.subr.mxu0 0.0
        %1060 = vmatpush1.msra.mxu0 0.0
        %1061 = vmatprep.subr.mxu0 0.0
        %1062 = vmatpush1.msra.mxu0 0.0
        %1063 = vmatprep.subr.mxu0 0.0
        %1064 = vmatpush1.msra.mxu0 0.0
        %1065 = vmatprep.subr.mxu0 0.0
        %1066 = vmatpush1.msra.mxu0 0.0
        %1067 = vmatprep.subr.mxu0 0.0
        %1068 = vmatpush1.msra.mxu0 0.0
        %1069 = vmatprep.subr.mxu0 0.0
        %1070 = vmatpush1.msra.mxu0 0.0
        %1071 = vmatprep.mubr.f32.mxu0 0.0
        %1072 = vmatmul.mubr.f32.gmra.mrb[0].mxu0 %v941
        %v1073 = vpop.f32.mrb[0].mxu0
        %v1074 = vadd.f32 0.0, %v1073
        %v1075 = vpop.f32.mrb[0].mxu0
        %v1076 = vadd.f32 0.0, %v1075
        %1077 = vdwg.mxu0
        %1078 = vmatprep.subr.mxu0 %v946
        %1079 = vmatpush1.msra.mxu0 %v945
        %1080 = vmatprep.subr.mxu0 %v950
        %1081 = vmatpush1.msra.mxu0 %v949
        %1082 = vmatprep.subr.mxu0 %v954
        %1083 = vmatpush1.msra.mxu0 %v953
        %1084 = vmatprep.subr.mxu0 %v958
        %1085 = vmatpush1.msra.mxu0 %v957
        %1086 = vmatprep.subr.mxu0 %v962
        %1087 = vmatpush1.msra.mxu0 %v961
        %1088 = vmatprep.subr.mxu0 %v966
        %1089 = vmatpush1.msra.mxu0 %v965
        %1090 = vmatprep.subr.mxu0 %v970
        %1091 = vmatpush1.msra.mxu0 %v969
        %1092 = vmatprep.subr.mxu0 %v974
        %1093 = vmatpush1.msra.mxu0 %v973
        %1094 = vmatprep.subr.mxu0 %v978
        %1095 = vmatpush1.msra.mxu0 %v977
        %1096 = vmatprep.subr.mxu0 %v982
        %1097 = vmatpush1.msra.mxu0 %v981
        %1098 = vmatprep.subr.mxu0 %v986
        %1099 = vmatpush1.msra.mxu0 %v985
        %1100 = vmatprep.subr.mxu0 %v990
        %1101 = vmatpush1.msra.mxu0 %v989
        %1102 = vmatprep.subr.mxu0 %v994
        %1103 = vmatpush1.msra.mxu0 %v993
        %1104 = vmatprep.subr.mxu0 %v998
        %1105 = vmatpush1.msra.mxu0 %v997
        %1106 = vmatprep.subr.mxu0 %v1002
        %1107 = vmatpush1.msra.mxu0 %v1001
        %1108 = vmatprep.subr.mxu0 %v1006
        %1109 = vmatpush1.msra.mxu0 %v1005
        %1110 = vmatprep.subr.mxu0 0.0
        %1111 = vmatpush1.msra.mxu0 0.0
        %1112 = vmatprep.subr.mxu0 0.0
        %1113 = vmatpush1.msra.mxu0 0.0
        %1114 = vmatprep.subr.mxu0 0.0
        %1115 = vmatpush1.msra.mxu0 0.0
        %1116 = vmatprep.subr.mxu0 0.0
        %1117 = vmatpush1.msra.mxu0 0.0
        %1118 = vmatprep.subr.mxu0 0.0
        %1119 = vmatpush1.msra.mxu0 0.0
        %1120 = vmatprep.subr.mxu0 0.0
        %1121 = vmatpush1.msra.mxu0 0.0
        %1122 = vmatprep.subr.mxu0 0.0
        %1123 = vmatpush1.msra.mxu0 0.0
        %1124 = vmatprep.subr.mxu0 0.0
        %1125 = vmatpush1.msra.mxu0 0.0
        %1126 = vmatprep.subr.mxu0 0.0
        %1127 = vmatpush1.msra.mxu0 0.0
        %1128 = vmatprep.subr.mxu0 0.0
        %1129 = vmatpush1.msra.mxu0 0.0
        %1130 = vmatprep.subr.mxu0 0.0
        %1131 = vmatpush1.msra.mxu0 0.0
        %1132 = vmatprep.subr.mxu0 0.0
        %1133 = vmatpush1.msra.mxu0 0.0
        %1134 = vmatprep.subr.mxu0 0.0
        %1135 = vmatpush1.msra.mxu0 0.0
        %1136 = vmatprep.subr.mxu0 0.0
        %1137 = vmatpush1.msra.mxu0 0.0
        %1138 = vmatprep.subr.mxu0 0.0
        %1139 = vmatpush1.msra.mxu0 0.0
        %1140 = vmatprep.subr.mxu0 0.0
        %1141 = vmatpush1.msra.mxu0 0.0
        %1142 = vmatprep.mubr.f32.mxu0 0.0
        %1143 = vmatmul.mubr.f32.gmra.mrb[0].mxu0 %v941
        %v1144 = vpop.f32.mrb[0].mxu0
        %v1145 = vadd.f32 0.0, %v1144
        %v1146 = vpop.f32.mrb[0].mxu0
        %v1147 = vadd.f32 0.0, %v1146
        %1148 = vdwg.mxu0
        %v1149 = vadd.f32 %v937, %v1074
        %v1150 = vadd.f32 %v938, %v1076
        %v1151 = vadd.f32 %v939, %v1145
        %v1152 = vadd.f32 %v940, %v1147
        %v1153 = vxor.u32 %v1149, 2147483648
        %v1154 = vmul.f32 %v1153, 1.442695
        %v1155 = vpow.pop %v1154
        %v1156 = vadd.f32 %v1155, 1.0
        %v1157 = vrcp.pop %v1156
        %v1158 = vmul.f32 1.0, %v1157
        %v1159 = vxor.u32 %v1150, 2147483648
        %v1160 = vmul.f32 %v1159, 1.442695
        %v1161 = vpow.pop %v1160
        %v1162 = vadd.f32 %v1161, 1.0
        %v1163 = vrcp.pop %v1162
        %v1164 = vmul.f32 1.0, %v1163
        %v1165 = vtanh.pop %v1151
        %v1166 = vxor.u32 %v1152, 2147483648
        %v1167 = vmul.f32 %v1166, 1.442695
        %v1168 = vpow.pop %v1167
        %v1169 = vadd.f32 %v1168, 1.0
        %v1170 = vrcp.pop %v1169
        %v1171 = vmul.f32 1.0, %v1170
        %v1172 = vmul.f32 %v1164, %v942
        %v1173 = vmul.f32 %v1158, %v1165
        %v1174 = vadd.f32 %v1172, %v1173
        %v1175 = vtanh.pop %v1174
        %v1176 = vmul.f32 %v1171, %v1175
        %1177 = vst [vmem:[#allocation2] sm:$0xff] %v1176
        %1178 = vst [vmem:[#allocation3] sm:$0xff] %v1174
        %v1179 = vpack.c.bf16 %v1176, %v1176
        %s1180 = scalar_lea.vmem %s428, 4
        %1181 = vst [vmem:[%s1180] sm:$0xf] %v1179
        %s1182 = scalar_lea.vmem %s386, 192 [#allocation7]
        %v1183 = vld [vmem:[%s1182] sm:$0xff]
        %v1184 = vld [vmem:[%s1182 + $0x8] sm:$0xff]
        %v1185 = vld [vmem:[%s1182 + $0x10] sm:$0xff]
        %v1186 = vld [vmem:[%s1182 + $0x18] sm:$0xff]
        %v1187 = vld [vmem:[#allocation4] sm:$0xff]
        %v1188 = vld [vmem:[#allocation5] sm:$0xff]
        %v1189 = vld [vmem:[%s3] sm:$0xff]
        %v1190 = vld [vmem:[%s3 + $0x8] sm:$0xff]
        %v1191 = vld [vmem:[%s3 + $0x10] sm:$0xff]
        %v1192 = vld [vmem:[%s3 + $0x18] sm:$0xff]
        %v1193 = vld [vmem:[%s3 + $0x20] sm:$0xff]
        %v1194 = vld [vmem:[%s3 + $0x28] sm:$0xff]
        %v1195 = vld [vmem:[%s3 + $0x30] sm:$0xff]
        %v1196 = vld [vmem:[%s3 + $0x38] sm:$0xff]
        %v1197 = vld [vmem:[%s3 + $0x40] sm:$0xff]
        %v1198 = vld [vmem:[%s3 + $0x48] sm:$0xff]
        %v1199 = vld [vmem:[%s3 + $0x50] sm:$0xff]
        %v1200 = vld [vmem:[%s3 + $0x58] sm:$0xff]
        %v1201 = vld [vmem:[%s3 + $0x60] sm:$0xff]
        %v1202 = vld [vmem:[%s3 + $0x68] sm:$0xff]
        %v1203 = vld [vmem:[%s3 + $0x70] sm:$0xff]
        %v1204 = vld [vmem:[%s3 + $0x78] sm:$0xff]
        %v1205 = vld [vmem:[%s3 + $0x80] sm:$0xff]
        %v1206 = vld [vmem:[%s3 + $0x88] sm:$0xff]
        %v1207 = vld [vmem:[%s3 + $0x90] sm:$0xff]
        %v1208 = vld [vmem:[%s3 + $0x98] sm:$0xff]
        %v1209 = vld [vmem:[%s3 + $0xa0] sm:$0xff]
        %v1210 = vld [vmem:[%s3 + $0xa8] sm:$0xff]
        %v1211 = vld [vmem:[%s3 + $0xb0] sm:$0xff]
        %v1212 = vld [vmem:[%s3 + $0xb8] sm:$0xff]
        %v1213 = vld [vmem:[%s3 + $0xc0] sm:$0xff]
        %v1214 = vld [vmem:[%s3 + $0xc8] sm:$0xff]
        %v1215 = vld [vmem:[%s3 + $0xd0] sm:$0xff]
        %v1216 = vld [vmem:[%s3 + $0xd8] sm:$0xff]
        %v1217 = vld [vmem:[%s3 + $0xe0] sm:$0xff]
        %v1218 = vld [vmem:[%s3 + $0xe8] sm:$0xff]
        %v1219 = vld [vmem:[%s3 + $0xf0] sm:$0xff]
        %v1220 = vld [vmem:[%s3 + $0xf8] sm:$0xff]
        %v1221 = vld [vmem:[%s3 + $0x100] sm:$0xff]
        %v1222 = vld [vmem:[%s3 + $0x108] sm:$0xff]
        %v1223 = vld [vmem:[%s3 + $0x110] sm:$0xff]
        %v1224 = vld [vmem:[%s3 + $0x118] sm:$0xff]
        %v1225 = vld [vmem:[%s3 + $0x120] sm:$0xff]
        %v1226 = vld [vmem:[%s3 + $0x128] sm:$0xff]
        %v1227 = vld [vmem:[%s3 + $0x130] sm:$0xff]
        %v1228 = vld [vmem:[%s3 + $0x138] sm:$0xff]
        %v1229 = vld [vmem:[%s3 + $0x140] sm:$0xff]
        %v1230 = vld [vmem:[%s3 + $0x148] sm:$0xff]
        %v1231 = vld [vmem:[%s3 + $0x150] sm:$0xff]
        %v1232 = vld [vmem:[%s3 + $0x158] sm:$0xff]
        %v1233 = vld [vmem:[%s3 + $0x160] sm:$0xff]
        %v1234 = vld [vmem:[%s3 + $0x168] sm:$0xff]
        %v1235 = vld [vmem:[%s3 + $0x170] sm:$0xff]
        %v1236 = vld [vmem:[%s3 + $0x178] sm:$0xff]
        %v1237 = vld [vmem:[%s3 + $0x180] sm:$0xff]
        %v1238 = vld [vmem:[%s3 + $0x188] sm:$0xff]
        %v1239 = vld [vmem:[%s3 + $0x190] sm:$0xff]
        %v1240 = vld [vmem:[%s3 + $0x198] sm:$0xff]
        %v1241 = vld [vmem:[%s3 + $0x1a0] sm:$0xff]
        %v1242 = vld [vmem:[%s3 + $0x1a8] sm:$0xff]
        %v1243 = vld [vmem:[%s3 + $0x1b0] sm:$0xff]
        %v1244 = vld [vmem:[%s3 + $0x1b8] sm:$0xff]
        %v1245 = vld [vmem:[%s3 + $0x1c0] sm:$0xff]
        %v1246 = vld [vmem:[%s3 + $0x1c8] sm:$0xff]
        %v1247 = vld [vmem:[%s3 + $0x1d0] sm:$0xff]
        %v1248 = vld [vmem:[%s3 + $0x1d8] sm:$0xff]
        %v1249 = vld [vmem:[%s3 + $0x1e0] sm:$0xff]
        %v1250 = vld [vmem:[%s3 + $0x1e8] sm:$0xff]
        %v1251 = vld [vmem:[%s3 + $0x1f0] sm:$0xff]
        %v1252 = vld [vmem:[%s3 + $0x1f8] sm:$0xff]
        %1253 = vmatprep.subr.mxu0 %v1190
        %1254 = vmatpush1.msra.mxu0 %v1189
        %1255 = vmatprep.subr.mxu0 %v1194
        %1256 = vmatpush1.msra.mxu0 %v1193
        %1257 = vmatprep.subr.mxu0 %v1198
        %1258 = vmatpush1.msra.mxu0 %v1197
        %1259 = vmatprep.subr.mxu0 %v1202
        %1260 = vmatpush1.msra.mxu0 %v1201
        %1261 = vmatprep.subr.mxu0 %v1206
        %1262 = vmatpush1.msra.mxu0 %v1205
        %1263 = vmatprep.subr.mxu0 %v1210
        %1264 = vmatpush1.msra.mxu0 %v1209
        %1265 = vmatprep.subr.mxu0 %v1214
        %1266 = vmatpush1.msra.mxu0 %v1213
        %1267 = vmatprep.subr.mxu0 %v1218
        %1268 = vmatpush1.msra.mxu0 %v1217
        %1269 = vmatprep.subr.mxu0 %v1222
        %1270 = vmatpush1.msra.mxu0 %v1221
        %1271 = vmatprep.subr.mxu0 %v1226
        %1272 = vmatpush1.msra.mxu0 %v1225
        %1273 = vmatprep.subr.mxu0 %v1230
        %1274 = vmatpush1.msra.mxu0 %v1229
        %1275 = vmatprep.subr.mxu0 %v1234
        %1276 = vmatpush1.msra.mxu0 %v1233
        %1277 = vmatprep.subr.mxu0 %v1238
        %1278 = vmatpush1.msra.mxu0 %v1237
        %1279 = vmatprep.subr.mxu0 %v1242
        %1280 = vmatpush1.msra.mxu0 %v1241
        %1281 = vmatprep.subr.mxu0 %v1246
        %1282 = vmatpush1.msra.mxu0 %v1245
        %1283 = vmatprep.subr.mxu0 %v1250
        %1284 = vmatpush1.msra.mxu0 %v1249
        %1285 = vmatprep.subr.mxu0 0.0
        %1286 = vmatpush1.msra.mxu0 0.0
        %1287 = vmatprep.subr.mxu0 0.0
        %1288 = vmatpush1.msra.mxu0 0.0
        %1289 = vmatprep.subr.mxu0 0.0
        %1290 = vmatpush1.msra.mxu0 0.0
        %1291 = vmatprep.subr.mxu0 0.0
        %1292 = vmatpush1.msra.mxu0 0.0
        %1293 = vmatprep.subr.mxu0 0.0
        %1294 = vmatpush1.msra.mxu0 0.0
        %1295 = vmatprep.subr.mxu0 0.0
        %1296 = vmatpush1.msra.mxu0 0.0
        %1297 = vmatprep.subr.mxu0 0.0
        %1298 = vmatpush1.msra.mxu0 0.0
        %1299 = vmatprep.subr.mxu0 0.0
        %1300 = vmatpush1.msra.mxu0 0.0
        %1301 = vmatprep.subr.mxu0 0.0
        %1302 = vmatpush1.msra.mxu0 0.0
        %1303 = vmatprep.subr.mxu0 0.0
        %1304 = vmatpush1.msra.mxu0 0.0
        %1305 = vmatprep.subr.mxu0 0.0
        %1306 = vmatpush1.msra.mxu0 0.0
        %1307 = vmatprep.subr.mxu0 0.0
        %1308 = vmatpush1.msra.mxu0 0.0
        %1309 = vmatprep.subr.mxu0 0.0
        %1310 = vmatpush1.msra.mxu0 0.0
        %1311 = vmatprep.subr.mxu0 0.0
        %1312 = vmatpush1.msra.mxu0 0.0
        %1313 = vmatprep.subr.mxu0 0.0
        %1314 = vmatpush1.msra.mxu0 0.0
        %1315 = vmatprep.subr.mxu0 0.0
        %1316 = vmatpush1.msra.mxu0 0.0
        %1317 = vmatprep.mubr.f32.mxu0 0.0
        %1318 = vmatmul.mubr.f32.gmra.mrb[0].mxu0 %v1187
        %v1319 = vpop.f32.mrb[0].mxu0
        %v1320 = vadd.f32 0.0, %v1319
        %v1321 = vpop.f32.mrb[0].mxu0
        %v1322 = vadd.f32 0.0, %v1321
        %1323 = vdwg.mxu0
        %1324 = vmatprep.subr.mxu0 %v1192
        %1325 = vmatpush1.msra.mxu0 %v1191
        %1326 = vmatprep.subr.mxu0 %v1196
        %1327 = vmatpush1.msra.mxu0 %v1195
        %1328 = vmatprep.subr.mxu0 %v1200
        %1329 = vmatpush1.msra.mxu0 %v1199
        %1330 = vmatprep.subr.mxu0 %v1204
        %1331 = vmatpush1.msra.mxu0 %v1203
        %1332 = vmatprep.subr.mxu0 %v1208
        %1333 = vmatpush1.msra.mxu0 %v1207
        %1334 = vmatprep.subr.mxu0 %v1212
        %1335 = vmatpush1.msra.mxu0 %v1211
        %1336 = vmatprep.subr.mxu0 %v1216
        %1337 = vmatpush1.msra.mxu0 %v1215
        %1338 = vmatprep.subr.mxu0 %v1220
        %1339 = vmatpush1.msra.mxu0 %v1219
        %1340 = vmatprep.subr.mxu0 %v1224
        %1341 = vmatpush1.msra.mxu0 %v1223
        %1342 = vmatprep.subr.mxu0 %v1228
        %1343 = vmatpush1.msra.mxu0 %v1227
        %1344 = vmatprep.subr.mxu0 %v1232
        %1345 = vmatpush1.msra.mxu0 %v1231
        %1346 = vmatprep.subr.mxu0 %v1236
        %1347 = vmatpush1.msra.mxu0 %v1235
        %1348 = vmatprep.subr.mxu0 %v1240
        %1349 = vmatpush1.msra.mxu0 %v1239
        %1350 = vmatprep.subr.mxu0 %v1244
        %1351 = vmatpush1.msra.mxu0 %v1243
        %1352 = vmatprep.subr.mxu0 %v1248
        %1353 = vmatpush1.msra.mxu0 %v1247
        %1354 = vmatprep.subr.mxu0 %v1252
        %1355 = vmatpush1.msra.mxu0 %v1251
        %1356 = vmatprep.subr.mxu0 0.0
        %1357 = vmatpush1.msra.mxu0 0.0
        %1358 = vmatprep.subr.mxu0 0.0
        %1359 = vmatpush1.msra.mxu0 0.0
        %1360 = vmatprep.subr.mxu0 0.0
        %1361 = vmatpush1.msra.mxu0 0.0
        %1362 = vmatprep.subr.mxu0 0.0
        %1363 = vmatpush1.msra.mxu0 0.0
        %1364 = vmatprep.subr.mxu0 0.0
        %1365 = vmatpush1.msra.mxu0 0.0
        %1366 = vmatprep.subr.mxu0 0.0
        %1367 = vmatpush1.msra.mxu0 0.0
        %1368 = vmatprep.subr.mxu0 0.0
        %1369 = vmatpush1.msra.mxu0 0.0
        %1370 = vmatprep.subr.mxu0 0.0
        %1371 = vmatpush1.msra.mxu0 0.0
        %1372 = vmatprep.subr.mxu0 0.0
        %1373 = vmatpush1.msra.mxu0 0.0
        %1374 = vmatprep.subr.mxu0 0.0
        %1375 = vmatpush1.msra.mxu0 0.0
        %1376 = vmatprep.subr.mxu0 0.0
        %1377 = vmatpush1.msra.mxu0 0.0
        %1378 = vmatprep.subr.mxu0 0.0
        %1379 = vmatpush1.msra.mxu0 0.0
        %1380 = vmatprep.subr.mxu0 0.0
        %1381 = vmatpush1.msra.mxu0 0.0
        %1382 = vmatprep.subr.mxu0 0.0
        %1383 = vmatpush1.msra.mxu0 0.0
        %1384 = vmatprep.subr.mxu0 0.0
        %1385 = vmatpush1.msra.mxu0 0.0
        %1386 = vmatprep.subr.mxu0 0.0
        %1387 = vmatpush1.msra.mxu0 0.0
        %1388 = vmatprep.mubr.f32.mxu0 0.0
        %1389 = vmatmul.mubr.f32.gmra.mrb[0].mxu0 %v1187
        %v1390 = vpop.f32.mrb[0].mxu0
        %v1391 = vadd.f32 0.0, %v1390
        %v1392 = vpop.f32.mrb[0].mxu0
        %v1393 = vadd.f32 0.0, %v1392
        %1394 = vdwg.mxu0
        %v1395 = vadd.f32 %v1183, %v1320
        %v1396 = vadd.f32 %v1184, %v1322
        %v1397 = vadd.f32 %v1185, %v1391
        %v1398 = vadd.f32 %v1186, %v1393
        %v1399 = vxor.u32 %v1395, 2147483648
        %v1400 = vmul.f32 %v1399, 1.442695
        %v1401 = vpow.pop %v1400
        %v1402 = vadd.f32 %v1401, 1.0
        %v1403 = vrcp.pop %v1402
        %v1404 = vmul.f32 1.0, %v1403
        %v1405 = vxor.u32 %v1396, 2147483648
        %v1406 = vmul.f32 %v1405, 1.442695
        %v1407 = vpow.pop %v1406
        %v1408 = vadd.f32 %v1407, 1.0
        %v1409 = vrcp.pop %v1408
        %v1410 = vmul.f32 1.0, %v1409
        %v1411 = vtanh.pop %v1397
        %v1412 = vxor.u32 %v1398, 2147483648
        %v1413 = vmul.f32 %v1412, 1.442695
        %v1414 = vpow.pop %v1413
        %v1415 = vadd.f32 %v1414, 1.0
        %v1416 = vrcp.pop %v1415
        %v1417 = vmul.f32 1.0, %v1416
        %v1418 = vmul.f32 %v1410, %v1188
        %v1419 = vmul.f32 %v1404, %v1411
        %v1420 = vadd.f32 %v1418, %v1419
        %v1421 = vtanh.pop %v1420
        %v1422 = vmul.f32 %v1417, %v1421
        %1423 = vst [vmem:[#allocation4] sm:$0xff] %v1422
        %1424 = vst [vmem:[#allocation5] sm:$0xff] %v1420
        %v1425 = vpack.c.bf16 %v1422, %v1422
        %s1426 = scalar_lea.vmem %s435, 24
        %1427 = vst [vmem:[%s1426] sm:$0xf] %v1425
        %s1428 = scalar_lea.vmem %s379, 64 [#allocation6]
        %v1429 = vld [vmem:[%s1428] sm:$0xff]
        %v1430 = vld [vmem:[%s1428 + $0x8] sm:$0xff]
        %v1431 = vld [vmem:[%s1428 + $0x10] sm:$0xff]
        %v1432 = vld [vmem:[%s1428 + $0x18] sm:$0xff]
        %v1433 = vld [vmem:[#allocation2] sm:$0xff]
        %v1434 = vld [vmem:[#allocation3] sm:$0xff]
        %v1435 = vld [vmem:[%s2] sm:$0xff]
        %v1436 = vld [vmem:[%s2 + $0x8] sm:$0xff]
        %v1437 = vld [vmem:[%s2 + $0x10] sm:$0xff]
        %v1438 = vld [vmem:[%s2 + $0x18] sm:$0xff]
        %v1439 = vld [vmem:[%s2 + $0x20] sm:$0xff]
        %v1440 = vld [vmem:[%s2 + $0x28] sm:$0xff]
        %v1441 = vld [vmem:[%s2 + $0x30] sm:$0xff]
        %v1442 = vld [vmem:[%s2 + $0x38] sm:$0xff]
        %v1443 = vld [vmem:[%s2 + $0x40] sm:$0xff]
        %v1444 = vld [vmem:[%s2 + $0x48] sm:$0xff]
        %v1445 = vld [vmem:[%s2 + $0x50] sm:$0xff]
        %v1446 = vld [vmem:[%s2 + $0x58] sm:$0xff]
        %v1447 = vld [vmem:[%s2 + $0x60] sm:$0xff]
        %v1448 = vld [vmem:[%s2 + $0x68] sm:$0xff]
        %v1449 = vld [vmem:[%s2 + $0x70] sm:$0xff]
        %v1450 = vld [vmem:[%s2 + $0x78] sm:$0xff]
        %v1451 = vld [vmem:[%s2 + $0x80] sm:$0xff]
        %v1452 = vld [vmem:[%s2 + $0x88] sm:$0xff]
        %v1453 = vld [vmem:[%s2 + $0x90] sm:$0xff]
        %v1454 = vld [vmem:[%s2 + $0x98] sm:$0xff]
        %v1455 = vld [vmem:[%s2 + $0xa0] sm:$0xff]
        %v1456 = vld [vmem:[%s2 + $0xa8] sm:$0xff]
        %v1457 = vld [vmem:[%s2 + $0xb0] sm:$0xff]
        %v1458 = vld [vmem:[%s2 + $0xb8] sm:$0xff]
        %v1459 = vld [vmem:[%s2 + $0xc0] sm:$0xff]
        %v1460 = vld [vmem:[%s2 + $0xc8] sm:$0xff]
        %v1461 = vld [vmem:[%s2 + $0xd0] sm:$0xff]
        %v1462 = vld [vmem:[%s2 + $0xd8] sm:$0xff]
        %v1463 = vld [vmem:[%s2 + $0xe0] sm:$0xff]
        %v1464 = vld [vmem:[%s2 + $0xe8] sm:$0xff]
        %v1465 = vld [vmem:[%s2 + $0xf0] sm:$0xff]
        %v1466 = vld [vmem:[%s2 + $0xf8] sm:$0xff]
        %v1467 = vld [vmem:[%s2 + $0x100] sm:$0xff]
        %v1468 = vld [vmem:[%s2 + $0x108] sm:$0xff]
        %v1469 = vld [vmem:[%s2 + $0x110] sm:$0xff]
        %v1470 = vld [vmem:[%s2 + $0x118] sm:$0xff]
        %v1471 = vld [vmem:[%s2 + $0x120] sm:$0xff]
        %v1472 = vld [vmem:[%s2 + $0x128] sm:$0xff]
        %v1473 = vld [vmem:[%s2 + $0x130] sm:$0xff]
        %v1474 = vld [vmem:[%s2 + $0x138] sm:$0xff]
        %v1475 = vld [vmem:[%s2 + $0x140] sm:$0xff]
        %v1476 = vld [vmem:[%s2 + $0x148] sm:$0xff]
        %v1477 = vld [vmem:[%s2 + $0x150] sm:$0xff]
        %v1478 = vld [vmem:[%s2 + $0x158] sm:$0xff]
        %v1479 = vld [vmem:[%s2 + $0x160] sm:$0xff]
        %v1480 = vld [vmem:[%s2 + $0x168] sm:$0xff]
        %v1481 = vld [vmem:[%s2 + $0x170] sm:$0xff]
        %v1482 = vld [vmem:[%s2 + $0x178] sm:$0xff]
        %v1483 = vld [vmem:[%s2 + $0x180] sm:$0xff]
        %v1484 = vld [vmem:[%s2 + $0x188] sm:$0xff]
        %v1485 = vld [vmem:[%s2 + $0x190] sm:$0xff]
        %v1486 = vld [vmem:[%s2 + $0x198] sm:$0xff]
        %v1487 = vld [vmem:[%s2 + $0x1a0] sm:$0xff]
        %v1488 = vld [vmem:[%s2 + $0x1a8] sm:$0xff]
        %v1489 = vld [vmem:[%s2 + $0x1b0] sm:$0xff]
        %v1490 = vld [vmem:[%s2 + $0x1b8] sm:$0xff]
        %v1491 = vld [vmem:[%s2 + $0x1c0] sm:$0xff]
        %v1492 = vld [vmem:[%s2 + $0x1c8] sm:$0xff]
        %v1493 = vld [vmem:[%s2 + $0x1d0] sm:$0xff]
        %v1494 = vld [vmem:[%s2 + $0x1d8] sm:$0xff]
        %v1495 = vld [vmem:[%s2 + $0x1e0] sm:$0xff]
        %v1496 = vld [vmem:[%s2 + $0x1e8] sm:$0xff]
        %v1497 = vld [vmem:[%s2 + $0x1f0] sm:$0xff]
        %v1498 = vld [vmem:[%s2 + $0x1f8] sm:$0xff]
        %1499 = vmatprep.subr.mxu0 %v1436
        %1500 = vmatpush1.msra.mxu0 %v1435
        %1501 = vmatprep.subr.mxu0 %v1440
        %1502 = vmatpush1.msra.mxu0 %v1439
        %1503 = vmatprep.subr.mxu0 %v1444
        %1504 = vmatpush1.msra.mxu0 %v1443
        %1505 = vmatprep.subr.mxu0 %v1448
        %1506 = vmatpush1.msra.mxu0 %v1447
        %1507 = vmatprep.subr.mxu0 %v1452
        %1508 = vmatpush1.msra.mxu0 %v1451
        %1509 = vmatprep.subr.mxu0 %v1456
        %1510 = vmatpush1.msra.mxu0 %v1455
        %1511 = vmatprep.subr.mxu0 %v1460
        %1512 = vmatpush1.msra.mxu0 %v1459
        %1513 = vmatprep.subr.mxu0 %v1464
        %1514 = vmatpush1.msra.mxu0 %v1463
        %1515 = vmatprep.subr.mxu0 %v1468
        %1516 = vmatpush1.msra.mxu0 %v1467
        %1517 = vmatprep.subr.mxu0 %v1472
        %1518 = vmatpush1.msra.mxu0 %v1471
        %1519 = vmatprep.subr.mxu0 %v1476
        %1520 = vmatpush1.msra.mxu0 %v1475
        %1521 = vmatprep.subr.mxu0 %v1480
        %1522 = vmatpush1.msra.mxu0 %v1479
        %1523 = vmatprep.subr.mxu0 %v1484
        %1524 = vmatpush1.msra.mxu0 %v1483
        %1525 = vmatprep.subr.mxu0 %v1488
        %1526 = vmatpush1.msra.mxu0 %v1487
        %1527 = vmatprep.subr.mxu0 %v1492
        %1528 = vmatpush1.msra.mxu0 %v1491
        %1529 = vmatprep.subr.mxu0 %v1496
        %1530 = vmatpush1.msra.mxu0 %v1495
        %1531 = vmatprep.subr.mxu0 0.0
        %1532 = vmatpush1.msra.mxu0 0.0
        %1533 = vmatprep.subr.mxu0 0.0
        %1534 = vmatpush1.msra.mxu0 0.0
        %1535 = vmatprep.subr.mxu0 0.0
        %1536 = vmatpush1.msra.mxu0 0.0
        %1537 = vmatprep.subr.mxu0 0.0
        %1538 = vmatpush1.msra.mxu0 0.0
        %1539 = vmatprep.subr.mxu0 0.0
        %1540 = vmatpush1.msra.mxu0 0.0
        %1541 = vmatprep.subr.mxu0 0.0
        %1542 = vmatpush1.msra.mxu0 0.0
        %1543 = vmatprep.subr.mxu0 0.0
        %1544 = vmatpush1.msra.mxu0 0.0
        %1545 = vmatprep.subr.mxu0 0.0
        %1546 = vmatpush1.msra.mxu0 0.0
        %1547 = vmatprep.subr.mxu0 0.0
        %1548 = vmatpush1.msra.mxu0 0.0
        %1549 = vmatprep.subr.mxu0 0.0
        %1550 = vmatpush1.msra.mxu0 0.0
        %1551 = vmatprep.subr.mxu0 0.0
        %1552 = vmatpush1.msra.mxu0 0.0
        %1553 = vmatprep.subr.mxu0 0.0
        %1554 = vmatpush1.msra.mxu0 0.0
        %1555 = vmatprep.subr.mxu0 0.0
        %1556 = vmatpush1.msra.mxu0 0.0
        %1557 = vmatprep.subr.mxu0 0.0
        %1558 = vmatpush1.msra.mxu0 0.0
        %1559 = vmatprep.subr.mxu0 0.0
        %1560 = vmatpush1.msra.mxu0 0.0
        %1561 = vmatprep.subr.mxu0 0.0
        %1562 = vmatpush1.msra.mxu0 0.0
        %1563 = vmatprep.mubr.f32.mxu0 0.0
        %1564 = vmatmul.mubr.f32.gmra.mrb[0].mxu0 %v1433
        %v1565 = vpop.f32.mrb[0].mxu0
        %v1566 = vadd.f32 0.0, %v1565
        %v1567 = vpop.f32.mrb[0].mxu0
        %v1568 = vadd.f32 0.0, %v1567
        %1569 = vdwg.mxu0
        %1570 = vmatprep.subr.mxu0 %v1438
        %1571 = vmatpush1.msra.mxu0 %v1437
        %1572 = vmatprep.subr.mxu0 %v1442
        %1573 = vmatpush1.msra.mxu0 %v1441
        %1574 = vmatprep.subr.mxu0 %v1446
        %1575 = vmatpush1.msra.mxu0 %v1445
        %1576 = vmatprep.subr.mxu0 %v1450
        %1577 = vmatpush1.msra.mxu0 %v1449
        %1578 = vmatprep.subr.mxu0 %v1454
        %1579 = vmatpush1.msra.mxu0 %v1453
        %1580 = vmatprep.subr.mxu0 %v1458
        %1581 = vmatpush1.msra.mxu0 %v1457
        %1582 = vmatprep.subr.mxu0 %v1462
        %1583 = vmatpush1.msra.mxu0 %v1461
        %1584 = vmatprep.subr.mxu0 %v1466
        %1585 = vmatpush1.msra.mxu0 %v1465
        %1586 = vmatprep.subr.mxu0 %v1470
        %1587 = vmatpush1.msra.mxu0 %v1469
        %1588 = vmatprep.subr.mxu0 %v1474
        %1589 = vmatpush1.msra.mxu0 %v1473
        %1590 = vmatprep.subr.mxu0 %v1478
        %1591 = vmatpush1.msra.mxu0 %v1477
        %1592 = vmatprep.subr.mxu0 %v1482
        %1593 = vmatpush1.msra.mxu0 %v1481
        %1594 = vmatprep.subr.mxu0 %v1486
        %1595 = vmatpush1.msra.mxu0 %v1485
        %1596 = vmatprep.subr.mxu0 %v1490
        %1597 = vmatpush1.msra.mxu0 %v1489
        %1598 = vmatprep.subr.mxu0 %v1494
        %1599 = vmatpush1.msra.mxu0 %v1493
        %1600 = vmatprep.subr.mxu0 %v1498
        %1601 = vmatpush1.msra.mxu0 %v1497
        %1602 = vmatprep.subr.mxu0 0.0
        %1603 = vmatpush1.msra.mxu0 0.0
        %1604 = vmatprep.subr.mxu0 0.0
        %1605 = vmatpush1.msra.mxu0 0.0
        %1606 = vmatprep.subr.mxu0 0.0
        %1607 = vmatpush1.msra.mxu0 0.0
        %1608 = vmatprep.subr.mxu0 0.0
        %1609 = vmatpush1.msra.mxu0 0.0
        %1610 = vmatprep.subr.mxu0 0.0
        %1611 = vmatpush1.msra.mxu0 0.0
        %1612 = vmatprep.subr.mxu0 0.0
        %1613 = vmatpush1.msra.mxu0 0.0
        %1614 = vmatprep.subr.mxu0 0.0
        %1615 = vmatpush1.msra.mxu0 0.0
        %1616 = vmatprep.subr.mxu0 0.0
        %1617 = vmatpush1.msra.mxu0 0.0
        %1618 = vmatprep.subr.mxu0 0.0
        %1619 = vmatpush1.msra.mxu0 0.0
        %1620 = vmatprep.subr.mxu0 0.0
        %1621 = vmatpush1.msra.mxu0 0.0
        %1622 = vmatprep.subr.mxu0 0.0
        %1623 = vmatpush1.msra.mxu0 0.0
        %1624 = vmatprep.subr.mxu0 0.0
        %1625 = vmatpush1.msra.mxu0 0.0
        %1626 = vmatprep.subr.mxu0 0.0
        %1627 = vmatpush1.msra.mxu0 0.0
        %1628 = vmatprep.subr.mxu0 0.0
        %1629 = vmatpush1.msra.mxu0 0.0
        %1630 = vmatprep.subr.mxu0 0.0
        %1631 = vmatpush1.msra.mxu0 0.0
        %1632 = vmatprep.subr.mxu0 0.0
        %1633 = vmatpush1.msra.mxu0 0.0
        %1634 = vmatprep.mubr.f32.mxu0 0.0
        %1635 = vmatmul.mubr.f32.gmra.mrb[0].mxu0 %v1433
        %v1636 = vpop.f32.mrb[0].mxu0
        %v1637 = vadd.f32 0.0, %v1636
        %v1638 = vpop.f32.mrb[0].mxu0
        %v1639 = vadd.f32 0.0, %v1638
        %1640 = vdwg.mxu0
        %v1641 = vadd.f32 %v1429, %v1566
        %v1642 = vadd.f32 %v1430, %v1568
        %v1643 = vadd.f32 %v1431, %v1637
        %v1644 = vadd.f32 %v1432, %v1639
        %v1645 = vxor.u32 %v1641, 2147483648
        %v1646 = vmul.f32 %v1645, 1.442695
        %v1647 = vpow.pop %v1646
        %v1648 = vadd.f32 %v1647, 1.0
        %v1649 = vrcp.pop %v1648
        %v1650 = vmul.f32 1.0, %v1649
        %v1651 = vxor.u32 %v1642, 2147483648
        %v1652 = vmul.f32 %v1651, 1.442695
        %v1653 = vpow.pop %v1652
        %v1654 = vadd.f32 %v1653, 1.0
        %v1655 = vrcp.pop %v1654
        %v1656 = vmul.f32 1.0, %v1655
        %v1657 = vtanh.pop %v1643
        %v1658 = vxor.u32 %v1644, 2147483648
        %v1659 = vmul.f32 %v1658, 1.442695
        %v1660 = vpow.pop %v1659
        %v1661 = vadd.f32 %v1660, 1.0
        %v1662 = vrcp.pop %v1661
        %v1663 = vmul.f32 1.0, %v1662
        %v1664 = vmul.f32 %v1656, %v1434
        %v1665 = vmul.f32 %v1650, %v1657
        %v1666 = vadd.f32 %v1664, %v1665
        %v1667 = vtanh.pop %v1666
        %v1668 = vmul.f32 %v1663, %v1667
        %1669 = vst [vmem:[#allocation2] sm:$0xff] %v1668
        %1670 = vst [vmem:[#allocation3] sm:$0xff] %v1666
        %v1671 = vpack.c.bf16 %v1668, %v1668
        %s1672 = scalar_lea.vmem %s428, 8
        %1673 = vst [vmem:[%s1672] sm:$0xf] %v1671
        %s1674 = scalar_lea.vmem %s386, 160 [#allocation7]
        %v1675 = vld [vmem:[%s1674] sm:$0xff]
        %v1676 = vld [vmem:[%s1674 + $0x8] sm:$0xff]
        %v1677 = vld [vmem:[%s1674 + $0x10] sm:$0xff]
        %v1678 = vld [vmem:[%s1674 + $0x18] sm:$0xff]
        %v1679 = vld [vmem:[#allocation4] sm:$0xff]
        %v1680 = vld [vmem:[#allocation5] sm:$0xff]
        %v1681 = vld [vmem:[%s3] sm:$0xff]
        %v1682 = vld [vmem:[%s3 + $0x8] sm:$0xff]
        %v1683 = vld [vmem:[%s3 + $0x10] sm:$0xff]
        %v1684 = vld [vmem:[%s3 + $0x18] sm:$0xff]
        %v1685 = vld [vmem:[%s3 + $0x20] sm:$0xff]
        %v1686 = vld [vmem:[%s3 + $0x28] sm:$0xff]
        %v1687 = vld [vmem:[%s3 + $0x30] sm:$0xff]
        %v1688 = vld [vmem:[%s3 + $0x38] sm:$0xff]
        %v1689 = vld [vmem:[%s3 + $0x40] sm:$0xff]
        %v1690 = vld [vmem:[%s3 + $0x48] sm:$0xff]
        %v1691 = vld [vmem:[%s3 + $0x50] sm:$0xff]
        %v1692 = vld [vmem:[%s3 + $0x58] sm:$0xff]
        %v1693 = vld [vmem:[%s3 + $0x60] sm:$0xff]
        %v1694 = vld [vmem:[%s3 + $0x68] sm:$0xff]
        %v1695 = vld [vmem:[%s3 + $0x70] sm:$0xff]
        %v1696 = vld [vmem:[%s3 + $0x78] sm:$0xff]
        %v1697 = vld [vmem:[%s3 + $0x80] sm:$0xff]
        %v1698 = vld [vmem:[%s3 + $0x88] sm:$0xff]
        %v1699 = vld [vmem:[%s3 + $0x90] sm:$0xff]
        %v1700 = vld [vmem:[%s3 + $0x98] sm:$0xff]
        %v1701 = vld [vmem:[%s3 + $0xa0] sm:$0xff]
        %v1702 = vld [vmem:[%s3 + $0xa8] sm:$0xff]
        %v1703 = vld [vmem:[%s3 + $0xb0] sm:$0xff]
        %v1704 = vld [vmem:[%s3 + $0xb8] sm:$0xff]
        %v1705 = vld [vmem:[%s3 + $0xc0] sm:$0xff]
        %v1706 = vld [vmem:[%s3 + $0xc8] sm:$0xff]
        %v1707 = vld [vmem:[%s3 + $0xd0] sm:$0xff]
        %v1708 = vld [vmem:[%s3 + $0xd8] sm:$0xff]
        %v1709 = vld [vmem:[%s3 + $0xe0] sm:$0xff]
        %v1710 = vld [vmem:[%s3 + $0xe8] sm:$0xff]
        %v1711 = vld [vmem:[%s3 + $0xf0] sm:$0xff]
        %v1712 = vld [vmem:[%s3 + $0xf8] sm:$0xff]
        %v1713 = vld [vmem:[%s3 + $0x100] sm:$0xff]
        %v1714 = vld [vmem:[%s3 + $0x108] sm:$0xff]
        %v1715 = vld [vmem:[%s3 + $0x110] sm:$0xff]
        %v1716 = vld [vmem:[%s3 + $0x118] sm:$0xff]
        %v1717 = vld [vmem:[%s3 + $0x120] sm:$0xff]
        %v1718 = vld [vmem:[%s3 + $0x128] sm:$0xff]
        %v1719 = vld [vmem:[%s3 + $0x130] sm:$0xff]
        %v1720 = vld [vmem:[%s3 + $0x138] sm:$0xff]
        %v1721 = vld [vmem:[%s3 + $0x140] sm:$0xff]
        %v1722 = vld [vmem:[%s3 + $0x148] sm:$0xff]
        %v1723 = vld [vmem:[%s3 + $0x150] sm:$0xff]
        %v1724 = vld [vmem:[%s3 + $0x158] sm:$0xff]
        %v1725 = vld [vmem:[%s3 + $0x160] sm:$0xff]
        %v1726 = vld [vmem:[%s3 + $0x168] sm:$0xff]
        %v1727 = vld [vmem:[%s3 + $0x170] sm:$0xff]
        %v1728 = vld [vmem:[%s3 + $0x178] sm:$0xff]
        %v1729 = vld [vmem:[%s3 + $0x180] sm:$0xff]
        %v1730 = vld [vmem:[%s3 + $0x188] sm:$0xff]
        %v1731 = vld [vmem:[%s3 + $0x190] sm:$0xff]
        %v1732 = vld [vmem:[%s3 + $0x198] sm:$0xff]
        %v1733 = vld [vmem:[%s3 + $0x1a0] sm:$0xff]
        %v1734 = vld [vmem:[%s3 + $0x1a8] sm:$0xff]
        %v1735 = vld [vmem:[%s3 + $0x1b0] sm:$0xff]
        %v1736 = vld [vmem:[%s3 + $0x1b8] sm:$0xff]
        %v1737 = vld [vmem:[%s3 + $0x1c0] sm:$0xff]
        %v1738 = vld [vmem:[%s3 + $0x1c8] sm:$0xff]
        %v1739 = vld [vmem:[%s3 + $0x1d0] sm:$0xff]
        %v1740 = vld [vmem:[%s3 + $0x1d8] sm:$0xff]
        %v1741 = vld [vmem:[%s3 + $0x1e0] sm:$0xff]
        %v1742 = vld [vmem:[%s3 + $0x1e8] sm:$0xff]
        %v1743 = vld [vmem:[%s3 + $0x1f0] sm:$0xff]
        %v1744 = vld [vmem:[%s3 + $0x1f8] sm:$0xff]
        %1745 = vmatprep.subr.mxu0 %v1682
        %1746 = vmatpush1.msra.mxu0 %v1681
        %1747 = vmatprep.subr.mxu0 %v1686
        %1748 = vmatpush1.msra.mxu0 %v1685
        %1749 = vmatprep.subr.mxu0 %v1690
        %1750 = vmatpush1.msra.mxu0 %v1689
        %1751 = vmatprep.subr.mxu0 %v1694
        %1752 = vmatpush1.msra.mxu0 %v1693
        %1753 = vmatprep.subr.mxu0 %v1698
        %1754 = vmatpush1.msra.mxu0 %v1697
        %1755 = vmatprep.subr.mxu0 %v1702
        %1756 = vmatpush1.msra.mxu0 %v1701
        %1757 = vmatprep.subr.mxu0 %v1706
        %1758 = vmatpush1.msra.mxu0 %v1705
        %1759 = vmatprep.subr.mxu0 %v1710
        %1760 = vmatpush1.msra.mxu0 %v1709
        %1761 = vmatprep.subr.mxu0 %v1714
        %1762 = vmatpush1.msra.mxu0 %v1713
        %1763 = vmatprep.subr.mxu0 %v1718
        %1764 = vmatpush1.msra.mxu0 %v1717
        %1765 = vmatprep.subr.mxu0 %v1722
        %1766 = vmatpush1.msra.mxu0 %v1721
        %1767 = vmatprep.subr.mxu0 %v1726
        %1768 = vmatpush1.msra.mxu0 %v1725
        %1769 = vmatprep.subr.mxu0 %v1730
        %1770 = vmatpush1.msra.mxu0 %v1729
        %1771 = vmatprep.subr.mxu0 %v1734
        %1772 = vmatpush1.msra.mxu0 %v1733
        %1773 = vmatprep.subr.mxu0 %v1738
        %1774 = vmatpush1.msra.mxu0 %v1737
        %1775 = vmatprep.subr.mxu0 %v1742
        %1776 = vmatpush1.msra.mxu0 %v1741
        %1777 = vmatprep.subr.mxu0 0.0
        %1778 = vmatpush1.msra.mxu0 0.0
        %1779 = vmatprep.subr.mxu0 0.0
        %1780 = vmatpush1.msra.mxu0 0.0
        %1781 = vmatprep.subr.mxu0 0.0
        %1782 = vmatpush1.msra.mxu0 0.0
        %1783 = vmatprep.subr.mxu0 0.0
        %1784 = vmatpush1.msra.mxu0 0.0
        %1785 = vmatprep.subr.mxu0 0.0
        %1786 = vmatpush1.msra.mxu0 0.0
        %1787 = vmatprep.subr.mxu0 0.0
        %1788 = vmatpush1.msra.mxu0 0.0
        %1789 = vmatprep.subr.mxu0 0.0
        %1790 = vmatpush1.msra.mxu0 0.0
        %1791 = vmatprep.subr.mxu0 0.0
        %1792 = vmatpush1.msra.mxu0 0.0
        %1793 = vmatprep.subr.mxu0 0.0
        %1794 = vmatpush1.msra.mxu0 0.0
        %1795 = vmatprep.subr.mxu0 0.0
        %1796 = vmatpush1.msra.mxu0 0.0
        %1797 = vmatprep.subr.mxu0 0.0
        %1798 = vmatpush1.msra.mxu0 0.0
        %1799 = vmatprep.subr.mxu0 0.0
        %1800 = vmatpush1.msra.mxu0 0.0
        %1801 = vmatprep.subr.mxu0 0.0
        %1802 = vmatpush1.msra.mxu0 0.0
        %1803 = vmatprep.subr.mxu0 0.0
        %1804 = vmatpush1.msra.mxu0 0.0
        %1805 = vmatprep.subr.mxu0 0.0
        %1806 = vmatpush1.msra.mxu0 0.0
        %1807 = vmatprep.subr.mxu0 0.0
        %1808 = vmatpush1.msra.mxu0 0.0
        %1809 = vmatprep.mubr.f32.mxu0 0.0
        %1810 = vmatmul.mubr.f32.gmra.mrb[0].mxu0 %v1679
        %v1811 = vpop.f32.mrb[0].mxu0
        %v1812 = vadd.f32 0.0, %v1811
        %v1813 = vpop.f32.mrb[0].mxu0
        %v1814 = vadd.f32 0.0, %v1813
        %1815 = vdwg.mxu0
        %1816 = vmatprep.subr.mxu0 %v1684
        %1817 = vmatpush1.msra.mxu0 %v1683
        %1818 = vmatprep.subr.mxu0 %v1688
        %1819 = vmatpush1.msra.mxu0 %v1687
        %1820 = vmatprep.subr.mxu0 %v1692
        %1821 = vmatpush1.msra.mxu0 %v1691
        %1822 = vmatprep.subr.mxu0 %v1696
        %1823 = vmatpush1.msra.mxu0 %v1695
        %1824 = vmatprep.subr.mxu0 %v1700
        %1825 = vmatpush1.msra.mxu0 %v1699
        %1826 = vmatprep.subr.mxu0 %v1704
        %1827 = vmatpush1.msra.mxu0 %v1703
        %1828 = vmatprep.subr.mxu0 %v1708
        %1829 = vmatpush1.msra.mxu0 %v1707
        %1830 = vmatprep.subr.mxu0 %v1712
        %1831 = vmatpush1.msra.mxu0 %v1711
        %1832 = vmatprep.subr.mxu0 %v1716
        %1833 = vmatpush1.msra.mxu0 %v1715
        %1834 = vmatprep.subr.mxu0 %v1720
        %1835 = vmatpush1.msra.mxu0 %v1719
        %1836 = vmatprep.subr.mxu0 %v1724
        %1837 = vmatpush1.msra.mxu0 %v1723
        %1838 = vmatprep.subr.mxu0 %v1728
        %1839 = vmatpush1.msra.mxu0 %v1727
        %1840 = vmatprep.subr.mxu0 %v1732
        %1841 = vmatpush1.msra.mxu0 %v1731
        %1842 = vmatprep.subr.mxu0 %v1736
        %1843 = vmatpush1.msra.mxu0 %v1735
        %1844 = vmatprep.subr.mxu0 %v1740
        %1845 = vmatpush1.msra.mxu0 %v1739
        %1846 = vmatprep.subr.mxu0 %v1744
        %1847 = vmatpush1.msra.mxu0 %v1743
        %1848 = vmatprep.subr.mxu0 0.0
        %1849 = vmatpush1.msra.mxu0 0.0
        %1850 = vmatprep.subr.mxu0 0.0
        %1851 = vmatpush1.msra.mxu0 0.0
        %1852 = vmatprep.subr.mxu0 0.0
        %1853 = vmatpush1.msra.mxu0 0.0
        %1854 = vmatprep.subr.mxu0 0.0
        %1855 = vmatpush1.msra.mxu0 0.0
        %1856 = vmatprep.subr.mxu0 0.0
        %1857 = vmatpush1.msra.mxu0 0.0
        %1858 = vmatprep.subr.mxu0 0.0
        %1859 = vmatpush1.msra.mxu0 0.0
        %1860 = vmatprep.subr.mxu0 0.0
        %1861 = vmatpush1.msra.mxu0 0.0
        %1862 = vmatprep.subr.mxu0 0.0
        %1863 = vmatpush1.msra.mxu0 0.0
        %1864 = vmatprep.subr.mxu0 0.0
        %1865 = vmatpush1.msra.mxu0 0.0
        %1866 = vmatprep.subr.mxu0 0.0
        %1867 = vmatpush1.msra.mxu0 0.0
        %1868 = vmatprep.subr.mxu0 0.0
        %1869 = vmatpush1.msra.mxu0 0.0
        %1870 = vmatprep.subr.mxu0 0.0
        %1871 = vmatpush1.msra.mxu0 0.0
        %1872 = vmatprep.subr.mxu0 0.0
        %1873 = vmatpush1.msra.mxu0 0.0
        %1874 = vmatprep.subr.mxu0 0.0
        %1875 = vmatpush1.msra.mxu0 0.0
        %1876 = vmatprep.subr.mxu0 0.0
        %1877 = vmatpush1.msra.mxu0 0.0
        %1878 = vmatprep.subr.mxu0 0.0
        %1879 = vmatpush1.msra.mxu0 0.0
        %1880 = vmatprep.mubr.f32.mxu0 0.0
        %1881 = vmatmul.mubr.f32.gmra.mrb[0].mxu0 %v1679
        %v1882 = vpop.f32.mrb[0].mxu0
        %v1883 = vadd.f32 0.0, %v1882
        %v1884 = vpop.f32.mrb[0].mxu0
        %v1885 = vadd.f32 0.0, %v1884
        %1886 = vdwg.mxu0
        %v1887 = vadd.f32 %v1675, %v1812
        %v1888 = vadd.f32 %v1676, %v1814
        %v1889 = vadd.f32 %v1677, %v1883
        %v1890 = vadd.f32 %v1678, %v1885
        %v1891 = vxor.u32 %v1887, 2147483648
        %v1892 = vmul.f32 %v1891, 1.442695
        %v1893 = vpow.pop %v1892
        %v1894 = vadd.f32 %v1893, 1.0
        %v1895 = vrcp.pop %v1894
        %v1896 = vmul.f32 1.0, %v1895
        %v1897 = vxor.u32 %v1888, 2147483648
        %v1898 = vmul.f32 %v1897, 1.442695
        %v1899 = vpow.pop %v1898
        %v1900 = vadd.f32 %v1899, 1.0
        %v1901 = vrcp.pop %v1900
        %v1902 = vmul.f32 1.0, %v1901
        %v1903 = vtanh.pop %v1889
        %v1904 = vxor.u32 %v1890, 2147483648
        %v1905 = vmul.f32 %v1904, 1.442695
        %v1906 = vpow.pop %v1905
        %v1907 = vadd.f32 %v1906, 1.0
        %v1908 = vrcp.pop %v1907
        %v1909 = vmul.f32 1.0, %v1908
        %v1910 = vmul.f32 %v1902, %v1680
        %v1911 = vmul.f32 %v1896, %v1903
        %v1912 = vadd.f32 %v1910, %v1911
        %v1913 = vtanh.pop %v1912
        %v1914 = vmul.f32 %v1909, %v1913
        %1915 = vst [vmem:[#allocation4] sm:$0xff] %v1914
        %1916 = vst [vmem:[#allocation5] sm:$0xff] %v1912
        %v1917 = vpack.c.bf16 %v1914, %v1914
        %s1918 = scalar_lea.vmem %s435, 20
        %1919 = vst [vmem:[%s1918] sm:$0xf] %v1917
        %s1920 = scalar_lea.vmem %s379, 96 [#allocation6]
        %v1921 = vld [vmem:[%s1920] sm:$0xff]
        %v1922 = vld [vmem:[%s1920 + $0x8] sm:$0xff]
        %v1923 = vld [vmem:[%s1920 + $0x10] sm:$0xff]
        %v1924 = vld [vmem:[%s1920 + $0x18] sm:$0xff]
        %v1925 = vld [vmem:[#allocation2] sm:$0xff]
        %v1926 = vld [vmem:[#allocation3] sm:$0xff]
        %v1927 = vld [vmem:[%s2] sm:$0xff]
        %v1928 = vld [vmem:[%s2 + $0x8] sm:$0xff]
        %v1929 = vld [vmem:[%s2 + $0x10] sm:$0xff]
        %v1930 = vld [vmem:[%s2 + $0x18] sm:$0xff]
        %v1931 = vld [vmem:[%s2 + $0x20] sm:$0xff]
        %v1932 = vld [vmem:[%s2 + $0x28] sm:$0xff]
        %v1933 = vld [vmem:[%s2 + $0x30] sm:$0xff]
        %v1934 = vld [vmem:[%s2 + $0x38] sm:$0xff]
        %v1935 = vld [vmem:[%s2 + $0x40] sm:$0xff]
        %v1936 = vld [vmem:[%s2 + $0x48] sm:$0xff]
        %v1937 = vld [vmem:[%s2 + $0x50] sm:$0xff]
        %v1938 = vld [vmem:[%s2 + $0x58] sm:$0xff]
        %v1939 = vld [vmem:[%s2 + $0x60] sm:$0xff]
        %v1940 = vld [vmem:[%s2 + $0x68] sm:$0xff]
        %v1941 = vld [vmem:[%s2 + $0x70] sm:$0xff]
        %v1942 = vld [vmem:[%s2 + $0x78] sm:$0xff]
        %v1943 = vld [vmem:[%s2 + $0x80] sm:$0xff]
        %v1944 = vld [vmem:[%s2 + $0x88] sm:$0xff]
        %v1945 = vld [vmem:[%s2 + $0x90] sm:$0xff]
        %v1946 = vld [vmem:[%s2 + $0x98] sm:$0xff]
        %v1947 = vld [vmem:[%s2 + $0xa0] sm:$0xff]
        %v1948 = vld [vmem:[%s2 + $0xa8] sm:$0xff]
        %v1949 = vld [vmem:[%s2 + $0xb0] sm:$0xff]
        %v1950 = vld [vmem:[%s2 + $0xb8] sm:$0xff]
        %v1951 = vld [vmem:[%s2 + $0xc0] sm:$0xff]
        %v1952 = vld [vmem:[%s2 + $0xc8] sm:$0xff]
        %v1953 = vld [vmem:[%s2 + $0xd0] sm:$0xff]
        %v1954 = vld [vmem:[%s2 + $0xd8] sm:$0xff]
        %v1955 = vld [vmem:[%s2 + $0xe0] sm:$0xff]
        %v1956 = vld [vmem:[%s2 + $0xe8] sm:$0xff]
        %v1957 = vld [vmem:[%s2 + $0xf0] sm:$0xff]
        %v1958 = vld [vmem:[%s2 + $0xf8] sm:$0xff]
        %v1959 = vld [vmem:[%s2 + $0x100] sm:$0xff]
        %v1960 = vld [vmem:[%s2 + $0x108] sm:$0xff]
        %v1961 = vld [vmem:[%s2 + $0x110] sm:$0xff]
        %v1962 = vld [vmem:[%s2 + $0x118] sm:$0xff]
        %v1963 = vld [vmem:[%s2 + $0x120] sm:$0xff]
        %v1964 = vld [vmem:[%s2 + $0x128] sm:$0xff]
        %v1965 = vld [vmem:[%s2 + $0x130] sm:$0xff]
        %v1966 = vld [vmem:[%s2 + $0x138] sm:$0xff]
        %v1967 = vld [vmem:[%s2 + $0x140] sm:$0xff]
        %v1968 = vld [vmem:[%s2 + $0x148] sm:$0xff]
        %v1969 = vld [vmem:[%s2 + $0x150] sm:$0xff]
        %v1970 = vld [vmem:[%s2 + $0x158] sm:$0xff]
        %v1971 = vld [vmem:[%s2 + $0x160] sm:$0xff]
        %v1972 = vld [vmem:[%s2 + $0x168] sm:$0xff]
        %v1973 = vld [vmem:[%s2 + $0x170] sm:$0xff]
        %v1974 = vld [vmem:[%s2 + $0x178] sm:$0xff]
        %v1975 = vld [vmem:[%s2 + $0x180] sm:$0xff]
        %v1976 = vld [vmem:[%s2 + $0x188] sm:$0xff]
        %v1977 = vld [vmem:[%s2 + $0x190] sm:$0xff]
        %v1978 = vld [vmem:[%s2 + $0x198] sm:$0xff]
        %v1979 = vld [vmem:[%s2 + $0x1a0] sm:$0xff]
        %v1980 = vld [vmem:[%s2 + $0x1a8] sm:$0xff]
        %v1981 = vld [vmem:[%s2 + $0x1b0] sm:$0xff]
        %v1982 = vld [vmem:[%s2 + $0x1b8] sm:$0xff]
        %v1983 = vld [vmem:[%s2 + $0x1c0] sm:$0xff]
        %v1984 = vld [vmem:[%s2 + $0x1c8] sm:$0xff]
        %v1985 = vld [vmem:[%s2 + $0x1d0] sm:$0xff]
        %v1986 = vld [vmem:[%s2 + $0x1d8] sm:$0xff]
        %v1987 = vld [vmem:[%s2 + $0x1e0] sm:$0xff]
        %v1988 = vld [vmem:[%s2 + $0x1e8] sm:$0xff]
        %v1989 = vld [vmem:[%s2 + $0x1f0] sm:$0xff]
        %v1990 = vld [vmem:[%s2 + $0x1f8] sm:$0xff]
        %1991 = vmatprep.subr.mxu0 %v1928
        %1992 = vmatpush1.msra.mxu0 %v1927
        %1993 = vmatprep.subr.mxu0 %v1932
        %1994 = vmatpush1.msra.mxu0 %v1931
        %1995 = vmatprep.subr.mxu0 %v1936
        %1996 = vmatpush1.msra.mxu0 %v1935
        %1997 = vmatprep.subr.mxu0 %v1940
        %1998 = vmatpush1.msra.mxu0 %v1939
        %1999 = vmatprep.subr.mxu0 %v1944
        %2000 = vmatpush1.msra.mxu0 %v1943
        %2001 = vmatprep.subr.mxu0 %v1948
        %2002 = vmatpush1.msra.mxu0 %v1947
        %2003 = vmatprep.subr.mxu0 %v1952
        %2004 = vmatpush1.msra.mxu0 %v1951
        %2005 = vmatprep.subr.mxu0 %v1956
        %2006 = vmatpush1.msra.mxu0 %v1955
        %2007 = vmatprep.subr.mxu0 %v1960
        %2008 = vmatpush1.msra.mxu0 %v1959
        %2009 = vmatprep.subr.mxu0 %v1964
        %2010 = vmatpush1.msra.mxu0 %v1963
        %2011 = vmatprep.subr.mxu0 %v1968
        %2012 = vmatpush1.msra.mxu0 %v1967
        %2013 = vmatprep.subr.mxu0 %v1972
        %2014 = vmatpush1.msra.mxu0 %v1971
        %2015 = vmatprep.subr.mxu0 %v1976
        %2016 = vmatpush1.msra.mxu0 %v1975
        %2017 = vmatprep.subr.mxu0 %v1980
        %2018 = vmatpush1.msra.mxu0 %v1979
        %2019 = vmatprep.subr.mxu0 %v1984
        %2020 = vmatpush1.msra.mxu0 %v1983
        %2021 = vmatprep.subr.mxu0 %v1988
        %2022 = vmatpush1.msra.mxu0 %v1987
        %2023 = vmatprep.subr.mxu0 0.0
        %2024 = vmatpush1.msra.mxu0 0.0
        %2025 = vmatprep.subr.mxu0 0.0
        %2026 = vmatpush1.msra.mxu0 0.0
        %2027 = vmatprep.subr.mxu0 0.0
        %2028 = vmatpush1.msra.mxu0 0.0
        %2029 = vmatprep.subr.mxu0 0.0
        %2030 = vmatpush1.msra.mxu0 0.0
        %2031 = vmatprep.subr.mxu0 0.0
        %2032 = vmatpush1.msra.mxu0 0.0
        %2033 = vmatprep.subr.mxu0 0.0
        %2034 = vmatpush1.msra.mxu0 0.0
        %2035 = vmatprep.subr.mxu0 0.0
        %2036 = vmatpush1.msra.mxu0 0.0
        %2037 = vmatprep.subr.mxu0 0.0
        %2038 = vmatpush1.msra.mxu0 0.0
        %2039 = vmatprep.subr.mxu0 0.0
        %2040 = vmatpush1.msra.mxu0 0.0
        %2041 = vmatprep.subr.mxu0 0.0
        %2042 = vmatpush1.msra.mxu0 0.0
        %2043 = vmatprep.subr.mxu0 0.0
        %2044 = vmatpush1.msra.mxu0 0.0
        %2045 = vmatprep.subr.mxu0 0.0
        %2046 = vmatpush1.msra.mxu0 0.0
        %2047 = vmatprep.subr.mxu0 0.0
        %2048 = vmatpush1.msra.mxu0 0.0
        %2049 = vmatprep.subr.mxu0 0.0
        %2050 = vmatpush1.msra.mxu0 0.0
        %2051 = vmatprep.subr.mxu0 0.0
        %2052 = vmatpush1.msra.mxu0 0.0
        %2053 = vmatprep.subr.mxu0 0.0
        %2054 = vmatpush1.msra.mxu0 0.0
        %2055 = vmatprep.mubr.f32.mxu0 0.0
        %2056 = vmatmul.mubr.f32.gmra.mrb[0].mxu0 %v1925
        %v2057 = vpop.f32.mrb[0].mxu0
        %v2058 = vadd.f32 0.0, %v2057
        %v2059 = vpop.f32.mrb[0].mxu0
        %v2060 = vadd.f32 0.0, %v2059
        %2061 = vdwg.mxu0
        %2062 = vmatprep.subr.mxu0 %v1930
        %2063 = vmatpush1.msra.mxu0 %v1929
        %2064 = vmatprep.subr.mxu0 %v1934
        %2065 = vmatpush1.msra.mxu0 %v1933
        %2066 = vmatprep.subr.mxu0 %v1938
        %2067 = vmatpush1.msra.mxu0 %v1937
        %2068 = vmatprep.subr.mxu0 %v1942
        %2069 = vmatpush1.msra.mxu0 %v1941
        %2070 = vmatprep.subr.mxu0 %v1946
        %2071 = vmatpush1.msra.mxu0 %v1945
        %2072 = vmatprep.subr.mxu0 %v1950
        %2073 = vmatpush1.msra.mxu0 %v1949
        %2074 = vmatprep.subr.mxu0 %v1954
        %2075 = vmatpush1.msra.mxu0 %v1953
        %2076 = vmatprep.subr.mxu0 %v1958
        %2077 = vmatpush1.msra.mxu0 %v1957
        %2078 = vmatprep.subr.mxu0 %v1962
        %2079 = vmatpush1.msra.mxu0 %v1961
        %2080 = vmatprep.subr.mxu0 %v1966
        %2081 = vmatpush1.msra.mxu0 %v1965
        %2082 = vmatprep.subr.mxu0 %v1970
        %2083 = vmatpush1.msra.mxu0 %v1969
        %2084 = vmatprep.subr.mxu0 %v1974
        %2085 = vmatpush1.msra.mxu0 %v1973
        %2086 = vmatprep.subr.mxu0 %v1978
        %2087 = vmatpush1.msra.mxu0 %v1977
        %2088 = vmatprep.subr.mxu0 %v1982
        %2089 = vmatpush1.msra.mxu0 %v1981
        %2090 = vmatprep.subr.mxu0 %v1986
        %2091 = vmatpush1.msra.mxu0 %v1985
        %2092 = vmatprep.subr.mxu0 %v1990
        %2093 = vmatpush1.msra.mxu0 %v1989
        %2094 = vmatprep.subr.mxu0 0.0
        %2095 = vmatpush1.msra.mxu0 0.0
        %2096 = vmatprep.subr.mxu0 0.0
        %2097 = vmatpush1.msra.mxu0 0.0
        %2098 = vmatprep.subr.mxu0 0.0
        %2099 = vmatpush1.msra.mxu0 0.0
        %2100 = vmatprep.subr.mxu0 0.0
        %2101 = vmatpush1.msra.mxu0 0.0
        %2102 = vmatprep.subr.mxu0 0.0
        %2103 = vmatpush1.msra.mxu0 0.0
        %2104 = vmatprep.subr.mxu0 0.0
        %2105 = vmatpush1.msra.mxu0 0.0
        %2106 = vmatprep.subr.mxu0 0.0
        %2107 = vmatpush1.msra.mxu0 0.0
        %2108 = vmatprep.subr.mxu0 0.0
        %2109 = vmatpush1.msra.mxu0 0.0
        %2110 = vmatprep.subr.mxu0 0.0
        %2111 = vmatpush1.msra.mxu0 0.0
        %2112 = vmatprep.subr.mxu0 0.0
        %2113 = vmatpush1.msra.mxu0 0.0
        %2114 = vmatprep.subr.mxu0 0.0
        %2115 = vmatpush1.msra.mxu0 0.0
        %2116 = vmatprep.subr.mxu0 0.0
        %2117 = vmatpush1.msra.mxu0 0.0
        %2118 = vmatprep.subr.mxu0 0.0
        %2119 = vmatpush1.msra.mxu0 0.0
        %2120 = vmatprep.subr.mxu0 0.0
        %2121 = vmatpush1.msra.mxu0 0.0
        %2122 = vmatprep.subr.mxu0 0.0
        %2123 = vmatpush1.msra.mxu0 0.0
        %2124 = vmatprep.subr.mxu0 0.0
        %2125 = vmatpush1.msra.mxu0 0.0
        %2126 = vmatprep.mubr.f32.mxu0 0.0
        %2127 = vmatmul.mubr.f32.gmra.mrb[0].mxu0 %v1925
        %v2128 = vpop.f32.mrb[0].mxu0
        %v2129 = vadd.f32 0.0, %v2128
        %v2130 = vpop.f32.mrb[0].mxu0
        %v2131 = vadd.f32 0.0, %v2130
        %2132 = vdwg.mxu0
        %v2133 = vadd.f32 %v1921, %v2058
        %v2134 = vadd.f32 %v1922, %v2060
        %v2135 = vadd.f32 %v1923, %v2129
        %v2136 = vadd.f32 %v1924, %v2131
        %v2137 = vxor.u32 %v2133, 2147483648
        %v2138 = vmul.f32 %v2137, 1.442695
        %v2139 = vpow.pop %v2138
        %v2140 = vadd.f32 %v2139, 1.0
        %v2141 = vrcp.pop %v2140
        %v2142 = vmul.f32 1.0, %v2141
        %v2143 = vxor.u32 %v2134, 2147483648
        %v2144 = vmul.f32 %v2143, 1.442695
        %v2145 = vpow.pop %v2144
        %v2146 = vadd.f32 %v2145, 1.0
        %v2147 = vrcp.pop %v2146
        %v2148 = vmul.f32 1.0, %v2147
        %v2149 = vtanh.pop %v2135
        %v2150 = vxor.u32 %v2136, 2147483648
        %v2151 = vmul.f32 %v2150, 1.442695
        %v2152 = vpow.pop %v2151
        %v2153 = vadd.f32 %v2152, 1.0
        %v2154 = vrcp.pop %v2153
        %v2155 = vmul.f32 1.0, %v2154
        %v2156 = vmul.f32 %v2148, %v1926
        %v2157 = vmul.f32 %v2142, %v2149
        %v2158 = vadd.f32 %v2156, %v2157
        %v2159 = vtanh.pop %v2158
        %v2160 = vmul.f32 %v2155, %v2159
        %2161 = vst [vmem:[#allocation2] sm:$0xff] %v2160
        %2162 = vst [vmem:[#allocation3] sm:$0xff] %v2158
        %v2163 = vpack.c.bf16 %v2160, %v2160
        %s2164 = scalar_lea.vmem %s428, 12
        %2165 = vst [vmem:[%s2164] sm:$0xf] %v2163
        %s2166 = scalar_lea.vmem %s386, 128 [#allocation7]
        %v2167 = vld [vmem:[%s2166] sm:$0xff]
        %v2168 = vld [vmem:[%s2166 + $0x8] sm:$0xff]
        %v2169 = vld [vmem:[%s2166 + $0x10] sm:$0xff]
        %v2170 = vld [vmem:[%s2166 + $0x18] sm:$0xff]
        %v2171 = vld [vmem:[#allocation4] sm:$0xff]
        %v2172 = vld [vmem:[#allocation5] sm:$0xff]
        %v2173 = vld [vmem:[%s3] sm:$0xff]
        %v2174 = vld [vmem:[%s3 + $0x8] sm:$0xff]
        %v2175 = vld [vmem:[%s3 + $0x10] sm:$0xff]
        %v2176 = vld [vmem:[%s3 + $0x18] sm:$0xff]
        %v2177 = vld [vmem:[%s3 + $0x20] sm:$0xff]
        %v2178 = vld [vmem:[%s3 + $0x28] sm:$0xff]
        %v2179 = vld [vmem:[%s3 + $0x30] sm:$0xff]
        %v2180 = vld [vmem:[%s3 + $0x38] sm:$0xff]
        %v2181 = vld [vmem:[%s3 + $0x40] sm:$0xff]
        %v2182 = vld [vmem:[%s3 + $0x48] sm:$0xff]
        %v2183 = vld [vmem:[%s3 + $0x50] sm:$0xff]
        %v2184 = vld [vmem:[%s3 + $0x58] sm:$0xff]
        %v2185 = vld [vmem:[%s3 + $0x60] sm:$0xff]
        %v2186 = vld [vmem:[%s3 + $0x68] sm:$0xff]
        %v2187 = vld [vmem:[%s3 + $0x70] sm:$0xff]
        %v2188 = vld [vmem:[%s3 + $0x78] sm:$0xff]
        %v2189 = vld [vmem:[%s3 + $0x80] sm:$0xff]
        %v2190 = vld [vmem:[%s3 + $0x88] sm:$0xff]
        %v2191 = vld [vmem:[%s3 + $0x90] sm:$0xff]
        %v2192 = vld [vmem:[%s3 + $0x98] sm:$0xff]
        %v2193 = vld [vmem:[%s3 + $0xa0] sm:$0xff]
        %v2194 = vld [vmem:[%s3 + $0xa8] sm:$0xff]
        %v2195 = vld [vmem:[%s3 + $0xb0] sm:$0xff]
        %v2196 = vld [vmem:[%s3 + $0xb8] sm:$0xff]
        %v2197 = vld [vmem:[%s3 + $0xc0] sm:$0xff]
        %v2198 = vld [vmem:[%s3 + $0xc8] sm:$0xff]
        %v2199 = vld [vmem:[%s3 + $0xd0] sm:$0xff]
        %v2200 = vld [vmem:[%s3 + $0xd8] sm:$0xff]
        %v2201 = vld [vmem:[%s3 + $0xe0] sm:$0xff]
        %v2202 = vld [vmem:[%s3 + $0xe8] sm:$0xff]
        %v2203 = vld [vmem:[%s3 + $0xf0] sm:$0xff]
        %v2204 = vld [vmem:[%s3 + $0xf8] sm:$0xff]
        %v2205 = vld [vmem:[%s3 + $0x100] sm:$0xff]
        %v2206 = vld [vmem:[%s3 + $0x108] sm:$0xff]
        %v2207 = vld [vmem:[%s3 + $0x110] sm:$0xff]
        %v2208 = vld [vmem:[%s3 + $0x118] sm:$0xff]
        %v2209 = vld [vmem:[%s3 + $0x120] sm:$0xff]
        %v2210 = vld [vmem:[%s3 + $0x128] sm:$0xff]
        %v2211 = vld [vmem:[%s3 + $0x130] sm:$0xff]
        %v2212 = vld [vmem:[%s3 + $0x138] sm:$0xff]
        %v2213 = vld [vmem:[%s3 + $0x140] sm:$0xff]
        %v2214 = vld [vmem:[%s3 + $0x148] sm:$0xff]
        %v2215 = vld [vmem:[%s3 + $0x150] sm:$0xff]
        %v2216 = vld [vmem:[%s3 + $0x158] sm:$0xff]
        %v2217 = vld [vmem:[%s3 + $0x160] sm:$0xff]
        %v2218 = vld [vmem:[%s3 + $0x168] sm:$0xff]
        %v2219 = vld [vmem:[%s3 + $0x170] sm:$0xff]
        %v2220 = vld [vmem:[%s3 + $0x178] sm:$0xff]
        %v2221 = vld [vmem:[%s3 + $0x180] sm:$0xff]
        %v2222 = vld [vmem:[%s3 + $0x188] sm:$0xff]
        %v2223 = vld [vmem:[%s3 + $0x190] sm:$0xff]
        %v2224 = vld [vmem:[%s3 + $0x198] sm:$0xff]
        %v2225 = vld [vmem:[%s3 + $0x1a0] sm:$0xff]
        %v2226 = vld [vmem:[%s3 + $0x1a8] sm:$0xff]
        %v2227 = vld [vmem:[%s3 + $0x1b0] sm:$0xff]
        %v2228 = vld [vmem:[%s3 + $0x1b8] sm:$0xff]
        %v2229 = vld [vmem:[%s3 + $0x1c0] sm:$0xff]
        %v2230 = vld [vmem:[%s3 + $0x1c8] sm:$0xff]
        %v2231 = vld [vmem:[%s3 + $0x1d0] sm:$0xff]
        %v2232 = vld [vmem:[%s3 + $0x1d8] sm:$0xff]
        %v2233 = vld [vmem:[%s3 + $0x1e0] sm:$0xff]
        %v2234 = vld [vmem:[%s3 + $0x1e8] sm:$0xff]
        %v2235 = vld [vmem:[%s3 + $0x1f0] sm:$0xff]
        %v2236 = vld [vmem:[%s3 + $0x1f8] sm:$0xff]
        %2237 = vmatprep.subr.mxu0 %v2174
        %2238 = vmatpush1.msra.mxu0 %v2173
        %2239 = vmatprep.subr.mxu0 %v2178
        %2240 = vmatpush1.msra.mxu0 %v2177
        %2241 = vmatprep.subr.mxu0 %v2182
        %2242 = vmatpush1.msra.mxu0 %v2181
        %2243 = vmatprep.subr.mxu0 %v2186
        %2244 = vmatpush1.msra.mxu0 %v2185
        %2245 = vmatprep.subr.mxu0 %v2190
        %2246 = vmatpush1.msra.mxu0 %v2189
        %2247 = vmatprep.subr.mxu0 %v2194
        %2248 = vmatpush1.msra.mxu0 %v2193
        %2249 = vmatprep.subr.mxu0 %v2198
        %2250 = vmatpush1.msra.mxu0 %v2197
        %2251 = vmatprep.subr.mxu0 %v2202
        %2252 = vmatpush1.msra.mxu0 %v2201
        %2253 = vmatprep.subr.mxu0 %v2206
        %2254 = vmatpush1.msra.mxu0 %v2205
        %2255 = vmatprep.subr.mxu0 %v2210
        %2256 = vmatpush1.msra.mxu0 %v2209
        %2257 = vmatprep.subr.mxu0 %v2214
        %2258 = vmatpush1.msra.mxu0 %v2213
        %2259 = vmatprep.subr.mxu0 %v2218
        %2260 = vmatpush1.msra.mxu0 %v2217
        %2261 = vmatprep.subr.mxu0 %v2222
        %2262 = vmatpush1.msra.mxu0 %v2221
        %2263 = vmatprep.subr.mxu0 %v2226
        %2264 = vmatpush1.msra.mxu0 %v2225
        %2265 = vmatprep.subr.mxu0 %v2230
        %2266 = vmatpush1.msra.mxu0 %v2229
        %2267 = vmatprep.subr.mxu0 %v2234
        %2268 = vmatpush1.msra.mxu0 %v2233
        %2269 = vmatprep.subr.mxu0 0.0
        %2270 = vmatpush1.msra.mxu0 0.0
        %2271 = vmatprep.subr.mxu0 0.0
        %2272 = vmatpush1.msra.mxu0 0.0
        %2273 = vmatprep.subr.mxu0 0.0
        %2274 = vmatpush1.msra.mxu0 0.0
        %2275 = vmatprep.subr.mxu0 0.0
        %2276 = vmatpush1.msra.mxu0 0.0
        %2277 = vmatprep.subr.mxu0 0.0
        %2278 = vmatpush1.msra.mxu0 0.0
        %2279 = vmatprep.subr.mxu0 0.0
        %2280 = vmatpush1.msra.mxu0 0.0
        %2281 = vmatprep.subr.mxu0 0.0
        %2282 = vmatpush1.msra.mxu0 0.0
        %2283 = vmatprep.subr.mxu0 0.0
        %2284 = vmatpush1.msra.mxu0 0.0
        %2285 = vmatprep.subr.mxu0 0.0
        %2286 = vmatpush1.msra.mxu0 0.0
        %2287 = vmatprep.subr.mxu0 0.0
        %2288 = vmatpush1.msra.mxu0 0.0
        %2289 = vmatprep.subr.mxu0 0.0
        %2290 = vmatpush1.msra.mxu0 0.0
        %2291 = vmatprep.subr.mxu0 0.0
        %2292 = vmatpush1.msra.mxu0 0.0
        %2293 = vmatprep.subr.mxu0 0.0
        %2294 = vmatpush1.msra.mxu0 0.0
        %2295 = vmatprep.subr.mxu0 0.0
        %2296 = vmatpush1.msra.mxu0 0.0
        %2297 = vmatprep.subr.mxu0 0.0
        %2298 = vmatpush1.msra.mxu0 0.0
        %2299 = vmatprep.subr.mxu0 0.0
        %2300 = vmatpush1.msra.mxu0 0.0
        %2301 = vmatprep.mubr.f32.mxu0 0.0
        %2302 = vmatmul.mubr.f32.gmra.mrb[0].mxu0 %v2171
        %v2303 = vpop.f32.mrb[0].mxu0
        %v2304 = vadd.f32 0.0, %v2303
        %v2305 = vpop.f32.mrb[0].mxu0
        %v2306 = vadd.f32 0.0, %v2305
        %2307 = vdwg.mxu0
        %2308 = vmatprep.subr.mxu0 %v2176
        %2309 = vmatpush1.msra.mxu0 %v2175
        %2310 = vmatprep.subr.mxu0 %v2180
        %2311 = vmatpush1.msra.mxu0 %v2179
        %2312 = vmatprep.subr.mxu0 %v2184
        %2313 = vmatpush1.msra.mxu0 %v2183
        %2314 = vmatprep.subr.mxu0 %v2188
        %2315 = vmatpush1.msra.mxu0 %v2187
        %2316 = vmatprep.subr.mxu0 %v2192
        %2317 = vmatpush1.msra.mxu0 %v2191
        %2318 = vmatprep.subr.mxu0 %v2196
        %2319 = vmatpush1.msra.mxu0 %v2195
        %2320 = vmatprep.subr.mxu0 %v2200
        %2321 = vmatpush1.msra.mxu0 %v2199
        %2322 = vmatprep.subr.mxu0 %v2204
        %2323 = vmatpush1.msra.mxu0 %v2203
        %2324 = vmatprep.subr.mxu0 %v2208
        %2325 = vmatpush1.msra.mxu0 %v2207
        %2326 = vmatprep.subr.mxu0 %v2212
        %2327 = vmatpush1.msra.mxu0 %v2211
        %2328 = vmatprep.subr.mxu0 %v2216
        %2329 = vmatpush1.msra.mxu0 %v2215
        %2330 = vmatprep.subr.mxu0 %v2220
        %2331 = vmatpush1.msra.mxu0 %v2219
        %2332 = vmatprep.subr.mxu0 %v2224
        %2333 = vmatpush1.msra.mxu0 %v2223
        %2334 = vmatprep.subr.mxu0 %v2228
        %2335 = vmatpush1.msra.mxu0 %v2227
        %2336 = vmatprep.subr.mxu0 %v2232
        %2337 = vmatpush1.msra.mxu0 %v2231
        %2338 = vmatprep.subr.mxu0 %v2236
        %2339 = vmatpush1.msra.mxu0 %v2235
        %2340 = vmatprep.subr.mxu0 0.0
        %2341 = vmatpush1.msra.mxu0 0.0
        %2342 = vmatprep.subr.mxu0 0.0
        %2343 = vmatpush1.msra.mxu0 0.0
        %2344 = vmatprep.subr.mxu0 0.0
        %2345 = vmatpush1.msra.mxu0 0.0
        %2346 = vmatprep.subr.mxu0 0.0
        %2347 = vmatpush1.msra.mxu0 0.0
        %2348 = vmatprep.subr.mxu0 0.0
        %2349 = vmatpush1.msra.mxu0 0.0
        %2350 = vmatprep.subr.mxu0 0.0
        %2351 = vmatpush1.msra.mxu0 0.0
        %2352 = vmatprep.subr.mxu0 0.0
        %2353 = vmatpush1.msra.mxu0 0.0
        %2354 = vmatprep.subr.mxu0 0.0
        %2355 = vmatpush1.msra.mxu0 0.0
        %2356 = vmatprep.subr.mxu0 0.0
        %2357 = vmatpush1.msra.mxu0 0.0
        %2358 = vmatprep.subr.mxu0 0.0
        %2359 = vmatpush1.msra.mxu0 0.0
        %2360 = vmatprep.subr.mxu0 0.0
        %2361 = vmatpush1.msra.mxu0 0.0
        %2362 = vmatprep.subr.mxu0 0.0
        %2363 = vmatpush1.msra.mxu0 0.0
        %2364 = vmatprep.subr.mxu0 0.0
        %2365 = vmatpush1.msra.mxu0 0.0
        %2366 = vmatprep.subr.mxu0 0.0
        %2367 = vmatpush1.msra.mxu0 0.0
        %2368 = vmatprep.subr.mxu0 0.0
        %2369 = vmatpush1.msra.mxu0 0.0
        %2370 = vmatprep.subr.mxu0 0.0
        %2371 = vmatpush1.msra.mxu0 0.0
        %2372 = vmatprep.mubr.f32.mxu0 0.0
        %2373 = vmatmul.mubr.f32.gmra.mrb[0].mxu0 %v2171
        %v2374 = vpop.f32.mrb[0].mxu0
        %v2375 = vadd.f32 0.0, %v2374
        %v2376 = vpop.f32.mrb[0].mxu0
        %v2377 = vadd.f32 0.0, %v2376
        %2378 = vdwg.mxu0
        %v2379 = vadd.f32 %v2167, %v2304
        %v2380 = vadd.f32 %v2168, %v2306
        %v2381 = vadd.f32 %v2169, %v2375
        %v2382 = vadd.f32 %v2170, %v2377
        %v2383 = vxor.u32 %v2379, 2147483648
        %v2384 = vmul.f32 %v2383, 1.442695
        %v2385 = vpow.pop %v2384
        %v2386 = vadd.f32 %v2385, 1.0
        %v2387 = vrcp.pop %v2386
        %v2388 = vmul.f32 1.0, %v2387
        %v2389 = vxor.u32 %v2380, 2147483648
        %v2390 = vmul.f32 %v2389, 1.442695
        %v2391 = vpow.pop %v2390
        %v2392 = vadd.f32 %v2391, 1.0
        %v2393 = vrcp.pop %v2392
        %v2394 = vmul.f32 1.0, %v2393
        %v2395 = vtanh.pop %v2381
        %v2396 = vxor.u32 %v2382, 2147483648
        %v2397 = vmul.f32 %v2396, 1.442695
        %v2398 = vpow.pop %v2397
        %v2399 = vadd.f32 %v2398, 1.0
        %v2400 = vrcp.pop %v2399
        %v2401 = vmul.f32 1.0, %v2400
        %v2402 = vmul.f32 %v2394, %v2172
        %v2403 = vmul.f32 %v2388, %v2395
        %v2404 = vadd.f32 %v2402, %v2403
        %v2405 = vtanh.pop %v2404
        %v2406 = vmul.f32 %v2401, %v2405
        %2407 = vst [vmem:[#allocation4] sm:$0xff] %v2406
        %2408 = vst [vmem:[#allocation5] sm:$0xff] %v2404
        %v2409 = vpack.c.bf16 %v2406, %v2406
        %s2410 = scalar_lea.vmem %s435, 16
        %2411 = vst [vmem:[%s2410] sm:$0xf] %v2409
        %s2412 = scalar_lea.vmem %s379, 128 [#allocation6]
        %v2413 = vld [vmem:[%s2412] sm:$0xff]
        %v2414 = vld [vmem:[%s2412 + $0x8] sm:$0xff]
        %v2415 = vld [vmem:[%s2412 + $0x10] sm:$0xff]
        %v2416 = vld [vmem:[%s2412 + $0x18] sm:$0xff]
        %v2417 = vld [vmem:[#allocation2] sm:$0xff]
        %v2418 = vld [vmem:[#allocation3] sm:$0xff]
        %v2419 = vld [vmem:[%s2] sm:$0xff]
        %v2420 = vld [vmem:[%s2 + $0x8] sm:$0xff]
        %v2421 = vld [vmem:[%s2 + $0x10] sm:$0xff]
        %v2422 = vld [vmem:[%s2 + $0x18] sm:$0xff]
        %v2423 = vld [vmem:[%s2 + $0x20] sm:$0xff]
        %v2424 = vld [vmem:[%s2 + $0x28] sm:$0xff]
        %v2425 = vld [vmem:[%s2 + $0x30] sm:$0xff]
        %v2426 = vld [vmem:[%s2 + $0x38] sm:$0xff]
        %v2427 = vld [vmem:[%s2 + $0x40] sm:$0xff]
        %v2428 = vld [vmem:[%s2 + $0x48] sm:$0xff]
        %v2429 = vld [vmem:[%s2 + $0x50] sm:$0xff]
        %v2430 = vld [vmem:[%s2 + $0x58] sm:$0xff]
        %v2431 = vld [vmem:[%s2 + $0x60] sm:$0xff]
        %v2432 = vld [vmem:[%s2 + $0x68] sm:$0xff]
        %v2433 = vld [vmem:[%s2 + $0x70] sm:$0xff]
        %v2434 = vld [vmem:[%s2 + $0x78] sm:$0xff]
        %v2435 = vld [vmem:[%s2 + $0x80] sm:$0xff]
        %v2436 = vld [vmem:[%s2 + $0x88] sm:$0xff]
        %v2437 = vld [vmem:[%s2 + $0x90] sm:$0xff]
        %v2438 = vld [vmem:[%s2 + $0x98] sm:$0xff]
        %v2439 = vld [vmem:[%s2 + $0xa0] sm:$0xff]
        %v2440 = vld [vmem:[%s2 + $0xa8] sm:$0xff]
        %v2441 = vld [vmem:[%s2 + $0xb0] sm:$0xff]
        %v2442 = vld [vmem:[%s2 + $0xb8] sm:$0xff]
        %v2443 = vld [vmem:[%s2 + $0xc0] sm:$0xff]
        %v2444 = vld [vmem:[%s2 + $0xc8] sm:$0xff]
        %v2445 = vld [vmem:[%s2 + $0xd0] sm:$0xff]
        %v2446 = vld [vmem:[%s2 + $0xd8] sm:$0xff]
        %v2447 = vld [vmem:[%s2 + $0xe0] sm:$0xff]
        %v2448 = vld [vmem:[%s2 + $0xe8] sm:$0xff]
        %v2449 = vld [vmem:[%s2 + $0xf0] sm:$0xff]
        %v2450 = vld [vmem:[%s2 + $0xf8] sm:$0xff]
        %v2451 = vld [vmem:[%s2 + $0x100] sm:$0xff]
        %v2452 = vld [vmem:[%s2 + $0x108] sm:$0xff]
        %v2453 = vld [vmem:[%s2 + $0x110] sm:$0xff]
        %v2454 = vld [vmem:[%s2 + $0x118] sm:$0xff]
        %v2455 = vld [vmem:[%s2 + $0x120] sm:$0xff]
        %v2456 = vld [vmem:[%s2 + $0x128] sm:$0xff]
        %v2457 = vld [vmem:[%s2 + $0x130] sm:$0xff]
        %v2458 = vld [vmem:[%s2 + $0x138] sm:$0xff]
        %v2459 = vld [vmem:[%s2 + $0x140] sm:$0xff]
        %v2460 = vld [vmem:[%s2 + $0x148] sm:$0xff]
        %v2461 = vld [vmem:[%s2 + $0x150] sm:$0xff]
        %v2462 = vld [vmem:[%s2 + $0x158] sm:$0xff]
        %v2463 = vld [vmem:[%s2 + $0x160] sm:$0xff]
        %v2464 = vld [vmem:[%s2 + $0x168] sm:$0xff]
        %v2465 = vld [vmem:[%s2 + $0x170] sm:$0xff]
        %v2466 = vld [vmem:[%s2 + $0x178] sm:$0xff]
        %v2467 = vld [vmem:[%s2 + $0x180] sm:$0xff]
        %v2468 = vld [vmem:[%s2 + $0x188] sm:$0xff]
        %v2469 = vld [vmem:[%s2 + $0x190] sm:$0xff]
        %v2470 = vld [vmem:[%s2 + $0x198] sm:$0xff]
        %v2471 = vld [vmem:[%s2 + $0x1a0] sm:$0xff]
        %v2472 = vld [vmem:[%s2 + $0x1a8] sm:$0xff]
        %v2473 = vld [vmem:[%s2 + $0x1b0] sm:$0xff]
        %v2474 = vld [vmem:[%s2 + $0x1b8] sm:$0xff]
        %v2475 = vld [vmem:[%s2 + $0x1c0] sm:$0xff]
        %v2476 = vld [vmem:[%s2 + $0x1c8] sm:$0xff]
        %v2477 = vld [vmem:[%s2 + $0x1d0] sm:$0xff]
        %v2478 = vld [vmem:[%s2 + $0x1d8] sm:$0xff]
        %v2479 = vld [vmem:[%s2 + $0x1e0] sm:$0xff]
        %v2480 = vld [vmem:[%s2 + $0x1e8] sm:$0xff]
        %v2481 = vld [vmem:[%s2 + $0x1f0] sm:$0xff]
        %v2482 = vld [vmem:[%s2 + $0x1f8] sm:$0xff]
        %2483 = vmatprep.subr.mxu0 %v2420
        %2484 = vmatpush1.msra.mxu0 %v2419
        %2485 = vmatprep.subr.mxu0 %v2424
        %2486 = vmatpush1.msra.mxu0 %v2423
        %2487 = vmatprep.subr.mxu0 %v2428
        %2488 = vmatpush1.msra.mxu0 %v2427
        %2489 = vmatprep.subr.mxu0 %v2432
        %2490 = vmatpush1.msra.mxu0 %v2431
        %2491 = vmatprep.subr.mxu0 %v2436
        %2492 = vmatpush1.msra.mxu0 %v2435
        %2493 = vmatprep.subr.mxu0 %v2440
        %2494 = vmatpush1.msra.mxu0 %v2439
        %2495 = vmatprep.subr.mxu0 %v2444
        %2496 = vmatpush1.msra.mxu0 %v2443
        %2497 = vmatprep.subr.mxu0 %v2448
        %2498 = vmatpush1.msra.mxu0 %v2447
        %2499 = vmatprep.subr.mxu0 %v2452
        %2500 = vmatpush1.msra.mxu0 %v2451
        %2501 = vmatprep.subr.mxu0 %v2456
        %2502 = vmatpush1.msra.mxu0 %v2455
        %2503 = vmatprep.subr.mxu0 %v2460
        %2504 = vmatpush1.msra.mxu0 %v2459
        %2505 = vmatprep.subr.mxu0 %v2464
        %2506 = vmatpush1.msra.mxu0 %v2463
        %2507 = vmatprep.subr.mxu0 %v2468
        %2508 = vmatpush1.msra.mxu0 %v2467
        %2509 = vmatprep.subr.mxu0 %v2472
        %2510 = vmatpush1.msra.mxu0 %v2471
        %2511 = vmatprep.subr.mxu0 %v2476
        %2512 = vmatpush1.msra.mxu0 %v2475
        %2513 = vmatprep.subr.mxu0 %v2480
        %2514 = vmatpush1.msra.mxu0 %v2479
        %2515 = vmatprep.subr.mxu0 0.0
        %2516 = vmatpush1.msra.mxu0 0.0
        %2517 = vmatprep.subr.mxu0 0.0
        %2518 = vmatpush1.msra.mxu0 0.0
        %2519 = vmatprep.subr.mxu0 0.0
        %2520 = vmatpush1.msra.mxu0 0.0
        %2521 = vmatprep.subr.mxu0 0.0
        %2522 = vmatpush1.msra.mxu0 0.0
        %2523 = vmatprep.subr.mxu0 0.0
        %2524 = vmatpush1.msra.mxu0 0.0
        %2525 = vmatprep.subr.mxu0 0.0
        %2526 = vmatpush1.msra.mxu0 0.0
        %2527 = vmatprep.subr.mxu0 0.0
        %2528 = vmatpush1.msra.mxu0 0.0
        %2529 = vmatprep.subr.mxu0 0.0
        %2530 = vmatpush1.msra.mxu0 0.0
        %2531 = vmatprep.subr.mxu0 0.0
        %2532 = vmatpush1.msra.mxu0 0.0
        %2533 = vmatprep.subr.mxu0 0.0
        %2534 = vmatpush1.msra.mxu0 0.0
        %2535 = vmatprep.subr.mxu0 0.0
        %2536 = vmatpush1.msra.mxu0 0.0
        %2537 = vmatprep.subr.mxu0 0.0
        %2538 = vmatpush1.msra.mxu0 0.0
        %2539 = vmatprep.subr.mxu0 0.0
        %2540 = vmatpush1.msra.mxu0 0.0
        %2541 = vmatprep.subr.mxu0 0.0
        %2542 = vmatpush1.msra.mxu0 0.0
        %2543 = vmatprep.subr.mxu0 0.0
        %2544 = vmatpush1.msra.mxu0 0.0
        %2545 = vmatprep.subr.mxu0 0.0
        %2546 = vmatpush1.msra.mxu0 0.0
        %2547 = vmatprep.mubr.f32.mxu0 0.0
        %2548 = vmatmul.mubr.f32.gmra.mrb[0].mxu0 %v2417
        %v2549 = vpop.f32.mrb[0].mxu0
        %v2550 = vadd.f32 0.0, %v2549
        %v2551 = vpop.f32.mrb[0].mxu0
        %v2552 = vadd.f32 0.0, %v2551
        %2553 = vdwg.mxu0
        %2554 = vmatprep.subr.mxu0 %v2422
        %2555 = vmatpush1.msra.mxu0 %v2421
        %2556 = vmatprep.subr.mxu0 %v2426
        %2557 = vmatpush1.msra.mxu0 %v2425
        %2558 = vmatprep.subr.mxu0 %v2430
        %2559 = vmatpush1.msra.mxu0 %v2429
        %2560 = vmatprep.subr.mxu0 %v2434
        %2561 = vmatpush1.msra.mxu0 %v2433
        %2562 = vmatprep.subr.mxu0 %v2438
        %2563 = vmatpush1.msra.mxu0 %v2437
        %2564 = vmatprep.subr.mxu0 %v2442
        %2565 = vmatpush1.msra.mxu0 %v2441
        %2566 = vmatprep.subr.mxu0 %v2446
        %2567 = vmatpush1.msra.mxu0 %v2445
        %2568 = vmatprep.subr.mxu0 %v2450
        %2569 = vmatpush1.msra.mxu0 %v2449
        %2570 = vmatprep.subr.mxu0 %v2454
        %2571 = vmatpush1.msra.mxu0 %v2453
        %2572 = vmatprep.subr.mxu0 %v2458
        %2573 = vmatpush1.msra.mxu0 %v2457
        %2574 = vmatprep.subr.mxu0 %v2462
        %2575 = vmatpush1.msra.mxu0 %v2461
        %2576 = vmatprep.subr.mxu0 %v2466
        %2577 = vmatpush1.msra.mxu0 %v2465
        %2578 = vmatprep.subr.mxu0 %v2470
        %2579 = vmatpush1.msra.mxu0 %v2469
        %2580 = vmatprep.subr.mxu0 %v2474
        %2581 = vmatpush1.msra.mxu0 %v2473
        %2582 = vmatprep.subr.mxu0 %v2478
        %2583 = vmatpush1.msra.mxu0 %v2477
        %2584 = vmatprep.subr.mxu0 %v2482
        %2585 = vmatpush1.msra.mxu0 %v2481
        %2586 = vmatprep.subr.mxu0 0.0
        %2587 = vmatpush1.msra.mxu0 0.0
        %2588 = vmatprep.subr.mxu0 0.0
        %2589 = vmatpush1.msra.mxu0 0.0
        %2590 = vmatprep.subr.mxu0 0.0
        %2591 = vmatpush1.msra.mxu0 0.0
        %2592 = vmatprep.subr.mxu0 0.0
        %2593 = vmatpush1.msra.mxu0 0.0
        %2594 = vmatprep.subr.mxu0 0.0
        %2595 = vmatpush1.msra.mxu0 0.0
        %2596 = vmatprep.subr.mxu0 0.0
        %2597 = vmatpush1.msra.mxu0 0.0
        %2598 = vmatprep.subr.mxu0 0.0
        %2599 = vmatpush1.msra.mxu0 0.0
        %2600 = vmatprep.subr.mxu0 0.0
        %2601 = vmatpush1.msra.mxu0 0.0
        %2602 = vmatprep.subr.mxu0 0.0
        %2603 = vmatpush1.msra.mxu0 0.0
        %2604 = vmatprep.subr.mxu0 0.0
        %2605 = vmatpush1.msra.mxu0 0.0
        %2606 = vmatprep.subr.mxu0 0.0
        %2607 = vmatpush1.msra.mxu0 0.0
        %2608 = vmatprep.subr.mxu0 0.0
        %2609 = vmatpush1.msra.mxu0 0.0
        %2610 = vmatprep.subr.mxu0 0.0
        %2611 = vmatpush1.msra.mxu0 0.0
        %2612 = vmatprep.subr.mxu0 0.0
        %2613 = vmatpush1.msra.mxu0 0.0
        %2614 = vmatprep.subr.mxu0 0.0
        %2615 = vmatpush1.msra.mxu0 0.0
        %2616 = vmatprep.subr.mxu0 0.0
        %2617 = vmatpush1.msra.mxu0 0.0
        %2618 = vmatprep.mubr.f32.mxu0 0.0
        %2619 = vmatmul.mubr.f32.gmra.mrb[0].mxu0 %v2417
        %v2620 = vpop.f32.mrb[0].mxu0
        %v2621 = vadd.f32 0.0, %v2620
        %v2622 = vpop.f32.mrb[0].mxu0
        %v2623 = vadd.f32 0.0, %v2622
        %2624 = vdwg.mxu0
        %v2625 = vadd.f32 %v2413, %v2550
        %v2626 = vadd.f32 %v2414, %v2552
        %v2627 = vadd.f32 %v2415, %v2621
        %v2628 = vadd.f32 %v2416, %v2623
        %v2629 = vxor.u32 %v2625, 2147483648
        %v2630 = vmul.f32 %v2629, 1.442695
        %v2631 = vpow.pop %v2630
        %v2632 = vadd.f32 %v2631, 1.0
        %v2633 = vrcp.pop %v2632
        %v2634 = vmul.f32 1.0, %v2633
        %v2635 = vxor.u32 %v2626, 2147483648
        %v2636 = vmul.f32 %v2635, 1.442695
        %v2637 = vpow.pop %v2636
        %v2638 = vadd.f32 %v2637, 1.0
        %v2639 = vrcp.pop %v2638
        %v2640 = vmul.f32 1.0, %v2639
        %v2641 = vtanh.pop %v2627
        %v2642 = vxor.u32 %v2628, 2147483648
        %v2643 = vmul.f32 %v2642, 1.442695
        %v2644 = vpow.pop %v2643
        %v2645 = vadd.f32 %v2644, 1.0
        %v2646 = vrcp.pop %v2645
        %v2647 = vmul.f32 1.0, %v2646
        %v2648 = vmul.f32 %v2640, %v2418
        %v2649 = vmul.f32 %v2634, %v2641
        %v2650 = vadd.f32 %v2648, %v2649
        %v2651 = vtanh.pop %v2650
        %v2652 = vmul.f32 %v2647, %v2651
        %2653 = vst [vmem:[#allocation2] sm:$0xff] %v2652
        %2654 = vst [vmem:[#allocation3] sm:$0xff] %v2650
        %v2655 = vpack.c.bf16 %v2652, %v2652
        %s2656 = scalar_lea.vmem %s428, 16
        %2657 = vst [vmem:[%s2656] sm:$0xf] %v2655
        %s2658 = scalar_lea.vmem %s386, 96 [#allocation7]
        %v2659 = vld [vmem:[%s2658] sm:$0xff]
        %v2660 = vld [vmem:[%s2658 + $0x8] sm:$0xff]
        %v2661 = vld [vmem:[%s2658 + $0x10] sm:$0xff]
        %v2662 = vld [vmem:[%s2658 + $0x18] sm:$0xff]
        %v2663 = vld [vmem:[#allocation4] sm:$0xff]
        %v2664 = vld [vmem:[#allocation5] sm:$0xff]
        %v2665 = vld [vmem:[%s3] sm:$0xff]
        %v2666 = vld [vmem:[%s3 + $0x8] sm:$0xff]
        %v2667 = vld [vmem:[%s3 + $0x10] sm:$0xff]
        %v2668 = vld [vmem:[%s3 + $0x18] sm:$0xff]
        %v2669 = vld [vmem:[%s3 + $0x20] sm:$0xff]
        %v2670 = vld [vmem:[%s3 + $0x28] sm:$0xff]
        %v2671 = vld [vmem:[%s3 + $0x30] sm:$0xff]
        %v2672 = vld [vmem:[%s3 + $0x38] sm:$0xff]
        %v2673 = vld [vmem:[%s3 + $0x40] sm:$0xff]
        %v2674 = vld [vmem:[%s3 + $0x48] sm:$0xff]
        %v2675 = vld [vmem:[%s3 + $0x50] sm:$0xff]
        %v2676 = vld [vmem:[%s3 + $0x58] sm:$0xff]
        %v2677 = vld [vmem:[%s3 + $0x60] sm:$0xff]
        %v2678 = vld [vmem:[%s3 + $0x68] sm:$0xff]
        %v2679 = vld [vmem:[%s3 + $0x70] sm:$0xff]
        %v2680 = vld [vmem:[%s3 + $0x78] sm:$0xff]
        %v2681 = vld [vmem:[%s3 + $0x80] sm:$0xff]
        %v2682 = vld [vmem:[%s3 + $0x88] sm:$0xff]
        %v2683 = vld [vmem:[%s3 + $0x90] sm:$0xff]
        %v2684 = vld [vmem:[%s3 + $0x98] sm:$0xff]
        %v2685 = vld [vmem:[%s3 + $0xa0] sm:$0xff]
        %v2686 = vld [vmem:[%s3 + $0xa8] sm:$0xff]
        %v2687 = vld [vmem:[%s3 + $0xb0] sm:$0xff]
        %v2688 = vld [vmem:[%s3 + $0xb8] sm:$0xff]
        %v2689 = vld [vmem:[%s3 + $0xc0] sm:$0xff]
        %v2690 = vld [vmem:[%s3 + $0xc8] sm:$0xff]
        %v2691 = vld [vmem:[%s3 + $0xd0] sm:$0xff]
        %v2692 = vld [vmem:[%s3 + $0xd8] sm:$0xff]
        %v2693 = vld [vmem:[%s3 + $0xe0] sm:$0xff]
        %v2694 = vld [vmem:[%s3 + $0xe8] sm:$0xff]
        %v2695 = vld [vmem:[%s3 + $0xf0] sm:$0xff]
        %v2696 = vld [vmem:[%s3 + $0xf8] sm:$0xff]
        %v2697 = vld [vmem:[%s3 + $0x100] sm:$0xff]
        %v2698 = vld [vmem:[%s3 + $0x108] sm:$0xff]
        %v2699 = vld [vmem:[%s3 + $0x110] sm:$0xff]
        %v2700 = vld [vmem:[%s3 + $0x118] sm:$0xff]
        %v2701 = vld [vmem:[%s3 + $0x120] sm:$0xff]
        %v2702 = vld [vmem:[%s3 + $0x128] sm:$0xff]
        %v2703 = vld [vmem:[%s3 + $0x130] sm:$0xff]
        %v2704 = vld [vmem:[%s3 + $0x138] sm:$0xff]
        %v2705 = vld [vmem:[%s3 + $0x140] sm:$0xff]
        %v2706 = vld [vmem:[%s3 + $0x148] sm:$0xff]
        %v2707 = vld [vmem:[%s3 + $0x150] sm:$0xff]
        %v2708 = vld [vmem:[%s3 + $0x158] sm:$0xff]
        %v2709 = vld [vmem:[%s3 + $0x160] sm:$0xff]
        %v2710 = vld [vmem:[%s3 + $0x168] sm:$0xff]
        %v2711 = vld [vmem:[%s3 + $0x170] sm:$0xff]
        %v2712 = vld [vmem:[%s3 + $0x178] sm:$0xff]
        %v2713 = vld [vmem:[%s3 + $0x180] sm:$0xff]
        %v2714 = vld [vmem:[%s3 + $0x188] sm:$0xff]
        %v2715 = vld [vmem:[%s3 + $0x190] sm:$0xff]
        %v2716 = vld [vmem:[%s3 + $0x198] sm:$0xff]
        %v2717 = vld [vmem:[%s3 + $0x1a0] sm:$0xff]
        %v2718 = vld [vmem:[%s3 + $0x1a8] sm:$0xff]
        %v2719 = vld [vmem:[%s3 + $0x1b0] sm:$0xff]
        %v2720 = vld [vmem:[%s3 + $0x1b8] sm:$0xff]
        %v2721 = vld [vmem:[%s3 + $0x1c0] sm:$0xff]
        %v2722 = vld [vmem:[%s3 + $0x1c8] sm:$0xff]
        %v2723 = vld [vmem:[%s3 + $0x1d0] sm:$0xff]
        %v2724 = vld [vmem:[%s3 + $0x1d8] sm:$0xff]
        %v2725 = vld [vmem:[%s3 + $0x1e0] sm:$0xff]
        %v2726 = vld [vmem:[%s3 + $0x1e8] sm:$0xff]
        %v2727 = vld [vmem:[%s3 + $0x1f0] sm:$0xff]
        %v2728 = vld [vmem:[%s3 + $0x1f8] sm:$0xff]
        %2729 = vmatprep.subr.mxu0 %v2666
        %2730 = vmatpush1.msra.mxu0 %v2665
        %2731 = vmatprep.subr.mxu0 %v2670
        %2732 = vmatpush1.msra.mxu0 %v2669
        %2733 = vmatprep.subr.mxu0 %v2674
        %2734 = vmatpush1.msra.mxu0 %v2673
        %2735 = vmatprep.subr.mxu0 %v2678
        %2736 = vmatpush1.msra.mxu0 %v2677
        %2737 = vmatprep.subr.mxu0 %v2682
        %2738 = vmatpush1.msra.mxu0 %v2681
        %2739 = vmatprep.subr.mxu0 %v2686
        %2740 = vmatpush1.msra.mxu0 %v2685
        %2741 = vmatprep.subr.mxu0 %v2690
        %2742 = vmatpush1.msra.mxu0 %v2689
        %2743 = vmatprep.subr.mxu0 %v2694
        %2744 = vmatpush1.msra.mxu0 %v2693
        %2745 = vmatprep.subr.mxu0 %v2698
        %2746 = vmatpush1.msra.mxu0 %v2697
        %2747 = vmatprep.subr.mxu0 %v2702
        %2748 = vmatpush1.msra.mxu0 %v2701
        %2749 = vmatprep.subr.mxu0 %v2706
        %2750 = vmatpush1.msra.mxu0 %v2705
        %2751 = vmatprep.subr.mxu0 %v2710
        %2752 = vmatpush1.msra.mxu0 %v2709
        %2753 = vmatprep.subr.mxu0 %v2714
        %2754 = vmatpush1.msra.mxu0 %v2713
        %2755 = vmatprep.subr.mxu0 %v2718
        %2756 = vmatpush1.msra.mxu0 %v2717
        %2757 = vmatprep.subr.mxu0 %v2722
        %2758 = vmatpush1.msra.mxu0 %v2721
        %2759 = vmatprep.subr.mxu0 %v2726
        %2760 = vmatpush1.msra.mxu0 %v2725
        %2761 = vmatprep.subr.mxu0 0.0
        %2762 = vmatpush1.msra.mxu0 0.0
        %2763 = vmatprep.subr.mxu0 0.0
        %2764 = vmatpush1.msra.mxu0 0.0
        %2765 = vmatprep.subr.mxu0 0.0
        %2766 = vmatpush1.msra.mxu0 0.0
        %2767 = vmatprep.subr.mxu0 0.0
        %2768 = vmatpush1.msra.mxu0 0.0
        %2769 = vmatprep.subr.mxu0 0.0
        %2770 = vmatpush1.msra.mxu0 0.0
        %2771 = vmatprep.subr.mxu0 0.0
        %2772 = vmatpush1.msra.mxu0 0.0
        %2773 = vmatprep.subr.mxu0 0.0
        %2774 = vmatpush1.msra.mxu0 0.0
        %2775 = vmatprep.subr.mxu0 0.0
        %2776 = vmatpush1.msra.mxu0 0.0
        %2777 = vmatprep.subr.mxu0 0.0
        %2778 = vmatpush1.msra.mxu0 0.0
        %2779 = vmatprep.subr.mxu0 0.0
        %2780 = vmatpush1.msra.mxu0 0.0
        %2781 = vmatprep.subr.mxu0 0.0
        %2782 = vmatpush1.msra.mxu0 0.0
        %2783 = vmatprep.subr.mxu0 0.0
        %2784 = vmatpush1.msra.mxu0 0.0
        %2785 = vmatprep.subr.mxu0 0.0
        %2786 = vmatpush1.msra.mxu0 0.0
        %2787 = vmatprep.subr.mxu0 0.0
        %2788 = vmatpush1.msra.mxu0 0.0
        %2789 = vmatprep.subr.mxu0 0.0
        %2790 = vmatpush1.msra.mxu0 0.0
        %2791 = vmatprep.subr.mxu0 0.0
        %2792 = vmatpush1.msra.mxu0 0.0
        %2793 = vmatprep.mubr.f32.mxu0 0.0
        %2794 = vmatmul.mubr.f32.gmra.mrb[0].mxu0 %v2663
        %v2795 = vpop.f32.mrb[0].mxu0
        %v2796 = vadd.f32 0.0, %v2795
        %v2797 = vpop.f32.mrb[0].mxu0
        %v2798 = vadd.f32 0.0, %v2797
        %2799 = vdwg.mxu0
        %2800 = vmatprep.subr.mxu0 %v2668
        %2801 = vmatpush1.msra.mxu0 %v2667
        %2802 = vmatprep.subr.mxu0 %v2672
        %2803 = vmatpush1.msra.mxu0 %v2671
        %2804 = vmatprep.subr.mxu0 %v2676
        %2805 = vmatpush1.msra.mxu0 %v2675
        %2806 = vmatprep.subr.mxu0 %v2680
        %2807 = vmatpush1.msra.mxu0 %v2679
        %2808 = vmatprep.subr.mxu0 %v2684
        %2809 = vmatpush1.msra.mxu0 %v2683
        %2810 = vmatprep.subr.mxu0 %v2688
        %2811 = vmatpush1.msra.mxu0 %v2687
        %2812 = vmatprep.subr.mxu0 %v2692
        %2813 = vmatpush1.msra.mxu0 %v2691
        %2814 = vmatprep.subr.mxu0 %v2696
        %2815 = vmatpush1.msra.mxu0 %v2695
        %2816 = vmatprep.subr.mxu0 %v2700
        %2817 = vmatpush1.msra.mxu0 %v2699
        %2818 = vmatprep.subr.mxu0 %v2704
        %2819 = vmatpush1.msra.mxu0 %v2703
        %2820 = vmatprep.subr.mxu0 %v2708
        %2821 = vmatpush1.msra.mxu0 %v2707
        %2822 = vmatprep.subr.mxu0 %v2712
        %2823 = vmatpush1.msra.mxu0 %v2711
        %2824 = vmatprep.subr.mxu0 %v2716
        %2825 = vmatpush1.msra.mxu0 %v2715
        %2826 = vmatprep.subr.mxu0 %v2720
        %2827 = vmatpush1.msra.mxu0 %v2719
        %2828 = vmatprep.subr.mxu0 %v2724
        %2829 = vmatpush1.msra.mxu0 %v2723
        %2830 = vmatprep.subr.mxu0 %v2728
        %2831 = vmatpush1.msra.mxu0 %v2727
        %2832 = vmatprep.subr.mxu0 0.0
        %2833 = vmatpush1.msra.mxu0 0.0
        %2834 = vmatprep.subr.mxu0 0.0
        %2835 = vmatpush1.msra.mxu0 0.0
        %2836 = vmatprep.subr.mxu0 0.0
        %2837 = vmatpush1.msra.mxu0 0.0
        %2838 = vmatprep.subr.mxu0 0.0
        %2839 = vmatpush1.msra.mxu0 0.0
        %2840 = vmatprep.subr.mxu0 0.0
        %2841 = vmatpush1.msra.mxu0 0.0
        %2842 = vmatprep.subr.mxu0 0.0
        %2843 = vmatpush1.msra.mxu0 0.0
        %2844 = vmatprep.subr.mxu0 0.0
        %2845 = vmatpush1.msra.mxu0 0.0
        %2846 = vmatprep.subr.mxu0 0.0
        %2847 = vmatpush1.msra.mxu0 0.0
        %2848 = vmatprep.subr.mxu0 0.0
        %2849 = vmatpush1.msra.mxu0 0.0
        %2850 = vmatprep.subr.mxu0 0.0
        %2851 = vmatpush1.msra.mxu0 0.0
        %2852 = vmatprep.subr.mxu0 0.0
        %2853 = vmatpush1.msra.mxu0 0.0
        %2854 = vmatprep.subr.mxu0 0.0
        %2855 = vmatpush1.msra.mxu0 0.0
        %2856 = vmatprep.subr.mxu0 0.0
        %2857 = vmatpush1.msra.mxu0 0.0
        %2858 = vmatprep.subr.mxu0 0.0
        %2859 = vmatpush1.msra.mxu0 0.0
        %2860 = vmatprep.subr.mxu0 0.0
        %2861 = vmatpush1.msra.mxu0 0.0
        %2862 = vmatprep.subr.mxu0 0.0
        %2863 = vmatpush1.msra.mxu0 0.0
        %2864 = vmatprep.mubr.f32.mxu0 0.0
        %2865 = vmatmul.mubr.f32.gmra.mrb[0].mxu0 %v2663
        %v2866 = vpop.f32.mrb[0].mxu0
        %v2867 = vadd.f32 0.0, %v2866
        %v2868 = vpop.f32.mrb[0].mxu0
        %v2869 = vadd.f32 0.0, %v2868
        %2870 = vdwg.mxu0
        %v2871 = vadd.f32 %v2659, %v2796
        %v2872 = vadd.f32 %v2660, %v2798
        %v2873 = vadd.f32 %v2661, %v2867
        %v2874 = vadd.f32 %v2662, %v2869
        %v2875 = vxor.u32 %v2871, 2147483648
        %v2876 = vmul.f32 %v2875, 1.442695
        %v2877 = vpow.pop %v2876
        %v2878 = vadd.f32 %v2877, 1.0
        %v2879 = vrcp.pop %v2878
        %v2880 = vmul.f32 1.0, %v2879
        %v2881 = vxor.u32 %v2872, 2147483648
        %v2882 = vmul.f32 %v2881, 1.442695
        %v2883 = vpow.pop %v2882
        %v2884 = vadd.f32 %v2883, 1.0
        %v2885 = vrcp.pop %v2884
        %v2886 = vmul.f32 1.0, %v2885
        %v2887 = vtanh.pop %v2873
        %v2888 = vxor.u32 %v2874, 2147483648
        %v2889 = vmul.f32 %v2888, 1.442695
        %v2890 = vpow.pop %v2889
        %v2891 = vadd.f32 %v2890, 1.0
        %v2892 = vrcp.pop %v2891
        %v2893 = vmul.f32 1.0, %v2892
        %v2894 = vmul.f32 %v2886, %v2664
        %v2895 = vmul.f32 %v2880, %v2887
        %v2896 = vadd.f32 %v2894, %v2895
        %v2897 = vtanh.pop %v2896
        %v2898 = vmul.f32 %v2893, %v2897
        %2899 = vst [vmem:[#allocation4] sm:$0xff] %v2898
        %2900 = vst [vmem:[#allocation5] sm:$0xff] %v2896
        %v2901 = vpack.c.bf16 %v2898, %v2898
        %s2902 = scalar_lea.vmem %s435, 12
        %2903 = vst [vmem:[%s2902] sm:$0xf] %v2901
        %s2904 = scalar_lea.vmem %s379, 160 [#allocation6]
        %v2905 = vld [vmem:[%s2904] sm:$0xff]
        %v2906 = vld [vmem:[%s2904 + $0x8] sm:$0xff]
        %v2907 = vld [vmem:[%s2904 + $0x10] sm:$0xff]
        %v2908 = vld [vmem:[%s2904 + $0x18] sm:$0xff]
        %v2909 = vld [vmem:[#allocation2] sm:$0xff]
        %v2910 = vld [vmem:[#allocation3] sm:$0xff]
        %v2911 = vld [vmem:[%s2] sm:$0xff]
        %v2912 = vld [vmem:[%s2 + $0x8] sm:$0xff]
        %v2913 = vld [vmem:[%s2 + $0x10] sm:$0xff]
        %v2914 = vld [vmem:[%s2 + $0x18] sm:$0xff]
        %v2915 = vld [vmem:[%s2 + $0x20] sm:$0xff]
        %v2916 = vld [vmem:[%s2 + $0x28] sm:$0xff]
        %v2917 = vld [vmem:[%s2 + $0x30] sm:$0xff]
        %v2918 = vld [vmem:[%s2 + $0x38] sm:$0xff]
        %v2919 = vld [vmem:[%s2 + $0x40] sm:$0xff]
        %v2920 = vld [vmem:[%s2 + $0x48] sm:$0xff]
        %v2921 = vld [vmem:[%s2 + $0x50] sm:$0xff]
        %v2922 = vld [vmem:[%s2 + $0x58] sm:$0xff]
        %v2923 = vld [vmem:[%s2 + $0x60] sm:$0xff]
        %v2924 = vld [vmem:[%s2 + $0x68] sm:$0xff]
        %v2925 = vld [vmem:[%s2 + $0x70] sm:$0xff]
        %v2926 = vld [vmem:[%s2 + $0x78] sm:$0xff]
        %v2927 = vld [vmem:[%s2 + $0x80] sm:$0xff]
        %v2928 = vld [vmem:[%s2 + $0x88] sm:$0xff]
        %v2929 = vld [vmem:[%s2 + $0x90] sm:$0xff]
        %v2930 = vld [vmem:[%s2 + $0x98] sm:$0xff]
        %v2931 = vld [vmem:[%s2 + $0xa0] sm:$0xff]
        %v2932 = vld [vmem:[%s2 + $0xa8] sm:$0xff]
        %v2933 = vld [vmem:[%s2 + $0xb0] sm:$0xff]
        %v2934 = vld [vmem:[%s2 + $0xb8] sm:$0xff]
        %v2935 = vld [vmem:[%s2 + $0xc0] sm:$0xff]
        %v2936 = vld [vmem:[%s2 + $0xc8] sm:$0xff]
        %v2937 = vld [vmem:[%s2 + $0xd0] sm:$0xff]
        %v2938 = vld [vmem:[%s2 + $0xd8] sm:$0xff]
        %v2939 = vld [vmem:[%s2 + $0xe0] sm:$0xff]
        %v2940 = vld [vmem:[%s2 + $0xe8] sm:$0xff]
        %v2941 = vld [vmem:[%s2 + $0xf0] sm:$0xff]
        %v2942 = vld [vmem:[%s2 + $0xf8] sm:$0xff]
        %v2943 = vld [vmem:[%s2 + $0x100] sm:$0xff]
        %v2944 = vld [vmem:[%s2 + $0x108] sm:$0xff]
        %v2945 = vld [vmem:[%s2 + $0x110] sm:$0xff]
        %v2946 = vld [vmem:[%s2 + $0x118] sm:$0xff]
        %v2947 = vld [vmem:[%s2 + $0x120] sm:$0xff]
        %v2948 = vld [vmem:[%s2 + $0x128] sm:$0xff]
        %v2949 = vld [vmem:[%s2 + $0x130] sm:$0xff]
        %v2950 = vld [vmem:[%s2 + $0x138] sm:$0xff]
        %v2951 = vld [vmem:[%s2 + $0x140] sm:$0xff]
        %v2952 = vld [vmem:[%s2 + $0x148] sm:$0xff]
        %v2953 = vld [vmem:[%s2 + $0x150] sm:$0xff]
        %v2954 = vld [vmem:[%s2 + $0x158] sm:$0xff]
        %v2955 = vld [vmem:[%s2 + $0x160] sm:$0xff]
        %v2956 = vld [vmem:[%s2 + $0x168] sm:$0xff]
        %v2957 = vld [vmem:[%s2 + $0x170] sm:$0xff]
        %v2958 = vld [vmem:[%s2 + $0x178] sm:$0xff]
        %v2959 = vld [vmem:[%s2 + $0x180] sm:$0xff]
        %v2960 = vld [vmem:[%s2 + $0x188] sm:$0xff]
        %v2961 = vld [vmem:[%s2 + $0x190] sm:$0xff]
        %v2962 = vld [vmem:[%s2 + $0x198] sm:$0xff]
        %v2963 = vld [vmem:[%s2 + $0x1a0] sm:$0xff]
        %v2964 = vld [vmem:[%s2 + $0x1a8] sm:$0xff]
        %v2965 = vld [vmem:[%s2 + $0x1b0] sm:$0xff]
        %v2966 = vld [vmem:[%s2 + $0x1b8] sm:$0xff]
        %v2967 = vld [vmem:[%s2 + $0x1c0] sm:$0xff]
        %v2968 = vld [vmem:[%s2 + $0x1c8] sm:$0xff]
        %v2969 = vld [vmem:[%s2 + $0x1d0] sm:$0xff]
        %v2970 = vld [vmem:[%s2 + $0x1d8] sm:$0xff]
        %v2971 = vld [vmem:[%s2 + $0x1e0] sm:$0xff]
        %v2972 = vld [vmem:[%s2 + $0x1e8] sm:$0xff]
        %v2973 = vld [vmem:[%s2 + $0x1f0] sm:$0xff]
        %v2974 = vld [vmem:[%s2 + $0x1f8] sm:$0xff]
        %2975 = vmatprep.subr.mxu0 %v2912
        %2976 = vmatpush1.msra.mxu0 %v2911
        %2977 = vmatprep.subr.mxu0 %v2916
        %2978 = vmatpush1.msra.mxu0 %v2915
        %2979 = vmatprep.subr.mxu0 %v2920
        %2980 = vmatpush1.msra.mxu0 %v2919
        %2981 = vmatprep.subr.mxu0 %v2924
        %2982 = vmatpush1.msra.mxu0 %v2923
        %2983 = vmatprep.subr.mxu0 %v2928
        %2984 = vmatpush1.msra.mxu0 %v2927
        %2985 = vmatprep.subr.mxu0 %v2932
        %2986 = vmatpush1.msra.mxu0 %v2931
        %2987 = vmatprep.subr.mxu0 %v2936
        %2988 = vmatpush1.msra.mxu0 %v2935
        %2989 = vmatprep.subr.mxu0 %v2940
        %2990 = vmatpush1.msra.mxu0 %v2939
        %2991 = vmatprep.subr.mxu0 %v2944
        %2992 = vmatpush1.msra.mxu0 %v2943
        %2993 = vmatprep.subr.mxu0 %v2948
        %2994 = vmatpush1.msra.mxu0 %v2947
        %2995 = vmatprep.subr.mxu0 %v2952
        %2996 = vmatpush1.msra.mxu0 %v2951
        %2997 = vmatprep.subr.mxu0 %v2956
        %2998 = vmatpush1.msra.mxu0 %v2955
        %2999 = vmatprep.subr.mxu0 %v2960
        %3000 = vmatpush1.msra.mxu0 %v2959
        %3001 = vmatprep.subr.mxu0 %v2964
        %3002 = vmatpush1.msra.mxu0 %v2963
        %3003 = vmatprep.subr.mxu0 %v2968
        %3004 = vmatpush1.msra.mxu0 %v2967
        %3005 = vmatprep.subr.mxu0 %v2972
        %3006 = vmatpush1.msra.mxu0 %v2971
        %3007 = vmatprep.subr.mxu0 0.0
        %3008 = vmatpush1.msra.mxu0 0.0
        %3009 = vmatprep.subr.mxu0 0.0
        %3010 = vmatpush1.msra.mxu0 0.0
        %3011 = vmatprep.subr.mxu0 0.0
        %3012 = vmatpush1.msra.mxu0 0.0
        %3013 = vmatprep.subr.mxu0 0.0
        %3014 = vmatpush1.msra.mxu0 0.0
        %3015 = vmatprep.subr.mxu0 0.0
        %3016 = vmatpush1.msra.mxu0 0.0
        %3017 = vmatprep.subr.mxu0 0.0
        %3018 = vmatpush1.msra.mxu0 0.0
        %3019 = vmatprep.subr.mxu0 0.0
        %3020 = vmatpush1.msra.mxu0 0.0
        %3021 = vmatprep.subr.mxu0 0.0
        %3022 = vmatpush1.msra.mxu0 0.0
        %3023 = vmatprep.subr.mxu0 0.0
        %3024 = vmatpush1.msra.mxu0 0.0
        %3025 = vmatprep.subr.mxu0 0.0
        %3026 = vmatpush1.msra.mxu0 0.0
        %3027 = vmatprep.subr.mxu0 0.0
        %3028 = vmatpush1.msra.mxu0 0.0
        %3029 = vmatprep.subr.mxu0 0.0
        %3030 = vmatpush1.msra.mxu0 0.0
        %3031 = vmatprep.subr.mxu0 0.0
        %3032 = vmatpush1.msra.mxu0 0.0
        %3033 = vmatprep.subr.mxu0 0.0
        %3034 = vmatpush1.msra.mxu0 0.0
        %3035 = vmatprep.subr.mxu0 0.0
        %3036 = vmatpush1.msra.mxu0 0.0
        %3037 = vmatprep.subr.mxu0 0.0
        %3038 = vmatpush1.msra.mxu0 0.0
        %3039 = vmatprep.mubr.f32.mxu0 0.0
        %3040 = vmatmul.mubr.f32.gmra.mrb[0].mxu0 %v2909
        %v3041 = vpop.f32.mrb[0].mxu0
        %v3042 = vadd.f32 0.0, %v3041
        %v3043 = vpop.f32.mrb[0].mxu0
        %v3044 = vadd.f32 0.0, %v3043
        %3045 = vdwg.mxu0
        %3046 = vmatprep.subr.mxu0 %v2914
        %3047 = vmatpush1.msra.mxu0 %v2913
        %3048 = vmatprep.subr.mxu0 %v2918
        %3049 = vmatpush1.msra.mxu0 %v2917
        %3050 = vmatprep.subr.mxu0 %v2922
        %3051 = vmatpush1.msra.mxu0 %v2921
        %3052 = vmatprep.subr.mxu0 %v2926
        %3053 = vmatpush1.msra.mxu0 %v2925
        %3054 = vmatprep.subr.mxu0 %v2930
        %3055 = vmatpush1.msra.mxu0 %v2929
        %3056 = vmatprep.subr.mxu0 %v2934
        %3057 = vmatpush1.msra.mxu0 %v2933
        %3058 = vmatprep.subr.mxu0 %v2938
        %3059 = vmatpush1.msra.mxu0 %v2937
        %3060 = vmatprep.subr.mxu0 %v2942
        %3061 = vmatpush1.msra.mxu0 %v2941
        %3062 = vmatprep.subr.mxu0 %v2946
        %3063 = vmatpush1.msra.mxu0 %v2945
        %3064 = vmatprep.subr.mxu0 %v2950
        %3065 = vmatpush1.msra.mxu0 %v2949
        %3066 = vmatprep.subr.mxu0 %v2954
        %3067 = vmatpush1.msra.mxu0 %v2953
        %3068 = vmatprep.subr.mxu0 %v2958
        %3069 = vmatpush1.msra.mxu0 %v2957
        %3070 = vmatprep.subr.mxu0 %v2962
        %3071 = vmatpush1.msra.mxu0 %v2961
        %3072 = vmatprep.subr.mxu0 %v2966
        %3073 = vmatpush1.msra.mxu0 %v2965
        %3074 = vmatprep.subr.mxu0 %v2970
        %3075 = vmatpush1.msra.mxu0 %v2969
        %3076 = vmatprep.subr.mxu0 %v2974
        %3077 = vmatpush1.msra.mxu0 %v2973
        %3078 = vmatprep.subr.mxu0 0.0
        %3079 = vmatpush1.msra.mxu0 0.0
        %3080 = vmatprep.subr.mxu0 0.0
        %3081 = vmatpush1.msra.mxu0 0.0
        %3082 = vmatprep.subr.mxu0 0.0
        %3083 = vmatpush1.msra.mxu0 0.0
        %3084 = vmatprep.subr.mxu0 0.0
        %3085 = vmatpush1.msra.mxu0 0.0
        %3086 = vmatprep.subr.mxu0 0.0
        %3087 = vmatpush1.msra.mxu0 0.0
        %3088 = vmatprep.subr.mxu0 0.0
        %3089 = vmatpush1.msra.mxu0 0.0
        %3090 = vmatprep.subr.mxu0 0.0
        %3091 = vmatpush1.msra.mxu0 0.0
        %3092 = vmatprep.subr.mxu0 0.0
        %3093 = vmatpush1.msra.mxu0 0.0
        %3094 = vmatprep.subr.mxu0 0.0
        %3095 = vmatpush1.msra.mxu0 0.0
        %3096 = vmatprep.subr.mxu0 0.0
        %3097 = vmatpush1.msra.mxu0 0.0
        %3098 = vmatprep.subr.mxu0 0.0
        %3099 = vmatpush1.msra.mxu0 0.0
        %3100 = vmatprep.subr.mxu0 0.0
        %3101 = vmatpush1.msra.mxu0 0.0
        %3102 = vmatprep.subr.mxu0 0.0
        %3103 = vmatpush1.msra.mxu0 0.0
        %3104 = vmatprep.subr.mxu0 0.0
        %3105 = vmatpush1.msra.mxu0 0.0
        %3106 = vmatprep.subr.mxu0 0.0
        %3107 = vmatpush1.msra.mxu0 0.0
        %3108 = vmatprep.subr.mxu0 0.0
        %3109 = vmatpush1.msra.mxu0 0.0
        %3110 = vmatprep.mubr.f32.mxu0 0.0
        %3111 = vmatmul.mubr.f32.gmra.mrb[0].mxu0 %v2909
        %v3112 = vpop.f32.mrb[0].mxu0
        %v3113 = vadd.f32 0.0, %v3112
        %v3114 = vpop.f32.mrb[0].mxu0
        %v3115 = vadd.f32 0.0, %v3114
        %3116 = vdwg.mxu0
        %v3117 = vadd.f32 %v2905, %v3042
        %v3118 = vadd.f32 %v2906, %v3044
        %v3119 = vadd.f32 %v2907, %v3113
        %v3120 = vadd.f32 %v2908, %v3115
        %v3121 = vxor.u32 %v3117, 2147483648
        %v3122 = vmul.f32 %v3121, 1.442695
        %v3123 = vpow.pop %v3122
        %v3124 = vadd.f32 %v3123, 1.0
        %v3125 = vrcp.pop %v3124
        %v3126 = vmul.f32 1.0, %v3125
        %v3127 = vxor.u32 %v3118, 2147483648
        %v3128 = vmul.f32 %v3127, 1.442695
        %v3129 = vpow.pop %v3128
        %v3130 = vadd.f32 %v3129, 1.0
        %v3131 = vrcp.pop %v3130
        %v3132 = vmul.f32 1.0, %v3131
        %v3133 = vtanh.pop %v3119
        %v3134 = vxor.u32 %v3120, 2147483648
        %v3135 = vmul.f32 %v3134, 1.442695
        %v3136 = vpow.pop %v3135
        %v3137 = vadd.f32 %v3136, 1.0
        %v3138 = vrcp.pop %v3137
        %v3139 = vmul.f32 1.0, %v3138
        %v3140 = vmul.f32 %v3132, %v2910
        %v3141 = vmul.f32 %v3126, %v3133
        %v3142 = vadd.f32 %v3140, %v3141
        %v3143 = vtanh.pop %v3142
        %v3144 = vmul.f32 %v3139, %v3143
        %3145 = vst [vmem:[#allocation2] sm:$0xff] %v3144
        %3146 = vst [vmem:[#allocation3] sm:$0xff] %v3142
        %v3147 = vpack.c.bf16 %v3144, %v3144
        %s3148 = scalar_lea.vmem %s428, 20
        %3149 = vst [vmem:[%s3148] sm:$0xf] %v3147
        %s3150 = scalar_lea.vmem %s386, 64 [#allocation7]
        %v3151 = vld [vmem:[%s3150] sm:$0xff]
        %v3152 = vld [vmem:[%s3150 + $0x8] sm:$0xff]
        %v3153 = vld [vmem:[%s3150 + $0x10] sm:$0xff]
        %v3154 = vld [vmem:[%s3150 + $0x18] sm:$0xff]
        %v3155 = vld [vmem:[#allocation4] sm:$0xff]
        %v3156 = vld [vmem:[#allocation5] sm:$0xff]
        %v3157 = vld [vmem:[%s3] sm:$0xff]
        %v3158 = vld [vmem:[%s3 + $0x8] sm:$0xff]
        %v3159 = vld [vmem:[%s3 + $0x10] sm:$0xff]
        %v3160 = vld [vmem:[%s3 + $0x18] sm:$0xff]
        %v3161 = vld [vmem:[%s3 + $0x20] sm:$0xff]
        %v3162 = vld [vmem:[%s3 + $0x28] sm:$0xff]
        %v3163 = vld [vmem:[%s3 + $0x30] sm:$0xff]
        %v3164 = vld [vmem:[%s3 + $0x38] sm:$0xff]
        %v3165 = vld [vmem:[%s3 + $0x40] sm:$0xff]
        %v3166 = vld [vmem:[%s3 + $0x48] sm:$0xff]
        %v3167 = vld [vmem:[%s3 + $0x50] sm:$0xff]
        %v3168 = vld [vmem:[%s3 + $0x58] sm:$0xff]
        %v3169 = vld [vmem:[%s3 + $0x60] sm:$0xff]
        %v3170 = vld [vmem:[%s3 + $0x68] sm:$0xff]
        %v3171 = vld [vmem:[%s3 + $0x70] sm:$0xff]
        %v3172 = vld [vmem:[%s3 + $0x78] sm:$0xff]
        %v3173 = vld [vmem:[%s3 + $0x80] sm:$0xff]
        %v3174 = vld [vmem:[%s3 + $0x88] sm:$0xff]
        %v3175 = vld [vmem:[%s3 + $0x90] sm:$0xff]
        %v3176 = vld [vmem:[%s3 + $0x98] sm:$0xff]
        %v3177 = vld [vmem:[%s3 + $0xa0] sm:$0xff]
        %v3178 = vld [vmem:[%s3 + $0xa8] sm:$0xff]
        %v3179 = vld [vmem:[%s3 + $0xb0] sm:$0xff]
        %v3180 = vld [vmem:[%s3 + $0xb8] sm:$0xff]
        %v3181 = vld [vmem:[%s3 + $0xc0] sm:$0xff]
        %v3182 = vld [vmem:[%s3 + $0xc8] sm:$0xff]
        %v3183 = vld [vmem:[%s3 + $0xd0] sm:$0xff]
        %v3184 = vld [vmem:[%s3 + $0xd8] sm:$0xff]
        %v3185 = vld [vmem:[%s3 + $0xe0] sm:$0xff]
        %v3186 = vld [vmem:[%s3 + $0xe8] sm:$0xff]
        %v3187 = vld [vmem:[%s3 + $0xf0] sm:$0xff]
        %v3188 = vld [vmem:[%s3 + $0xf8] sm:$0xff]
        %v3189 = vld [vmem:[%s3 + $0x100] sm:$0xff]
        %v3190 = vld [vmem:[%s3 + $0x108] sm:$0xff]
        %v3191 = vld [vmem:[%s3 + $0x110] sm:$0xff]
        %v3192 = vld [vmem:[%s3 + $0x118] sm:$0xff]
        %v3193 = vld [vmem:[%s3 + $0x120] sm:$0xff]
        %v3194 = vld [vmem:[%s3 + $0x128] sm:$0xff]
        %v3195 = vld [vmem:[%s3 + $0x130] sm:$0xff]
        %v3196 = vld [vmem:[%s3 + $0x138] sm:$0xff]
        %v3197 = vld [vmem:[%s3 + $0x140] sm:$0xff]
        %v3198 = vld [vmem:[%s3 + $0x148] sm:$0xff]
        %v3199 = vld [vmem:[%s3 + $0x150] sm:$0xff]
        %v3200 = vld [vmem:[%s3 + $0x158] sm:$0xff]
        %v3201 = vld [vmem:[%s3 + $0x160] sm:$0xff]
        %v3202 = vld [vmem:[%s3 + $0x168] sm:$0xff]
        %v3203 = vld [vmem:[%s3 + $0x170] sm:$0xff]
        %v3204 = vld [vmem:[%s3 + $0x178] sm:$0xff]
        %v3205 = vld [vmem:[%s3 + $0x180] sm:$0xff]
        %v3206 = vld [vmem:[%s3 + $0x188] sm:$0xff]
        %v3207 = vld [vmem:[%s3 + $0x190] sm:$0xff]
        %v3208 = vld [vmem:[%s3 + $0x198] sm:$0xff]
        %v3209 = vld [vmem:[%s3 + $0x1a0] sm:$0xff]
        %v3210 = vld [vmem:[%s3 + $0x1a8] sm:$0xff]
        %v3211 = vld [vmem:[%s3 + $0x1b0] sm:$0xff]
        %v3212 = vld [vmem:[%s3 + $0x1b8] sm:$0xff]
        %v3213 = vld [vmem:[%s3 + $0x1c0] sm:$0xff]
        %v3214 = vld [vmem:[%s3 + $0x1c8] sm:$0xff]
        %v3215 = vld [vmem:[%s3 + $0x1d0] sm:$0xff]
        %v3216 = vld [vmem:[%s3 + $0x1d8] sm:$0xff]
        %v3217 = vld [vmem:[%s3 + $0x1e0] sm:$0xff]
        %v3218 = vld [vmem:[%s3 + $0x1e8] sm:$0xff]
        %v3219 = vld [vmem:[%s3 + $0x1f0] sm:$0xff]
        %v3220 = vld [vmem:[%s3 + $0x1f8] sm:$0xff]
        %3221 = vmatprep.subr.mxu0 %v3158
        %3222 = vmatpush1.msra.mxu0 %v3157
        %3223 = vmatprep.subr.mxu0 %v3162
        %3224 = vmatpush1.msra.mxu0 %v3161
        %3225 = vmatprep.subr.mxu0 %v3166
        %3226 = vmatpush1.msra.mxu0 %v3165
        %3227 = vmatprep.subr.mxu0 %v3170
        %3228 = vmatpush1.msra.mxu0 %v3169
        %3229 = vmatprep.subr.mxu0 %v3174
        %3230 = vmatpush1.msra.mxu0 %v3173
        %3231 = vmatprep.subr.mxu0 %v3178
        %3232 = vmatpush1.msra.mxu0 %v3177
        %3233 = vmatprep.subr.mxu0 %v3182
        %3234 = vmatpush1.msra.mxu0 %v3181
        %3235 = vmatprep.subr.mxu0 %v3186
        %3236 = vmatpush1.msra.mxu0 %v3185
        %3237 = vmatprep.subr.mxu0 %v3190
        %3238 = vmatpush1.msra.mxu0 %v3189
        %3239 = vmatprep.subr.mxu0 %v3194
        %3240 = vmatpush1.msra.mxu0 %v3193
        %3241 = vmatprep.subr.mxu0 %v3198
        %3242 = vmatpush1.msra.mxu0 %v3197
        %3243 = vmatprep.subr.mxu0 %v3202
        %3244 = vmatpush1.msra.mxu0 %v3201
        %3245 = vmatprep.subr.mxu0 %v3206
        %3246 = vmatpush1.msra.mxu0 %v3205
        %3247 = vmatprep.subr.mxu0 %v3210
        %3248 = vmatpush1.msra.mxu0 %v3209
        %3249 = vmatprep.subr.mxu0 %v3214
        %3250 = vmatpush1.msra.mxu0 %v3213
        %3251 = vmatprep.subr.mxu0 %v3218
        %3252 = vmatpush1.msra.mxu0 %v3217
        %3253 = vmatprep.subr.mxu0 0.0
        %3254 = vmatpush1.msra.mxu0 0.0
        %3255 = vmatprep.subr.mxu0 0.0
        %3256 = vmatpush1.msra.mxu0 0.0
        %3257 = vmatprep.subr.mxu0 0.0
        %3258 = vmatpush1.msra.mxu0 0.0
        %3259 = vmatprep.subr.mxu0 0.0
        %3260 = vmatpush1.msra.mxu0 0.0
        %3261 = vmatprep.subr.mxu0 0.0
        %3262 = vmatpush1.msra.mxu0 0.0
        %3263 = vmatprep.subr.mxu0 0.0
        %3264 = vmatpush1.msra.mxu0 0.0
        %3265 = vmatprep.subr.mxu0 0.0
        %3266 = vmatpush1.msra.mxu0 0.0
        %3267 = vmatprep.subr.mxu0 0.0
        %3268 = vmatpush1.msra.mxu0 0.0
        %3269 = vmatprep.subr.mxu0 0.0
        %3270 = vmatpush1.msra.mxu0 0.0
        %3271 = vmatprep.subr.mxu0 0.0
        %3272 = vmatpush1.msra.mxu0 0.0
        %3273 = vmatprep.subr.mxu0 0.0
        %3274 = vmatpush1.msra.mxu0 0.0
        %3275 = vmatprep.subr.mxu0 0.0
        %3276 = vmatpush1.msra.mxu0 0.0
        %3277 = vmatprep.subr.mxu0 0.0
        %3278 = vmatpush1.msra.mxu0 0.0
        %3279 = vmatprep.subr.mxu0 0.0
        %3280 = vmatpush1.msra.mxu0 0.0
        %3281 = vmatprep.subr.mxu0 0.0
        %3282 = vmatpush1.msra.mxu0 0.0
        %3283 = vmatprep.subr.mxu0 0.0
        %3284 = vmatpush1.msra.mxu0 0.0
        %3285 = vmatprep.mubr.f32.mxu0 0.0
        %3286 = vmatmul.mubr.f32.gmra.mrb[0].mxu0 %v3155
        %v3287 = vpop.f32.mrb[0].mxu0
        %v3288 = vadd.f32 0.0, %v3287
        %v3289 = vpop.f32.mrb[0].mxu0
        %v3290 = vadd.f32 0.0, %v3289
        %3291 = vdwg.mxu0
        %3292 = vmatprep.subr.mxu0 %v3160
        %3293 = vmatpush1.msra.mxu0 %v3159
        %3294 = vmatprep.subr.mxu0 %v3164
        %3295 = vmatpush1.msra.mxu0 %v3163
        %3296 = vmatprep.subr.mxu0 %v3168
        %3297 = vmatpush1.msra.mxu0 %v3167
        %3298 = vmatprep.subr.mxu0 %v3172
        %3299 = vmatpush1.msra.mxu0 %v3171
        %3300 = vmatprep.subr.mxu0 %v3176
        %3301 = vmatpush1.msra.mxu0 %v3175
        %3302 = vmatprep.subr.mxu0 %v3180
        %3303 = vmatpush1.msra.mxu0 %v3179
        %3304 = vmatprep.subr.mxu0 %v3184
        %3305 = vmatpush1.msra.mxu0 %v3183
        %3306 = vmatprep.subr.mxu0 %v3188
        %3307 = vmatpush1.msra.mxu0 %v3187
        %3308 = vmatprep.subr.mxu0 %v3192
        %3309 = vmatpush1.msra.mxu0 %v3191
        %3310 = vmatprep.subr.mxu0 %v3196
        %3311 = vmatpush1.msra.mxu0 %v3195
        %3312 = vmatprep.subr.mxu0 %v3200
        %3313 = vmatpush1.msra.mxu0 %v3199
        %3314 = vmatprep.subr.mxu0 %v3204
        %3315 = vmatpush1.msra.mxu0 %v3203
        %3316 = vmatprep.subr.mxu0 %v3208
        %3317 = vmatpush1.msra.mxu0 %v3207
        %3318 = vmatprep.subr.mxu0 %v3212
        %3319 = vmatpush1.msra.mxu0 %v3211
        %3320 = vmatprep.subr.mxu0 %v3216
        %3321 = vmatpush1.msra.mxu0 %v3215
        %3322 = vmatprep.subr.mxu0 %v3220
        %3323 = vmatpush1.msra.mxu0 %v3219
        %3324 = vmatprep.subr.mxu0 0.0
        %3325 = vmatpush1.msra.mxu0 0.0
        %3326 = vmatprep.subr.mxu0 0.0
        %3327 = vmatpush1.msra.mxu0 0.0
        %3328 = vmatprep.subr.mxu0 0.0
        %3329 = vmatpush1.msra.mxu0 0.0
        %3330 = vmatprep.subr.mxu0 0.0
        %3331 = vmatpush1.msra.mxu0 0.0
        %3332 = vmatprep.subr.mxu0 0.0
        %3333 = vmatpush1.msra.mxu0 0.0
        %3334 = vmatprep.subr.mxu0 0.0
        %3335 = vmatpush1.msra.mxu0 0.0
        %3336 = vmatprep.subr.mxu0 0.0
        %3337 = vmatpush1.msra.mxu0 0.0
        %3338 = vmatprep.subr.mxu0 0.0
        %3339 = vmatpush1.msra.mxu0 0.0
        %3340 = vmatprep.subr.mxu0 0.0
        %3341 = vmatpush1.msra.mxu0 0.0
        %3342 = vmatprep.subr.mxu0 0.0
        %3343 = vmatpush1.msra.mxu0 0.0
        %3344 = vmatprep.subr.mxu0 0.0
        %3345 = vmatpush1.msra.mxu0 0.0
        %3346 = vmatprep.subr.mxu0 0.0
        %3347 = vmatpush1.msra.mxu0 0.0
        %3348 = vmatprep.subr.mxu0 0.0
        %3349 = vmatpush1.msra.mxu0 0.0
        %3350 = vmatprep.subr.mxu0 0.0
        %3351 = vmatpush1.msra.mxu0 0.0
        %3352 = vmatprep.subr.mxu0 0.0
        %3353 = vmatpush1.msra.mxu0 0.0
        %3354 = vmatprep.subr.mxu0 0.0
        %3355 = vmatpush1.msra.mxu0 0.0
        %3356 = vmatprep.mubr.f32.mxu0 0.0
        %3357 = vmatmul.mubr.f32.gmra.mrb[0].mxu0 %v3155
        %v3358 = vpop.f32.mrb[0].mxu0
        %v3359 = vadd.f32 0.0, %v3358
        %v3360 = vpop.f32.mrb[0].mxu0
        %v3361 = vadd.f32 0.0, %v3360
        %3362 = vdwg.mxu0
        %v3363 = vadd.f32 %v3151, %v3288
        %v3364 = vadd.f32 %v3152, %v3290
        %v3365 = vadd.f32 %v3153, %v3359
        %v3366 = vadd.f32 %v3154, %v3361
        %v3367 = vxor.u32 %v3363, 2147483648
        %v3368 = vmul.f32 %v3367, 1.442695
        %v3369 = vpow.pop %v3368
        %v3370 = vadd.f32 %v3369, 1.0
        %v3371 = vrcp.pop %v3370
        %v3372 = vmul.f32 1.0, %v3371
        %v3373 = vxor.u32 %v3364, 2147483648
        %v3374 = vmul.f32 %v3373, 1.442695
        %v3375 = vpow.pop %v3374
        %v3376 = vadd.f32 %v3375, 1.0
        %v3377 = vrcp.pop %v3376
        %v3378 = vmul.f32 1.0, %v3377
        %v3379 = vtanh.pop %v3365
        %v3380 = vxor.u32 %v3366, 2147483648
        %v3381 = vmul.f32 %v3380, 1.442695
        %v3382 = vpow.pop %v3381
        %v3383 = vadd.f32 %v3382, 1.0
        %v3384 = vrcp.pop %v3383
        %v3385 = vmul.f32 1.0, %v3384
        %v3386 = vmul.f32 %v3378, %v3156
        %v3387 = vmul.f32 %v3372, %v3379
        %v3388 = vadd.f32 %v3386, %v3387
        %v3389 = vtanh.pop %v3388
        %v3390 = vmul.f32 %v3385, %v3389
        %3391 = vst [vmem:[#allocation4] sm:$0xff] %v3390
        %3392 = vst [vmem:[#allocation5] sm:$0xff] %v3388
        %v3393 = vpack.c.bf16 %v3390, %v3390
        %s3394 = scalar_lea.vmem %s435, 8
        %3395 = vst [vmem:[%s3394] sm:$0xf] %v3393
        %s3396 = scalar_lea.vmem %s379, 192 [#allocation6]
        %v3397 = vld [vmem:[%s3396] sm:$0xff]
        %v3398 = vld [vmem:[%s3396 + $0x8] sm:$0xff]
        %v3399 = vld [vmem:[%s3396 + $0x10] sm:$0xff]
        %v3400 = vld [vmem:[%s3396 + $0x18] sm:$0xff]
        %v3401 = vld [vmem:[#allocation2] sm:$0xff]
        %v3402 = vld [vmem:[#allocation3] sm:$0xff]
        %v3403 = vld [vmem:[%s2] sm:$0xff]
        %v3404 = vld [vmem:[%s2 + $0x8] sm:$0xff]
        %v3405 = vld [vmem:[%s2 + $0x10] sm:$0xff]
        %v3406 = vld [vmem:[%s2 + $0x18] sm:$0xff]
        %v3407 = vld [vmem:[%s2 + $0x20] sm:$0xff]
        %v3408 = vld [vmem:[%s2 + $0x28] sm:$0xff]
        %v3409 = vld [vmem:[%s2 + $0x30] sm:$0xff]
        %v3410 = vld [vmem:[%s2 + $0x38] sm:$0xff]
        %v3411 = vld [vmem:[%s2 + $0x40] sm:$0xff]
        %v3412 = vld [vmem:[%s2 + $0x48] sm:$0xff]
        %v3413 = vld [vmem:[%s2 + $0x50] sm:$0xff]
        %v3414 = vld [vmem:[%s2 + $0x58] sm:$0xff]
        %v3415 = vld [vmem:[%s2 + $0x60] sm:$0xff]
        %v3416 = vld [vmem:[%s2 + $0x68] sm:$0xff]
        %v3417 = vld [vmem:[%s2 + $0x70] sm:$0xff]
        %v3418 = vld [vmem:[%s2 + $0x78] sm:$0xff]
        %v3419 = vld [vmem:[%s2 + $0x80] sm:$0xff]
        %v3420 = vld [vmem:[%s2 + $0x88] sm:$0xff]
        %v3421 = vld [vmem:[%s2 + $0x90] sm:$0xff]
        %v3422 = vld [vmem:[%s2 + $0x98] sm:$0xff]
        %v3423 = vld [vmem:[%s2 + $0xa0] sm:$0xff]
        %v3424 = vld [vmem:[%s2 + $0xa8] sm:$0xff]
        %v3425 = vld [vmem:[%s2 + $0xb0] sm:$0xff]
        %v3426 = vld [vmem:[%s2 + $0xb8] sm:$0xff]
        %v3427 = vld [vmem:[%s2 + $0xc0] sm:$0xff]
        %v3428 = vld [vmem:[%s2 + $0xc8] sm:$0xff]
        %v3429 = vld [vmem:[%s2 + $0xd0] sm:$0xff]
        %v3430 = vld [vmem:[%s2 + $0xd8] sm:$0xff]
        %v3431 = vld [vmem:[%s2 + $0xe0] sm:$0xff]
        %v3432 = vld [vmem:[%s2 + $0xe8] sm:$0xff]
        %v3433 = vld [vmem:[%s2 + $0xf0] sm:$0xff]
        %v3434 = vld [vmem:[%s2 + $0xf8] sm:$0xff]
        %v3435 = vld [vmem:[%s2 + $0x100] sm:$0xff]
        %v3436 = vld [vmem:[%s2 + $0x108] sm:$0xff]
        %v3437 = vld [vmem:[%s2 + $0x110] sm:$0xff]
        %v3438 = vld [vmem:[%s2 + $0x118] sm:$0xff]
        %v3439 = vld [vmem:[%s2 + $0x120] sm:$0xff]
        %v3440 = vld [vmem:[%s2 + $0x128] sm:$0xff]
        %v3441 = vld [vmem:[%s2 + $0x130] sm:$0xff]
        %v3442 = vld [vmem:[%s2 + $0x138] sm:$0xff]
        %v3443 = vld [vmem:[%s2 + $0x140] sm:$0xff]
        %v3444 = vld [vmem:[%s2 + $0x148] sm:$0xff]
        %v3445 = vld [vmem:[%s2 + $0x150] sm:$0xff]
        %v3446 = vld [vmem:[%s2 + $0x158] sm:$0xff]
        %v3447 = vld [vmem:[%s2 + $0x160] sm:$0xff]
        %v3448 = vld [vmem:[%s2 + $0x168] sm:$0xff]
        %v3449 = vld [vmem:[%s2 + $0x170] sm:$0xff]
        %v3450 = vld [vmem:[%s2 + $0x178] sm:$0xff]
        %v3451 = vld [vmem:[%s2 + $0x180] sm:$0xff]
        %v3452 = vld [vmem:[%s2 + $0x188] sm:$0xff]
        %v3453 = vld [vmem:[%s2 + $0x190] sm:$0xff]
        %v3454 = vld [vmem:[%s2 + $0x198] sm:$0xff]
        %v3455 = vld [vmem:[%s2 + $0x1a0] sm:$0xff]
        %v3456 = vld [vmem:[%s2 + $0x1a8] sm:$0xff]
        %v3457 = vld [vmem:[%s2 + $0x1b0] sm:$0xff]
        %v3458 = vld [vmem:[%s2 + $0x1b8] sm:$0xff]
        %v3459 = vld [vmem:[%s2 + $0x1c0] sm:$0xff]
        %v3460 = vld [vmem:[%s2 + $0x1c8] sm:$0xff]
        %v3461 = vld [vmem:[%s2 + $0x1d0] sm:$0xff]
        %v3462 = vld [vmem:[%s2 + $0x1d8] sm:$0xff]
        %v3463 = vld [vmem:[%s2 + $0x1e0] sm:$0xff]
        %v3464 = vld [vmem:[%s2 + $0x1e8] sm:$0xff]
        %v3465 = vld [vmem:[%s2 + $0x1f0] sm:$0xff]
        %v3466 = vld [vmem:[%s2 + $0x1f8] sm:$0xff]
        %3467 = vmatprep.subr.mxu0 %v3404
        %3468 = vmatpush1.msra.mxu0 %v3403
        %3469 = vmatprep.subr.mxu0 %v3408
        %3470 = vmatpush1.msra.mxu0 %v3407
        %3471 = vmatprep.subr.mxu0 %v3412
        %3472 = vmatpush1.msra.mxu0 %v3411
        %3473 = vmatprep.subr.mxu0 %v3416
        %3474 = vmatpush1.msra.mxu0 %v3415
        %3475 = vmatprep.subr.mxu0 %v3420
        %3476 = vmatpush1.msra.mxu0 %v3419
        %3477 = vmatprep.subr.mxu0 %v3424
        %3478 = vmatpush1.msra.mxu0 %v3423
        %3479 = vmatprep.subr.mxu0 %v3428
        %3480 = vmatpush1.msra.mxu0 %v3427
        %3481 = vmatprep.subr.mxu0 %v3432
        %3482 = vmatpush1.msra.mxu0 %v3431
        %3483 = vmatprep.subr.mxu0 %v3436
        %3484 = vmatpush1.msra.mxu0 %v3435
        %3485 = vmatprep.subr.mxu0 %v3440
        %3486 = vmatpush1.msra.mxu0 %v3439
        %3487 = vmatprep.subr.mxu0 %v3444
        %3488 = vmatpush1.msra.mxu0 %v3443
        %3489 = vmatprep.subr.mxu0 %v3448
        %3490 = vmatpush1.msra.mxu0 %v3447
        %3491 = vmatprep.subr.mxu0 %v3452
        %3492 = vmatpush1.msra.mxu0 %v3451
        %3493 = vmatprep.subr.mxu0 %v3456
        %3494 = vmatpush1.msra.mxu0 %v3455
        %3495 = vmatprep.subr.mxu0 %v3460
        %3496 = vmatpush1.msra.mxu0 %v3459
        %3497 = vmatprep.subr.mxu0 %v3464
        %3498 = vmatpush1.msra.mxu0 %v3463
        %3499 = vmatprep.subr.mxu0 0.0
        %3500 = vmatpush1.msra.mxu0 0.0
        %3501 = vmatprep.subr.mxu0 0.0
        %3502 = vmatpush1.msra.mxu0 0.0
        %3503 = vmatprep.subr.mxu0 0.0
        %3504 = vmatpush1.msra.mxu0 0.0
        %3505 = vmatprep.subr.mxu0 0.0
        %3506 = vmatpush1.msra.mxu0 0.0
        %3507 = vmatprep.subr.mxu0 0.0
        %3508 = vmatpush1.msra.mxu0 0.0
        %3509 = vmatprep.subr.mxu0 0.0
        %3510 = vmatpush1.msra.mxu0 0.0
        %3511 = vmatprep.subr.mxu0 0.0
        %3512 = vmatpush1.msra.mxu0 0.0
        %3513 = vmatprep.subr.mxu0 0.0
        %3514 = vmatpush1.msra.mxu0 0.0
        %3515 = vmatprep.subr.mxu0 0.0
        %3516 = vmatpush1.msra.mxu0 0.0
        %3517 = vmatprep.subr.mxu0 0.0
        %3518 = vmatpush1.msra.mxu0 0.0
        %3519 = vmatprep.subr.mxu0 0.0
        %3520 = vmatpush1.msra.mxu0 0.0
        %3521 = vmatprep.subr.mxu0 0.0
        %3522 = vmatpush1.msra.mxu0 0.0
        %3523 = vmatprep.subr.mxu0 0.0
        %3524 = vmatpush1.msra.mxu0 0.0
        %3525 = vmatprep.subr.mxu0 0.0
        %3526 = vmatpush1.msra.mxu0 0.0
        %3527 = vmatprep.subr.mxu0 0.0
        %3528 = vmatpush1.msra.mxu0 0.0
        %3529 = vmatprep.subr.mxu0 0.0
        %3530 = vmatpush1.msra.mxu0 0.0
        %3531 = vmatprep.mubr.f32.mxu0 0.0
        %3532 = vmatmul.mubr.f32.gmra.mrb[0].mxu0 %v3401
        %v3533 = vpop.f32.mrb[0].mxu0
        %v3534 = vadd.f32 0.0, %v3533
        %v3535 = vpop.f32.mrb[0].mxu0
        %v3536 = vadd.f32 0.0, %v3535
        %3537 = vdwg.mxu0
        %3538 = vmatprep.subr.mxu0 %v3406
        %3539 = vmatpush1.msra.mxu0 %v3405
        %3540 = vmatprep.subr.mxu0 %v3410
        %3541 = vmatpush1.msra.mxu0 %v3409
        %3542 = vmatprep.subr.mxu0 %v3414
        %3543 = vmatpush1.msra.mxu0 %v3413
        %3544 = vmatprep.subr.mxu0 %v3418
        %3545 = vmatpush1.msra.mxu0 %v3417
        %3546 = vmatprep.subr.mxu0 %v3422
        %3547 = vmatpush1.msra.mxu0 %v3421
        %3548 = vmatprep.subr.mxu0 %v3426
        %3549 = vmatpush1.msra.mxu0 %v3425
        %3550 = vmatprep.subr.mxu0 %v3430
        %3551 = vmatpush1.msra.mxu0 %v3429
        %3552 = vmatprep.subr.mxu0 %v3434
        %3553 = vmatpush1.msra.mxu0 %v3433
        %3554 = vmatprep.subr.mxu0 %v3438
        %3555 = vmatpush1.msra.mxu0 %v3437
        %3556 = vmatprep.subr.mxu0 %v3442
        %3557 = vmatpush1.msra.mxu0 %v3441
        %3558 = vmatprep.subr.mxu0 %v3446
        %3559 = vmatpush1.msra.mxu0 %v3445
        %3560 = vmatprep.subr.mxu0 %v3450
        %3561 = vmatpush1.msra.mxu0 %v3449
        %3562 = vmatprep.subr.mxu0 %v3454
        %3563 = vmatpush1.msra.mxu0 %v3453
        %3564 = vmatprep.subr.mxu0 %v3458
        %3565 = vmatpush1.msra.mxu0 %v3457
        %3566 = vmatprep.subr.mxu0 %v3462
        %3567 = vmatpush1.msra.mxu0 %v3461
        %3568 = vmatprep.subr.mxu0 %v3466
        %3569 = vmatpush1.msra.mxu0 %v3465
        %3570 = vmatprep.subr.mxu0 0.0
        %3571 = vmatpush1.msra.mxu0 0.0
        %3572 = vmatprep.subr.mxu0 0.0
        %3573 = vmatpush1.msra.mxu0 0.0
        %3574 = vmatprep.subr.mxu0 0.0
        %3575 = vmatpush1.msra.mxu0 0.0
        %3576 = vmatprep.subr.mxu0 0.0
        %3577 = vmatpush1.msra.mxu0 0.0
        %3578 = vmatprep.subr.mxu0 0.0
        %3579 = vmatpush1.msra.mxu0 0.0
        %3580 = vmatprep.subr.mxu0 0.0
        %3581 = vmatpush1.msra.mxu0 0.0
        %3582 = vmatprep.subr.mxu0 0.0
        %3583 = vmatpush1.msra.mxu0 0.0
        %3584 = vmatprep.subr.mxu0 0.0
        %3585 = vmatpush1.msra.mxu0 0.0
        %3586 = vmatprep.subr.mxu0 0.0
        %3587 = vmatpush1.msra.mxu0 0.0
        %3588 = vmatprep.subr.mxu0 0.0
        %3589 = vmatpush1.msra.mxu0 0.0
        %3590 = vmatprep.subr.mxu0 0.0
        %3591 = vmatpush1.msra.mxu0 0.0
        %3592 = vmatprep.subr.mxu0 0.0
        %3593 = vmatpush1.msra.mxu0 0.0
        %3594 = vmatprep.subr.mxu0 0.0
        %3595 = vmatpush1.msra.mxu0 0.0
        %3596 = vmatprep.subr.mxu0 0.0
        %3597 = vmatpush1.msra.mxu0 0.0
        %3598 = vmatprep.subr.mxu0 0.0
        %3599 = vmatpush1.msra.mxu0 0.0
        %3600 = vmatprep.subr.mxu0 0.0
        %3601 = vmatpush1.msra.mxu0 0.0
        %3602 = vmatprep.mubr.f32.mxu0 0.0
        %3603 = vmatmul.mubr.f32.gmra.mrb[0].mxu0 %v3401
        %v3604 = vpop.f32.mrb[0].mxu0
        %v3605 = vadd.f32 0.0, %v3604
        %v3606 = vpop.f32.mrb[0].mxu0
        %v3607 = vadd.f32 0.0, %v3606
        %3608 = vdwg.mxu0
        %v3609 = vadd.f32 %v3397, %v3534
        %v3610 = vadd.f32 %v3398, %v3536
        %v3611 = vadd.f32 %v3399, %v3605
        %v3612 = vadd.f32 %v3400, %v3607
        %v3613 = vxor.u32 %v3609, 2147483648
        %v3614 = vmul.f32 %v3613, 1.442695
        %v3615 = vpow.pop %v3614
        %v3616 = vadd.f32 %v3615, 1.0
        %v3617 = vrcp.pop %v3616
        %v3618 = vmul.f32 1.0, %v3617
        %v3619 = vxor.u32 %v3610, 2147483648
        %v3620 = vmul.f32 %v3619, 1.442695
        %v3621 = vpow.pop %v3620
        %v3622 = vadd.f32 %v3621, 1.0
        %v3623 = vrcp.pop %v3622
        %v3624 = vmul.f32 1.0, %v3623
        %v3625 = vtanh.pop %v3611
        %v3626 = vxor.u32 %v3612, 2147483648
        %v3627 = vmul.f32 %v3626, 1.442695
        %v3628 = vpow.pop %v3627
        %v3629 = vadd.f32 %v3628, 1.0
        %v3630 = vrcp.pop %v3629
        %v3631 = vmul.f32 1.0, %v3630
        %v3632 = vmul.f32 %v3624, %v3402
        %v3633 = vmul.f32 %v3618, %v3625
        %v3634 = vadd.f32 %v3632, %v3633
        %v3635 = vtanh.pop %v3634
        %v3636 = vmul.f32 %v3631, %v3635
        %3637 = vst [vmem:[#allocation2] sm:$0xff] %v3636
        %3638 = vst [vmem:[#allocation3] sm:$0xff] %v3634
        %v3639 = vpack.c.bf16 %v3636, %v3636
        %s3640 = scalar_lea.vmem %s428, 24
        %3641 = vst [vmem:[%s3640] sm:$0xf] %v3639
        %s3642 = scalar_lea.vmem %s386, 32 [#allocation7]
        %v3643 = vld [vmem:[%s3642] sm:$0xff]
        %v3644 = vld [vmem:[%s3642 + $0x8] sm:$0xff]
        %v3645 = vld [vmem:[%s3642 + $0x10] sm:$0xff]
        %v3646 = vld [vmem:[%s3642 + $0x18] sm:$0xff]
        %v3647 = vld [vmem:[#allocation4] sm:$0xff]
        %v3648 = vld [vmem:[#allocation5] sm:$0xff]
        %v3649 = vld [vmem:[%s3] sm:$0xff]
        %v3650 = vld [vmem:[%s3 + $0x8] sm:$0xff]
        %v3651 = vld [vmem:[%s3 + $0x10] sm:$0xff]
        %v3652 = vld [vmem:[%s3 + $0x18] sm:$0xff]
        %v3653 = vld [vmem:[%s3 + $0x20] sm:$0xff]
        %v3654 = vld [vmem:[%s3 + $0x28] sm:$0xff]
        %v3655 = vld [vmem:[%s3 + $0x30] sm:$0xff]
        %v3656 = vld [vmem:[%s3 + $0x38] sm:$0xff]
        %v3657 = vld [vmem:[%s3 + $0x40] sm:$0xff]
        %v3658 = vld [vmem:[%s3 + $0x48] sm:$0xff]
        %v3659 = vld [vmem:[%s3 + $0x50] sm:$0xff]
        %v3660 = vld [vmem:[%s3 + $0x58] sm:$0xff]
        %v3661 = vld [vmem:[%s3 + $0x60] sm:$0xff]
        %v3662 = vld [vmem:[%s3 + $0x68] sm:$0xff]
        %v3663 = vld [vmem:[%s3 + $0x70] sm:$0xff]
        %v3664 = vld [vmem:[%s3 + $0x78] sm:$0xff]
        %v3665 = vld [vmem:[%s3 + $0x80] sm:$0xff]
        %v3666 = vld [vmem:[%s3 + $0x88] sm:$0xff]
        %v3667 = vld [vmem:[%s3 + $0x90] sm:$0xff]
        %v3668 = vld [vmem:[%s3 + $0x98] sm:$0xff]
        %v3669 = vld [vmem:[%s3 + $0xa0] sm:$0xff]
        %v3670 = vld [vmem:[%s3 + $0xa8] sm:$0xff]
        %v3671 = vld [vmem:[%s3 + $0xb0] sm:$0xff]
        %v3672 = vld [vmem:[%s3 + $0xb8] sm:$0xff]
        %v3673 = vld [vmem:[%s3 + $0xc0] sm:$0xff]
        %v3674 = vld [vmem:[%s3 + $0xc8] sm:$0xff]
        %v3675 = vld [vmem:[%s3 + $0xd0] sm:$0xff]
        %v3676 = vld [vmem:[%s3 + $0xd8] sm:$0xff]
        %v3677 = vld [vmem:[%s3 + $0xe0] sm:$0xff]
        %v3678 = vld [vmem:[%s3 + $0xe8] sm:$0xff]
        %v3679 = vld [vmem:[%s3 + $0xf0] sm:$0xff]
        %v3680 = vld [vmem:[%s3 + $0xf8] sm:$0xff]
        %v3681 = vld [vmem:[%s3 + $0x100] sm:$0xff]
        %v3682 = vld [vmem:[%s3 + $0x108] sm:$0xff]
        %v3683 = vld [vmem:[%s3 + $0x110] sm:$0xff]
        %v3684 = vld [vmem:[%s3 + $0x118] sm:$0xff]
        %v3685 = vld [vmem:[%s3 + $0x120] sm:$0xff]
        %v3686 = vld [vmem:[%s3 + $0x128] sm:$0xff]
        %v3687 = vld [vmem:[%s3 + $0x130] sm:$0xff]
        %v3688 = vld [vmem:[%s3 + $0x138] sm:$0xff]
        %v3689 = vld [vmem:[%s3 + $0x140] sm:$0xff]
        %v3690 = vld [vmem:[%s3 + $0x148] sm:$0xff]
        %v3691 = vld [vmem:[%s3 + $0x150] sm:$0xff]
        %v3692 = vld [vmem:[%s3 + $0x158] sm:$0xff]
        %v3693 = vld [vmem:[%s3 + $0x160] sm:$0xff]
        %v3694 = vld [vmem:[%s3 + $0x168] sm:$0xff]
        %v3695 = vld [vmem:[%s3 + $0x170] sm:$0xff]
        %v3696 = vld [vmem:[%s3 + $0x178] sm:$0xff]
        %v3697 = vld [vmem:[%s3 + $0x180] sm:$0xff]
        %v3698 = vld [vmem:[%s3 + $0x188] sm:$0xff]
        %v3699 = vld [vmem:[%s3 + $0x190] sm:$0xff]
        %v3700 = vld [vmem:[%s3 + $0x198] sm:$0xff]
        %v3701 = vld [vmem:[%s3 + $0x1a0] sm:$0xff]
        %v3702 = vld [vmem:[%s3 + $0x1a8] sm:$0xff]
        %v3703 = vld [vmem:[%s3 + $0x1b0] sm:$0xff]
        %v3704 = vld [vmem:[%s3 + $0x1b8] sm:$0xff]
        %v3705 = vld [vmem:[%s3 + $0x1c0] sm:$0xff]
        %v3706 = vld [vmem:[%s3 + $0x1c8] sm:$0xff]
        %v3707 = vld [vmem:[%s3 + $0x1d0] sm:$0xff]
        %v3708 = vld [vmem:[%s3 + $0x1d8] sm:$0xff]
        %v3709 = vld [vmem:[%s3 + $0x1e0] sm:$0xff]
        %v3710 = vld [vmem:[%s3 + $0x1e8] sm:$0xff]
        %v3711 = vld [vmem:[%s3 + $0x1f0] sm:$0xff]
        %v3712 = vld [vmem:[%s3 + $0x1f8] sm:$0xff]
        %3713 = vmatprep.subr.mxu0 %v3650
        %3714 = vmatpush1.msra.mxu0 %v3649
        %3715 = vmatprep.subr.mxu0 %v3654
        %3716 = vmatpush1.msra.mxu0 %v3653
        %3717 = vmatprep.subr.mxu0 %v3658
        %3718 = vmatpush1.msra.mxu0 %v3657
        %3719 = vmatprep.subr.mxu0 %v3662
        %3720 = vmatpush1.msra.mxu0 %v3661
        %3721 = vmatprep.subr.mxu0 %v3666
        %3722 = vmatpush1.msra.mxu0 %v3665
        %3723 = vmatprep.subr.mxu0 %v3670
        %3724 = vmatpush1.msra.mxu0 %v3669
        %3725 = vmatprep.subr.mxu0 %v3674
        %3726 = vmatpush1.msra.mxu0 %v3673
        %3727 = vmatprep.subr.mxu0 %v3678
        %3728 = vmatpush1.msra.mxu0 %v3677
        %3729 = vmatprep.subr.mxu0 %v3682
        %3730 = vmatpush1.msra.mxu0 %v3681
        %3731 = vmatprep.subr.mxu0 %v3686
        %3732 = vmatpush1.msra.mxu0 %v3685
        %3733 = vmatprep.subr.mxu0 %v3690
        %3734 = vmatpush1.msra.mxu0 %v3689
        %3735 = vmatprep.subr.mxu0 %v3694
        %3736 = vmatpush1.msra.mxu0 %v3693
        %3737 = vmatprep.subr.mxu0 %v3698
        %3738 = vmatpush1.msra.mxu0 %v3697
        %3739 = vmatprep.subr.mxu0 %v3702
        %3740 = vmatpush1.msra.mxu0 %v3701
        %3741 = vmatprep.subr.mxu0 %v3706
        %3742 = vmatpush1.msra.mxu0 %v3705
        %3743 = vmatprep.subr.mxu0 %v3710
        %3744 = vmatpush1.msra.mxu0 %v3709
        %3745 = vmatprep.subr.mxu0 0.0
        %3746 = vmatpush1.msra.mxu0 0.0
        %3747 = vmatprep.subr.mxu0 0.0
        %3748 = vmatpush1.msra.mxu0 0.0
        %3749 = vmatprep.subr.mxu0 0.0
        %3750 = vmatpush1.msra.mxu0 0.0
        %3751 = vmatprep.subr.mxu0 0.0
        %3752 = vmatpush1.msra.mxu0 0.0
        %3753 = vmatprep.subr.mxu0 0.0
        %3754 = vmatpush1.msra.mxu0 0.0
        %3755 = vmatprep.subr.mxu0 0.0
        %3756 = vmatpush1.msra.mxu0 0.0
        %3757 = vmatprep.subr.mxu0 0.0
        %3758 = vmatpush1.msra.mxu0 0.0
        %3759 = vmatprep.subr.mxu0 0.0
        %3760 = vmatpush1.msra.mxu0 0.0
        %3761 = vmatprep.subr.mxu0 0.0
        %3762 = vmatpush1.msra.mxu0 0.0
        %3763 = vmatprep.subr.mxu0 0.0
        %3764 = vmatpush1.msra.mxu0 0.0
        %3765 = vmatprep.subr.mxu0 0.0
        %3766 = vmatpush1.msra.mxu0 0.0
        %3767 = vmatprep.subr.mxu0 0.0
        %3768 = vmatpush1.msra.mxu0 0.0
        %3769 = vmatprep.subr.mxu0 0.0
        %3770 = vmatpush1.msra.mxu0 0.0
        %3771 = vmatprep.subr.mxu0 0.0
        %3772 = vmatpush1.msra.mxu0 0.0
        %3773 = vmatprep.subr.mxu0 0.0
        %3774 = vmatpush1.msra.mxu0 0.0
        %3775 = vmatprep.subr.mxu0 0.0
        %3776 = vmatpush1.msra.mxu0 0.0
        %3777 = vmatprep.mubr.f32.mxu0 0.0
        %3778 = vmatmul.mubr.f32.gmra.mrb[0].mxu0 %v3647
        %v3779 = vpop.f32.mrb[0].mxu0
        %v3780 = vadd.f32 0.0, %v3779
        %v3781 = vpop.f32.mrb[0].mxu0
        %v3782 = vadd.f32 0.0, %v3781
        %3783 = vdwg.mxu0
        %3784 = vmatprep.subr.mxu0 %v3652
        %3785 = vmatpush1.msra.mxu0 %v3651
        %3786 = vmatprep.subr.mxu0 %v3656
        %3787 = vmatpush1.msra.mxu0 %v3655
        %3788 = vmatprep.subr.mxu0 %v3660
        %3789 = vmatpush1.msra.mxu0 %v3659
        %3790 = vmatprep.subr.mxu0 %v3664
        %3791 = vmatpush1.msra.mxu0 %v3663
        %3792 = vmatprep.subr.mxu0 %v3668
        %3793 = vmatpush1.msra.mxu0 %v3667
        %3794 = vmatprep.subr.mxu0 %v3672
        %3795 = vmatpush1.msra.mxu0 %v3671
        %3796 = vmatprep.subr.mxu0 %v3676
        %3797 = vmatpush1.msra.mxu0 %v3675
        %3798 = vmatprep.subr.mxu0 %v3680
        %3799 = vmatpush1.msra.mxu0 %v3679
        %3800 = vmatprep.subr.mxu0 %v3684
        %3801 = vmatpush1.msra.mxu0 %v3683
        %3802 = vmatprep.subr.mxu0 %v3688
        %3803 = vmatpush1.msra.mxu0 %v3687
        %3804 = vmatprep.subr.mxu0 %v3692
        %3805 = vmatpush1.msra.mxu0 %v3691
        %3806 = vmatprep.subr.mxu0 %v3696
        %3807 = vmatpush1.msra.mxu0 %v3695
        %3808 = vmatprep.subr.mxu0 %v3700
        %3809 = vmatpush1.msra.mxu0 %v3699
        %3810 = vmatprep.subr.mxu0 %v3704
        %3811 = vmatpush1.msra.mxu0 %v3703
        %3812 = vmatprep.subr.mxu0 %v3708
        %3813 = vmatpush1.msra.mxu0 %v3707
        %3814 = vmatprep.subr.mxu0 %v3712
        %3815 = vmatpush1.msra.mxu0 %v3711
        %3816 = vmatprep.subr.mxu0 0.0
        %3817 = vmatpush1.msra.mxu0 0.0
        %3818 = vmatprep.subr.mxu0 0.0
        %3819 = vmatpush1.msra.mxu0 0.0
        %3820 = vmatprep.subr.mxu0 0.0
        %3821 = vmatpush1.msra.mxu0 0.0
        %3822 = vmatprep.subr.mxu0 0.0
        %3823 = vmatpush1.msra.mxu0 0.0
        %3824 = vmatprep.subr.mxu0 0.0
        %3825 = vmatpush1.msra.mxu0 0.0
        %3826 = vmatprep.subr.mxu0 0.0
        %3827 = vmatpush1.msra.mxu0 0.0
        %3828 = vmatprep.subr.mxu0 0.0
        %3829 = vmatpush1.msra.mxu0 0.0
        %3830 = vmatprep.subr.mxu0 0.0
        %3831 = vmatpush1.msra.mxu0 0.0
        %3832 = vmatprep.subr.mxu0 0.0
        %3833 = vmatpush1.msra.mxu0 0.0
        %3834 = vmatprep.subr.mxu0 0.0
        %3835 = vmatpush1.msra.mxu0 0.0
        %3836 = vmatprep.subr.mxu0 0.0
        %3837 = vmatpush1.msra.mxu0 0.0
        %3838 = vmatprep.subr.mxu0 0.0
        %3839 = vmatpush1.msra.mxu0 0.0
        %3840 = vmatprep.subr.mxu0 0.0
        %3841 = vmatpush1.msra.mxu0 0.0
        %3842 = vmatprep.subr.mxu0 0.0
        %3843 = vmatpush1.msra.mxu0 0.0
        %3844 = vmatprep.subr.mxu0 0.0
        %3845 = vmatpush1.msra.mxu0 0.0
        %3846 = vmatprep.subr.mxu0 0.0
        %3847 = vmatpush1.msra.mxu0 0.0
        %3848 = vmatprep.mubr.f32.mxu0 0.0
        %3849 = vmatmul.mubr.f32.gmra.mrb[0].mxu0 %v3647
        %v3850 = vpop.f32.mrb[0].mxu0
        %v3851 = vadd.f32 0.0, %v3850
        %v3852 = vpop.f32.mrb[0].mxu0
        %v3853 = vadd.f32 0.0, %v3852
        %3854 = vdwg.mxu0
        %v3855 = vadd.f32 %v3643, %v3780
        %v3856 = vadd.f32 %v3644, %v3782
        %v3857 = vadd.f32 %v3645, %v3851
        %v3858 = vadd.f32 %v3646, %v3853
        %v3859 = vxor.u32 %v3855, 2147483648
        %v3860 = vmul.f32 %v3859, 1.442695
        %v3861 = vpow.pop %v3860
        %v3862 = vadd.f32 %v3861, 1.0
        %v3863 = vrcp.pop %v3862
        %v3864 = vmul.f32 1.0, %v3863
        %v3865 = vxor.u32 %v3856, 2147483648
        %v3866 = vmul.f32 %v3865, 1.442695
        %v3867 = vpow.pop %v3866
        %v3868 = vadd.f32 %v3867, 1.0
        %v3869 = vrcp.pop %v3868
        %v3870 = vmul.f32 1.0, %v3869
        %v3871 = vtanh.pop %v3857
        %v3872 = vxor.u32 %v3858, 2147483648
        %v3873 = vmul.f32 %v3872, 1.442695
        %v3874 = vpow.pop %v3873
        %v3875 = vadd.f32 %v3874, 1.0
        %v3876 = vrcp.pop %v3875
        %v3877 = vmul.f32 1.0, %v3876
        %v3878 = vmul.f32 %v3870, %v3648
        %v3879 = vmul.f32 %v3864, %v3871
        %v3880 = vadd.f32 %v3878, %v3879
        %v3881 = vtanh.pop %v3880
        %v3882 = vmul.f32 %v3877, %v3881
        %3883 = vst [vmem:[#allocation4] sm:$0xff] %v3882
        %3884 = vst [vmem:[#allocation5] sm:$0xff] %v3880
        %v3885 = vpack.c.bf16 %v3882, %v3882
        %s3886 = scalar_lea.vmem %s435, 4
        %3887 = vst [vmem:[%s3886] sm:$0xf] %v3885
        %s3888 = scalar_lea.vmem %s379, 224 [#allocation6]
        %v3889 = vld [vmem:[%s3888] sm:$0xff]
        %v3890 = vld [vmem:[%s3888 + $0x8] sm:$0xff]
        %v3891 = vld [vmem:[%s3888 + $0x10] sm:$0xff]
        %v3892 = vld [vmem:[%s3888 + $0x18] sm:$0xff]
        %v3893 = vld [vmem:[#allocation2] sm:$0xff]
        %v3894 = vld [vmem:[#allocation3] sm:$0xff]
        %v3895 = vld [vmem:[%s2] sm:$0xff]
        %v3896 = vld [vmem:[%s2 + $0x8] sm:$0xff]
        %v3897 = vld [vmem:[%s2 + $0x10] sm:$0xff]
        %v3898 = vld [vmem:[%s2 + $0x18] sm:$0xff]
        %v3899 = vld [vmem:[%s2 + $0x20] sm:$0xff]
        %v3900 = vld [vmem:[%s2 + $0x28] sm:$0xff]
        %v3901 = vld [vmem:[%s2 + $0x30] sm:$0xff]
        %v3902 = vld [vmem:[%s2 + $0x38] sm:$0xff]
        %v3903 = vld [vmem:[%s2 + $0x40] sm:$0xff]
        %v3904 = vld [vmem:[%s2 + $0x48] sm:$0xff]
        %v3905 = vld [vmem:[%s2 + $0x50] sm:$0xff]
        %v3906 = vld [vmem:[%s2 + $0x58] sm:$0xff]
        %v3907 = vld [vmem:[%s2 + $0x60] sm:$0xff]
        %v3908 = vld [vmem:[%s2 + $0x68] sm:$0xff]
        %v3909 = vld [vmem:[%s2 + $0x70] sm:$0xff]
        %v3910 = vld [vmem:[%s2 + $0x78] sm:$0xff]
        %v3911 = vld [vmem:[%s2 + $0x80] sm:$0xff]
        %v3912 = vld [vmem:[%s2 + $0x88] sm:$0xff]
        %v3913 = vld [vmem:[%s2 + $0x90] sm:$0xff]
        %v3914 = vld [vmem:[%s2 + $0x98] sm:$0xff]
        %v3915 = vld [vmem:[%s2 + $0xa0] sm:$0xff]
        %v3916 = vld [vmem:[%s2 + $0xa8] sm:$0xff]
        %v3917 = vld [vmem:[%s2 + $0xb0] sm:$0xff]
        %v3918 = vld [vmem:[%s2 + $0xb8] sm:$0xff]
        %v3919 = vld [vmem:[%s2 + $0xc0] sm:$0xff]
        %v3920 = vld [vmem:[%s2 + $0xc8] sm:$0xff]
        %v3921 = vld [vmem:[%s2 + $0xd0] sm:$0xff]
        %v3922 = vld [vmem:[%s2 + $0xd8] sm:$0xff]
        %v3923 = vld [vmem:[%s2 + $0xe0] sm:$0xff]
        %v3924 = vld [vmem:[%s2 + $0xe8] sm:$0xff]
        %v3925 = vld [vmem:[%s2 + $0xf0] sm:$0xff]
        %v3926 = vld [vmem:[%s2 + $0xf8] sm:$0xff]
        %v3927 = vld [vmem:[%s2 + $0x100] sm:$0xff]
        %v3928 = vld [vmem:[%s2 + $0x108] sm:$0xff]
        %v3929 = vld [vmem:[%s2 + $0x110] sm:$0xff]
        %v3930 = vld [vmem:[%s2 + $0x118] sm:$0xff]
        %v3931 = vld [vmem:[%s2 + $0x120] sm:$0xff]
        %v3932 = vld [vmem:[%s2 + $0x128] sm:$0xff]
        %v3933 = vld [vmem:[%s2 + $0x130] sm:$0xff]
        %v3934 = vld [vmem:[%s2 + $0x138] sm:$0xff]
        %v3935 = vld [vmem:[%s2 + $0x140] sm:$0xff]
        %v3936 = vld [vmem:[%s2 + $0x148] sm:$0xff]
        %v3937 = vld [vmem:[%s2 + $0x150] sm:$0xff]
        %v3938 = vld [vmem:[%s2 + $0x158] sm:$0xff]
        %v3939 = vld [vmem:[%s2 + $0x160] sm:$0xff]
        %v3940 = vld [vmem:[%s2 + $0x168] sm:$0xff]
        %v3941 = vld [vmem:[%s2 + $0x170] sm:$0xff]
        %v3942 = vld [vmem:[%s2 + $0x178] sm:$0xff]
        %v3943 = vld [vmem:[%s2 + $0x180] sm:$0xff]
        %v3944 = vld [vmem:[%s2 + $0x188] sm:$0xff]
        %v3945 = vld [vmem:[%s2 + $0x190] sm:$0xff]
        %v3946 = vld [vmem:[%s2 + $0x198] sm:$0xff]
        %v3947 = vld [vmem:[%s2 + $0x1a0] sm:$0xff]
        %v3948 = vld [vmem:[%s2 + $0x1a8] sm:$0xff]
        %v3949 = vld [vmem:[%s2 + $0x1b0] sm:$0xff]
        %v3950 = vld [vmem:[%s2 + $0x1b8] sm:$0xff]
        %v3951 = vld [vmem:[%s2 + $0x1c0] sm:$0xff]
        %v3952 = vld [vmem:[%s2 + $0x1c8] sm:$0xff]
        %v3953 = vld [vmem:[%s2 + $0x1d0] sm:$0xff]
        %v3954 = vld [vmem:[%s2 + $0x1d8] sm:$0xff]
        %v3955 = vld [vmem:[%s2 + $0x1e0] sm:$0xff]
        %v3956 = vld [vmem:[%s2 + $0x1e8] sm:$0xff]
        %v3957 = vld [vmem:[%s2 + $0x1f0] sm:$0xff]
        %v3958 = vld [vmem:[%s2 + $0x1f8] sm:$0xff]
        %3959 = vmatprep.subr.mxu0 %v3896
        %3960 = vmatpush1.msra.mxu0 %v3895
        %3961 = vmatprep.subr.mxu0 %v3900
        %3962 = vmatpush1.msra.mxu0 %v3899
        %3963 = vmatprep.subr.mxu0 %v3904
        %3964 = vmatpush1.msra.mxu0 %v3903
        %3965 = vmatprep.subr.mxu0 %v3908
        %3966 = vmatpush1.msra.mxu0 %v3907
        %3967 = vmatprep.subr.mxu0 %v3912
        %3968 = vmatpush1.msra.mxu0 %v3911
        %3969 = vmatprep.subr.mxu0 %v3916
        %3970 = vmatpush1.msra.mxu0 %v3915
        %3971 = vmatprep.subr.mxu0 %v3920
        %3972 = vmatpush1.msra.mxu0 %v3919
        %3973 = vmatprep.subr.mxu0 %v3924
        %3974 = vmatpush1.msra.mxu0 %v3923
        %3975 = vmatprep.subr.mxu0 %v3928
        %3976 = vmatpush1.msra.mxu0 %v3927
        %3977 = vmatprep.subr.mxu0 %v3932
        %3978 = vmatpush1.msra.mxu0 %v3931
        %3979 = vmatprep.subr.mxu0 %v3936
        %3980 = vmatpush1.msra.mxu0 %v3935
        %3981 = vmatprep.subr.mxu0 %v3940
        %3982 = vmatpush1.msra.mxu0 %v3939
        %3983 = vmatprep.subr.mxu0 %v3944
        %3984 = vmatpush1.msra.mxu0 %v3943
        %3985 = vmatprep.subr.mxu0 %v3948
        %3986 = vmatpush1.msra.mxu0 %v3947
        %3987 = vmatprep.subr.mxu0 %v3952
        %3988 = vmatpush1.msra.mxu0 %v3951
        %3989 = vmatprep.subr.mxu0 %v3956
        %3990 = vmatpush1.msra.mxu0 %v3955
        %3991 = vmatprep.subr.mxu0 0.0
        %3992 = vmatpush1.msra.mxu0 0.0
        %3993 = vmatprep.subr.mxu0 0.0
        %3994 = vmatpush1.msra.mxu0 0.0
        %3995 = vmatprep.subr.mxu0 0.0
        %3996 = vmatpush1.msra.mxu0 0.0
        %3997 = vmatprep.subr.mxu0 0.0
        %3998 = vmatpush1.msra.mxu0 0.0
        %3999 = vmatprep.subr.mxu0 0.0
        %4000 = vmatpush1.msra.mxu0 0.0
        %4001 = vmatprep.subr.mxu0 0.0
        %4002 = vmatpush1.msra.mxu0 0.0
        %4003 = vmatprep.subr.mxu0 0.0
        %4004 = vmatpush1.msra.mxu0 0.0
        %4005 = vmatprep.subr.mxu0 0.0
        %4006 = vmatpush1.msra.mxu0 0.0
        %4007 = vmatprep.subr.mxu0 0.0
        %4008 = vmatpush1.msra.mxu0 0.0
        %4009 = vmatprep.subr.mxu0 0.0
        %4010 = vmatpush1.msra.mxu0 0.0
        %4011 = vmatprep.subr.mxu0 0.0
        %4012 = vmatpush1.msra.mxu0 0.0
        %4013 = vmatprep.subr.mxu0 0.0
        %4014 = vmatpush1.msra.mxu0 0.0
        %4015 = vmatprep.subr.mxu0 0.0
        %4016 = vmatpush1.msra.mxu0 0.0
        %4017 = vmatprep.subr.mxu0 0.0
        %4018 = vmatpush1.msra.mxu0 0.0
        %4019 = vmatprep.subr.mxu0 0.0
        %4020 = vmatpush1.msra.mxu0 0.0
        %4021 = vmatprep.subr.mxu0 0.0
        %4022 = vmatpush1.msra.mxu0 0.0
        %4023 = vmatprep.mubr.f32.mxu0 0.0
        %4024 = vmatmul.mubr.f32.gmra.mrb[0].mxu0 %v3893
        %v4025 = vpop.f32.mrb[0].mxu0
        %v4026 = vadd.f32 0.0, %v4025
        %v4027 = vpop.f32.mrb[0].mxu0
        %v4028 = vadd.f32 0.0, %v4027
        %4029 = vdwg.mxu0
        %4030 = vmatprep.subr.mxu0 %v3898
        %4031 = vmatpush1.msra.mxu0 %v3897
        %4032 = vmatprep.subr.mxu0 %v3902
        %4033 = vmatpush1.msra.mxu0 %v3901
        %4034 = vmatprep.subr.mxu0 %v3906
        %4035 = vmatpush1.msra.mxu0 %v3905
        %4036 = vmatprep.subr.mxu0 %v3910
        %4037 = vmatpush1.msra.mxu0 %v3909
        %4038 = vmatprep.subr.mxu0 %v3914
        %4039 = vmatpush1.msra.mxu0 %v3913
        %4040 = vmatprep.subr.mxu0 %v3918
        %4041 = vmatpush1.msra.mxu0 %v3917
        %4042 = vmatprep.subr.mxu0 %v3922
        %4043 = vmatpush1.msra.mxu0 %v3921
        %4044 = vmatprep.subr.mxu0 %v3926
        %4045 = vmatpush1.msra.mxu0 %v3925
        %4046 = vmatprep.subr.mxu0 %v3930
        %4047 = vmatpush1.msra.mxu0 %v3929
        %4048 = vmatprep.subr.mxu0 %v3934
        %4049 = vmatpush1.msra.mxu0 %v3933
        %4050 = vmatprep.subr.mxu0 %v3938
        %4051 = vmatpush1.msra.mxu0 %v3937
        %4052 = vmatprep.subr.mxu0 %v3942
        %4053 = vmatpush1.msra.mxu0 %v3941
        %4054 = vmatprep.subr.mxu0 %v3946
        %4055 = vmatpush1.msra.mxu0 %v3945
        %4056 = vmatprep.subr.mxu0 %v3950
        %4057 = vmatpush1.msra.mxu0 %v3949
        %4058 = vmatprep.subr.mxu0 %v3954
        %4059 = vmatpush1.msra.mxu0 %v3953
        %4060 = vmatprep.subr.mxu0 %v3958
        %4061 = vmatpush1.msra.mxu0 %v3957
        %4062 = vmatprep.subr.mxu0 0.0
        %4063 = vmatpush1.msra.mxu0 0.0
        %4064 = vmatprep.subr.mxu0 0.0
        %4065 = vmatpush1.msra.mxu0 0.0
        %4066 = vmatprep.subr.mxu0 0.0
        %4067 = vmatpush1.msra.mxu0 0.0
        %4068 = vmatprep.subr.mxu0 0.0
        %4069 = vmatpush1.msra.mxu0 0.0
        %4070 = vmatprep.subr.mxu0 0.0
        %4071 = vmatpush1.msra.mxu0 0.0
        %4072 = vmatprep.subr.mxu0 0.0
        %4073 = vmatpush1.msra.mxu0 0.0
        %4074 = vmatprep.subr.mxu0 0.0
        %4075 = vmatpush1.msra.mxu0 0.0
        %4076 = vmatprep.subr.mxu0 0.0
        %4077 = vmatpush1.msra.mxu0 0.0
        %4078 = vmatprep.subr.mxu0 0.0
        %4079 = vmatpush1.msra.mxu0 0.0
        %4080 = vmatprep.subr.mxu0 0.0
        %4081 = vmatpush1.msra.mxu0 0.0
        %4082 = vmatprep.subr.mxu0 0.0
        %4083 = vmatpush1.msra.mxu0 0.0
        %4084 = vmatprep.subr.mxu0 0.0
        %4085 = vmatpush1.msra.mxu0 0.0
        %4086 = vmatprep.subr.mxu0 0.0
        %4087 = vmatpush1.msra.mxu0 0.0
        %4088 = vmatprep.subr.mxu0 0.0
        %4089 = vmatpush1.msra.mxu0 0.0
        %4090 = vmatprep.subr.mxu0 0.0
        %4091 = vmatpush1.msra.mxu0 0.0
        %4092 = vmatprep.subr.mxu0 0.0
        %4093 = vmatpush1.msra.mxu0 0.0
        %4094 = vmatprep.mubr.f32.mxu0 0.0
        %4095 = vmatmul.mubr.f32.gmra.mrb[0].mxu0 %v3893
        %v4096 = vpop.f32.mrb[0].mxu0
        %v4097 = vadd.f32 0.0, %v4096
        %v4098 = vpop.f32.mrb[0].mxu0
        %v4099 = vadd.f32 0.0, %v4098
        %4100 = vdwg.mxu0
        %v4101 = vadd.f32 %v3889, %v4026
        %v4102 = vadd.f32 %v3890, %v4028
        %v4103 = vadd.f32 %v3891, %v4097
        %v4104 = vadd.f32 %v3892, %v4099
        %v4105 = vxor.u32 %v4101, 2147483648
        %v4106 = vmul.f32 %v4105, 1.442695
        %v4107 = vpow.pop %v4106
        %v4108 = vadd.f32 %v4107, 1.0
        %v4109 = vrcp.pop %v4108
        %v4110 = vmul.f32 1.0, %v4109
        %v4111 = vxor.u32 %v4102, 2147483648
        %v4112 = vmul.f32 %v4111, 1.442695
        %v4113 = vpow.pop %v4112
        %v4114 = vadd.f32 %v4113, 1.0
        %v4115 = vrcp.pop %v4114
        %v4116 = vmul.f32 1.0, %v4115
        %v4117 = vtanh.pop %v4103
        %v4118 = vxor.u32 %v4104, 2147483648
        %v4119 = vmul.f32 %v4118, 1.442695
        %v4120 = vpow.pop %v4119
        %v4121 = vadd.f32 %v4120, 1.0
        %v4122 = vrcp.pop %v4121
        %v4123 = vmul.f32 1.0, %v4122
        %v4124 = vmul.f32 %v4116, %v3894
        %v4125 = vmul.f32 %v4110, %v4117
        %v4126 = vadd.f32 %v4124, %v4125
        %v4127 = vtanh.pop %v4126
        %v4128 = vmul.f32 %v4123, %v4127
        %4129 = vst [vmem:[#allocation2] sm:$0xff] %v4128
        %4130 = vst [vmem:[#allocation3] sm:$0xff] %v4126
        %v4131 = vpack.c.bf16 %v4128, %v4128
        %s4132 = scalar_lea.vmem %s428, 28
        %4133 = vst [vmem:[%s4132] sm:$0xf] %v4131
        %v4134 = vld [vmem:[%s386] sm:$0xff]
        %v4135 = vld [vmem:[%s386 + $0x8] sm:$0xff]
        %v4136 = vld [vmem:[%s386 + $0x10] sm:$0xff]
        %v4137 = vld [vmem:[%s386 + $0x18] sm:$0xff]
        %v4138 = vld [vmem:[#allocation4] sm:$0xff]
        %v4139 = vld [vmem:[#allocation5] sm:$0xff]
        %v4140 = vld [vmem:[%s3] sm:$0xff]
        %v4141 = vld [vmem:[%s3 + $0x8] sm:$0xff]
        %v4142 = vld [vmem:[%s3 + $0x10] sm:$0xff]
        %v4143 = vld [vmem:[%s3 + $0x18] sm:$0xff]
        %v4144 = vld [vmem:[%s3 + $0x20] sm:$0xff]
        %v4145 = vld [vmem:[%s3 + $0x28] sm:$0xff]
        %v4146 = vld [vmem:[%s3 + $0x30] sm:$0xff]
        %v4147 = vld [vmem:[%s3 + $0x38] sm:$0xff]
        %v4148 = vld [vmem:[%s3 + $0x40] sm:$0xff]
        %v4149 = vld [vmem:[%s3 + $0x48] sm:$0xff]
        %v4150 = vld [vmem:[%s3 + $0x50] sm:$0xff]
        %v4151 = vld [vmem:[%s3 + $0x58] sm:$0xff]
        %v4152 = vld [vmem:[%s3 + $0x60] sm:$0xff]
        %v4153 = vld [vmem:[%s3 + $0x68] sm:$0xff]
        %v4154 = vld [vmem:[%s3 + $0x70] sm:$0xff]
        %v4155 = vld [vmem:[%s3 + $0x78] sm:$0xff]
        %v4156 = vld [vmem:[%s3 + $0x80] sm:$0xff]
        %v4157 = vld [vmem:[%s3 + $0x88] sm:$0xff]
        %v4158 = vld [vmem:[%s3 + $0x90] sm:$0xff]
        %v4159 = vld [vmem:[%s3 + $0x98] sm:$0xff]
        %v4160 = vld [vmem:[%s3 + $0xa0] sm:$0xff]
        %v4161 = vld [vmem:[%s3 + $0xa8] sm:$0xff]
        %v4162 = vld [vmem:[%s3 + $0xb0] sm:$0xff]
        %v4163 = vld [vmem:[%s3 + $0xb8] sm:$0xff]
        %v4164 = vld [vmem:[%s3 + $0xc0] sm:$0xff]
        %v4165 = vld [vmem:[%s3 + $0xc8] sm:$0xff]
        %v4166 = vld [vmem:[%s3 + $0xd0] sm:$0xff]
        %v4167 = vld [vmem:[%s3 + $0xd8] sm:$0xff]
        %v4168 = vld [vmem:[%s3 + $0xe0] sm:$0xff]
        %v4169 = vld [vmem:[%s3 + $0xe8] sm:$0xff]
        %v4170 = vld [vmem:[%s3 + $0xf0] sm:$0xff]
        %v4171 = vld [vmem:[%s3 + $0xf8] sm:$0xff]
        %v4172 = vld [vmem:[%s3 + $0x100] sm:$0xff]
        %v4173 = vld [vmem:[%s3 + $0x108] sm:$0xff]
        %v4174 = vld [vmem:[%s3 + $0x110] sm:$0xff]
        %v4175 = vld [vmem:[%s3 + $0x118] sm:$0xff]
        %v4176 = vld [vmem:[%s3 + $0x120] sm:$0xff]
        %v4177 = vld [vmem:[%s3 + $0x128] sm:$0xff]
        %v4178 = vld [vmem:[%s3 + $0x130] sm:$0xff]
        %v4179 = vld [vmem:[%s3 + $0x138] sm:$0xff]
        %v4180 = vld [vmem:[%s3 + $0x140] sm:$0xff]
        %v4181 = vld [vmem:[%s3 + $0x148] sm:$0xff]
        %v4182 = vld [vmem:[%s3 + $0x150] sm:$0xff]
        %v4183 = vld [vmem:[%s3 + $0x158] sm:$0xff]
        %v4184 = vld [vmem:[%s3 + $0x160] sm:$0xff]
        %v4185 = vld [vmem:[%s3 + $0x168] sm:$0xff]
        %v4186 = vld [vmem:[%s3 + $0x170] sm:$0xff]
        %v4187 = vld [vmem:[%s3 + $0x178] sm:$0xff]
        %v4188 = vld [vmem:[%s3 + $0x180] sm:$0xff]
        %v4189 = vld [vmem:[%s3 + $0x188] sm:$0xff]
        %v4190 = vld [vmem:[%s3 + $0x190] sm:$0xff]
        %v4191 = vld [vmem:[%s3 + $0x198] sm:$0xff]
        %v4192 = vld [vmem:[%s3 + $0x1a0] sm:$0xff]
        %v4193 = vld [vmem:[%s3 + $0x1a8] sm:$0xff]
        %v4194 = vld [vmem:[%s3 + $0x1b0] sm:$0xff]
        %v4195 = vld [vmem:[%s3 + $0x1b8] sm:$0xff]
        %v4196 = vld [vmem:[%s3 + $0x1c0] sm:$0xff]
        %v4197 = vld [vmem:[%s3 + $0x1c8] sm:$0xff]
        %v4198 = vld [vmem:[%s3 + $0x1d0] sm:$0xff]
        %v4199 = vld [vmem:[%s3 + $0x1d8] sm:$0xff]
        %v4200 = vld [vmem:[%s3 + $0x1e0] sm:$0xff]
        %v4201 = vld [vmem:[%s3 + $0x1e8] sm:$0xff]
        %v4202 = vld [vmem:[%s3 + $0x1f0] sm:$0xff]
        %v4203 = vld [vmem:[%s3 + $0x1f8] sm:$0xff]
        %4204 = vmatprep.subr.mxu0 %v4141
        %4205 = vmatpush1.msra.mxu0 %v4140
        %4206 = vmatprep.subr.mxu0 %v4145
        %4207 = vmatpush1.msra.mxu0 %v4144
        %4208 = vmatprep.subr.mxu0 %v4149
        %4209 = vmatpush1.msra.mxu0 %v4148
        %4210 = vmatprep.subr.mxu0 %v4153
        %4211 = vmatpush1.msra.mxu0 %v4152
        %4212 = vmatprep.subr.mxu0 %v4157
        %4213 = vmatpush1.msra.mxu0 %v4156
        %4214 = vmatprep.subr.mxu0 %v4161
        %4215 = vmatpush1.msra.mxu0 %v4160
        %4216 = vmatprep.subr.mxu0 %v4165
        %4217 = vmatpush1.msra.mxu0 %v4164
        %4218 = vmatprep.subr.mxu0 %v4169
        %4219 = vmatpush1.msra.mxu0 %v4168
        %4220 = vmatprep.subr.mxu0 %v4173
        %4221 = vmatpush1.msra.mxu0 %v4172
        %4222 = vmatprep.subr.mxu0 %v4177
        %4223 = vmatpush1.msra.mxu0 %v4176
        %4224 = vmatprep.subr.mxu0 %v4181
        %4225 = vmatpush1.msra.mxu0 %v4180
        %4226 = vmatprep.subr.mxu0 %v4185
        %4227 = vmatpush1.msra.mxu0 %v4184
        %4228 = vmatprep.subr.mxu0 %v4189
        %4229 = vmatpush1.msra.mxu0 %v4188
        %4230 = vmatprep.subr.mxu0 %v4193
        %4231 = vmatpush1.msra.mxu0 %v4192
        %4232 = vmatprep.subr.mxu0 %v4197
        %4233 = vmatpush1.msra.mxu0 %v4196
        %4234 = vmatprep.subr.mxu0 %v4201
        %4235 = vmatpush1.msra.mxu0 %v4200
        %4236 = vmatprep.subr.mxu0 0.0
        %4237 = vmatpush1.msra.mxu0 0.0
        %4238 = vmatprep.subr.mxu0 0.0
        %4239 = vmatpush1.msra.mxu0 0.0
        %4240 = vmatprep.subr.mxu0 0.0
        %4241 = vmatpush1.msra.mxu0 0.0
        %4242 = vmatprep.subr.mxu0 0.0
        %4243 = vmatpush1.msra.mxu0 0.0
        %4244 = vmatprep.subr.mxu0 0.0
        %4245 = vmatpush1.msra.mxu0 0.0
        %4246 = vmatprep.subr.mxu0 0.0
        %4247 = vmatpush1.msra.mxu0 0.0
        %4248 = vmatprep.subr.mxu0 0.0
        %4249 = vmatpush1.msra.mxu0 0.0
        %4250 = vmatprep.subr.mxu0 0.0
        %4251 = vmatpush1.msra.mxu0 0.0
        %4252 = vmatprep.subr.mxu0 0.0
        %4253 = vmatpush1.msra.mxu0 0.0
        %4254 = vmatprep.subr.mxu0 0.0
        %4255 = vmatpush1.msra.mxu0 0.0
        %4256 = vmatprep.subr.mxu0 0.0
        %4257 = vmatpush1.msra.mxu0 0.0
        %4258 = vmatprep.subr.mxu0 0.0
        %4259 = vmatpush1.msra.mxu0 0.0
        %4260 = vmatprep.subr.mxu0 0.0
        %4261 = vmatpush1.msra.mxu0 0.0
        %4262 = vmatprep.subr.mxu0 0.0
        %4263 = vmatpush1.msra.mxu0 0.0
        %4264 = vmatprep.subr.mxu0 0.0
        %4265 = vmatpush1.msra.mxu0 0.0
        %4266 = vmatprep.subr.mxu0 0.0
        %4267 = vmatpush1.msra.mxu0 0.0
        %4268 = vmatprep.mubr.f32.mxu0 0.0
        %4269 = vmatmul.mubr.f32.gmra.mrb[0].mxu0 %v4138
        %v4270 = vpop.f32.mrb[0].mxu0
        %v4271 = vadd.f32 0.0, %v4270
        %v4272 = vpop.f32.mrb[0].mxu0
        %v4273 = vadd.f32 0.0, %v4272
        %4274 = vdwg.mxu0
        %4275 = vmatprep.subr.mxu0 %v4143
        %4276 = vmatpush1.msra.mxu0 %v4142
        %4277 = vmatprep.subr.mxu0 %v4147
        %4278 = vmatpush1.msra.mxu0 %v4146
        %4279 = vmatprep.subr.mxu0 %v4151
        %4280 = vmatpush1.msra.mxu0 %v4150
        %4281 = vmatprep.subr.mxu0 %v4155
        %4282 = vmatpush1.msra.mxu0 %v4154
        %4283 = vmatprep.subr.mxu0 %v4159
        %4284 = vmatpush1.msra.mxu0 %v4158
        %4285 = vmatprep.subr.mxu0 %v4163
        %4286 = vmatpush1.msra.mxu0 %v4162
        %4287 = vmatprep.subr.mxu0 %v4167
        %4288 = vmatpush1.msra.mxu0 %v4166
        %4289 = vmatprep.subr.mxu0 %v4171
        %4290 = vmatpush1.msra.mxu0 %v4170
        %4291 = vmatprep.subr.mxu0 %v4175
        %4292 = vmatpush1.msra.mxu0 %v4174
        %4293 = vmatprep.subr.mxu0 %v4179
        %4294 = vmatpush1.msra.mxu0 %v4178
        %4295 = vmatprep.subr.mxu0 %v4183
        %4296 = vmatpush1.msra.mxu0 %v4182
        %4297 = vmatprep.subr.mxu0 %v4187
        %4298 = vmatpush1.msra.mxu0 %v4186
        %4299 = vmatprep.subr.mxu0 %v4191
        %4300 = vmatpush1.msra.mxu0 %v4190
        %4301 = vmatprep.subr.mxu0 %v4195
        %4302 = vmatpush1.msra.mxu0 %v4194
        %4303 = vmatprep.subr.mxu0 %v4199
        %4304 = vmatpush1.msra.mxu0 %v4198
        %4305 = vmatprep.subr.mxu0 %v4203
        %4306 = vmatpush1.msra.mxu0 %v4202
        %4307 = vmatprep.subr.mxu0 0.0
        %4308 = vmatpush1.msra.mxu0 0.0
        %4309 = vmatprep.subr.mxu0 0.0
        %4310 = vmatpush1.msra.mxu0 0.0
        %4311 = vmatprep.subr.mxu0 0.0
        %4312 = vmatpush1.msra.mxu0 0.0
        %4313 = vmatprep.subr.mxu0 0.0
        %4314 = vmatpush1.msra.mxu0 0.0
        %4315 = vmatprep.subr.mxu0 0.0
        %4316 = vmatpush1.msra.mxu0 0.0
        %4317 = vmatprep.subr.mxu0 0.0
        %4318 = vmatpush1.msra.mxu0 0.0
        %4319 = vmatprep.subr.mxu0 0.0
        %4320 = vmatpush1.msra.mxu0 0.0
        %4321 = vmatprep.subr.mxu0 0.0
        %4322 = vmatpush1.msra.mxu0 0.0
        %4323 = vmatprep.subr.mxu0 0.0
        %4324 = vmatpush1.msra.mxu0 0.0
        %4325 = vmatprep.subr.mxu0 0.0
        %4326 = vmatpush1.msra.mxu0 0.0
        %4327 = vmatprep.subr.mxu0 0.0
        %4328 = vmatpush1.msra.mxu0 0.0
        %4329 = vmatprep.subr.mxu0 0.0
        %4330 = vmatpush1.msra.mxu0 0.0
        %4331 = vmatprep.subr.mxu0 0.0
        %4332 = vmatpush1.msra.mxu0 0.0
        %4333 = vmatprep.subr.mxu0 0.0
        %4334 = vmatpush1.msra.mxu0 0.0
        %4335 = vmatprep.subr.mxu0 0.0
        %4336 = vmatpush1.msra.mxu0 0.0
        %4337 = vmatprep.subr.mxu0 0.0
        %4338 = vmatpush1.msra.mxu0 0.0
        %4339 = vmatprep.mubr.f32.mxu0 0.0
        %4340 = vmatmul.mubr.f32.gmra.mrb[0].mxu0 %v4138
        %v4341 = vpop.f32.mrb[0].mxu0
        %v4342 = vadd.f32 0.0, %v4341
        %v4343 = vpop.f32.mrb[0].mxu0
        %v4344 = vadd.f32 0.0, %v4343
        %4345 = vdwg.mxu0
        %v4346 = vadd.f32 %v4134, %v4271
        %v4347 = vadd.f32 %v4135, %v4273
        %v4348 = vadd.f32 %v4136, %v4342
        %v4349 = vadd.f32 %v4137, %v4344
        %v4350 = vxor.u32 %v4346, 2147483648
        %v4351 = vmul.f32 %v4350, 1.442695
        %v4352 = vpow.pop %v4351
        %v4353 = vadd.f32 %v4352, 1.0
        %v4354 = vrcp.pop %v4353
        %v4355 = vmul.f32 1.0, %v4354
        %v4356 = vxor.u32 %v4347, 2147483648
        %v4357 = vmul.f32 %v4356, 1.442695
        %v4358 = vpow.pop %v4357
        %v4359 = vadd.f32 %v4358, 1.0
        %v4360 = vrcp.pop %v4359
        %v4361 = vmul.f32 1.0, %v4360
        %v4362 = vtanh.pop %v4348
        %v4363 = vxor.u32 %v4349, 2147483648
        %v4364 = vmul.f32 %v4363, 1.442695
        %v4365 = vpow.pop %v4364
        %v4366 = vadd.f32 %v4365, 1.0
        %v4367 = vrcp.pop %v4366
        %v4368 = vmul.f32 1.0, %v4367
        %v4369 = vmul.f32 %v4361, %v4139
        %v4370 = vmul.f32 %v4355, %v4362
        %v4371 = vadd.f32 %v4369, %v4370
        %v4372 = vtanh.pop %v4371
        %v4373 = vmul.f32 %v4368, %v4372
        %4374 = vst [vmem:[#allocation4] sm:$0xff] %v4373
        %4375 = vst [vmem:[#allocation5] sm:$0xff] %v4371
        %v4376 = vpack.c.bf16 %v4373, %v4373
        %4377 = vst [vmem:[%s435] sm:$0xf] %v4376
        %s4378 = smul.u32 8, %s17
        %p4379 = scmp.lt.s32.totalorder %s4378, 15
        %s4380 = scalar_select %p4379, %s4378, 15
        %s4381 = smul.addr %s4380, 4
        %s4382 = scalar_lea.vmem %s4, %s4381
        %s4383 = ssub.s32 1, %s17
        %s4384 = smul.u32 8, %s4383
        %p4385 = scmp.lt.s32.totalorder %s4384, 15
        %s4386 = scalar_select %p4385, %s4384, 15
        %s4387 = smul.addr %s4386, 4
        %s4388 = scalar_lea.vmem %s5, %s4387
        // Predicated region
        $region87: #{lstm_crf_forward.4} parent=73 // pred_check
          %p4389 = pneg %p131
        $region88: #{lstm_crf_forward.4} parent=73 // pred_check_branch
          %4391 = sbr.rel (%p4389) target = $region90
        $region89: #{lstm_crf_forward.4} parent=73 // pred_region
          %s4392 = smul.u32 8, %s17
        $region90: #{lstm_crf_forward.4} parent=73 // pred_fallthru
          _
        // Predicated region
        $region91: #{lstm_crf_forward.4} parent=73 // pred_check
          %p4393 = pneg %p159
        $region92: #{lstm_crf_forward.4} parent=73 // pred_check_branch
          %4395 = sbr.rel (%p4393) target = $region94
        $region93: #{lstm_crf_forward.4} parent=73 // pred_region
          %s4396 = ssub.s32 1, %s17
          %s4397 = smul.u32 8, %s4396
        $region94: #{lstm_crf_forward.4} parent=73 // pred_fallthru
          _
      $region74: #{lstm_crf_forward.4} parent=5 // pred_fallthru
        _
      %p4398 = scmp.le.s32.totalorder 2, %s12
      // Predicated region
      $region95: #{lstm_crf_forward.4} parent=5 // pred_check
        %p4399 = pneg %p4398
      $region96: #{lstm_crf_forward.4} parent=5 // pred_check_branch
        %4401 = sbr.rel (%p4399) target = $region98
      $region97: #{lstm_crf_forward.4} parent=5 // pred_region
        %s4402 = ssub.s32 %s12, 2
        // Predicated region
        $region99: #{lstm_crf_forward.4} parent=97 // pred_check
          %p4403 = pneg %p137
        $region100: #{lstm_crf_forward.4} parent=97 // pred_check_branch
          %4405 = sbr.rel (%p4403) target = $region102
        $region101: #{lstm_crf_forward.4} parent=97 // pred_region
          %s4406 = smul.u32 8, %s18
          %p4407 = scmp.lt.s32.totalorder %s4406, 15
          %s4408 = scalar_select %p4407, %s4406, 15
          %s4409 = smul.addr %s4408, 4
          %s4410 = scalar_lea.vmem %s4, %s4409
        $region102: #{lstm_crf_forward.4} parent=97 // pred_fallthru
          _
        // Predicated region
        $region103: #{lstm_crf_forward.4} parent=97 // pred_check
          %p4411 = pneg %p165
        $region104: #{lstm_crf_forward.4} parent=97 // pred_check_branch
          %4413 = sbr.rel (%p4411) target = $region106
        $region105: #{lstm_crf_forward.4} parent=97 // pred_region
          %s4414 = ssub.s32 1, %s18
          %s4415 = smul.u32 8, %s4414
          %p4416 = scmp.lt.s32.totalorder %s4415, 15
          %s4417 = scalar_select %p4416, %s4415, 15
          %s4418 = smul.addr %s4417, 4
          %s4419 = scalar_lea.vmem %s5, %s4418
        $region106: #{lstm_crf_forward.4} parent=97 // pred_fallthru
          _
      $region98: #{lstm_crf_forward.4} parent=5 // pred_fallthru
        _
    $region6: #{lstm_crf_forward.4} parent=1 // loop_footer
      %s16 = sadd.s32 1, %s12
    $region7: #{lstm_crf_forward.4} parent=1 // loop_footer_branch
      %11 = sbr.rel target = $region3
    $region8: #{lstm_crf_forward.4} parent=1 // loop_exit
      _

</llo_original>
